<compile_context>
chip_gen: v6e
topology: v6e:2x2x1
jax: 0.10.0
libtpu: 0.0.40
codegen_flags: <defaults>
</compile_context>

<pallas_src>
import numpy as np
import jax
import jax.numpy as jnp
from jax.experimental import pallas as pl
from jax.experimental.pallas import tpu as pltpu

ALPHA = 0.1   # LeakyReLU negative slope
EPS = 1e-5    # InstanceNorm2d eps (PyTorch default, affine=False)
C = 64        # conv channel width
KK = 16       # 4x4 kernel taps


def _leaky(x):
    return jnp.where(x > 0, x, ALPHA * x)


def _dot(a, b):
    return jnp.dot(a, b, preferred_element_type=jnp.float32)


# ---------------------------------------------------------------------------
# The single fused kernel (one grid step == one sample)
# ---------------------------------------------------------------------------
def _fused_kernel(p1_ref, z_ref,
                  w1_ref, b1_ref, w2_ref, b2_ref, w3_ref, b3_ref, w4_ref, b4_ref,
                  g2_ref, g3_ref, g4_ref,
                  rw_ref, rb_ref, v_ref, wz_ref, l1b_ref, l2w_ref, l2b_ref,
                  feat_ref, dout_ref):
    bf16 = jnp.bfloat16

    def in_lrelu_f32(x):
        # InstanceNorm2d(affine=False): per-channel stats over spatial rows,
        # two-pass variance, all in f32.
        mean = jnp.mean(x, axis=0, keepdims=True)
        var = jnp.mean((x - mean) ** 2, axis=0, keepdims=True)
        return _leaky((x - mean) * jax.lax.rsqrt(var + EPS))

    def tap_matmul(taps, w_ref, p_out):
        # taps: (16*p_out, 64) bf16, tap-major row blocks; w_ref: (1024, 64) bf16
        acc = None
        for k in range(KK):
            t = _dot(taps[k * p_out:(k + 1) * p_out, :], w_ref[pl.ds(k * C, C), :])
            acc = t if acc is None else acc + t
        return acc

    # ---- img_layer1: Conv(1->64, k4 s2 p1) on host-built patches + LeakyReLU ----
    y = _leaky(_dot(p1_ref[...], w1_ref[...]) + b1_ref[...]).astype(bf16)      # (256,64)

    # ---- img_layer2: all 16 taps gathered with ONE stacked matmul ----
    taps = _dot(g2_ref[...], y).astype(bf16)                                   # (1024,64) exact
    y = in_lrelu_f32(tap_matmul(taps, w2_ref, 64) + b2_ref[...]).astype(bf16)  # (64,64)

    # ---- img_layer3 ----
    taps = _dot(g3_ref[...], y).astype(bf16)                                   # (256,64) exact
    y = in_lrelu_f32(tap_matmul(taps, w3_ref, 16) + b3_ref[...]).astype(bf16)  # (16,64)

    # ---- img_layer4 (tiny: per-tap gather keeps every sublane slice aligned) ----
    acc = None
    for k in range(KK):
        pk = _dot(g4_ref[k], y).astype(bf16)                                   # (4,64) exact
        t = _dot(pk, w4_ref[pl.ds(k * C, C), :])
        acc = t if acc is None else acc + t
    y4 = in_lrelu_f32(acc + b4_ref[...])                                       # (4,64) f32

    # ---- rnd_layer1: Linear(100 -> 512), K zero-padded to 128 ----
    z_out = (_dot(z_ref[...], rw_ref[...]) + rb_ref[...]).astype(bf16)         # (1,512)

    # ---- layer1: Linear(256+512 -> 1024); concat + NCHW flatten folded in ----
    feat = _dot(z_out, wz_ref[...]) + l1b_ref[...]                             # (1,1024) f32
    for p in range(4):                       # 4 spatial positions of the 2x2 map
        feat = feat + _dot(y4[p:p + 1, :].astype(bf16), v_ref[p])              # (1,64)@(64,1024)
    feat = _leaky(feat)
    feat_ref[...] = feat

    # ---- layer2: Linear(1024 -> 1) as elementwise mul + lane reduction ----
    dout_ref[...] = jnp.sum(feat * l2w_ref[...], axis=1, keepdims=True) + l2b_ref[...]


# ---------------------------------------------------------------------------
# Host-side helpers (plain JAX / numpy, trace-time only)
# ---------------------------------------------------------------------------
def im2col_l1(x):
    """x: (B, 32, 32, 1) NHWC -> (B, 256, 16) patches for the first conv."""
    B, H, W, Cin = x.shape
    xp = jnp.pad(x, ((0, 0), (1, 1), (1, 1), (0, 0)))
    OH, OW = H // 2, W // 2
    cols = [xp[:, i:i + 2 * OH:2, j:j + 2 * OW:2, :]
            for i in range(4) for j in range(4)]
    p = jnp.stack(cols, axis=3)                           # (B, OH, OW, 16, Cin)
    return p.reshape(B, OH * OW, 16 * Cin)


def _gather_taps(H, W):
    """Per-sample 0/1 matrices implementing im2col (k4/s2/p1), one per tap."""
    OH, OW = H // 2, W // 2
    G = np.zeros((16, OH * OW, H * W), np.float32)
    for oh in range(OH):
        for ow in range(OW):
            r = oh * OW + ow
            for i in range(4):
                for j in range(4):
                    h, w = 2 * oh + i - 1, 2 * ow + j - 1
                    if 0 <= h < H and 0 <= w < W:
                        G[i * 4 + j, r, h * W + w] = 1.0
    return G


def make_consts():
    """Batch-size independent, bf16 (0/1 values are exact)."""
    g2 = _gather_taps(16, 16)                 # (16, 64, 256)
    g3 = _gather_taps(8, 8)                   # (16, 16, 64)
    g4 = _gather_taps(4, 4)                   # (16, 4, 16)
    return dict(
        g2=jnp.asarray(g2.reshape(16 * 64, 256), jnp.bfloat16),   # stacked tap-major
        g3=jnp.asarray(g3.reshape(16 * 16, 64), jnp.bfloat16),    # stacked tap-major
        g4=jnp.asarray(g4, jnp.bfloat16),                         # per-tap
    )


def init_params(key):
    ks = jax.random.split(key, 14)

    def u(k, shape, fan_in):
        bound = 1.0 / float(fan_in) ** 0.5
        return jax.random.uniform(k, shape, jnp.float32, -bound, bound)

    p = {}
    # conv weights stored matmul-ready: (KH*KW*Cin, Cout), row = (i*4+j)*Cin + c
    p["c1_w"], p["c1_b"] = u(ks[0], (16, 64), 16), u(ks[1], (1, 64), 16)
    p["c2_w"], p["c2_b"] = u(ks[2], (1024, 64), 1024), u(ks[3], (1, 64), 1024)
    p["c3_w"], p["c3_b"] = u(ks[4], (1024, 64), 1024), u(ks[5], (1, 64), 1024)
    p["c4_w"], p["c4_b"] = u(ks[6], (1024, 64), 1024), u(ks[7], (1, 64), 1024)
    p["rnd_w"], p["rnd_b"] = u(ks[8], (100, 512), 100), u(ks[9], (1, 512), 100)
    p["l1_w"], p["l1_b"] = u(ks[10], (768, 1024), 768), u(ks[11], (1, 1024), 768)
    p["l2_w"], p["l2_b"] = u(ks[12], (1024, 1), 1024), u(ks[13], (1, 1), 1024)
    return p


# ---------------------------------------------------------------------------
# Fused forward (single pallas_call, batch on a parallel grid axis)
# ---------------------------------------------------------------------------
def discriminatorxz_forward(params, consts, img, z):
    """img: (B, 1, 32, 32) NCHW, z: (B, 100) -> (d_out (B, 1), feature (B, 1024))."""
    B = img.shape[0]
    f32, bf16 = jnp.float32, jnp.bfloat16

    x = jnp.transpose(img, (0, 2, 3, 1)).astype(f32)                  # NHWC
    p1 = im2col_l1(x)                                                 # (B, 256, 16)
    p1 = jnp.pad(p1, ((0, 0), (0, 0), (0, 112))).astype(bf16)         # K 16 -> 128
    z3 = jnp.pad(z.reshape(B, -1).astype(f32), ((0, 0), (0, 28)))     # K 100 -> 128
    z3 = z3.reshape(B, 1, 128).astype(bf16)

    w1 = jnp.pad(params["c1_w"], ((0, 112), (0, 0))).astype(bf16)     # (128, 64)
    rw = jnp.pad(params["rnd_w"], ((0, 28), (0, 0))).astype(bf16)     # (128, 512)

    # layer1 weight split: img half reordered so the NCHW flatten (idx = c*4 + p)
    # becomes a per-spatial-position matmul; z half used directly.
    w_img = params["l1_w"][:256]
    v = jnp.stack([w_img[p::4] for p in range(4)], axis=0).astype(bf16)   # (4, 64, 1024)
    wz = params["l1_w"][256:].astype(bf16)                                # (512, 1024)

    args = (p1, z3,
            w1, params["c1_b"],
            params["c2_w"].astype(bf16), params["c2_b"],
            params["c3_w"].astype(bf16), params["c3_b"],
            params["c4_w"].astype(bf16), params["c4_b"],
            consts["g2"], consts["g3"], consts["g4"],
            rw, params["rnd_b"],
            v, wz, params["l1_b"],
            params["l2_w"].reshape(1, 1024), params["l2_b"])

    def _const_spec(a):
        nd = a.ndim
        return pl.BlockSpec(a.shape, lambda b, nd=nd: (0,) * nd)

    in_specs = [
        pl.BlockSpec((None, 256, 128), lambda b: (b, 0, 0)),          # p1 (per-sample)
        pl.BlockSpec((None, 1, 128), lambda b: (b, 0, 0)),            # z  (per-sample)
    ] + [_const_spec(a) for a in args[2:]]                            # resident consts

    feat3, d3 = pl.pallas_call(
        _fused_kernel,
        out_shape=(jax.ShapeDtypeStruct((B, 1, 1024), jnp.float32),
                   jax.ShapeDtypeStruct((B, 1, 1), jnp.float32)),
        grid=(B,),
        in_specs=in_specs,
        out_specs=[pl.BlockSpec((None, 1, 1024), lambda b: (b, 0, 0)),
                   pl.BlockSpec((None, 1, 1), lambda b: (b, 0, 0))],
        compiler_params=pltpu.CompilerParams(
            dimension_semantics=("parallel",),
            vmem_limit_bytes=32 * 1024 * 1024),
    )(*args)
    return d3.reshape(B, 1), feat3.reshape(B, 1024)


# ---------------------------------------------------------------------------
# Plain-JAX f32 reference of the PyTorch module (correctness check only)
# ---------------------------------------------------------------------------
def reference_forward(params, img, z):
    def conv(x, w_mat, b, cin):
        w4 = w_mat.reshape(4, 4, cin, C).transpose(3, 2, 0, 1)        # OIHW
        y = jax.lax.conv_general_dilated(
            x, w4, window_strides=(2, 2), padding=((1, 1), (1, 1)),
            dimension_numbers=("NCHW", "OIHW", "NCHW"))
        return y + b.reshape(1, C, 1, 1)

    def inorm(x):
        mu = jnp.mean(x, axis=(2, 3), keepdims=True)
        var = jnp.mean((x - mu) ** 2, axis=(2, 3), keepdims=True)
        return (x - mu) * jax.lax.rsqrt(var + EPS)

    B = img.shape[0]
    x = img.astype(jnp.float32)
    y = _leaky(conv(x, params["c1_w"], params["c1_b"], 1))
    y = _leaky(inorm(conv(y, params["c2_w"], params["c2_b"], C)))
    y = _leaky(inorm(conv(y, params["c3_w"], params["c3_b"], C)))
    y = _leaky(inorm(conv(y, params["c4_w"], params["c4_b"], C)))
    img_feat = y.reshape(B, -1)                                       # NCHW flatten
    z_out = z.reshape(B, -1) @ params["rnd_w"] + params["rnd_b"]
    out = jnp.concatenate([img_feat, z_out], axis=1)
    feat = _leaky(out @ params["l1_w"] + params["l1_b"])
    d = feat @ params["l2_w"] + params["l2_b"]
    return d, feat


if __name__ == "__main__":
    key = jax.random.PRNGKey(0)
    kp, ki, kz = jax.random.split(key, 3)
    B = 2
    params = init_params(kp)
    consts = make_consts()   # batch-size independent

    # 4 stride-2 convs feeding a 256-wide FC input imply 32x32, 1-channel images.
    img = jax.random.normal(ki, (B, 1, 32, 32), dtype=jnp.float32)
    z = jax.random.normal(kz, (B, 100), dtype=jnp.float32)

    fwd = jax.jit(discriminatorxz_forward)
    d_out, feature = fwd(params, consts, img, z)
    jax.block_until_ready((d_out, feature))

    assert d_out.shape == (B, 1), d_out.shape
    assert feature.shape == (B, 1024), feature.shape
    assert bool(jnp.all(jnp.isfinite(d_out))) and bool(jnp.all(jnp.isfinite(feature)))

    # correctness vs a plain-JAX f32 reference (kernel uses bf16 MXU operands,
    # so allow ~1e-1 combined tolerance)
    d_ref, f_ref = reference_forward(params, img, z)
    np.testing.assert_allclose(np.asarray(d_out), np.asarray(d_ref),
                               atol=1e-1, rtol=1e-1)
    np.testing.assert_allclose(np.asarray(feature), np.asarray(f_ref),
                               atol=1e-1, rtol=1e-1)

    print("KERNEL_OK")
</pallas_src>

<mosaic_0001>
module attributes {stable_mosaic.version = 11 : i64} {
  func.func @_fused_kernel(%arg0: i32, %arg1: memref<1x256x128xbf16, #tpu.memory_space<vmem>>, %arg2: memref<1x1x128xbf16, #tpu.memory_space<vmem>>, %arg3: memref<128x64xbf16, #tpu.memory_space<vmem>>, %arg4: memref<1x64xf32, #tpu.memory_space<vmem>>, %arg5: memref<1024x64xbf16, #tpu.memory_space<vmem>>, %arg6: memref<1x64xf32, #tpu.memory_space<vmem>>, %arg7: memref<1024x64xbf16, #tpu.memory_space<vmem>>, %arg8: memref<1x64xf32, #tpu.memory_space<vmem>>, %arg9: memref<1024x64xbf16, #tpu.memory_space<vmem>>, %arg10: memref<1x64xf32, #tpu.memory_space<vmem>>, %arg11: memref<1024x256xbf16, #tpu.memory_space<vmem>>, %arg12: memref<256x64xbf16, #tpu.memory_space<vmem>>, %arg13: memref<16x4x16xbf16, #tpu.memory_space<vmem>>, %arg14: memref<128x512xbf16, #tpu.memory_space<vmem>>, %arg15: memref<1x512xf32, #tpu.memory_space<vmem>>, %arg16: memref<4x64x1024xbf16, #tpu.memory_space<vmem>>, %arg17: memref<512x1024xbf16, #tpu.memory_space<vmem>>, %arg18: memref<1x1024xf32, #tpu.memory_space<vmem>>, %arg19: memref<1x1024xf32, #tpu.memory_space<vmem>>, %arg20: memref<1x1xf32, #tpu.memory_space<vmem>>, %arg21: memref<1x1x1024xf32, #tpu.memory_space<vmem>>, %arg22: memref<1x1x1xf32, #tpu.memory_space<vmem>>) attributes {dimension_semantics = [#tpu.dimension_semantics<parallel>], iteration_bounds = array<i64: 2>, scalar_prefetch = 0 : i64, scratch_operands = 0 : i64, tpu.core_type = #tpu.core_type<tc>, window_params = [{transform_indices = @transform_0, window_bounds = array<i64: 1, 256, 128>}, {transform_indices = @transform_1, window_bounds = array<i64: 1, 1, 128>}, {pipeline_mode = #tpu.pipeline_mode<synchronous>, transform_indices = @transform_2, window_bounds = array<i64: 128, 64>}, {pipeline_mode = #tpu.pipeline_mode<synchronous>, transform_indices = @transform_3, window_bounds = array<i64: 1, 64>}, {pipeline_mode = #tpu.pipeline_mode<synchronous>, transform_indices = @transform_4, window_bounds = array<i64: 1024, 64>}, {pipeline_mode = #tpu.pipeline_mode<synchronous>, transform_indices = @transform_5, window_bounds = array<i64: 1, 64>}, {pipeline_mode = #tpu.pipeline_mode<synchronous>, transform_indices = @transform_6, window_bounds = array<i64: 1024, 64>}, {pipeline_mode = #tpu.pipeline_mode<synchronous>, transform_indices = @transform_7, window_bounds = array<i64: 1, 64>}, {pipeline_mode = #tpu.pipeline_mode<synchronous>, transform_indices = @transform_8, window_bounds = array<i64: 1024, 64>}, {pipeline_mode = #tpu.pipeline_mode<synchronous>, transform_indices = @transform_9, window_bounds = array<i64: 1, 64>}, {pipeline_mode = #tpu.pipeline_mode<synchronous>, transform_indices = @transform_10, window_bounds = array<i64: 1024, 256>}, {pipeline_mode = #tpu.pipeline_mode<synchronous>, transform_indices = @transform_11, window_bounds = array<i64: 256, 64>}, {pipeline_mode = #tpu.pipeline_mode<synchronous>, transform_indices = @transform_12, window_bounds = array<i64: 16, 4, 16>}, {pipeline_mode = #tpu.pipeline_mode<synchronous>, transform_indices = @transform_13, window_bounds = array<i64: 128, 512>}, {pipeline_mode = #tpu.pipeline_mode<synchronous>, transform_indices = @transform_14, window_bounds = array<i64: 1, 512>}, {pipeline_mode = #tpu.pipeline_mode<synchronous>, transform_indices = @transform_15, window_bounds = array<i64: 4, 64, 1024>}, {pipeline_mode = #tpu.pipeline_mode<synchronous>, transform_indices = @transform_16, window_bounds = array<i64: 512, 1024>}, {pipeline_mode = #tpu.pipeline_mode<synchronous>, transform_indices = @transform_17, window_bounds = array<i64: 1, 1024>}, {pipeline_mode = #tpu.pipeline_mode<synchronous>, transform_indices = @transform_18, window_bounds = array<i64: 1, 1024>}, {pipeline_mode = #tpu.pipeline_mode<synchronous>, transform_indices = @transform_19, window_bounds = array<i64: 1, 1>}, {transform_indices = @transform_20, window_bounds = array<i64: 1, 1, 1024>}, {transform_indices = @transform_21, window_bounds = array<i64: 1, 1, 1>}]} {
    %c0 = arith.constant 0 : index
    %c0_0 = arith.constant 0 : index
    %c0_1 = arith.constant 0 : index
    %0 = vector.load %arg1[%c0, %c0_0, %c0_1] : memref<1x256x128xbf16, #tpu.memory_space<vmem>>, vector<1x256x128xbf16>
    %1 = vector.shape_cast %0 : vector<1x256x128xbf16> to vector<256x128xbf16>
    %c0_2 = arith.constant 0 : index
    %c0_3 = arith.constant 0 : index
    %2 = vector.load %arg3[%c0_2, %c0_3] : memref<128x64xbf16, #tpu.memory_space<vmem>>, vector<128x64xbf16>
    %cst = arith.constant dense<0.000000e+00> : vector<256x64xf32>
    %3 = tpu.matmul %1, %2, %cst {dimension_numbers = #tpu.dot_dimension_numbers<[1], [0], [0], [1], [0, 0, 1, 1], [], []>} : vector<256x128xbf16>, vector<128x64xbf16>, vector<256x64xf32> -> vector<256x64xf32>
    %c0_4 = arith.constant 0 : index
    %c0_5 = arith.constant 0 : index
    %4 = vector.load %arg4[%c0_4, %c0_5] : memref<1x64xf32, #tpu.memory_space<vmem>>, vector<1x64xf32>
    %5 = vector.broadcast %4 : vector<1x64xf32> to vector<256x64xf32>
    %6 = arith.addf %3, %5 : vector<256x64xf32>
    %cst_6 = arith.constant 0.000000e+00 : f32
    %7 = vector.broadcast %cst_6 : f32 to vector<256x64xf32>
    %8 = arith.cmpf ogt, %6, %7 : vector<256x64xf32>
    %cst_7 = arith.constant 1.000000e-01 : f32
    %9 = vector.broadcast %cst_7 : f32 to vector<256x64xf32>
    %10 = arith.mulf %9, %6 : vector<256x64xf32>
    %11 = arith.select %8, %6, %10 : vector<256x64xi1>, vector<256x64xf32>
    %12 = arith.truncf %11 : vector<256x64xf32> to vector<256x64xbf16>
    %c0_8 = arith.constant 0 : index
    %c0_9 = arith.constant 0 : index
    %13 = vector.load %arg11[%c0_8, %c0_9] : memref<1024x256xbf16, #tpu.memory_space<vmem>>, vector<1024x256xbf16>
    %cst_10 = arith.constant dense<0.000000e+00> : vector<1024x64xf32>
    %14 = tpu.matmul %13, %12, %cst_10 {dimension_numbers = #tpu.dot_dimension_numbers<[1], [0], [0], [1], [0, 0, 1, 1], [], []>} : vector<1024x256xbf16>, vector<256x64xbf16>, vector<1024x64xf32> -> vector<1024x64xf32>
    %15 = arith.truncf %14 : vector<1024x64xf32> to vector<1024x64xbf16>
    %16 = vector.extract_strided_slice %15 {offsets = [0, 0], sizes = [64, 64], strides = [1, 1]} : vector<1024x64xbf16> to vector<64x64xbf16>
    %c0_11 = arith.constant 0 : index
    %c0_12 = arith.constant 0 : index
    %17 = vector.load %arg5[%c0_11, %c0_12] : memref<1024x64xbf16, #tpu.memory_space<vmem>>, vector<64x64xbf16>
    %cst_13 = arith.constant dense<0.000000e+00> : vector<64x64xf32>
    %18 = tpu.matmul %16, %17, %cst_13 {dimension_numbers = #tpu.dot_dimension_numbers<[1], [0], [0], [1], [0, 0, 1, 1], [], []>} : vector<64x64xbf16>, vector<64x64xbf16>, vector<64x64xf32> -> vector<64x64xf32>
    %19 = vector.extract_strided_slice %15 {offsets = [64, 0], sizes = [64, 64], strides = [1, 1]} : vector<1024x64xbf16> to vector<64x64xbf16>
    %c64 = arith.constant 64 : index
    %c0_14 = arith.constant 0 : index
    %20 = vector.load %arg5[%c64, %c0_14] : memref<1024x64xbf16, #tpu.memory_space<vmem>>, vector<64x64xbf16>
    %cst_15 = arith.constant dense<0.000000e+00> : vector<64x64xf32>
    %21 = tpu.matmul %19, %20, %cst_15 {dimension_numbers = #tpu.dot_dimension_numbers<[1], [0], [0], [1], [0, 0, 1, 1], [], []>} : vector<64x64xbf16>, vector<64x64xbf16>, vector<64x64xf32> -> vector<64x64xf32>
    %22 = arith.addf %18, %21 : vector<64x64xf32>
    %23 = vector.extract_strided_slice %15 {offsets = [128, 0], sizes = [64, 64], strides = [1, 1]} : vector<1024x64xbf16> to vector<64x64xbf16>
    %c128 = arith.constant 128 : index
    %c0_16 = arith.constant 0 : index
    %24 = vector.load %arg5[%c128, %c0_16] : memref<1024x64xbf16, #tpu.memory_space<vmem>>, vector<64x64xbf16>
    %cst_17 = arith.constant dense<0.000000e+00> : vector<64x64xf32>
    %25 = tpu.matmul %23, %24, %cst_17 {dimension_numbers = #tpu.dot_dimension_numbers<[1], [0], [0], [1], [0, 0, 1, 1], [], []>} : vector<64x64xbf16>, vector<64x64xbf16>, vector<64x64xf32> -> vector<64x64xf32>
    %26 = arith.addf %22, %25 : vector<64x64xf32>
    %27 = vector.extract_strided_slice %15 {offsets = [192, 0], sizes = [64, 64], strides = [1, 1]} : vector<1024x64xbf16> to vector<64x64xbf16>
    %c192 = arith.constant 192 : index
    %c0_18 = arith.constant 0 : index
    %28 = vector.load %arg5[%c192, %c0_18] : memref<1024x64xbf16, #tpu.memory_space<vmem>>, vector<64x64xbf16>
    %cst_19 = arith.constant dense<0.000000e+00> : vector<64x64xf32>
    %29 = tpu.matmul %27, %28, %cst_19 {dimension_numbers = #tpu.dot_dimension_numbers<[1], [0], [0], [1], [0, 0, 1, 1], [], []>} : vector<64x64xbf16>, vector<64x64xbf16>, vector<64x64xf32> -> vector<64x64xf32>
    %30 = arith.addf %26, %29 : vector<64x64xf32>
    %31 = vector.extract_strided_slice %15 {offsets = [256, 0], sizes = [64, 64], strides = [1, 1]} : vector<1024x64xbf16> to vector<64x64xbf16>
    %c256 = arith.constant 256 : index
    %c0_20 = arith.constant 0 : index
    %32 = vector.load %arg5[%c256, %c0_20] : memref<1024x64xbf16, #tpu.memory_space<vmem>>, vector<64x64xbf16>
    %cst_21 = arith.constant dense<0.000000e+00> : vector<64x64xf32>
    %33 = tpu.matmul %31, %32, %cst_21 {dimension_numbers = #tpu.dot_dimension_numbers<[1], [0], [0], [1], [0, 0, 1, 1], [], []>} : vector<64x64xbf16>, vector<64x64xbf16>, vector<64x64xf32> -> vector<64x64xf32>
    %34 = arith.addf %30, %33 : vector<64x64xf32>
    %35 = vector.extract_strided_slice %15 {offsets = [320, 0], sizes = [64, 64], strides = [1, 1]} : vector<1024x64xbf16> to vector<64x64xbf16>
    %c320 = arith.constant 320 : index
    %c0_22 = arith.constant 0 : index
    %36 = vector.load %arg5[%c320, %c0_22] : memref<1024x64xbf16, #tpu.memory_space<vmem>>, vector<64x64xbf16>
    %cst_23 = arith.constant dense<0.000000e+00> : vector<64x64xf32>
    %37 = tpu.matmul %35, %36, %cst_23 {dimension_numbers = #tpu.dot_dimension_numbers<[1], [0], [0], [1], [0, 0, 1, 1], [], []>} : vector<64x64xbf16>, vector<64x64xbf16>, vector<64x64xf32> -> vector<64x64xf32>
    %38 = arith.addf %34, %37 : vector<64x64xf32>
    %39 = vector.extract_strided_slice %15 {offsets = [384, 0], sizes = [64, 64], strides = [1, 1]} : vector<1024x64xbf16> to vector<64x64xbf16>
    %c384 = arith.constant 384 : index
    %c0_24 = arith.constant 0 : index
    %40 = vector.load %arg5[%c384, %c0_24] : memref<1024x64xbf16, #tpu.memory_space<vmem>>, vector<64x64xbf16>
    %cst_25 = arith.constant dense<0.000000e+00> : vector<64x64xf32>
    %41 = tpu.matmul %39, %40, %cst_25 {dimension_numbers = #tpu.dot_dimension_numbers<[1], [0], [0], [1], [0, 0, 1, 1], [], []>} : vector<64x64xbf16>, vector<64x64xbf16>, vector<64x64xf32> -> vector<64x64xf32>
    %42 = arith.addf %38, %41 : vector<64x64xf32>
    %43 = vector.extract_strided_slice %15 {offsets = [448, 0], sizes = [64, 64], strides = [1, 1]} : vector<1024x64xbf16> to vector<64x64xbf16>
    %c448 = arith.constant 448 : index
    %c0_26 = arith.constant 0 : index
    %44 = vector.load %arg5[%c448, %c0_26] : memref<1024x64xbf16, #tpu.memory_space<vmem>>, vector<64x64xbf16>
    %cst_27 = arith.constant dense<0.000000e+00> : vector<64x64xf32>
    %45 = tpu.matmul %43, %44, %cst_27 {dimension_numbers = #tpu.dot_dimension_numbers<[1], [0], [0], [1], [0, 0, 1, 1], [], []>} : vector<64x64xbf16>, vector<64x64xbf16>, vector<64x64xf32> -> vector<64x64xf32>
    %46 = arith.addf %42, %45 : vector<64x64xf32>
    %47 = vector.extract_strided_slice %15 {offsets = [512, 0], sizes = [64, 64], strides = [1, 1]} : vector<1024x64xbf16> to vector<64x64xbf16>
    %c512 = arith.constant 512 : index
    %c0_28 = arith.constant 0 : index
    %48 = vector.load %arg5[%c512, %c0_28] : memref<1024x64xbf16, #tpu.memory_space<vmem>>, vector<64x64xbf16>
    %cst_29 = arith.constant dense<0.000000e+00> : vector<64x64xf32>
    %49 = tpu.matmul %47, %48, %cst_29 {dimension_numbers = #tpu.dot_dimension_numbers<[1], [0], [0], [1], [0, 0, 1, 1], [], []>} : vector<64x64xbf16>, vector<64x64xbf16>, vector<64x64xf32> -> vector<64x64xf32>
    %50 = arith.addf %46, %49 : vector<64x64xf32>
    %51 = vector.extract_strided_slice %15 {offsets = [576, 0], sizes = [64, 64], strides = [1, 1]} : vector<1024x64xbf16> to vector<64x64xbf16>
    %c576 = arith.constant 576 : index
    %c0_30 = arith.constant 0 : index
    %52 = vector.load %arg5[%c576, %c0_30] : memref<1024x64xbf16, #tpu.memory_space<vmem>>, vector<64x64xbf16>
    %cst_31 = arith.constant dense<0.000000e+00> : vector<64x64xf32>
    %53 = tpu.matmul %51, %52, %cst_31 {dimension_numbers = #tpu.dot_dimension_numbers<[1], [0], [0], [1], [0, 0, 1, 1], [], []>} : vector<64x64xbf16>, vector<64x64xbf16>, vector<64x64xf32> -> vector<64x64xf32>
    %54 = arith.addf %50, %53 : vector<64x64xf32>
    %55 = vector.extract_strided_slice %15 {offsets = [640, 0], sizes = [64, 64], strides = [1, 1]} : vector<1024x64xbf16> to vector<64x64xbf16>
    %c640 = arith.constant 640 : index
    %c0_32 = arith.constant 0 : index
    %56 = vector.load %arg5[%c640, %c0_32] : memref<1024x64xbf16, #tpu.memory_space<vmem>>, vector<64x64xbf16>
    %cst_33 = arith.constant dense<0.000000e+00> : vector<64x64xf32>
    %57 = tpu.matmul %55, %56, %cst_33 {dimension_numbers = #tpu.dot_dimension_numbers<[1], [0], [0], [1], [0, 0, 1, 1], [], []>} : vector<64x64xbf16>, vector<64x64xbf16>, vector<64x64xf32> -> vector<64x64xf32>
    %58 = arith.addf %54, %57 : vector<64x64xf32>
    %59 = vector.extract_strided_slice %15 {offsets = [704, 0], sizes = [64, 64], strides = [1, 1]} : vector<1024x64xbf16> to vector<64x64xbf16>
    %c704 = arith.constant 704 : index
    %c0_34 = arith.constant 0 : index
    %60 = vector.load %arg5[%c704, %c0_34] : memref<1024x64xbf16, #tpu.memory_space<vmem>>, vector<64x64xbf16>
    %cst_35 = arith.constant dense<0.000000e+00> : vector<64x64xf32>
    %61 = tpu.matmul %59, %60, %cst_35 {dimension_numbers = #tpu.dot_dimension_numbers<[1], [0], [0], [1], [0, 0, 1, 1], [], []>} : vector<64x64xbf16>, vector<64x64xbf16>, vector<64x64xf32> -> vector<64x64xf32>
    %62 = arith.addf %58, %61 : vector<64x64xf32>
    %63 = vector.extract_strided_slice %15 {offsets = [768, 0], sizes = [64, 64], strides = [1, 1]} : vector<1024x64xbf16> to vector<64x64xbf16>
    %c768 = arith.constant 768 : index
    %c0_36 = arith.constant 0 : index
    %64 = vector.load %arg5[%c768, %c0_36] : memref<1024x64xbf16, #tpu.memory_space<vmem>>, vector<64x64xbf16>
    %cst_37 = arith.constant dense<0.000000e+00> : vector<64x64xf32>
    %65 = tpu.matmul %63, %64, %cst_37 {dimension_numbers = #tpu.dot_dimension_numbers<[1], [0], [0], [1], [0, 0, 1, 1], [], []>} : vector<64x64xbf16>, vector<64x64xbf16>, vector<64x64xf32> -> vector<64x64xf32>
    %66 = arith.addf %62, %65 : vector<64x64xf32>
    %67 = vector.extract_strided_slice %15 {offsets = [832, 0], sizes = [64, 64], strides = [1, 1]} : vector<1024x64xbf16> to vector<64x64xbf16>
    %c832 = arith.constant 832 : index
    %c0_38 = arith.constant 0 : index
    %68 = vector.load %arg5[%c832, %c0_38] : memref<1024x64xbf16, #tpu.memory_space<vmem>>, vector<64x64xbf16>
    %cst_39 = arith.constant dense<0.000000e+00> : vector<64x64xf32>
    %69 = tpu.matmul %67, %68, %cst_39 {dimension_numbers = #tpu.dot_dimension_numbers<[1], [0], [0], [1], [0, 0, 1, 1], [], []>} : vector<64x64xbf16>, vector<64x64xbf16>, vector<64x64xf32> -> vector<64x64xf32>
    %70 = arith.addf %66, %69 : vector<64x64xf32>
    %71 = vector.extract_strided_slice %15 {offsets = [896, 0], sizes = [64, 64], strides = [1, 1]} : vector<1024x64xbf16> to vector<64x64xbf16>
    %c896 = arith.constant 896 : index
    %c0_40 = arith.constant 0 : index
    %72 = vector.load %arg5[%c896, %c0_40] : memref<1024x64xbf16, #tpu.memory_space<vmem>>, vector<64x64xbf16>
    %cst_41 = arith.constant dense<0.000000e+00> : vector<64x64xf32>
    %73 = tpu.matmul %71, %72, %cst_41 {dimension_numbers = #tpu.dot_dimension_numbers<[1], [0], [0], [1], [0, 0, 1, 1], [], []>} : vector<64x64xbf16>, vector<64x64xbf16>, vector<64x64xf32> -> vector<64x64xf32>
    %74 = arith.addf %70, %73 : vector<64x64xf32>
    %75 = vector.extract_strided_slice %15 {offsets = [960, 0], sizes = [64, 64], strides = [1, 1]} : vector<1024x64xbf16> to vector<64x64xbf16>
    %c960 = arith.constant 960 : index
    %c0_42 = arith.constant 0 : index
    %76 = vector.load %arg5[%c960, %c0_42] : memref<1024x64xbf16, #tpu.memory_space<vmem>>, vector<64x64xbf16>
    %cst_43 = arith.constant dense<0.000000e+00> : vector<64x64xf32>
    %77 = tpu.matmul %75, %76, %cst_43 {dimension_numbers = #tpu.dot_dimension_numbers<[1], [0], [0], [1], [0, 0, 1, 1], [], []>} : vector<64x64xbf16>, vector<64x64xbf16>, vector<64x64xf32> -> vector<64x64xf32>
    %78 = arith.addf %74, %77 : vector<64x64xf32>
    %c0_44 = arith.constant 0 : index
    %c0_45 = arith.constant 0 : index
    %79 = vector.load %arg6[%c0_44, %c0_45] : memref<1x64xf32, #tpu.memory_space<vmem>>, vector<1x64xf32>
    %80 = vector.broadcast %79 : vector<1x64xf32> to vector<64x64xf32>
    %81 = arith.addf %78, %80 : vector<64x64xf32>
    %cst_46 = arith.constant dense<0.000000e+00> : vector<64xf32>
    %82 = vector.multi_reduction <add>, %81, %cst_46 [0] : vector<64x64xf32> to vector<64xf32>
    %83 = vector.shape_cast %82 : vector<64xf32> to vector<1x64xf32>
    %cst_47 = arith.constant 6.400000e+01 : f32
    %84 = vector.broadcast %cst_47 : f32 to vector<1x64xf32>
    %85 = arith.divf %83, %84 : vector<1x64xf32>
    %86 = vector.broadcast %85 : vector<1x64xf32> to vector<64x64xf32>
    %87 = arith.subf %81, %86 : vector<64x64xf32>
    %88 = arith.mulf %87, %87 : vector<64x64xf32>
    %cst_48 = arith.constant dense<0.000000e+00> : vector<64xf32>
    %89 = vector.multi_reduction <add>, %88, %cst_48 [0] : vector<64x64xf32> to vector<64xf32>
    %90 = vector.shape_cast %89 : vector<64xf32> to vector<1x64xf32>
    %cst_49 = arith.constant 6.400000e+01 : f32
    %91 = vector.broadcast %cst_49 : f32 to vector<1x64xf32>
    %92 = arith.divf %90, %91 : vector<1x64xf32>
    %93 = vector.broadcast %85 : vector<1x64xf32> to vector<64x64xf32>
    %94 = arith.subf %81, %93 : vector<64x64xf32>
    %cst_50 = arith.constant 9.99999974E-6 : f32
    %95 = vector.broadcast %cst_50 : f32 to vector<1x64xf32>
    %96 = arith.addf %92, %95 : vector<1x64xf32>
    %97 = math.rsqrt %96 : vector<1x64xf32>
    %98 = vector.broadcast %97 : vector<1x64xf32> to vector<64x64xf32>
    %99 = arith.mulf %94, %98 : vector<64x64xf32>
    %cst_51 = arith.constant 0.000000e+00 : f32
    %100 = vector.broadcast %cst_51 : f32 to vector<64x64xf32>
    %101 = arith.cmpf ogt, %99, %100 : vector<64x64xf32>
    %cst_52 = arith.constant 1.000000e-01 : f32
    %102 = vector.broadcast %cst_52 : f32 to vector<64x64xf32>
    %103 = arith.mulf %102, %99 : vector<64x64xf32>
    %104 = arith.select %101, %99, %103 : vector<64x64xi1>, vector<64x64xf32>
    %105 = arith.truncf %104 : vector<64x64xf32> to vector<64x64xbf16>
    %c0_53 = arith.constant 0 : index
    %c0_54 = arith.constant 0 : index
    %106 = vector.load %arg12[%c0_53, %c0_54] : memref<256x64xbf16, #tpu.memory_space<vmem>>, vector<256x64xbf16>
    %cst_55 = arith.constant dense<0.000000e+00> : vector<256x64xf32>
    %107 = tpu.matmul %106, %105, %cst_55 {dimension_numbers = #tpu.dot_dimension_numbers<[1], [0], [0], [1], [0, 0, 1, 1], [], []>} : vector<256x64xbf16>, vector<64x64xbf16>, vector<256x64xf32> -> vector<256x64xf32>
    %108 = arith.truncf %107 : vector<256x64xf32> to vector<256x64xbf16>
    %109 = vector.extract_strided_slice %108 {offsets = [0, 0], sizes = [16, 64], strides = [1, 1]} : vector<256x64xbf16> to vector<16x64xbf16>
    %c0_56 = arith.constant 0 : index
    %c0_57 = arith.constant 0 : index
    %110 = vector.load %arg7[%c0_56, %c0_57] : memref<1024x64xbf16, #tpu.memory_space<vmem>>, vector<64x64xbf16>
    %cst_58 = arith.constant dense<0.000000e+00> : vector<16x64xf32>
    %111 = tpu.matmul %109, %110, %cst_58 {dimension_numbers = #tpu.dot_dimension_numbers<[1], [0], [0], [1], [0, 0, 1, 1], [], []>} : vector<16x64xbf16>, vector<64x64xbf16>, vector<16x64xf32> -> vector<16x64xf32>
    %112 = vector.extract_strided_slice %108 {offsets = [16, 0], sizes = [16, 64], strides = [1, 1]} : vector<256x64xbf16> to vector<16x64xbf16>
    %c64_59 = arith.constant 64 : index
    %c0_60 = arith.constant 0 : index
    %113 = vector.load %arg7[%c64_59, %c0_60] : memref<1024x64xbf16, #tpu.memory_space<vmem>>, vector<64x64xbf16>
    %cst_61 = arith.constant dense<0.000000e+00> : vector<16x64xf32>
    %114 = tpu.matmul %112, %113, %cst_61 {dimension_numbers = #tpu.dot_dimension_numbers<[1], [0], [0], [1], [0, 0, 1, 1], [], []>} : vector<16x64xbf16>, vector<64x64xbf16>, vector<16x64xf32> -> vector<16x64xf32>
    %115 = arith.addf %111, %114 : vector<16x64xf32>
    %116 = vector.extract_strided_slice %108 {offsets = [32, 0], sizes = [16, 64], strides = [1, 1]} : vector<256x64xbf16> to vector<16x64xbf16>
    %c128_62 = arith.constant 128 : index
    %c0_63 = arith.constant 0 : index
    %117 = vector.load %arg7[%c128_62, %c0_63] : memref<1024x64xbf16, #tpu.memory_space<vmem>>, vector<64x64xbf16>
    %cst_64 = arith.constant dense<0.000000e+00> : vector<16x64xf32>
    %118 = tpu.matmul %116, %117, %cst_64 {dimension_numbers = #tpu.dot_dimension_numbers<[1], [0], [0], [1], [0, 0, 1, 1], [], []>} : vector<16x64xbf16>, vector<64x64xbf16>, vector<16x64xf32> -> vector<16x64xf32>
    %119 = arith.addf %115, %118 : vector<16x64xf32>
    %120 = vector.extract_strided_slice %108 {offsets = [48, 0], sizes = [16, 64], strides = [1, 1]} : vector<256x64xbf16> to vector<16x64xbf16>
    %c192_65 = arith.constant 192 : index
    %c0_66 = arith.constant 0 : index
    %121 = vector.load %arg7[%c192_65, %c0_66] : memref<1024x64xbf16, #tpu.memory_space<vmem>>, vector<64x64xbf16>
    %cst_67 = arith.constant dense<0.000000e+00> : vector<16x64xf32>
    %122 = tpu.matmul %120, %121, %cst_67 {dimension_numbers = #tpu.dot_dimension_numbers<[1], [0], [0], [1], [0, 0, 1, 1], [], []>} : vector<16x64xbf16>, vector<64x64xbf16>, vector<16x64xf32> -> vector<16x64xf32>
    %123 = arith.addf %119, %122 : vector<16x64xf32>
    %124 = vector.extract_strided_slice %108 {offsets = [64, 0], sizes = [16, 64], strides = [1, 1]} : vector<256x64xbf16> to vector<16x64xbf16>
    %c256_68 = arith.constant 256 : index
    %c0_69 = arith.constant 0 : index
    %125 = vector.load %arg7[%c256_68, %c0_69] : memref<1024x64xbf16, #tpu.memory_space<vmem>>, vector<64x64xbf16>
    %cst_70 = arith.constant dense<0.000000e+00> : vector<16x64xf32>
    %126 = tpu.matmul %124, %125, %cst_70 {dimension_numbers = #tpu.dot_dimension_numbers<[1], [0], [0], [1], [0, 0, 1, 1], [], []>} : vector<16x64xbf16>, vector<64x64xbf16>, vector<16x64xf32> -> vector<16x64xf32>
    %127 = arith.addf %123, %126 : vector<16x64xf32>
    %128 = vector.extract_strided_slice %108 {offsets = [80, 0], sizes = [16, 64], strides = [1, 1]} : vector<256x64xbf16> to vector<16x64xbf16>
    %c320_71 = arith.constant 320 : index
    %c0_72 = arith.constant 0 : index
    %129 = vector.load %arg7[%c320_71, %c0_72] : memref<1024x64xbf16, #tpu.memory_space<vmem>>, vector<64x64xbf16>
    %cst_73 = arith.constant dense<0.000000e+00> : vector<16x64xf32>
    %130 = tpu.matmul %128, %129, %cst_73 {dimension_numbers = #tpu.dot_dimension_numbers<[1], [0], [0], [1], [0, 0, 1, 1], [], []>} : vector<16x64xbf16>, vector<64x64xbf16>, vector<16x64xf32> -> vector<16x64xf32>
    %131 = arith.addf %127, %130 : vector<16x64xf32>
    %132 = vector.extract_strided_slice %108 {offsets = [96, 0], sizes = [16, 64], strides = [1, 1]} : vector<256x64xbf16> to vector<16x64xbf16>
    %c384_74 = arith.constant 384 : index
    %c0_75 = arith.constant 0 : index
    %133 = vector.load %arg7[%c384_74, %c0_75] : memref<1024x64xbf16, #tpu.memory_space<vmem>>, vector<64x64xbf16>
    %cst_76 = arith.constant dense<0.000000e+00> : vector<16x64xf32>
    %134 = tpu.matmul %132, %133, %cst_76 {dimension_numbers = #tpu.dot_dimension_numbers<[1], [0], [0], [1], [0, 0, 1, 1], [], []>} : vector<16x64xbf16>, vector<64x64xbf16>, vector<16x64xf32> -> vector<16x64xf32>
    %135 = arith.addf %131, %134 : vector<16x64xf32>
    %136 = vector.extract_strided_slice %108 {offsets = [112, 0], sizes = [16, 64], strides = [1, 1]} : vector<256x64xbf16> to vector<16x64xbf16>
    %c448_77 = arith.constant 448 : index
    %c0_78 = arith.constant 0 : index
    %137 = vector.load %arg7[%c448_77, %c0_78] : memref<1024x64xbf16, #tpu.memory_space<vmem>>, vector<64x64xbf16>
    %cst_79 = arith.constant dense<0.000000e+00> : vector<16x64xf32>
    %138 = tpu.matmul %136, %137, %cst_79 {dimension_numbers = #tpu.dot_dimension_numbers<[1], [0], [0], [1], [0, 0, 1, 1], [], []>} : vector<16x64xbf16>, vector<64x64xbf16>, vector<16x64xf32> -> vector<16x64xf32>
    %139 = arith.addf %135, %138 : vector<16x64xf32>
    %140 = vector.extract_strided_slice %108 {offsets = [128, 0], sizes = [16, 64], strides = [1, 1]} : vector<256x64xbf16> to vector<16x64xbf16>
    %c512_80 = arith.constant 512 : index
    %c0_81 = arith.constant 0 : index
    %141 = vector.load %arg7[%c512_80, %c0_81] : memref<1024x64xbf16, #tpu.memory_space<vmem>>, vector<64x64xbf16>
    %cst_82 = arith.constant dense<0.000000e+00> : vector<16x64xf32>
    %142 = tpu.matmul %140, %141, %cst_82 {dimension_numbers = #tpu.dot_dimension_numbers<[1], [0], [0], [1], [0, 0, 1, 1], [], []>} : vector<16x64xbf16>, vector<64x64xbf16>, vector<16x64xf32> -> vector<16x64xf32>
    %143 = arith.addf %139, %142 : vector<16x64xf32>
    %144 = vector.extract_strided_slice %108 {offsets = [144, 0], sizes = [16, 64], strides = [1, 1]} : vector<256x64xbf16> to vector<16x64xbf16>
    %c576_83 = arith.constant 576 : index
    %c0_84 = arith.constant 0 : index
    %145 = vector.load %arg7[%c576_83, %c0_84] : memref<1024x64xbf16, #tpu.memory_space<vmem>>, vector<64x64xbf16>
    %cst_85 = arith.constant dense<0.000000e+00> : vector<16x64xf32>
    %146 = tpu.matmul %144, %145, %cst_85 {dimension_numbers = #tpu.dot_dimension_numbers<[1], [0], [0], [1], [0, 0, 1, 1], [], []>} : vector<16x64xbf16>, vector<64x64xbf16>, vector<16x64xf32> -> vector<16x64xf32>
    %147 = arith.addf %143, %146 : vector<16x64xf32>
    %148 = vector.extract_strided_slice %108 {offsets = [160, 0], sizes = [16, 64], strides = [1, 1]} : vector<256x64xbf16> to vector<16x64xbf16>
    %c640_86 = arith.constant 640 : index
    %c0_87 = arith.constant 0 : index
    %149 = vector.load %arg7[%c640_86, %c0_87] : memref<1024x64xbf16, #tpu.memory_space<vmem>>, vector<64x64xbf16>
    %cst_88 = arith.constant dense<0.000000e+00> : vector<16x64xf32>
    %150 = tpu.matmul %148, %149, %cst_88 {dimension_numbers = #tpu.dot_dimension_numbers<[1], [0], [0], [1], [0, 0, 1, 1], [], []>} : vector<16x64xbf16>, vector<64x64xbf16>, vector<16x64xf32> -> vector<16x64xf32>
    %151 = arith.addf %147, %150 : vector<16x64xf32>
    %152 = vector.extract_strided_slice %108 {offsets = [176, 0], sizes = [16, 64], strides = [1, 1]} : vector<256x64xbf16> to vector<16x64xbf16>
    %c704_89 = arith.constant 704 : index
    %c0_90 = arith.constant 0 : index
    %153 = vector.load %arg7[%c704_89, %c0_90] : memref<1024x64xbf16, #tpu.memory_space<vmem>>, vector<64x64xbf16>
    %cst_91 = arith.constant dense<0.000000e+00> : vector<16x64xf32>
    %154 = tpu.matmul %152, %153, %cst_91 {dimension_numbers = #tpu.dot_dimension_numbers<[1], [0], [0], [1], [0, 0, 1, 1], [], []>} : vector<16x64xbf16>, vector<64x64xbf16>, vector<16x64xf32> -> vector<16x64xf32>
    %155 = arith.addf %151, %154 : vector<16x64xf32>
    %156 = vector.extract_strided_slice %108 {offsets = [192, 0], sizes = [16, 64], strides = [1, 1]} : vector<256x64xbf16> to vector<16x64xbf16>
    %c768_92 = arith.constant 768 : index
    %c0_93 = arith.constant 0 : index
    %157 = vector.load %arg7[%c768_92, %c0_93] : memref<1024x64xbf16, #tpu.memory_space<vmem>>, vector<64x64xbf16>
    %cst_94 = arith.constant dense<0.000000e+00> : vector<16x64xf32>
    %158 = tpu.matmul %156, %157, %cst_94 {dimension_numbers = #tpu.dot_dimension_numbers<[1], [0], [0], [1], [0, 0, 1, 1], [], []>} : vector<16x64xbf16>, vector<64x64xbf16>, vector<16x64xf32> -> vector<16x64xf32>
    %159 = arith.addf %155, %158 : vector<16x64xf32>
    %160 = vector.extract_strided_slice %108 {offsets = [208, 0], sizes = [16, 64], strides = [1, 1]} : vector<256x64xbf16> to vector<16x64xbf16>
    %c832_95 = arith.constant 832 : index
    %c0_96 = arith.constant 0 : index
    %161 = vector.load %arg7[%c832_95, %c0_96] : memref<1024x64xbf16, #tpu.memory_space<vmem>>, vector<64x64xbf16>
    %cst_97 = arith.constant dense<0.000000e+00> : vector<16x64xf32>
    %162 = tpu.matmul %160, %161, %cst_97 {dimension_numbers = #tpu.dot_dimension_numbers<[1], [0], [0], [1], [0, 0, 1, 1], [], []>} : vector<16x64xbf16>, vector<64x64xbf16>, vector<16x64xf32> -> vector<16x64xf32>
    %163 = arith.addf %159, %162 : vector<16x64xf32>
    %164 = vector.extract_strided_slice %108 {offsets = [224, 0], sizes = [16, 64], strides = [1, 1]} : vector<256x64xbf16> to vector<16x64xbf16>
    %c896_98 = arith.constant 896 : index
    %c0_99 = arith.constant 0 : index
    %165 = vector.load %arg7[%c896_98, %c0_99] : memref<1024x64xbf16, #tpu.memory_space<vmem>>, vector<64x64xbf16>
    %cst_100 = arith.constant dense<0.000000e+00> : vector<16x64xf32>
    %166 = tpu.matmul %164, %165, %cst_100 {dimension_numbers = #tpu.dot_dimension_numbers<[1], [0], [0], [1], [0, 0, 1, 1], [], []>} : vector<16x64xbf16>, vector<64x64xbf16>, vector<16x64xf32> -> vector<16x64xf32>
    %167 = arith.addf %163, %166 : vector<16x64xf32>
    %168 = vector.extract_strided_slice %108 {offsets = [240, 0], sizes = [16, 64], strides = [1, 1]} : vector<256x64xbf16> to vector<16x64xbf16>
    %c960_101 = arith.constant 960 : index
    %c0_102 = arith.constant 0 : index
    %169 = vector.load %arg7[%c960_101, %c0_102] : memref<1024x64xbf16, #tpu.memory_space<vmem>>, vector<64x64xbf16>
    %cst_103 = arith.constant dense<0.000000e+00> : vector<16x64xf32>
    %170 = tpu.matmul %168, %169, %cst_103 {dimension_numbers = #tpu.dot_dimension_numbers<[1], [0], [0], [1], [0, 0, 1, 1], [], []>} : vector<16x64xbf16>, vector<64x64xbf16>, vector<16x64xf32> -> vector<16x64xf32>
    %171 = arith.addf %167, %170 : vector<16x64xf32>
    %c0_104 = arith.constant 0 : index
    %c0_105 = arith.constant 0 : index
    %172 = vector.load %arg8[%c0_104, %c0_105] : memref<1x64xf32, #tpu.memory_space<vmem>>, vector<1x64xf32>
    %173 = vector.broadcast %172 : vector<1x64xf32> to vector<16x64xf32>
    %174 = arith.addf %171, %173 : vector<16x64xf32>
    %cst_106 = arith.constant dense<0.000000e+00> : vector<64xf32>
    %175 = vector.multi_reduction <add>, %174, %cst_106 [0] : vector<16x64xf32> to vector<64xf32>
    %176 = vector.shape_cast %175 : vector<64xf32> to vector<1x64xf32>
    %cst_107 = arith.constant 1.600000e+01 : f32
    %177 = vector.broadcast %cst_107 : f32 to vector<1x64xf32>
    %178 = arith.divf %176, %177 : vector<1x64xf32>
    %179 = vector.broadcast %178 : vector<1x64xf32> to vector<16x64xf32>
    %180 = arith.subf %174, %179 : vector<16x64xf32>
    %181 = arith.mulf %180, %180 : vector<16x64xf32>
    %cst_108 = arith.constant dense<0.000000e+00> : vector<64xf32>
    %182 = vector.multi_reduction <add>, %181, %cst_108 [0] : vector<16x64xf32> to vector<64xf32>
    %183 = vector.shape_cast %182 : vector<64xf32> to vector<1x64xf32>
    %cst_109 = arith.constant 1.600000e+01 : f32
    %184 = vector.broadcast %cst_109 : f32 to vector<1x64xf32>
    %185 = arith.divf %183, %184 : vector<1x64xf32>
    %186 = vector.broadcast %178 : vector<1x64xf32> to vector<16x64xf32>
    %187 = arith.subf %174, %186 : vector<16x64xf32>
    %cst_110 = arith.constant 9.99999974E-6 : f32
    %188 = vector.broadcast %cst_110 : f32 to vector<1x64xf32>
    %189 = arith.addf %185, %188 : vector<1x64xf32>
    %190 = math.rsqrt %189 : vector<1x64xf32>
    %191 = vector.broadcast %190 : vector<1x64xf32> to vector<16x64xf32>
    %192 = arith.mulf %187, %191 : vector<16x64xf32>
    %cst_111 = arith.constant 0.000000e+00 : f32
    %193 = vector.broadcast %cst_111 : f32 to vector<16x64xf32>
    %194 = arith.cmpf ogt, %192, %193 : vector<16x64xf32>
    %cst_112 = arith.constant 1.000000e-01 : f32
    %195 = vector.broadcast %cst_112 : f32 to vector<16x64xf32>
    %196 = arith.mulf %195, %192 : vector<16x64xf32>
    %197 = arith.select %194, %192, %196 : vector<16x64xi1>, vector<16x64xf32>
    %198 = arith.truncf %197 : vector<16x64xf32> to vector<16x64xbf16>
    %c0_113 = arith.constant 0 : index
    %c0_114 = arith.constant 0 : index
    %c0_115 = arith.constant 0 : index
    %199 = vector.load %arg13[%c0_113, %c0_114, %c0_115] : memref<16x4x16xbf16, #tpu.memory_space<vmem>>, vector<1x4x16xbf16>
    %200 = vector.shape_cast %199 : vector<1x4x16xbf16> to vector<4x16xbf16>
    %cst_116 = arith.constant dense<0.000000e+00> : vector<4x64xf32>
    %201 = tpu.matmul %200, %198, %cst_116 {dimension_numbers = #tpu.dot_dimension_numbers<[1], [0], [0], [1], [0, 0, 1, 1], [], []>} : vector<4x16xbf16>, vector<16x64xbf16>, vector<4x64xf32> -> vector<4x64xf32>
    %202 = arith.truncf %201 : vector<4x64xf32> to vector<4x64xbf16>
    %c0_117 = arith.constant 0 : index
    %c0_118 = arith.constant 0 : index
    %203 = vector.load %arg9[%c0_117, %c0_118] : memref<1024x64xbf16, #tpu.memory_space<vmem>>, vector<64x64xbf16>
    %cst_119 = arith.constant dense<0.000000e+00> : vector<4x64xf32>
    %204 = tpu.matmul %202, %203, %cst_119 {dimension_numbers = #tpu.dot_dimension_numbers<[1], [0], [0], [1], [0, 0, 1, 1], [], []>} : vector<4x64xbf16>, vector<64x64xbf16>, vector<4x64xf32> -> vector<4x64xf32>
    %c1 = arith.constant 1 : index
    %c0_120 = arith.constant 0 : index
    %c0_121 = arith.constant 0 : index
    %205 = vector.load %arg13[%c1, %c0_120, %c0_121] : memref<16x4x16xbf16, #tpu.memory_space<vmem>>, vector<1x4x16xbf16>
    %206 = vector.shape_cast %205 : vector<1x4x16xbf16> to vector<4x16xbf16>
    %cst_122 = arith.constant dense<0.000000e+00> : vector<4x64xf32>
    %207 = tpu.matmul %206, %198, %cst_122 {dimension_numbers = #tpu.dot_dimension_numbers<[1], [0], [0], [1], [0, 0, 1, 1], [], []>} : vector<4x16xbf16>, vector<16x64xbf16>, vector<4x64xf32> -> vector<4x64xf32>
    %208 = arith.truncf %207 : vector<4x64xf32> to vector<4x64xbf16>
    %c64_123 = arith.constant 64 : index
    %c0_124 = arith.constant 0 : index
    %209 = vector.load %arg9[%c64_123, %c0_124] : memref<1024x64xbf16, #tpu.memory_space<vmem>>, vector<64x64xbf16>
    %cst_125 = arith.constant dense<0.000000e+00> : vector<4x64xf32>
    %210 = tpu.matmul %208, %209, %cst_125 {dimension_numbers = #tpu.dot_dimension_numbers<[1], [0], [0], [1], [0, 0, 1, 1], [], []>} : vector<4x64xbf16>, vector<64x64xbf16>, vector<4x64xf32> -> vector<4x64xf32>
    %211 = arith.addf %204, %210 : vector<4x64xf32>
    %c2 = arith.constant 2 : index
    %c0_126 = arith.constant 0 : index
    %c0_127 = arith.constant 0 : index
    %212 = vector.load %arg13[%c2, %c0_126, %c0_127] : memref<16x4x16xbf16, #tpu.memory_space<vmem>>, vector<1x4x16xbf16>
    %213 = vector.shape_cast %212 : vector<1x4x16xbf16> to vector<4x16xbf16>
    %cst_128 = arith.constant dense<0.000000e+00> : vector<4x64xf32>
    %214 = tpu.matmul %213, %198, %cst_128 {dimension_numbers = #tpu.dot_dimension_numbers<[1], [0], [0], [1], [0, 0, 1, 1], [], []>} : vector<4x16xbf16>, vector<16x64xbf16>, vector<4x64xf32> -> vector<4x64xf32>
    %215 = arith.truncf %214 : vector<4x64xf32> to vector<4x64xbf16>
    %c128_129 = arith.constant 128 : index
    %c0_130 = arith.constant 0 : index
    %216 = vector.load %arg9[%c128_129, %c0_130] : memref<1024x64xbf16, #tpu.memory_space<vmem>>, vector<64x64xbf16>
    %cst_131 = arith.constant dense<0.000000e+00> : vector<4x64xf32>
    %217 = tpu.matmul %215, %216, %cst_131 {dimension_numbers = #tpu.dot_dimension_numbers<[1], [0], [0], [1], [0, 0, 1, 1], [], []>} : vector<4x64xbf16>, vector<64x64xbf16>, vector<4x64xf32> -> vector<4x64xf32>
    %218 = arith.addf %211, %217 : vector<4x64xf32>
    %c3 = arith.constant 3 : index
    %c0_132 = arith.constant 0 : index
    %c0_133 = arith.constant 0 : index
    %219 = vector.load %arg13[%c3, %c0_132, %c0_133] : memref<16x4x16xbf16, #tpu.memory_space<vmem>>, vector<1x4x16xbf16>
    %220 = vector.shape_cast %219 : vector<1x4x16xbf16> to vector<4x16xbf16>
    %cst_134 = arith.constant dense<0.000000e+00> : vector<4x64xf32>
    %221 = tpu.matmul %220, %198, %cst_134 {dimension_numbers = #tpu.dot_dimension_numbers<[1], [0], [0], [1], [0, 0, 1, 1], [], []>} : vector<4x16xbf16>, vector<16x64xbf16>, vector<4x64xf32> -> vector<4x64xf32>
    %222 = arith.truncf %221 : vector<4x64xf32> to vector<4x64xbf16>
    %c192_135 = arith.constant 192 : index
    %c0_136 = arith.constant 0 : index
    %223 = vector.load %arg9[%c192_135, %c0_136] : memref<1024x64xbf16, #tpu.memory_space<vmem>>, vector<64x64xbf16>
    %cst_137 = arith.constant dense<0.000000e+00> : vector<4x64xf32>
    %224 = tpu.matmul %222, %223, %cst_137 {dimension_numbers = #tpu.dot_dimension_numbers<[1], [0], [0], [1], [0, 0, 1, 1], [], []>} : vector<4x64xbf16>, vector<64x64xbf16>, vector<4x64xf32> -> vector<4x64xf32>
    %225 = arith.addf %218, %224 : vector<4x64xf32>
    %c4 = arith.constant 4 : index
    %c0_138 = arith.constant 0 : index
    %c0_139 = arith.constant 0 : index
    %226 = vector.load %arg13[%c4, %c0_138, %c0_139] : memref<16x4x16xbf16, #tpu.memory_space<vmem>>, vector<1x4x16xbf16>
    %227 = vector.shape_cast %226 : vector<1x4x16xbf16> to vector<4x16xbf16>
    %cst_140 = arith.constant dense<0.000000e+00> : vector<4x64xf32>
    %228 = tpu.matmul %227, %198, %cst_140 {dimension_numbers = #tpu.dot_dimension_numbers<[1], [0], [0], [1], [0, 0, 1, 1], [], []>} : vector<4x16xbf16>, vector<16x64xbf16>, vector<4x64xf32> -> vector<4x64xf32>
    %229 = arith.truncf %228 : vector<4x64xf32> to vector<4x64xbf16>
    %c256_141 = arith.constant 256 : index
    %c0_142 = arith.constant 0 : index
    %230 = vector.load %arg9[%c256_141, %c0_142] : memref<1024x64xbf16, #tpu.memory_space<vmem>>, vector<64x64xbf16>
    %cst_143 = arith.constant dense<0.000000e+00> : vector<4x64xf32>
    %231 = tpu.matmul %229, %230, %cst_143 {dimension_numbers = #tpu.dot_dimension_numbers<[1], [0], [0], [1], [0, 0, 1, 1], [], []>} : vector<4x64xbf16>, vector<64x64xbf16>, vector<4x64xf32> -> vector<4x64xf32>
    %232 = arith.addf %225, %231 : vector<4x64xf32>
    %c5 = arith.constant 5 : index
    %c0_144 = arith.constant 0 : index
    %c0_145 = arith.constant 0 : index
    %233 = vector.load %arg13[%c5, %c0_144, %c0_145] : memref<16x4x16xbf16, #tpu.memory_space<vmem>>, vector<1x4x16xbf16>
    %234 = vector.shape_cast %233 : vector<1x4x16xbf16> to vector<4x16xbf16>
    %cst_146 = arith.constant dense<0.000000e+00> : vector<4x64xf32>
    %235 = tpu.matmul %234, %198, %cst_146 {dimension_numbers = #tpu.dot_dimension_numbers<[1], [0], [0], [1], [0, 0, 1, 1], [], []>} : vector<4x16xbf16>, vector<16x64xbf16>, vector<4x64xf32> -> vector<4x64xf32>
    %236 = arith.truncf %235 : vector<4x64xf32> to vector<4x64xbf16>
    %c320_147 = arith.constant 320 : index
    %c0_148 = arith.constant 0 : index
    %237 = vector.load %arg9[%c320_147, %c0_148] : memref<1024x64xbf16, #tpu.memory_space<vmem>>, vector<64x64xbf16>
    %cst_149 = arith.constant dense<0.000000e+00> : vector<4x64xf32>
    %238 = tpu.matmul %236, %237, %cst_149 {dimension_numbers = #tpu.dot_dimension_numbers<[1], [0], [0], [1], [0, 0, 1, 1], [], []>} : vector<4x64xbf16>, vector<64x64xbf16>, vector<4x64xf32> -> vector<4x64xf32>
    %239 = arith.addf %232, %238 : vector<4x64xf32>
    %c6 = arith.constant 6 : index
    %c0_150 = arith.constant 0 : index
    %c0_151 = arith.constant 0 : index
    %240 = vector.load %arg13[%c6, %c0_150, %c0_151] : memref<16x4x16xbf16, #tpu.memory_space<vmem>>, vector<1x4x16xbf16>
    %241 = vector.shape_cast %240 : vector<1x4x16xbf16> to vector<4x16xbf16>
    %cst_152 = arith.constant dense<0.000000e+00> : vector<4x64xf32>
    %242 = tpu.matmul %241, %198, %cst_152 {dimension_numbers = #tpu.dot_dimension_numbers<[1], [0], [0], [1], [0, 0, 1, 1], [], []>} : vector<4x16xbf16>, vector<16x64xbf16>, vector<4x64xf32> -> vector<4x64xf32>
    %243 = arith.truncf %242 : vector<4x64xf32> to vector<4x64xbf16>
    %c384_153 = arith.constant 384 : index
    %c0_154 = arith.constant 0 : index
    %244 = vector.load %arg9[%c384_153, %c0_154] : memref<1024x64xbf16, #tpu.memory_space<vmem>>, vector<64x64xbf16>
    %cst_155 = arith.constant dense<0.000000e+00> : vector<4x64xf32>
    %245 = tpu.matmul %243, %244, %cst_155 {dimension_numbers = #tpu.dot_dimension_numbers<[1], [0], [0], [1], [0, 0, 1, 1], [], []>} : vector<4x64xbf16>, vector<64x64xbf16>, vector<4x64xf32> -> vector<4x64xf32>
    %246 = arith.addf %239, %245 : vector<4x64xf32>
    %c7 = arith.constant 7 : index
    %c0_156 = arith.constant 0 : index
    %c0_157 = arith.constant 0 : index
    %247 = vector.load %arg13[%c7, %c0_156, %c0_157] : memref<16x4x16xbf16, #tpu.memory_space<vmem>>, vector<1x4x16xbf16>
    %248 = vector.shape_cast %247 : vector<1x4x16xbf16> to vector<4x16xbf16>
    %cst_158 = arith.constant dense<0.000000e+00> : vector<4x64xf32>
    %249 = tpu.matmul %248, %198, %cst_158 {dimension_numbers = #tpu.dot_dimension_numbers<[1], [0], [0], [1], [0, 0, 1, 1], [], []>} : vector<4x16xbf16>, vector<16x64xbf16>, vector<4x64xf32> -> vector<4x64xf32>
    %250 = arith.truncf %249 : vector<4x64xf32> to vector<4x64xbf16>
    %c448_159 = arith.constant 448 : index
    %c0_160 = arith.constant 0 : index
    %251 = vector.load %arg9[%c448_159, %c0_160] : memref<1024x64xbf16, #tpu.memory_space<vmem>>, vector<64x64xbf16>
    %cst_161 = arith.constant dense<0.000000e+00> : vector<4x64xf32>
    %252 = tpu.matmul %250, %251, %cst_161 {dimension_numbers = #tpu.dot_dimension_numbers<[1], [0], [0], [1], [0, 0, 1, 1], [], []>} : vector<4x64xbf16>, vector<64x64xbf16>, vector<4x64xf32> -> vector<4x64xf32>
    %253 = arith.addf %246, %252 : vector<4x64xf32>
    %c8 = arith.constant 8 : index
    %c0_162 = arith.constant 0 : index
    %c0_163 = arith.constant 0 : index
    %254 = vector.load %arg13[%c8, %c0_162, %c0_163] : memref<16x4x16xbf16, #tpu.memory_space<vmem>>, vector<1x4x16xbf16>
    %255 = vector.shape_cast %254 : vector<1x4x16xbf16> to vector<4x16xbf16>
    %cst_164 = arith.constant dense<0.000000e+00> : vector<4x64xf32>
    %256 = tpu.matmul %255, %198, %cst_164 {dimension_numbers = #tpu.dot_dimension_numbers<[1], [0], [0], [1], [0, 0, 1, 1], [], []>} : vector<4x16xbf16>, vector<16x64xbf16>, vector<4x64xf32> -> vector<4x64xf32>
    %257 = arith.truncf %256 : vector<4x64xf32> to vector<4x64xbf16>
    %c512_165 = arith.constant 512 : index
    %c0_166 = arith.constant 0 : index
    %258 = vector.load %arg9[%c512_165, %c0_166] : memref<1024x64xbf16, #tpu.memory_space<vmem>>, vector<64x64xbf16>
    %cst_167 = arith.constant dense<0.000000e+00> : vector<4x64xf32>
    %259 = tpu.matmul %257, %258, %cst_167 {dimension_numbers = #tpu.dot_dimension_numbers<[1], [0], [0], [1], [0, 0, 1, 1], [], []>} : vector<4x64xbf16>, vector<64x64xbf16>, vector<4x64xf32> -> vector<4x64xf32>
    %260 = arith.addf %253, %259 : vector<4x64xf32>
    %c9 = arith.constant 9 : index
    %c0_168 = arith.constant 0 : index
    %c0_169 = arith.constant 0 : index
    %261 = vector.load %arg13[%c9, %c0_168, %c0_169] : memref<16x4x16xbf16, #tpu.memory_space<vmem>>, vector<1x4x16xbf16>
    %262 = vector.shape_cast %261 : vector<1x4x16xbf16> to vector<4x16xbf16>
    %cst_170 = arith.constant dense<0.000000e+00> : vector<4x64xf32>
    %263 = tpu.matmul %262, %198, %cst_170 {dimension_numbers = #tpu.dot_dimension_numbers<[1], [0], [0], [1], [0, 0, 1, 1], [], []>} : vector<4x16xbf16>, vector<16x64xbf16>, vector<4x64xf32> -> vector<4x64xf32>
    %264 = arith.truncf %263 : vector<4x64xf32> to vector<4x64xbf16>
    %c576_171 = arith.constant 576 : index
    %c0_172 = arith.constant 0 : index
    %265 = vector.load %arg9[%c576_171, %c0_172] : memref<1024x64xbf16, #tpu.memory_space<vmem>>, vector<64x64xbf16>
    %cst_173 = arith.constant dense<0.000000e+00> : vector<4x64xf32>
    %266 = tpu.matmul %264, %265, %cst_173 {dimension_numbers = #tpu.dot_dimension_numbers<[1], [0], [0], [1], [0, 0, 1, 1], [], []>} : vector<4x64xbf16>, vector<64x64xbf16>, vector<4x64xf32> -> vector<4x64xf32>
    %267 = arith.addf %260, %266 : vector<4x64xf32>
    %c10 = arith.constant 10 : index
    %c0_174 = arith.constant 0 : index
    %c0_175 = arith.constant 0 : index
    %268 = vector.load %arg13[%c10, %c0_174, %c0_175] : memref<16x4x16xbf16, #tpu.memory_space<vmem>>, vector<1x4x16xbf16>
    %269 = vector.shape_cast %268 : vector<1x4x16xbf16> to vector<4x16xbf16>
    %cst_176 = arith.constant dense<0.000000e+00> : vector<4x64xf32>
    %270 = tpu.matmul %269, %198, %cst_176 {dimension_numbers = #tpu.dot_dimension_numbers<[1], [0], [0], [1], [0, 0, 1, 1], [], []>} : vector<4x16xbf16>, vector<16x64xbf16>, vector<4x64xf32> -> vector<4x64xf32>
    %271 = arith.truncf %270 : vector<4x64xf32> to vector<4x64xbf16>
    %c640_177 = arith.constant 640 : index
    %c0_178 = arith.constant 0 : index
    %272 = vector.load %arg9[%c640_177, %c0_178] : memref<1024x64xbf16, #tpu.memory_space<vmem>>, vector<64x64xbf16>
    %cst_179 = arith.constant dense<0.000000e+00> : vector<4x64xf32>
    %273 = tpu.matmul %271, %272, %cst_179 {dimension_numbers = #tpu.dot_dimension_numbers<[1], [0], [0], [1], [0, 0, 1, 1], [], []>} : vector<4x64xbf16>, vector<64x64xbf16>, vector<4x64xf32> -> vector<4x64xf32>
    %274 = arith.addf %267, %273 : vector<4x64xf32>
    %c11 = arith.constant 11 : index
    %c0_180 = arith.constant 0 : index
    %c0_181 = arith.constant 0 : index
    %275 = vector.load %arg13[%c11, %c0_180, %c0_181] : memref<16x4x16xbf16, #tpu.memory_space<vmem>>, vector<1x4x16xbf16>
    %276 = vector.shape_cast %275 : vector<1x4x16xbf16> to vector<4x16xbf16>
    %cst_182 = arith.constant dense<0.000000e+00> : vector<4x64xf32>
    %277 = tpu.matmul %276, %198, %cst_182 {dimension_numbers = #tpu.dot_dimension_numbers<[1], [0], [0], [1], [0, 0, 1, 1], [], []>} : vector<4x16xbf16>, vector<16x64xbf16>, vector<4x64xf32> -> vector<4x64xf32>
    %278 = arith.truncf %277 : vector<4x64xf32> to vector<4x64xbf16>
    %c704_183 = arith.constant 704 : index
    %c0_184 = arith.constant 0 : index
    %279 = vector.load %arg9[%c704_183, %c0_184] : memref<1024x64xbf16, #tpu.memory_space<vmem>>, vector<64x64xbf16>
    %cst_185 = arith.constant dense<0.000000e+00> : vector<4x64xf32>
    %280 = tpu.matmul %278, %279, %cst_185 {dimension_numbers = #tpu.dot_dimension_numbers<[1], [0], [0], [1], [0, 0, 1, 1], [], []>} : vector<4x64xbf16>, vector<64x64xbf16>, vector<4x64xf32> -> vector<4x64xf32>
    %281 = arith.addf %274, %280 : vector<4x64xf32>
    %c12 = arith.constant 12 : index
    %c0_186 = arith.constant 0 : index
    %c0_187 = arith.constant 0 : index
    %282 = vector.load %arg13[%c12, %c0_186, %c0_187] : memref<16x4x16xbf16, #tpu.memory_space<vmem>>, vector<1x4x16xbf16>
    %283 = vector.shape_cast %282 : vector<1x4x16xbf16> to vector<4x16xbf16>
    %cst_188 = arith.constant dense<0.000000e+00> : vector<4x64xf32>
    %284 = tpu.matmul %283, %198, %cst_188 {dimension_numbers = #tpu.dot_dimension_numbers<[1], [0], [0], [1], [0, 0, 1, 1], [], []>} : vector<4x16xbf16>, vector<16x64xbf16>, vector<4x64xf32> -> vector<4x64xf32>
    %285 = arith.truncf %284 : vector<4x64xf32> to vector<4x64xbf16>
    %c768_189 = arith.constant 768 : index
    %c0_190 = arith.constant 0 : index
    %286 = vector.load %arg9[%c768_189, %c0_190] : memref<1024x64xbf16, #tpu.memory_space<vmem>>, vector<64x64xbf16>
    %cst_191 = arith.constant dense<0.000000e+00> : vector<4x64xf32>
    %287 = tpu.matmul %285, %286, %cst_191 {dimension_numbers = #tpu.dot_dimension_numbers<[1], [0], [0], [1], [0, 0, 1, 1], [], []>} : vector<4x64xbf16>, vector<64x64xbf16>, vector<4x64xf32> -> vector<4x64xf32>
    %288 = arith.addf %281, %287 : vector<4x64xf32>
    %c13 = arith.constant 13 : index
    %c0_192 = arith.constant 0 : index
    %c0_193 = arith.constant 0 : index
    %289 = vector.load %arg13[%c13, %c0_192, %c0_193] : memref<16x4x16xbf16, #tpu.memory_space<vmem>>, vector<1x4x16xbf16>
    %290 = vector.shape_cast %289 : vector<1x4x16xbf16> to vector<4x16xbf16>
    %cst_194 = arith.constant dense<0.000000e+00> : vector<4x64xf32>
    %291 = tpu.matmul %290, %198, %cst_194 {dimension_numbers = #tpu.dot_dimension_numbers<[1], [0], [0], [1], [0, 0, 1, 1], [], []>} : vector<4x16xbf16>, vector<16x64xbf16>, vector<4x64xf32> -> vector<4x64xf32>
    %292 = arith.truncf %291 : vector<4x64xf32> to vector<4x64xbf16>
    %c832_195 = arith.constant 832 : index
    %c0_196 = arith.constant 0 : index
    %293 = vector.load %arg9[%c832_195, %c0_196] : memref<1024x64xbf16, #tpu.memory_space<vmem>>, vector<64x64xbf16>
    %cst_197 = arith.constant dense<0.000000e+00> : vector<4x64xf32>
    %294 = tpu.matmul %292, %293, %cst_197 {dimension_numbers = #tpu.dot_dimension_numbers<[1], [0], [0], [1], [0, 0, 1, 1], [], []>} : vector<4x64xbf16>, vector<64x64xbf16>, vector<4x64xf32> -> vector<4x64xf32>
    %295 = arith.addf %288, %294 : vector<4x64xf32>
    %c14 = arith.constant 14 : index
    %c0_198 = arith.constant 0 : index
    %c0_199 = arith.constant 0 : index
    %296 = vector.load %arg13[%c14, %c0_198, %c0_199] : memref<16x4x16xbf16, #tpu.memory_space<vmem>>, vector<1x4x16xbf16>
    %297 = vector.shape_cast %296 : vector<1x4x16xbf16> to vector<4x16xbf16>
    %cst_200 = arith.constant dense<0.000000e+00> : vector<4x64xf32>
    %298 = tpu.matmul %297, %198, %cst_200 {dimension_numbers = #tpu.dot_dimension_numbers<[1], [0], [0], [1], [0, 0, 1, 1], [], []>} : vector<4x16xbf16>, vector<16x64xbf16>, vector<4x64xf32> -> vector<4x64xf32>
    %299 = arith.truncf %298 : vector<4x64xf32> to vector<4x64xbf16>
    %c896_201 = arith.constant 896 : index
    %c0_202 = arith.constant 0 : index
    %300 = vector.load %arg9[%c896_201, %c0_202] : memref<1024x64xbf16, #tpu.memory_space<vmem>>, vector<64x64xbf16>
    %cst_203 = arith.constant dense<0.000000e+00> : vector<4x64xf32>
    %301 = tpu.matmul %299, %300, %cst_203 {dimension_numbers = #tpu.dot_dimension_numbers<[1], [0], [0], [1], [0, 0, 1, 1], [], []>} : vector<4x64xbf16>, vector<64x64xbf16>, vector<4x64xf32> -> vector<4x64xf32>
    %302 = arith.addf %295, %301 : vector<4x64xf32>
    %c15 = arith.constant 15 : index
    %c0_204 = arith.constant 0 : index
    %c0_205 = arith.constant 0 : index
    %303 = vector.load %arg13[%c15, %c0_204, %c0_205] : memref<16x4x16xbf16, #tpu.memory_space<vmem>>, vector<1x4x16xbf16>
    %304 = vector.shape_cast %303 : vector<1x4x16xbf16> to vector<4x16xbf16>
    %cst_206 = arith.constant dense<0.000000e+00> : vector<4x64xf32>
    %305 = tpu.matmul %304, %198, %cst_206 {dimension_numbers = #tpu.dot_dimension_numbers<[1], [0], [0], [1], [0, 0, 1, 1], [], []>} : vector<4x16xbf16>, vector<16x64xbf16>, vector<4x64xf32> -> vector<4x64xf32>
    %306 = arith.truncf %305 : vector<4x64xf32> to vector<4x64xbf16>
    %c960_207 = arith.constant 960 : index
    %c0_208 = arith.constant 0 : index
    %307 = vector.load %arg9[%c960_207, %c0_208] : memref<1024x64xbf16, #tpu.memory_space<vmem>>, vector<64x64xbf16>
    %cst_209 = arith.constant dense<0.000000e+00> : vector<4x64xf32>
    %308 = tpu.matmul %306, %307, %cst_209 {dimension_numbers = #tpu.dot_dimension_numbers<[1], [0], [0], [1], [0, 0, 1, 1], [], []>} : vector<4x64xbf16>, vector<64x64xbf16>, vector<4x64xf32> -> vector<4x64xf32>
    %309 = arith.addf %302, %308 : vector<4x64xf32>
    %c0_210 = arith.constant 0 : index
    %c0_211 = arith.constant 0 : index
    %310 = vector.load %arg10[%c0_210, %c0_211] : memref<1x64xf32, #tpu.memory_space<vmem>>, vector<1x64xf32>
    %311 = vector.broadcast %310 : vector<1x64xf32> to vector<4x64xf32>
    %312 = arith.addf %309, %311 : vector<4x64xf32>
    %cst_212 = arith.constant dense<0.000000e+00> : vector<64xf32>
    %313 = vector.multi_reduction <add>, %312, %cst_212 [0] : vector<4x64xf32> to vector<64xf32>
    %314 = vector.shape_cast %313 : vector<64xf32> to vector<1x64xf32>
    %cst_213 = arith.constant 4.000000e+00 : f32
    %315 = vector.broadcast %cst_213 : f32 to vector<1x64xf32>
    %316 = arith.divf %314, %315 : vector<1x64xf32>
    %317 = vector.broadcast %316 : vector<1x64xf32> to vector<4x64xf32>
    %318 = arith.subf %312, %317 : vector<4x64xf32>
    %319 = arith.mulf %318, %318 : vector<4x64xf32>
    %cst_214 = arith.constant dense<0.000000e+00> : vector<64xf32>
    %320 = vector.multi_reduction <add>, %319, %cst_214 [0] : vector<4x64xf32> to vector<64xf32>
    %321 = vector.shape_cast %320 : vector<64xf32> to vector<1x64xf32>
    %cst_215 = arith.constant 4.000000e+00 : f32
    %322 = vector.broadcast %cst_215 : f32 to vector<1x64xf32>
    %323 = arith.divf %321, %322 : vector<1x64xf32>
    %324 = vector.broadcast %316 : vector<1x64xf32> to vector<4x64xf32>
    %325 = arith.subf %312, %324 : vector<4x64xf32>
    %cst_216 = arith.constant 9.99999974E-6 : f32
    %326 = vector.broadcast %cst_216 : f32 to vector<1x64xf32>
    %327 = arith.addf %323, %326 : vector<1x64xf32>
    %328 = math.rsqrt %327 : vector<1x64xf32>
    %329 = vector.broadcast %328 : vector<1x64xf32> to vector<4x64xf32>
    %330 = arith.mulf %325, %329 : vector<4x64xf32>
    %cst_217 = arith.constant 0.000000e+00 : f32
    %331 = vector.broadcast %cst_217 : f32 to vector<4x64xf32>
    %332 = arith.cmpf ogt, %330, %331 : vector<4x64xf32>
    %cst_218 = arith.constant 1.000000e-01 : f32
    %333 = vector.broadcast %cst_218 : f32 to vector<4x64xf32>
    %334 = arith.mulf %333, %330 : vector<4x64xf32>
    %335 = arith.select %332, %330, %334 : vector<4x64xi1>, vector<4x64xf32>
    %c0_219 = arith.constant 0 : index
    %c0_220 = arith.constant 0 : index
    %c0_221 = arith.constant 0 : index
    %336 = vector.load %arg2[%c0_219, %c0_220, %c0_221] : memref<1x1x128xbf16, #tpu.memory_space<vmem>>, vector<1x1x128xbf16>
    %337 = vector.shape_cast %336 : vector<1x1x128xbf16> to vector<1x128xbf16>
    %c0_222 = arith.constant 0 : index
    %c0_223 = arith.constant 0 : index
    %338 = vector.load %arg14[%c0_222, %c0_223] : memref<128x512xbf16, #tpu.memory_space<vmem>>, vector<128x512xbf16>
    %cst_224 = arith.constant dense<0.000000e+00> : vector<1x512xf32>
    %339 = tpu.matmul %337, %338, %cst_224 {dimension_numbers = #tpu.dot_dimension_numbers<[1], [0], [0], [1], [0, 0, 1, 1], [], []>} : vector<1x128xbf16>, vector<128x512xbf16>, vector<1x512xf32> -> vector<1x512xf32>
    %c0_225 = arith.constant 0 : index
    %c0_226 = arith.constant 0 : index
    %340 = vector.load %arg15[%c0_225, %c0_226] : memref<1x512xf32, #tpu.memory_space<vmem>>, vector<1x512xf32>
    %341 = arith.addf %339, %340 : vector<1x512xf32>
    %342 = arith.truncf %341 : vector<1x512xf32> to vector<1x512xbf16>
    %c0_227 = arith.constant 0 : index
    %c0_228 = arith.constant 0 : index
    %343 = vector.load %arg17[%c0_227, %c0_228] : memref<512x1024xbf16, #tpu.memory_space<vmem>>, vector<512x1024xbf16>
    %cst_229 = arith.constant dense<0.000000e+00> : vector<1x1024xf32>
    %344 = tpu.matmul %342, %343, %cst_229 {dimension_numbers = #tpu.dot_dimension_numbers<[1], [0], [0], [1], [0, 0, 1, 1], [], []>} : vector<1x512xbf16>, vector<512x1024xbf16>, vector<1x1024xf32> -> vector<1x1024xf32>
    %c0_230 = arith.constant 0 : index
    %c0_231 = arith.constant 0 : index
    %345 = vector.load %arg18[%c0_230, %c0_231] : memref<1x1024xf32, #tpu.memory_space<vmem>>, vector<1x1024xf32>
    %346 = arith.addf %344, %345 : vector<1x1024xf32>
    %347 = vector.extract_strided_slice %335 {offsets = [0, 0], sizes = [1, 64], strides = [1, 1]} : vector<4x64xf32> to vector<1x64xf32>
    %348 = arith.truncf %347 : vector<1x64xf32> to vector<1x64xbf16>
    %c0_232 = arith.constant 0 : index
    %c0_233 = arith.constant 0 : index
    %c0_234 = arith.constant 0 : index
    %349 = vector.load %arg16[%c0_232, %c0_233, %c0_234] : memref<4x64x1024xbf16, #tpu.memory_space<vmem>>, vector<1x64x1024xbf16>
    %350 = vector.shape_cast %349 : vector<1x64x1024xbf16> to vector<64x1024xbf16>
    %cst_235 = arith.constant dense<0.000000e+00> : vector<1x1024xf32>
    %351 = tpu.matmul %348, %350, %cst_235 {dimension_numbers = #tpu.dot_dimension_numbers<[1], [0], [0], [1], [0, 0, 1, 1], [], []>} : vector<1x64xbf16>, vector<64x1024xbf16>, vector<1x1024xf32> -> vector<1x1024xf32>
    %352 = arith.addf %346, %351 : vector<1x1024xf32>
    %353 = vector.extract_strided_slice %335 {offsets = [1, 0], sizes = [1, 64], strides = [1, 1]} : vector<4x64xf32> to vector<1x64xf32>
    %354 = arith.truncf %353 : vector<1x64xf32> to vector<1x64xbf16>
    %c1_236 = arith.constant 1 : index
    %c0_237 = arith.constant 0 : index
    %c0_238 = arith.constant 0 : index
    %355 = vector.load %arg16[%c1_236, %c0_237, %c0_238] : memref<4x64x1024xbf16, #tpu.memory_space<vmem>>, vector<1x64x1024xbf16>
    %356 = vector.shape_cast %355 : vector<1x64x1024xbf16> to vector<64x1024xbf16>
    %cst_239 = arith.constant dense<0.000000e+00> : vector<1x1024xf32>
    %357 = tpu.matmul %354, %356, %cst_239 {dimension_numbers = #tpu.dot_dimension_numbers<[1], [0], [0], [1], [0, 0, 1, 1], [], []>} : vector<1x64xbf16>, vector<64x1024xbf16>, vector<1x1024xf32> -> vector<1x1024xf32>
    %358 = arith.addf %352, %357 : vector<1x1024xf32>
    %359 = vector.extract_strided_slice %335 {offsets = [2, 0], sizes = [1, 64], strides = [1, 1]} : vector<4x64xf32> to vector<1x64xf32>
    %360 = arith.truncf %359 : vector<1x64xf32> to vector<1x64xbf16>
    %c2_240 = arith.constant 2 : index
    %c0_241 = arith.constant 0 : index
    %c0_242 = arith.constant 0 : index
    %361 = vector.load %arg16[%c2_240, %c0_241, %c0_242] : memref<4x64x1024xbf16, #tpu.memory_space<vmem>>, vector<1x64x1024xbf16>
    %362 = vector.shape_cast %361 : vector<1x64x1024xbf16> to vector<64x1024xbf16>
    %cst_243 = arith.constant dense<0.000000e+00> : vector<1x1024xf32>
    %363 = tpu.matmul %360, %362, %cst_243 {dimension_numbers = #tpu.dot_dimension_numbers<[1], [0], [0], [1], [0, 0, 1, 1], [], []>} : vector<1x64xbf16>, vector<64x1024xbf16>, vector<1x1024xf32> -> vector<1x1024xf32>
    %364 = arith.addf %358, %363 : vector<1x1024xf32>
    %365 = vector.extract_strided_slice %335 {offsets = [3, 0], sizes = [1, 64], strides = [1, 1]} : vector<4x64xf32> to vector<1x64xf32>
    %366 = arith.truncf %365 : vector<1x64xf32> to vector<1x64xbf16>
    %c3_244 = arith.constant 3 : index
    %c0_245 = arith.constant 0 : index
    %c0_246 = arith.constant 0 : index
    %367 = vector.load %arg16[%c3_244, %c0_245, %c0_246] : memref<4x64x1024xbf16, #tpu.memory_space<vmem>>, vector<1x64x1024xbf16>
    %368 = vector.shape_cast %367 : vector<1x64x1024xbf16> to vector<64x1024xbf16>
    %cst_247 = arith.constant dense<0.000000e+00> : vector<1x1024xf32>
    %369 = tpu.matmul %366, %368, %cst_247 {dimension_numbers = #tpu.dot_dimension_numbers<[1], [0], [0], [1], [0, 0, 1, 1], [], []>} : vector<1x64xbf16>, vector<64x1024xbf16>, vector<1x1024xf32> -> vector<1x1024xf32>
    %370 = arith.addf %364, %369 : vector<1x1024xf32>
    %cst_248 = arith.constant 0.000000e+00 : f32
    %371 = vector.broadcast %cst_248 : f32 to vector<1x1024xf32>
    %372 = arith.cmpf ogt, %370, %371 : vector<1x1024xf32>
    %cst_249 = arith.constant 1.000000e-01 : f32
    %373 = vector.broadcast %cst_249 : f32 to vector<1x1024xf32>
    %374 = arith.mulf %373, %370 : vector<1x1024xf32>
    %375 = arith.select %372, %370, %374 : vector<1x1024xi1>, vector<1x1024xf32>
    %c0_250 = arith.constant 0 : index
    %c0_251 = arith.constant 0 : index
    %c0_252 = arith.constant 0 : index
    %376 = vector.load %arg21[%c0_250, %c0_251, %c0_252] : memref<1x1x1024xf32, #tpu.memory_space<vmem>>, vector<1x1x1024xf32>
    %377 = vector.shape_cast %376 : vector<1x1x1024xf32> to vector<1x1024xf32>
    %378 = vector.shape_cast %375 : vector<1x1024xf32> to vector<1x1x1024xf32>
    tpu.vector_store %arg21[%c0_250, %c0_251, %c0_252], %378 {strides = array<i32>} : memref<1x1x1024xf32, #tpu.memory_space<vmem>>, vector<1x1x1024xf32>,
    %c0_253 = arith.constant 0 : index
    %c0_254 = arith.constant 0 : index
    %379 = vector.load %arg19[%c0_253, %c0_254] : memref<1x1024xf32, #tpu.memory_space<vmem>>, vector<1x1024xf32>
    %380 = arith.mulf %375, %379 : vector<1x1024xf32>
    %cst_255 = arith.constant dense<0.000000e+00> : vector<1xf32>
    %381 = vector.multi_reduction <add>, %380, %cst_255 [1] : vector<1x1024xf32> to vector<1xf32>
    %382 = vector.shape_cast %381 : vector<1xf32> to vector<1x1xf32>
    %c0_256 = arith.constant 0 : index
    %c0_257 = arith.constant 0 : index
    %383 = vector.load %arg20[%c0_256, %c0_257] : memref<1x1xf32, #tpu.memory_space<vmem>>, vector<1x1xf32>
    %384 = arith.addf %382, %383 : vector<1x1xf32>
    %c0_258 = arith.constant 0 : index
    %c0_259 = arith.constant 0 : index
    %c0_260 = arith.constant 0 : index
    %385 = vector.load %arg22[%c0_258, %c0_259, %c0_260] : memref<1x1x1xf32, #tpu.memory_space<vmem>>, vector<1x1x1xf32>
    %386 = vector.shape_cast %385 : vector<1x1x1xf32> to vector<1x1xf32>
    %387 = vector.shape_cast %384 : vector<1x1xf32> to vector<1x1x1xf32>
    tpu.vector_store %arg22[%c0_258, %c0_259, %c0_260], %387 {strides = array<i32>} : memref<1x1x1xf32, #tpu.memory_space<vmem>>, vector<1x1x1xf32>,
    return
  }
  func.func @transform_0(%arg0: i32) -> (i32, i32, i32) {
    %c0_i32 = arith.constant 0 : i32
    %c0_i32_0 = arith.constant 0 : i32
    %c0_i32_1 = arith.constant 0 : i32
    return %arg0, %c0_i32, %c0_i32_0 : i32, i32, i32
  }
  func.func @transform_1(%arg0: i32) -> (i32, i32, i32) {
    %c0_i32 = arith.constant 0 : i32
    %c0_i32_0 = arith.constant 0 : i32
    %c0_i32_1 = arith.constant 0 : i32
    return %arg0, %c0_i32, %c0_i32_0 : i32, i32, i32
  }
  func.func @transform_2(%arg0: i32) -> (i32, i32) {
    %c0_i32 = arith.constant 0 : i32
    %c0_i32_0 = arith.constant 0 : i32
    %c0_i32_1 = arith.constant 0 : i32
    return %c0_i32, %c0_i32_0 : i32, i32
  }
  func.func @transform_3(%arg0: i32) -> (i32, i32) {
    %c0_i32 = arith.constant 0 : i32
    %c0_i32_0 = arith.constant 0 : i32
    %c0_i32_1 = arith.constant 0 : i32
    return %c0_i32, %c0_i32_0 : i32, i32
  }
  func.func @transform_4(%arg0: i32) -> (i32, i32) {
    %c0_i32 = arith.constant 0 : i32
    %c0_i32_0 = arith.constant 0 : i32
    %c0_i32_1 = arith.constant 0 : i32
    return %c0_i32, %c0_i32_0 : i32, i32
  }
  func.func @transform_5(%arg0: i32) -> (i32, i32) {
    %c0_i32 = arith.constant 0 : i32
    %c0_i32_0 = arith.constant 0 : i32
    %c0_i32_1 = arith.constant 0 : i32
    return %c0_i32, %c0_i32_0 : i32, i32
  }
  func.func @transform_6(%arg0: i32) -> (i32, i32) {
    %c0_i32 = arith.constant 0 : i32
    %c0_i32_0 = arith.constant 0 : i32
    %c0_i32_1 = arith.constant 0 : i32
    return %c0_i32, %c0_i32_0 : i32, i32
  }
  func.func @transform_7(%arg0: i32) -> (i32, i32) {
    %c0_i32 = arith.constant 0 : i32
    %c0_i32_0 = arith.constant 0 : i32
    %c0_i32_1 = arith.constant 0 : i32
    return %c0_i32, %c0_i32_0 : i32, i32
  }
  func.func @transform_8(%arg0: i32) -> (i32, i32) {
    %c0_i32 = arith.constant 0 : i32
    %c0_i32_0 = arith.constant 0 : i32
    %c0_i32_1 = arith.constant 0 : i32
    return %c0_i32, %c0_i32_0 : i32, i32
  }
  func.func @transform_9(%arg0: i32) -> (i32, i32) {
    %c0_i32 = arith.constant 0 : i32
    %c0_i32_0 = arith.constant 0 : i32
    %c0_i32_1 = arith.constant 0 : i32
    return %c0_i32, %c0_i32_0 : i32, i32
  }
  func.func @transform_10(%arg0: i32) -> (i32, i32) {
    %c0_i32 = arith.constant 0 : i32
    %c0_i32_0 = arith.constant 0 : i32
    %c0_i32_1 = arith.constant 0 : i32
    return %c0_i32, %c0_i32_0 : i32, i32
  }
  func.func @transform_11(%arg0: i32) -> (i32, i32) {
    %c0_i32 = arith.constant 0 : i32
    %c0_i32_0 = arith.constant 0 : i32
    %c0_i32_1 = arith.constant 0 : i32
    return %c0_i32, %c0_i32_0 : i32, i32
  }
  func.func @transform_12(%arg0: i32) -> (i32, i32, i32) {
    %c0_i32 = arith.constant 0 : i32
    %c0_i32_0 = arith.constant 0 : i32
    %c0_i32_1 = arith.constant 0 : i32
    %c0_i32_2 = arith.constant 0 : i32
    return %c0_i32, %c0_i32_0, %c0_i32_1 : i32, i32, i32
  }
  func.func @transform_13(%arg0: i32) -> (i32, i32) {
    %c0_i32 = arith.constant 0 : i32
    %c0_i32_0 = arith.constant 0 : i32
    %c0_i32_1 = arith.constant 0 : i32
    return %c0_i32, %c0_i32_0 : i32, i32
  }
  func.func @transform_14(%arg0: i32) -> (i32, i32) {
    %c0_i32 = arith.constant 0 : i32
    %c0_i32_0 = arith.constant 0 : i32
    %c0_i32_1 = arith.constant 0 : i32
    return %c0_i32, %c0_i32_0 : i32, i32
  }
  func.func @transform_15(%arg0: i32) -> (i32, i32, i32) {
    %c0_i32 = arith.constant 0 : i32
    %c0_i32_0 = arith.constant 0 : i32
    %c0_i32_1 = arith.constant 0 : i32
    %c0_i32_2 = arith.constant 0 : i32
    return %c0_i32, %c0_i32_0, %c0_i32_1 : i32, i32, i32
  }
  func.func @transform_16(%arg0: i32) -> (i32, i32) {
    %c0_i32 = arith.constant 0 : i32
    %c0_i32_0 = arith.constant 0 : i32
    %c0_i32_1 = arith.constant 0 : i32
    return %c0_i32, %c0_i32_0 : i32, i32
  }
  func.func @transform_17(%arg0: i32) -> (i32, i32) {
    %c0_i32 = arith.constant 0 : i32
    %c0_i32_0 = arith.constant 0 : i32
    %c0_i32_1 = arith.constant 0 : i32
    return %c0_i32, %c0_i32_0 : i32, i32
  }
  func.func @transform_18(%arg0: i32) -> (i32, i32) {
    %c0_i32 = arith.constant 0 : i32
    %c0_i32_0 = arith.constant 0 : i32
    %c0_i32_1 = arith.constant 0 : i32
    return %c0_i32, %c0_i32_0 : i32, i32
  }
  func.func @transform_19(%arg0: i32) -> (i32, i32) {
    %c0_i32 = arith.constant 0 : i32
    %c0_i32_0 = arith.constant 0 : i32
    %c0_i32_1 = arith.constant 0 : i32
    return %c0_i32, %c0_i32_0 : i32, i32
  }
  func.func @transform_20(%arg0: i32) -> (i32, i32, i32) {
    %c0_i32 = arith.constant 0 : i32
    %c0_i32_0 = arith.constant 0 : i32
    %c0_i32_1 = arith.constant 0 : i32
    return %arg0, %c0_i32, %c0_i32_0 : i32, i32, i32
  }
  func.func @transform_21(%arg0: i32) -> (i32, i32, i32) {
    %c0_i32 = arith.constant 0 : i32
    %c0_i32_0 = arith.constant 0 : i32
    %c0_i32_1 = arith.constant 0 : i32
    return %arg0, %c0_i32, %c0_i32_0 : i32, i32, i32
  }
}

</mosaic_0001>

<llo_original>
// kernel: discriminatorxz_forward.1
$region0: #{discriminatorxz_forward.1}
  #allocation0 [shape = 'u32[]', space=smem, size = 0x4, offset = 0x4, fixed_abs, tag = 'smem constant byte address 0x4 - core index']
  #allocation1 [shape = 'u32[144,128]{1,0:T(1,128)}', space=vmem, size = 0x12000, scoped, tag = 'internal scratch']
  #allocation2 [shape = 'f32[1,1]{1,0:T(1,128)S(1)}', space=vmem, size = 0x200, scoped, tag = 'scoped memory for discriminatorxz_forward.1']
  %s0 = inlined_call_operand.vmem [shape: bf16[2,256,128], index: 0, kind: input, shape index: {}]
  %s1 = inlined_call_operand.vmem [shape: bf16[2,1,128], index: 1, kind: input, shape index: {}]
  %s2 = inlined_call_operand.vmem [shape: bf16[128,64], index: 2, kind: input, shape index: {}]
  %s3 = inlined_call_operand.vmem [shape: f32[1,64], index: 3, kind: input, shape index: {}]
  %s4 = inlined_call_operand.vmem [shape: bf16[1024,64], index: 4, kind: input, shape index: {}]
  %s5 = inlined_call_operand.vmem [shape: f32[1,64], index: 5, kind: input, shape index: {}]
  %s6 = inlined_call_operand.vmem [shape: bf16[1024,64], index: 6, kind: input, shape index: {}]
  %s7 = inlined_call_operand.vmem [shape: f32[1,64], index: 7, kind: input, shape index: {}]
  %s8 = inlined_call_operand.vmem [shape: bf16[1024,64], index: 8, kind: input, shape index: {}]
  %s9 = inlined_call_operand.vmem [shape: f32[1,64], index: 9, kind: input, shape index: {}]
  %s10 = inlined_call_operand.vmem [shape: bf16[1024,256], index: 10, kind: input, shape index: {}]
  %s11 = inlined_call_operand.vmem [shape: bf16[256,64], index: 11, kind: input, shape index: {}]
  %s12 = inlined_call_operand.vmem [shape: bf16[16,4,16], index: 12, kind: input, shape index: {}]
  %s13 = inlined_call_operand.vmem [shape: bf16[128,512], index: 13, kind: input, shape index: {}]
  %s14 = inlined_call_operand.vmem [shape: f32[1,512], index: 14, kind: input, shape index: {}]
  %s15 = inlined_call_operand.vmem [shape: bf16[4,64,1024], index: 15, kind: input, shape index: {}]
  %s16 = inlined_call_operand.vmem [shape: bf16[512,1024], index: 16, kind: input, shape index: {}]
  %s17 = inlined_call_operand.vmem [shape: f32[1,1024], index: 17, kind: input, shape index: {}]
  %s18 = inlined_call_operand.vmem [shape: f32[1,1024], index: 18, kind: input, shape index: {}]
  %s19 = inlined_call_operand.<no memory space> [shape: f32[1,1], index: 19, kind: input, shape index: {}]
  %s20 = inlined_call_operand.vmem [shape: f32[2,1,1024], index: 20, kind: output, shape index: {0}]
  %s21 = inlined_call_operand.vmem [shape: f32[2,1,1], index: 21, kind: output, shape index: {1}]
  %22 = xla_tuple %s20, %s21
  %s23 = sld [smem:[#allocation0]]
  $region121: #{discriminatorxz_forward.1} parent=0
    _
  %s25 = ssub.s32 1, %s23
  %s26 = scalar_select 0, %s25, %s23
  %v27 = vstv %s19
  %28 = vst [vmem:[#allocation2] sm:$0x1] %v27
  loop: start=0, step=1, limit=4
  $region2: #{discriminatorxz_forward.1} parent=0 // loop_pre_header
    _
  $region3: #{discriminatorxz_forward.1} parent=0 // loop_header
    %s30 = sphi 0, %s34
    %p31 = scmp.ge.s32.totalorder %s30, 4
    %s40 = sphi 0, %s42
    %s43 = sphi 0, %s40
    %s44 = sphi 0, %s43
    %s60 = sphi 0, %s44
    %s66 = sphi 0, %s68
    %s69 = sphi 0, %s66
    %s70 = sphi 0, %s69
    %s86 = sphi 0, %s70
    %s90 = sphi 0, %s90
    %s92 = sphi 0, %s90
    %s93 = sphi 0, %s92
    %s107 = sphi 0, %s93
    %s111 = sphi 0, %s111
    %s113 = sphi 0, %s111
    %s114 = sphi 0, %s113
    %s128 = sphi 0, %s114
    %s132 = sphi 0, %s132
    %s134 = sphi 0, %s132
    %s135 = sphi 0, %s134
    %s149 = sphi 0, %s135
    %s153 = sphi 0, %s153
    %s155 = sphi 0, %s153
    %s156 = sphi 0, %s155
    %s170 = sphi 0, %s156
    %s174 = sphi 0, %s174
    %s176 = sphi 0, %s174
    %s177 = sphi 0, %s176
    %s191 = sphi 0, %s177
    %s195 = sphi 0, %s195
    %s197 = sphi 0, %s195
    %s198 = sphi 0, %s197
    %s212 = sphi 0, %s198
    %s216 = sphi 0, %s216
    %s218 = sphi 0, %s216
    %s219 = sphi 0, %s218
    %s233 = sphi 0, %s219
    %s237 = sphi 0, %s237
    %s239 = sphi 0, %s237
    %s240 = sphi 0, %s239
    %s254 = sphi 0, %s240
    %s258 = sphi 0, %s258
    %s260 = sphi 0, %s258
    %s261 = sphi 0, %s260
    %s275 = sphi 0, %s261
    %s279 = sphi 0, %s279
    %s281 = sphi 0, %s279
    %s282 = sphi 0, %s281
    %s296 = sphi 0, %s282
    %s300 = sphi 0, %s300
    %s302 = sphi 0, %s300
    %s303 = sphi 0, %s302
    %s317 = sphi 0, %s303
    %s321 = sphi 0, %s321
    %s323 = sphi 0, %s321
    %s324 = sphi 0, %s323
    %s338 = sphi 0, %s324
    %s342 = sphi 0, %s342
    %s344 = sphi 0, %s342
    %s345 = sphi 0, %s344
    %s359 = sphi 0, %s345
    %s363 = sphi 0, %s363
    %s365 = sphi 0, %s363
    %s366 = sphi 0, %s365
    %s380 = sphi 0, %s366
    %s384 = sphi 0, %s384
    %s386 = sphi 0, %s384
    %s387 = sphi 0, %s386
    %s401 = sphi 0, %s387
    %s405 = sphi 0, %s405
    %s407 = sphi 0, %s405
    %s408 = sphi 0, %s407
    %s422 = sphi 0, %s408
    %s426 = sphi 0, %s426
    %s428 = sphi 0, %s426
    %s429 = sphi 0, %s428
    %s443 = sphi 0, %s429
    %s447 = sphi 0, %s447
    %s449 = sphi 0, %s447
    %s450 = sphi 0, %s449
    %s464 = sphi 0, %s450
    %s470 = sphi 0, %s472
    %s473 = sphi 0, %s470
    %s474 = sphi 0, %s473
    %s490 = sphi 0, %s474
    %s496 = sphi 0, %s498
    %s499 = sphi 0, %s496
    %s500 = sphi 0, %s499
    %s516 = sphi 0, %s500
  $region4: #{discriminatorxz_forward.1} parent=0 // loop_header_branch
    %33 = sbr.rel (%p31) target = $region8
  $region5: #{discriminatorxz_forward.1} parent=0 // loop_body
    %s35 = ssub.s32 %s30, 1
    %s36 = ssub.s32 %s30, 2
    %s37 = sadd.s32 %s30, 1
    %s38 = ssub.s32 %s30, %s37
    %p39 = scmp.eq.s32.totalorder %s38, 0
    %s41 = sadd.s32 %s40, 1
    %s42 = scalar_select %p39, %s40, %s41
    %p45 = pneg %p39
    %p46 = scmp.eq.s32.totalorder %s30, 1
    %p47 = por %p45, %p46
    %p48 = scmp.ne.s32.totalorder %s40, %s43
    %p49 = scmp.eq.s32.totalorder %s30, 0
    %p50 = por %p48, %p49
    %p51 = scmp.ne.s32.totalorder %s40, %s43
    %p52 = scmp.eq.s32.totalorder %s35, 1
    %p53 = por %p51, %p52
    %p54 = scmp.ne.s32.totalorder %s43, %s44
    %p55 = scmp.eq.s32.totalorder %s35, 0
    %p56 = por %p54, %p55
    %p57 = scmp.ne.s32.totalorder %s43, %s44
    %p58 = scmp.eq.s32.totalorder %s36, 1
    %p59 = por %p57, %p58
    %p61 = scmp.ne.s32.totalorder %s44, %s60
    %p62 = scmp.eq.s32.totalorder %s36, 0
    %p63 = por %p61, %p62
    %s64 = ssub.s32 %s30, %s37
    %p65 = scmp.eq.s32.totalorder %s64, 0
    %s67 = sadd.s32 %s66, 1
    %s68 = scalar_select %p65, %s66, %s67
    %p71 = pneg %p65
    %p72 = scmp.eq.s32.totalorder %s30, 1
    %p73 = por %p71, %p72
    %p74 = scmp.ne.s32.totalorder %s66, %s69
    %p75 = scmp.eq.s32.totalorder %s30, 0
    %p76 = por %p74, %p75
    %p77 = scmp.ne.s32.totalorder %s66, %s69
    %p78 = scmp.eq.s32.totalorder %s35, 1
    %p79 = por %p77, %p78
    %p80 = scmp.ne.s32.totalorder %s69, %s70
    %p81 = scmp.eq.s32.totalorder %s35, 0
    %p82 = por %p80, %p81
    %p83 = scmp.ne.s32.totalorder %s69, %s70
    %p84 = scmp.eq.s32.totalorder %s36, 1
    %p85 = por %p83, %p84
    %p87 = scmp.ne.s32.totalorder %s70, %s86
    %p88 = scmp.eq.s32.totalorder %s36, 0
    %p89 = por %p87, %p88
    %s91 = sadd.s32 %s90, 1
    %p94 = scmp.eq.s32.totalorder %s30, 1
    %p95 = scmp.ne.s32.totalorder %s90, %s92
    %p96 = scmp.eq.s32.totalorder %s30, 0
    %p97 = por %p95, %p96
    %p98 = scmp.ne.s32.totalorder %s90, %s92
    %p99 = scmp.eq.s32.totalorder %s35, 1
    %p100 = por %p98, %p99
    %p101 = scmp.ne.s32.totalorder %s92, %s93
    %p102 = scmp.eq.s32.totalorder %s35, 0
    %p103 = por %p101, %p102
    %p104 = scmp.ne.s32.totalorder %s92, %s93
    %p105 = scmp.eq.s32.totalorder %s36, 1
    %p106 = por %p104, %p105
    %p108 = scmp.ne.s32.totalorder %s93, %s107
    %p109 = scmp.eq.s32.totalorder %s36, 0
    %p110 = por %p108, %p109
    %s112 = sadd.s32 %s111, 1
    %p115 = scmp.eq.s32.totalorder %s30, 1
    %p116 = scmp.ne.s32.totalorder %s111, %s113
    %p117 = scmp.eq.s32.totalorder %s30, 0
    %p118 = por %p116, %p117
    %p119 = scmp.ne.s32.totalorder %s111, %s113
    %p120 = scmp.eq.s32.totalorder %s35, 1
    %p121 = por %p119, %p120
    %p122 = scmp.ne.s32.totalorder %s113, %s114
    %p123 = scmp.eq.s32.totalorder %s35, 0
    %p124 = por %p122, %p123
    %p125 = scmp.ne.s32.totalorder %s113, %s114
    %p126 = scmp.eq.s32.totalorder %s36, 1
    %p127 = por %p125, %p126
    %p129 = scmp.ne.s32.totalorder %s114, %s128
    %p130 = scmp.eq.s32.totalorder %s36, 0
    %p131 = por %p129, %p130
    %s133 = sadd.s32 %s132, 1
    %p136 = scmp.eq.s32.totalorder %s30, 1
    %p137 = scmp.ne.s32.totalorder %s132, %s134
    %p138 = scmp.eq.s32.totalorder %s30, 0
    %p139 = por %p137, %p138
    %p140 = scmp.ne.s32.totalorder %s132, %s134
    %p141 = scmp.eq.s32.totalorder %s35, 1
    %p142 = por %p140, %p141
    %p143 = scmp.ne.s32.totalorder %s134, %s135
    %p144 = scmp.eq.s32.totalorder %s35, 0
    %p145 = por %p143, %p144
    %p146 = scmp.ne.s32.totalorder %s134, %s135
    %p147 = scmp.eq.s32.totalorder %s36, 1
    %p148 = por %p146, %p147
    %p150 = scmp.ne.s32.totalorder %s135, %s149
    %p151 = scmp.eq.s32.totalorder %s36, 0
    %p152 = por %p150, %p151
    %s154 = sadd.s32 %s153, 1
    %p157 = scmp.eq.s32.totalorder %s30, 1
    %p158 = scmp.ne.s32.totalorder %s153, %s155
    %p159 = scmp.eq.s32.totalorder %s30, 0
    %p160 = por %p158, %p159
    %p161 = scmp.ne.s32.totalorder %s153, %s155
    %p162 = scmp.eq.s32.totalorder %s35, 1
    %p163 = por %p161, %p162
    %p164 = scmp.ne.s32.totalorder %s155, %s156
    %p165 = scmp.eq.s32.totalorder %s35, 0
    %p166 = por %p164, %p165
    %p167 = scmp.ne.s32.totalorder %s155, %s156
    %p168 = scmp.eq.s32.totalorder %s36, 1
    %p169 = por %p167, %p168
    %p171 = scmp.ne.s32.totalorder %s156, %s170
    %p172 = scmp.eq.s32.totalorder %s36, 0
    %p173 = por %p171, %p172
    %s175 = sadd.s32 %s174, 1
    %p178 = scmp.eq.s32.totalorder %s30, 1
    %p179 = scmp.ne.s32.totalorder %s174, %s176
    %p180 = scmp.eq.s32.totalorder %s30, 0
    %p181 = por %p179, %p180
    %p182 = scmp.ne.s32.totalorder %s174, %s176
    %p183 = scmp.eq.s32.totalorder %s35, 1
    %p184 = por %p182, %p183
    %p185 = scmp.ne.s32.totalorder %s176, %s177
    %p186 = scmp.eq.s32.totalorder %s35, 0
    %p187 = por %p185, %p186
    %p188 = scmp.ne.s32.totalorder %s176, %s177
    %p189 = scmp.eq.s32.totalorder %s36, 1
    %p190 = por %p188, %p189
    %p192 = scmp.ne.s32.totalorder %s177, %s191
    %p193 = scmp.eq.s32.totalorder %s36, 0
    %p194 = por %p192, %p193
    %s196 = sadd.s32 %s195, 1
    %p199 = scmp.eq.s32.totalorder %s30, 1
    %p200 = scmp.ne.s32.totalorder %s195, %s197
    %p201 = scmp.eq.s32.totalorder %s30, 0
    %p202 = por %p200, %p201
    %p203 = scmp.ne.s32.totalorder %s195, %s197
    %p204 = scmp.eq.s32.totalorder %s35, 1
    %p205 = por %p203, %p204
    %p206 = scmp.ne.s32.totalorder %s197, %s198
    %p207 = scmp.eq.s32.totalorder %s35, 0
    %p208 = por %p206, %p207
    %p209 = scmp.ne.s32.totalorder %s197, %s198
    %p210 = scmp.eq.s32.totalorder %s36, 1
    %p211 = por %p209, %p210
    %p213 = scmp.ne.s32.totalorder %s198, %s212
    %p214 = scmp.eq.s32.totalorder %s36, 0
    %p215 = por %p213, %p214
    %s217 = sadd.s32 %s216, 1
    %p220 = scmp.eq.s32.totalorder %s30, 1
    %p221 = scmp.ne.s32.totalorder %s216, %s218
    %p222 = scmp.eq.s32.totalorder %s30, 0
    %p223 = por %p221, %p222
    %p224 = scmp.ne.s32.totalorder %s216, %s218
    %p225 = scmp.eq.s32.totalorder %s35, 1
    %p226 = por %p224, %p225
    %p227 = scmp.ne.s32.totalorder %s218, %s219
    %p228 = scmp.eq.s32.totalorder %s35, 0
    %p229 = por %p227, %p228
    %p230 = scmp.ne.s32.totalorder %s218, %s219
    %p231 = scmp.eq.s32.totalorder %s36, 1
    %p232 = por %p230, %p231
    %p234 = scmp.ne.s32.totalorder %s219, %s233
    %p235 = scmp.eq.s32.totalorder %s36, 0
    %p236 = por %p234, %p235
    %s238 = sadd.s32 %s237, 1
    %p241 = scmp.eq.s32.totalorder %s30, 1
    %p242 = scmp.ne.s32.totalorder %s237, %s239
    %p243 = scmp.eq.s32.totalorder %s30, 0
    %p244 = por %p242, %p243
    %p245 = scmp.ne.s32.totalorder %s237, %s239
    %p246 = scmp.eq.s32.totalorder %s35, 1
    %p247 = por %p245, %p246
    %p248 = scmp.ne.s32.totalorder %s239, %s240
    %p249 = scmp.eq.s32.totalorder %s35, 0
    %p250 = por %p248, %p249
    %p251 = scmp.ne.s32.totalorder %s239, %s240
    %p252 = scmp.eq.s32.totalorder %s36, 1
    %p253 = por %p251, %p252
    %p255 = scmp.ne.s32.totalorder %s240, %s254
    %p256 = scmp.eq.s32.totalorder %s36, 0
    %p257 = por %p255, %p256
    %s259 = sadd.s32 %s258, 1
    %p262 = scmp.eq.s32.totalorder %s30, 1
    %p263 = scmp.ne.s32.totalorder %s258, %s260
    %p264 = scmp.eq.s32.totalorder %s30, 0
    %p265 = por %p263, %p264
    %p266 = scmp.ne.s32.totalorder %s258, %s260
    %p267 = scmp.eq.s32.totalorder %s35, 1
    %p268 = por %p266, %p267
    %p269 = scmp.ne.s32.totalorder %s260, %s261
    %p270 = scmp.eq.s32.totalorder %s35, 0
    %p271 = por %p269, %p270
    %p272 = scmp.ne.s32.totalorder %s260, %s261
    %p273 = scmp.eq.s32.totalorder %s36, 1
    %p274 = por %p272, %p273
    %p276 = scmp.ne.s32.totalorder %s261, %s275
    %p277 = scmp.eq.s32.totalorder %s36, 0
    %p278 = por %p276, %p277
    %s280 = sadd.s32 %s279, 1
    %p283 = scmp.eq.s32.totalorder %s30, 1
    %p284 = scmp.ne.s32.totalorder %s279, %s281
    %p285 = scmp.eq.s32.totalorder %s30, 0
    %p286 = por %p284, %p285
    %p287 = scmp.ne.s32.totalorder %s279, %s281
    %p288 = scmp.eq.s32.totalorder %s35, 1
    %p289 = por %p287, %p288
    %p290 = scmp.ne.s32.totalorder %s281, %s282
    %p291 = scmp.eq.s32.totalorder %s35, 0
    %p292 = por %p290, %p291
    %p293 = scmp.ne.s32.totalorder %s281, %s282
    %p294 = scmp.eq.s32.totalorder %s36, 1
    %p295 = por %p293, %p294
    %p297 = scmp.ne.s32.totalorder %s282, %s296
    %p298 = scmp.eq.s32.totalorder %s36, 0
    %p299 = por %p297, %p298
    %s301 = sadd.s32 %s300, 1
    %p304 = scmp.eq.s32.totalorder %s30, 1
    %p305 = scmp.ne.s32.totalorder %s300, %s302
    %p306 = scmp.eq.s32.totalorder %s30, 0
    %p307 = por %p305, %p306
    %p308 = scmp.ne.s32.totalorder %s300, %s302
    %p309 = scmp.eq.s32.totalorder %s35, 1
    %p310 = por %p308, %p309
    %p311 = scmp.ne.s32.totalorder %s302, %s303
    %p312 = scmp.eq.s32.totalorder %s35, 0
    %p313 = por %p311, %p312
    %p314 = scmp.ne.s32.totalorder %s302, %s303
    %p315 = scmp.eq.s32.totalorder %s36, 1
    %p316 = por %p314, %p315
    %p318 = scmp.ne.s32.totalorder %s303, %s317
    %p319 = scmp.eq.s32.totalorder %s36, 0
    %p320 = por %p318, %p319
    %s322 = sadd.s32 %s321, 1
    %p325 = scmp.eq.s32.totalorder %s30, 1
    %p326 = scmp.ne.s32.totalorder %s321, %s323
    %p327 = scmp.eq.s32.totalorder %s30, 0
    %p328 = por %p326, %p327
    %p329 = scmp.ne.s32.totalorder %s321, %s323
    %p330 = scmp.eq.s32.totalorder %s35, 1
    %p331 = por %p329, %p330
    %p332 = scmp.ne.s32.totalorder %s323, %s324
    %p333 = scmp.eq.s32.totalorder %s35, 0
    %p334 = por %p332, %p333
    %p335 = scmp.ne.s32.totalorder %s323, %s324
    %p336 = scmp.eq.s32.totalorder %s36, 1
    %p337 = por %p335, %p336
    %p339 = scmp.ne.s32.totalorder %s324, %s338
    %p340 = scmp.eq.s32.totalorder %s36, 0
    %p341 = por %p339, %p340
    %s343 = sadd.s32 %s342, 1
    %p346 = scmp.eq.s32.totalorder %s30, 1
    %p347 = scmp.ne.s32.totalorder %s342, %s344
    %p348 = scmp.eq.s32.totalorder %s30, 0
    %p349 = por %p347, %p348
    %p350 = scmp.ne.s32.totalorder %s342, %s344
    %p351 = scmp.eq.s32.totalorder %s35, 1
    %p352 = por %p350, %p351
    %p353 = scmp.ne.s32.totalorder %s344, %s345
    %p354 = scmp.eq.s32.totalorder %s35, 0
    %p355 = por %p353, %p354
    %p356 = scmp.ne.s32.totalorder %s344, %s345
    %p357 = scmp.eq.s32.totalorder %s36, 1
    %p358 = por %p356, %p357
    %p360 = scmp.ne.s32.totalorder %s345, %s359
    %p361 = scmp.eq.s32.totalorder %s36, 0
    %p362 = por %p360, %p361
    %s364 = sadd.s32 %s363, 1
    %p367 = scmp.eq.s32.totalorder %s30, 1
    %p368 = scmp.ne.s32.totalorder %s363, %s365
    %p369 = scmp.eq.s32.totalorder %s30, 0
    %p370 = por %p368, %p369
    %p371 = scmp.ne.s32.totalorder %s363, %s365
    %p372 = scmp.eq.s32.totalorder %s35, 1
    %p373 = por %p371, %p372
    %p374 = scmp.ne.s32.totalorder %s365, %s366
    %p375 = scmp.eq.s32.totalorder %s35, 0
    %p376 = por %p374, %p375
    %p377 = scmp.ne.s32.totalorder %s365, %s366
    %p378 = scmp.eq.s32.totalorder %s36, 1
    %p379 = por %p377, %p378
    %p381 = scmp.ne.s32.totalorder %s366, %s380
    %p382 = scmp.eq.s32.totalorder %s36, 0
    %p383 = por %p381, %p382
    %s385 = sadd.s32 %s384, 1
    %p388 = scmp.eq.s32.totalorder %s30, 1
    %p389 = scmp.ne.s32.totalorder %s384, %s386
    %p390 = scmp.eq.s32.totalorder %s30, 0
    %p391 = por %p389, %p390
    %p392 = scmp.ne.s32.totalorder %s384, %s386
    %p393 = scmp.eq.s32.totalorder %s35, 1
    %p394 = por %p392, %p393
    %p395 = scmp.ne.s32.totalorder %s386, %s387
    %p396 = scmp.eq.s32.totalorder %s35, 0
    %p397 = por %p395, %p396
    %p398 = scmp.ne.s32.totalorder %s386, %s387
    %p399 = scmp.eq.s32.totalorder %s36, 1
    %p400 = por %p398, %p399
    %p402 = scmp.ne.s32.totalorder %s387, %s401
    %p403 = scmp.eq.s32.totalorder %s36, 0
    %p404 = por %p402, %p403
    %s406 = sadd.s32 %s405, 1
    %p409 = scmp.eq.s32.totalorder %s30, 1
    %p410 = scmp.ne.s32.totalorder %s405, %s407
    %p411 = scmp.eq.s32.totalorder %s30, 0
    %p412 = por %p410, %p411
    %p413 = scmp.ne.s32.totalorder %s405, %s407
    %p414 = scmp.eq.s32.totalorder %s35, 1
    %p415 = por %p413, %p414
    %p416 = scmp.ne.s32.totalorder %s407, %s408
    %p417 = scmp.eq.s32.totalorder %s35, 0
    %p418 = por %p416, %p417
    %p419 = scmp.ne.s32.totalorder %s407, %s408
    %p420 = scmp.eq.s32.totalorder %s36, 1
    %p421 = por %p419, %p420
    %p423 = scmp.ne.s32.totalorder %s408, %s422
    %p424 = scmp.eq.s32.totalorder %s36, 0
    %p425 = por %p423, %p424
    %s427 = sadd.s32 %s426, 1
    %p430 = scmp.eq.s32.totalorder %s30, 1
    %p431 = scmp.ne.s32.totalorder %s426, %s428
    %p432 = scmp.eq.s32.totalorder %s30, 0
    %p433 = por %p431, %p432
    %p434 = scmp.ne.s32.totalorder %s426, %s428
    %p435 = scmp.eq.s32.totalorder %s35, 1
    %p436 = por %p434, %p435
    %p437 = scmp.ne.s32.totalorder %s428, %s429
    %p438 = scmp.eq.s32.totalorder %s35, 0
    %p439 = por %p437, %p438
    %p440 = scmp.ne.s32.totalorder %s428, %s429
    %p441 = scmp.eq.s32.totalorder %s36, 1
    %p442 = por %p440, %p441
    %p444 = scmp.ne.s32.totalorder %s429, %s443
    %p445 = scmp.eq.s32.totalorder %s36, 0
    %p446 = por %p444, %p445
    %s448 = sadd.s32 %s447, 1
    %p451 = scmp.eq.s32.totalorder %s30, 1
    %p452 = scmp.ne.s32.totalorder %s447, %s449
    %p453 = scmp.eq.s32.totalorder %s30, 0
    %p454 = por %p452, %p453
    %p455 = scmp.ne.s32.totalorder %s447, %s449
    %p456 = scmp.eq.s32.totalorder %s35, 1
    %p457 = por %p455, %p456
    %p458 = scmp.ne.s32.totalorder %s449, %s450
    %p459 = scmp.eq.s32.totalorder %s35, 0
    %p460 = por %p458, %p459
    %p461 = scmp.ne.s32.totalorder %s449, %s450
    %p462 = scmp.eq.s32.totalorder %s36, 1
    %p463 = por %p461, %p462
    %p465 = scmp.ne.s32.totalorder %s450, %s464
    %p466 = scmp.eq.s32.totalorder %s36, 0
    %p467 = por %p465, %p466
    %s468 = ssub.s32 %s30, %s37
    %p469 = scmp.eq.s32.totalorder %s468, 0
    %s471 = sadd.s32 %s470, 1
    %s472 = scalar_select %p469, %s470, %s471
    %p475 = pneg %p469
    %p476 = scmp.eq.s32.totalorder %s30, 1
    %p477 = por %p475, %p476
    %p478 = scmp.ne.s32.totalorder %s470, %s473
    %p479 = scmp.eq.s32.totalorder %s30, 0
    %p480 = por %p478, %p479
    %p481 = scmp.ne.s32.totalorder %s470, %s473
    %p482 = scmp.eq.s32.totalorder %s35, 1
    %p483 = por %p481, %p482
    %p484 = scmp.ne.s32.totalorder %s473, %s474
    %p485 = scmp.eq.s32.totalorder %s35, 0
    %p486 = por %p484, %p485
    %p487 = scmp.ne.s32.totalorder %s473, %s474
    %p488 = scmp.eq.s32.totalorder %s36, 1
    %p489 = por %p487, %p488
    %p491 = scmp.ne.s32.totalorder %s474, %s490
    %p492 = scmp.eq.s32.totalorder %s36, 0
    %p493 = por %p491, %p492
    %s494 = ssub.s32 %s30, %s37
    %p495 = scmp.eq.s32.totalorder %s494, 0
    %s497 = sadd.s32 %s496, 1
    %s498 = scalar_select %p495, %s496, %s497
    %p501 = pneg %p495
    %p502 = scmp.eq.s32.totalorder %s30, 1
    %p503 = por %p501, %p502
    %p504 = scmp.ne.s32.totalorder %s496, %s499
    %p505 = scmp.eq.s32.totalorder %s30, 0
    %p506 = por %p504, %p505
    %p507 = scmp.ne.s32.totalorder %s496, %s499
    %p508 = scmp.eq.s32.totalorder %s35, 1
    %p509 = por %p507, %p508
    %p510 = scmp.ne.s32.totalorder %s499, %s500
    %p511 = scmp.eq.s32.totalorder %s35, 0
    %p512 = por %p510, %p511
    %p513 = scmp.ne.s32.totalorder %s499, %s500
    %p514 = scmp.eq.s32.totalorder %s36, 1
    %p515 = por %p513, %p514
    %p517 = scmp.ne.s32.totalorder %s500, %s516
    %p518 = scmp.eq.s32.totalorder %s36, 0
    %p519 = por %p517, %p518
    %p520 = scmp.le.s32.totalorder 1, %s30
    %p521 = scmp.lt.s32.totalorder %s30, 3
    %p522 = pnand %p520, %p521
    %p523 = pneg %p522
    // Predicated region
    $region9: #{discriminatorxz_forward.1} parent=5 // pred_check
      _
    $region10: #{discriminatorxz_forward.1} parent=5 // pred_check_branch
      %525 = sbr.rel (%p522) target = $region12
    $region11: #{discriminatorxz_forward.1} parent=5 // pred_region
      %s526 = ssub.s32 %s30, 1
      // Predicated region
      $region13: #{discriminatorxz_forward.1} parent=11 // pred_check
        %p527 = pneg %p103
      $region14: #{discriminatorxz_forward.1} parent=11 // pred_check_branch
        %529 = sbr.rel (%p527) target = $region16
      $region15: #{discriminatorxz_forward.1} parent=11 // pred_region
        _
      $region16: #{discriminatorxz_forward.1} parent=11 // pred_fallthru
        _
      // Predicated region
      $region17: #{discriminatorxz_forward.1} parent=11 // pred_check
        %p530 = pneg %p124
      $region18: #{discriminatorxz_forward.1} parent=11 // pred_check_branch
        %532 = sbr.rel (%p530) target = $region20
      $region19: #{discriminatorxz_forward.1} parent=11 // pred_region
        _
      $region20: #{discriminatorxz_forward.1} parent=11 // pred_fallthru
        _
      // Predicated region
      $region21: #{discriminatorxz_forward.1} parent=11 // pred_check
        %p533 = pneg %p145
      $region22: #{discriminatorxz_forward.1} parent=11 // pred_check_branch
        %535 = sbr.rel (%p533) target = $region24
      $region23: #{discriminatorxz_forward.1} parent=11 // pred_region
        _
      $region24: #{discriminatorxz_forward.1} parent=11 // pred_fallthru
        _
      // Predicated region
      $region25: #{discriminatorxz_forward.1} parent=11 // pred_check
        %p536 = pneg %p166
      $region26: #{discriminatorxz_forward.1} parent=11 // pred_check_branch
        %538 = sbr.rel (%p536) target = $region28
      $region27: #{discriminatorxz_forward.1} parent=11 // pred_region
        _
      $region28: #{discriminatorxz_forward.1} parent=11 // pred_fallthru
        _
      // Predicated region
      $region29: #{discriminatorxz_forward.1} parent=11 // pred_check
        %p539 = pneg %p187
      $region30: #{discriminatorxz_forward.1} parent=11 // pred_check_branch
        %541 = sbr.rel (%p539) target = $region32
      $region31: #{discriminatorxz_forward.1} parent=11 // pred_region
        _
      $region32: #{discriminatorxz_forward.1} parent=11 // pred_fallthru
        _
      // Predicated region
      $region33: #{discriminatorxz_forward.1} parent=11 // pred_check
        %p542 = pneg %p208
      $region34: #{discriminatorxz_forward.1} parent=11 // pred_check_branch
        %544 = sbr.rel (%p542) target = $region36
      $region35: #{discriminatorxz_forward.1} parent=11 // pred_region
        _
      $region36: #{discriminatorxz_forward.1} parent=11 // pred_fallthru
        _
      // Predicated region
      $region37: #{discriminatorxz_forward.1} parent=11 // pred_check
        %p545 = pneg %p229
      $region38: #{discriminatorxz_forward.1} parent=11 // pred_check_branch
        %547 = sbr.rel (%p545) target = $region40
      $region39: #{discriminatorxz_forward.1} parent=11 // pred_region
        _
      $region40: #{discriminatorxz_forward.1} parent=11 // pred_fallthru
        _
      // Predicated region
      $region41: #{discriminatorxz_forward.1} parent=11 // pred_check
        %p548 = pneg %p250
      $region42: #{discriminatorxz_forward.1} parent=11 // pred_check_branch
        %550 = sbr.rel (%p548) target = $region44
      $region43: #{discriminatorxz_forward.1} parent=11 // pred_region
        _
      $region44: #{discriminatorxz_forward.1} parent=11 // pred_fallthru
        _
      // Predicated region
      $region45: #{discriminatorxz_forward.1} parent=11 // pred_check
        %p551 = pneg %p271
      $region46: #{discriminatorxz_forward.1} parent=11 // pred_check_branch
        %553 = sbr.rel (%p551) target = $region48
      $region47: #{discriminatorxz_forward.1} parent=11 // pred_region
        _
      $region48: #{discriminatorxz_forward.1} parent=11 // pred_fallthru
        _
      // Predicated region
      $region49: #{discriminatorxz_forward.1} parent=11 // pred_check
        %p554 = pneg %p292
      $region50: #{discriminatorxz_forward.1} parent=11 // pred_check_branch
        %556 = sbr.rel (%p554) target = $region52
      $region51: #{discriminatorxz_forward.1} parent=11 // pred_region
        _
      $region52: #{discriminatorxz_forward.1} parent=11 // pred_fallthru
        _
      // Predicated region
      $region53: #{discriminatorxz_forward.1} parent=11 // pred_check
        %p557 = pneg %p313
      $region54: #{discriminatorxz_forward.1} parent=11 // pred_check_branch
        %559 = sbr.rel (%p557) target = $region56
      $region55: #{discriminatorxz_forward.1} parent=11 // pred_region
        _
      $region56: #{discriminatorxz_forward.1} parent=11 // pred_fallthru
        _
      // Predicated region
      $region57: #{discriminatorxz_forward.1} parent=11 // pred_check
        %p560 = pneg %p334
      $region58: #{discriminatorxz_forward.1} parent=11 // pred_check_branch
        %562 = sbr.rel (%p560) target = $region60
      $region59: #{discriminatorxz_forward.1} parent=11 // pred_region
        _
      $region60: #{discriminatorxz_forward.1} parent=11 // pred_fallthru
        _
      // Predicated region
      $region61: #{discriminatorxz_forward.1} parent=11 // pred_check
        %p563 = pneg %p355
      $region62: #{discriminatorxz_forward.1} parent=11 // pred_check_branch
        %565 = sbr.rel (%p563) target = $region64
      $region63: #{discriminatorxz_forward.1} parent=11 // pred_region
        _
      $region64: #{discriminatorxz_forward.1} parent=11 // pred_fallthru
        _
      // Predicated region
      $region65: #{discriminatorxz_forward.1} parent=11 // pred_check
        %p566 = pneg %p376
      $region66: #{discriminatorxz_forward.1} parent=11 // pred_check_branch
        %568 = sbr.rel (%p566) target = $region68
      $region67: #{discriminatorxz_forward.1} parent=11 // pred_region
        _
      $region68: #{discriminatorxz_forward.1} parent=11 // pred_fallthru
        _
      // Predicated region
      $region69: #{discriminatorxz_forward.1} parent=11 // pred_check
        %p569 = pneg %p397
      $region70: #{discriminatorxz_forward.1} parent=11 // pred_check_branch
        %571 = sbr.rel (%p569) target = $region72
      $region71: #{discriminatorxz_forward.1} parent=11 // pred_region
        _
      $region72: #{discriminatorxz_forward.1} parent=11 // pred_fallthru
        _
      // Predicated region
      $region73: #{discriminatorxz_forward.1} parent=11 // pred_check
        %p572 = pneg %p418
      $region74: #{discriminatorxz_forward.1} parent=11 // pred_check_branch
        %574 = sbr.rel (%p572) target = $region76
      $region75: #{discriminatorxz_forward.1} parent=11 // pred_region
        _
      $region76: #{discriminatorxz_forward.1} parent=11 // pred_fallthru
        _
      // Predicated region
      $region77: #{discriminatorxz_forward.1} parent=11 // pred_check
        %p575 = pneg %p439
      $region78: #{discriminatorxz_forward.1} parent=11 // pred_check_branch
        %577 = sbr.rel (%p575) target = $region80
      $region79: #{discriminatorxz_forward.1} parent=11 // pred_region
        _
      $region80: #{discriminatorxz_forward.1} parent=11 // pred_fallthru
        _
      // Predicated region
      $region81: #{discriminatorxz_forward.1} parent=11 // pred_check
        %p578 = pneg %p460
      $region82: #{discriminatorxz_forward.1} parent=11 // pred_check_branch
        %580 = sbr.rel (%p578) target = $region84
      $region83: #{discriminatorxz_forward.1} parent=11 // pred_region
        _
      $region84: #{discriminatorxz_forward.1} parent=11 // pred_fallthru
        _
    $region12: #{discriminatorxz_forward.1} parent=5 // pred_fallthru
      _
    %p581 = scmp.lt.s32.totalorder %s30, 2
    // Predicated region
    $region85: #{discriminatorxz_forward.1} parent=5 // pred_check
      %p582 = pneg %p581
    $region86: #{discriminatorxz_forward.1} parent=5 // pred_check_branch
      %584 = sbr.rel (%p582) target = $region88
    $region87: #{discriminatorxz_forward.1} parent=5 // pred_region
      // Predicated region
      $region89: #{discriminatorxz_forward.1} parent=87 // pred_check
        %p585 = pneg %p50
      $region90: #{discriminatorxz_forward.1} parent=87 // pred_check_branch
        %587 = sbr.rel (%p585) target = $region92
      $region91: #{discriminatorxz_forward.1} parent=87 // pred_region
        %p588 = scmp.lt.s32.totalorder %s30, 1
        %s589 = scalar_select %p588, %s30, 1
        %s590 = smul.addr %s589, 32
        %s591 = smul.addr %s590, 4
        %s592 = scalar_lea.vmem %s0, %s591
      $region92: #{discriminatorxz_forward.1} parent=87 // pred_fallthru
        _
      // Predicated region
      $region93: #{discriminatorxz_forward.1} parent=87 // pred_check
        %p593 = pneg %p76
      $region94: #{discriminatorxz_forward.1} parent=87 // pred_check_branch
        %595 = sbr.rel (%p593) target = $region96
      $region95: #{discriminatorxz_forward.1} parent=87 // pred_region
        %p596 = scmp.lt.s32.totalorder %s30, 1
        %s597 = scalar_select %p596, %s30, 1
        %s598 = scalar_lea.vmem %s1, %s597
      $region96: #{discriminatorxz_forward.1} parent=87 // pred_fallthru
        _
    $region88: #{discriminatorxz_forward.1} parent=5 // pred_fallthru
      _
    %p599 = scmp.le.s32.totalorder 1, %s30
    %p600 = scmp.lt.s32.totalorder %s30, 3
    %p601 = pnand %p599, %p600
    %p602 = pneg %p601
    // Predicated region
    $region97: #{discriminatorxz_forward.1} parent=5 // pred_check
      _
    $region98: #{discriminatorxz_forward.1} parent=5 // pred_check_branch
      %604 = sbr.rel (%p601) target = $region100
    $region99: #{discriminatorxz_forward.1} parent=5 // pred_region
      %s605 = ssub.s32 %s30, 1
      %p606 = scmp.lt.s32.totalorder %s35, 1
      %s607 = scalar_select %p606, %s35, 1
      %s608 = smul.addr %s607, 32
      %s609 = smul.addr %s608, 4
      %s610 = scalar_lea.vmem %s0, %s609
      %p611 = pneg %p56
      %p612 = pneg %p53
      %p613 = scmp.lt.s32.totalorder %s35, 1
      %s614 = scalar_select %p613, %s35, 1
      %s615 = scalar_lea.vmem %s1, %s614
      %p616 = pneg %p82
      %p617 = pneg %p79
      %p618 = pneg %p103
      %p619 = pneg %p100
      %p620 = pneg %p124
      %p621 = pneg %p121
      %p622 = pneg %p145
      %p623 = pneg %p142
      %p624 = pneg %p166
      %p625 = pneg %p163
      %p626 = pneg %p187
      %p627 = pneg %p184
      %p628 = pneg %p208
      %p629 = pneg %p205
      %p630 = pneg %p229
      %p631 = pneg %p226
      %p632 = pneg %p250
      %p633 = pneg %p247
      %p634 = pneg %p271
      %p635 = pneg %p268
      %p636 = pneg %p292
      %p637 = pneg %p289
      %p638 = pneg %p313
      %p639 = pneg %p310
      %p640 = pneg %p334
      %p641 = pneg %p331
      %p642 = pneg %p355
      %p643 = pneg %p352
      %p644 = pneg %p376
      %p645 = pneg %p373
      %p646 = pneg %p397
      %p647 = pneg %p394
      %p648 = pneg %p418
      %p649 = pneg %p415
      %p650 = pneg %p439
      %p651 = pneg %p436
      %p652 = pneg %p460
      %p653 = pneg %p457
      %p654 = pneg %p486
      %p655 = pneg %p483
      %p656 = scmp.lt.s32.totalorder %s35, 1
      %s657 = scalar_select %p656, %s35, 1
      %s658 = smul.addr %s657, 8
      %s659 = scalar_lea.vmem %s20, %s658
      %p660 = pneg %p512
      %p661 = pneg %p509
      %p662 = scmp.lt.s32.totalorder %s35, 1
      %s663 = scalar_select %p662, %s35, 1
      %s664 = scalar_lea.vmem %s21, %s663
      %p665 = scmp.lt.s32.totalorder %s35, 1
      %s666 = scalar_select %p665, %s35, 1
      %s667 = smul.addr %s666, 32
      %s668 = smul.addr %s667, 4
      %s669 = scalar_lea.vmem %s0, %s668
      %p670 = scmp.lt.s32.totalorder %s35, 1
      %s671 = scalar_select %p670, %s35, 1
      %s672 = scalar_lea.vmem %s1, %s671
      %p673 = scmp.lt.s32.totalorder %s35, 1
      %s674 = scalar_select %p673, %s35, 1
      %s675 = smul.addr %s674, 8
      %s676 = scalar_lea.vmem %s20, %s675
      %p677 = scmp.lt.s32.totalorder %s35, 1
      %s678 = scalar_select %p677, %s35, 1
      %s679 = scalar_lea.vmem %s21, %s678
      %v681 = vld [vmem:[%s669] sm:$0xf]
      %v682 = vld [vmem:[%s669 + $0x4] sm:$0xf]
      %v683 = vld [vmem:[%s669 + $0x8] sm:$0xf]
      %v684 = vld [vmem:[%s669 + $0xc] sm:$0xf]
      %v685 = vld [vmem:[%s669 + $0x10] sm:$0xf]
      %v686 = vld [vmem:[%s669 + $0x14] sm:$0xf]
      %v687 = vld [vmem:[%s669 + $0x18] sm:$0xf]
      %v688 = vld [vmem:[%s669 + $0x1c] sm:$0xf]
      %v689 = vld [vmem:[%s669 + $0x20] sm:$0xf]
      %v690 = vld [vmem:[%s669 + $0x24] sm:$0xf]
      %v691 = vld [vmem:[%s669 + $0x28] sm:$0xf]
      %v692 = vld [vmem:[%s669 + $0x2c] sm:$0xf]
      %v693 = vld [vmem:[%s669 + $0x30] sm:$0xf]
      %v694 = vld [vmem:[%s669 + $0x34] sm:$0xf]
      %v695 = vld [vmem:[%s669 + $0x38] sm:$0xf]
      %v696 = vld [vmem:[%s669 + $0x3c] sm:$0xf]
      %v697 = vld [vmem:[%s669 + $0x40] sm:$0xf]
      %v698 = vld [vmem:[%s669 + $0x44] sm:$0xf]
      %v699 = vld [vmem:[%s669 + $0x48] sm:$0xf]
      %v700 = vld [vmem:[%s669 + $0x4c] sm:$0xf]
      %v701 = vld [vmem:[%s669 + $0x50] sm:$0xf]
      %v702 = vld [vmem:[%s669 + $0x54] sm:$0xf]
      %v703 = vld [vmem:[%s669 + $0x58] sm:$0xf]
      %v704 = vld [vmem:[%s669 + $0x5c] sm:$0xf]
      %v705 = vld [vmem:[%s669 + $0x60] sm:$0xf]
      %v706 = vld [vmem:[%s669 + $0x64] sm:$0xf]
      %v707 = vld [vmem:[%s669 + $0x68] sm:$0xf]
      %v708 = vld [vmem:[%s669 + $0x6c] sm:$0xf]
      %v709 = vld [vmem:[%s669 + $0x70] sm:$0xf]
      %v710 = vld [vmem:[%s669 + $0x74] sm:$0xf]
      %v711 = vld [vmem:[%s669 + $0x78] sm:$0xf]
      %v712 = vld [vmem:[%s669 + $0x7c] sm:$0xf]
      %v713 = vld [vmem:[%s2] sm:$0xf]
      %v714 = vld [vmem:[%s2 + $0x4] sm:$0xf]
      %v715 = vld [vmem:[%s2 + $0x8] sm:$0xf]
      %v716 = vld [vmem:[%s2 + $0xc] sm:$0xf]
      %v717 = vld [vmem:[%s2 + $0x10] sm:$0xf]
      %v718 = vld [vmem:[%s2 + $0x14] sm:$0xf]
      %v719 = vld [vmem:[%s2 + $0x18] sm:$0xf]
      %v720 = vld [vmem:[%s2 + $0x1c] sm:$0xf]
      %v721 = vld [vmem:[%s2 + $0x20] sm:$0xf]
      %v722 = vld [vmem:[%s2 + $0x24] sm:$0xf]
      %v723 = vld [vmem:[%s2 + $0x28] sm:$0xf]
      %v724 = vld [vmem:[%s2 + $0x2c] sm:$0xf]
      %v725 = vld [vmem:[%s2 + $0x30] sm:$0xf]
      %v726 = vld [vmem:[%s2 + $0x34] sm:$0xf]
      %v727 = vld [vmem:[%s2 + $0x38] sm:$0xf]
      %v728 = vld [vmem:[%s2 + $0x3c] sm:$0xf]
      %v729 = vld [vmem:[%s3] sm:$0x1]
      %v731 = vlaneseq
      %v732 = vshrl.u32 %v731, 7
      %v733 = vsub.s32 0, %v732
      %v734 = vrot.slane %v729, %v733
      %v768 = vunpack.c.l.b16 %v681
      %v769 = vunpack.c.l.b16 %v682
      %v770 = vunpack.c.l.b16 %v683
      %v771 = vunpack.c.l.b16 %v684
      %v772 = vunpack.c.l.b16 %v685
      %v773 = vunpack.c.l.b16 %v686
      %v774 = vunpack.c.l.b16 %v687
      %v775 = vunpack.c.l.b16 %v688
      %v776 = vunpack.c.l.b16 %v689
      %v777 = vunpack.c.l.b16 %v690
      %v778 = vunpack.c.l.b16 %v691
      %v779 = vunpack.c.l.b16 %v692
      %v780 = vunpack.c.l.b16 %v693
      %v781 = vunpack.c.l.b16 %v694
      %v782 = vunpack.c.l.b16 %v695
      %v783 = vunpack.c.l.b16 %v696
      %v784 = vunpack.c.l.b16 %v697
      %v785 = vunpack.c.l.b16 %v698
      %v786 = vunpack.c.l.b16 %v699
      %v787 = vunpack.c.l.b16 %v700
      %v788 = vunpack.c.l.b16 %v701
      %v789 = vunpack.c.l.b16 %v702
      %v790 = vunpack.c.l.b16 %v703
      %v791 = vunpack.c.l.b16 %v704
      %v792 = vunpack.c.l.b16 %v705
      %v793 = vunpack.c.l.b16 %v706
      %v794 = vunpack.c.l.b16 %v707
      %v795 = vunpack.c.l.b16 %v708
      %v796 = vunpack.c.l.b16 %v709
      %v797 = vunpack.c.l.b16 %v710
      %v798 = vunpack.c.l.b16 %v711
      %v799 = vunpack.c.l.b16 %v712
      %v800 = vpack.c.b16 %v769, %v768
      %v801 = vpack.c.b16 %v771, %v770
      %v802 = vpack.c.b16 %v773, %v772
      %v803 = vpack.c.b16 %v775, %v774
      %v804 = vpack.c.b16 %v777, %v776
      %v805 = vpack.c.b16 %v779, %v778
      %v806 = vpack.c.b16 %v781, %v780
      %v807 = vpack.c.b16 %v783, %v782
      %v808 = vpack.c.b16 %v785, %v784
      %v809 = vpack.c.b16 %v787, %v786
      %v810 = vpack.c.b16 %v789, %v788
      %v811 = vpack.c.b16 %v791, %v790
      %v812 = vpack.c.b16 %v793, %v792
      %v813 = vpack.c.b16 %v795, %v794
      %v814 = vpack.c.b16 %v797, %v796
      %v815 = vpack.c.b16 %v799, %v798
      %v848 = vunpack.c.l.b16 %v713
      %v849 = vunpack.c.l.b16 %v714
      %v850 = vunpack.c.l.b16 %v715
      %v851 = vunpack.c.l.b16 %v716
      %v852 = vunpack.c.l.b16 %v717
      %v853 = vunpack.c.l.b16 %v718
      %v854 = vunpack.c.l.b16 %v719
      %v855 = vunpack.c.l.b16 %v720
      %v856 = vunpack.c.l.b16 %v721
      %v857 = vunpack.c.l.b16 %v722
      %v858 = vunpack.c.l.b16 %v723
      %v859 = vunpack.c.l.b16 %v724
      %v860 = vunpack.c.l.b16 %v725
      %v861 = vunpack.c.l.b16 %v726
      %v862 = vunpack.c.l.b16 %v727
      %v863 = vunpack.c.l.b16 %v728
      %v864 = vpack.c.b16 %v849, %v848
      %v865 = vpack.c.b16 %v851, %v850
      %v866 = vpack.c.b16 %v853, %v852
      %v867 = vpack.c.b16 %v855, %v854
      %v868 = vpack.c.b16 %v857, %v856
      %v869 = vpack.c.b16 %v859, %v858
      %v870 = vpack.c.b16 %v861, %v860
      %v871 = vpack.c.b16 %v863, %v862
      %880 = vmatprep.subr.bf16.mxu0 0
      %881 = vmatpush1.bf16.msra.mxu0 %v871
      %882 = vmatprep.subr.bf16.mxu0 0
      %883 = vmatpush1.bf16.msra.mxu0 %v870
      %884 = vmatprep.subr.bf16.mxu0 0
      %885 = vmatpush1.bf16.msra.mxu0 %v869
      %886 = vmatprep.subr.bf16.mxu0 0
      %887 = vmatpush1.bf16.msra.mxu0 %v868
      %888 = vmatprep.subr.bf16.mxu0 0
      %889 = vmatpush1.bf16.msra.mxu0 %v867
      %890 = vmatprep.subr.bf16.mxu0 0
      %891 = vmatpush1.bf16.msra.mxu0 %v866
      %892 = vmatprep.subr.bf16.mxu0 0
      %893 = vmatpush1.bf16.msra.mxu0 %v865
      %894 = vmatprep.subr.bf16.mxu0 0
      %895 = vmatpush1.bf16.msra.mxu0 %v864
      %896 = vmatprep.subr.bf16.mxu0 0
      %897 = vmatpush2.bf16.msra.mxu0 0
      %898 = vmatprep.subr.bf16.mxu0 0
      %899 = vmatpush2.bf16.msra.mxu0 0
      %900 = vmatprep.subr.bf16.mxu0 0
      %901 = vmatpush2.bf16.msra.mxu0 0
      %902 = vmatprep.subr.bf16.mxu0 0
      %903 = vmatpush2.bf16.msra.mxu0 0
      %904 = vmatprep.subr.bf16.mxu0 0
      %905 = vmatpush2.bf16.msra.mxu0 0
      %906 = vmatprep.subr.bf16.mxu0 0
      %907 = vmatpush2.bf16.msra.mxu0 0
      %908 = vmatprep.subr.bf16.mxu0 0
      %909 = vmatpush2.bf16.msra.mxu0 0
      %910 = vmatprep.subr.bf16.mxu0 0
      %911 = vmatpush2.bf16.msra.mxu0 0
      %912 = vmatprep.mubr.bf16.mxu0 0
      %913 = vmatmul.mubr.bf16.gmra.mxu0 %v800
      %v914 = vpop.f32.mrf.mxu0
      %v915 = vadd.f32 %v734, %v914
      %v916 = vpop.f32.mrf.mxu0
      %v917 = vpop.f32.mrf.mxu0
      %v918 = vadd.f32 %v734, %v917
      %v919 = vpop.f32.mrf.mxu0
      %920 = vmatprep.mubr.bf16.mxu0 0
      %921 = vmatmul.mubr.bf16.gmra.mxu0 %v801
      %v922 = vpop.f32.mrf.mxu0
      %v923 = vadd.f32 %v734, %v922
      %v924 = vpop.f32.mrf.mxu0
      %v925 = vpop.f32.mrf.mxu0
      %v926 = vadd.f32 %v734, %v925
      %v927 = vpop.f32.mrf.mxu0
      %928 = vmatprep.mubr.bf16.mxu0 0
      %929 = vmatmul.mubr.bf16.gmra.mxu0 %v802
      %v930 = vpop.f32.mrf.mxu0
      %v931 = vadd.f32 %v734, %v930
      %v932 = vpop.f32.mrf.mxu0
      %v933 = vpop.f32.mrf.mxu0
      %v934 = vadd.f32 %v734, %v933
      %v935 = vpop.f32.mrf.mxu0
      %936 = vmatprep.mubr.bf16.mxu0 0
      %937 = vmatmul.mubr.bf16.gmra.mxu0 %v803
      %v938 = vpop.f32.mrf.mxu0
      %v939 = vadd.f32 %v734, %v938
      %v940 = vpop.f32.mrf.mxu0
      %v941 = vpop.f32.mrf.mxu0
      %v942 = vadd.f32 %v734, %v941
      %v943 = vpop.f32.mrf.mxu0
      %944 = vmatprep.mubr.bf16.mxu0 0
      %945 = vmatmul.mubr.bf16.gmra.mxu0 %v804
      %v946 = vpop.f32.mrf.mxu0
      %v947 = vadd.f32 %v734, %v946
      %v948 = vpop.f32.mrf.mxu0
      %v949 = vpop.f32.mrf.mxu0
      %v950 = vadd.f32 %v734, %v949
      %v951 = vpop.f32.mrf.mxu0
      %952 = vmatprep.mubr.bf16.mxu0 0
      %953 = vmatmul.mubr.bf16.gmra.mxu0 %v805
      %v954 = vpop.f32.mrf.mxu0
      %v955 = vadd.f32 %v734, %v954
      %v956 = vpop.f32.mrf.mxu0
      %v957 = vpop.f32.mrf.mxu0
      %v958 = vadd.f32 %v734, %v957
      %v959 = vpop.f32.mrf.mxu0
      %960 = vmatprep.mubr.bf16.mxu0 0
      %961 = vmatmul.mubr.bf16.gmra.mxu0 %v806
      %v962 = vpop.f32.mrf.mxu0
      %v963 = vadd.f32 %v734, %v962
      %v964 = vpop.f32.mrf.mxu0
      %v965 = vpop.f32.mrf.mxu0
      %v966 = vadd.f32 %v734, %v965
      %v967 = vpop.f32.mrf.mxu0
      %968 = vmatprep.mubr.bf16.mxu0 0
      %969 = vmatmul.mubr.bf16.gmra.mxu0 %v807
      %v970 = vpop.f32.mrf.mxu0
      %v971 = vadd.f32 %v734, %v970
      %v972 = vpop.f32.mrf.mxu0
      %v973 = vpop.f32.mrf.mxu0
      %v974 = vadd.f32 %v734, %v973
      %v975 = vpop.f32.mrf.mxu0
      %976 = vmatprep.mubr.bf16.mxu0 0
      %977 = vmatmul.mubr.bf16.gmra.mxu0 %v808
      %v978 = vpop.f32.mrf.mxu0
      %v979 = vadd.f32 %v734, %v978
      %v980 = vpop.f32.mrf.mxu0
      %v981 = vpop.f32.mrf.mxu0
      %v982 = vadd.f32 %v734, %v981
      %v983 = vpop.f32.mrf.mxu0
      %984 = vmatprep.mubr.bf16.mxu0 0
      %985 = vmatmul.mubr.bf16.gmra.mxu0 %v809
      %v986 = vpop.f32.mrf.mxu0
      %v987 = vadd.f32 %v734, %v986
      %v988 = vpop.f32.mrf.mxu0
      %v989 = vpop.f32.mrf.mxu0
      %v990 = vadd.f32 %v734, %v989
      %v991 = vpop.f32.mrf.mxu0
      %992 = vmatprep.mubr.bf16.mxu0 0
      %993 = vmatmul.mubr.bf16.gmra.mxu0 %v810
      %v994 = vpop.f32.mrf.mxu0
      %v995 = vadd.f32 %v734, %v994
      %v996 = vpop.f32.mrf.mxu0
      %v997 = vpop.f32.mrf.mxu0
      %v998 = vadd.f32 %v734, %v997
      %v999 = vpop.f32.mrf.mxu0
      %1000 = vmatprep.mubr.bf16.mxu0 0
      %1001 = vmatmul.mubr.bf16.gmra.mxu0 %v811
      %v1002 = vpop.f32.mrf.mxu0
      %v1003 = vadd.f32 %v734, %v1002
      %v1004 = vpop.f32.mrf.mxu0
      %v1005 = vpop.f32.mrf.mxu0
      %v1006 = vadd.f32 %v734, %v1005
      %v1007 = vpop.f32.mrf.mxu0
      %1008 = vmatprep.mubr.bf16.mxu0 0
      %1009 = vmatmul.mubr.bf16.gmra.mxu0 %v812
      %v1010 = vpop.f32.mrf.mxu0
      %v1011 = vadd.f32 %v734, %v1010
      %v1012 = vpop.f32.mrf.mxu0
      %v1013 = vpop.f32.mrf.mxu0
      %v1014 = vadd.f32 %v734, %v1013
      %v1015 = vpop.f32.mrf.mxu0
      %1016 = vmatprep.mubr.bf16.mxu0 0
      %1017 = vmatmul.mubr.bf16.gmra.mxu0 %v813
      %v1018 = vpop.f32.mrf.mxu0
      %v1019 = vadd.f32 %v734, %v1018
      %v1020 = vpop.f32.mrf.mxu0
      %v1021 = vpop.f32.mrf.mxu0
      %v1022 = vadd.f32 %v734, %v1021
      %v1023 = vpop.f32.mrf.mxu0
      %1024 = vmatprep.mubr.bf16.mxu0 0
      %1025 = vmatmul.mubr.bf16.gmra.mxu0 %v814
      %v1026 = vpop.f32.mrf.mxu0
      %v1027 = vadd.f32 %v734, %v1026
      %v1028 = vpop.f32.mrf.mxu0
      %v1029 = vpop.f32.mrf.mxu0
      %v1030 = vadd.f32 %v734, %v1029
      %v1031 = vpop.f32.mrf.mxu0
      %1032 = vmatprep.mubr.bf16.mxu0 0
      %1033 = vmatmul.mubr.bf16.gmra.mxu0 %v815
      %v1034 = vpop.f32.mrf.mxu0
      %v1035 = vadd.f32 %v734, %v1034
      %v1036 = vpop.f32.mrf.mxu0
      %v1037 = vpop.f32.mrf.mxu0
      %v1038 = vadd.f32 %v734, %v1037
      %v1039 = vpop.f32.mrf.mxu0
      %1040 = vdwg.mxu0
      %vm1041 = vcmp.gt.f32.partialorder %v915, 0.0
      %vm1042 = vcmp.gt.f32.partialorder %v918, 0.0
      %vm1043 = vcmp.gt.f32.partialorder %v923, 0.0
      %vm1044 = vcmp.gt.f32.partialorder %v926, 0.0
      %vm1045 = vcmp.gt.f32.partialorder %v931, 0.0
      %vm1046 = vcmp.gt.f32.partialorder %v934, 0.0
      %vm1047 = vcmp.gt.f32.partialorder %v939, 0.0
      %vm1048 = vcmp.gt.f32.partialorder %v942, 0.0
      %vm1049 = vcmp.gt.f32.partialorder %v947, 0.0
      %vm1050 = vcmp.gt.f32.partialorder %v950, 0.0
      %vm1051 = vcmp.gt.f32.partialorder %v955, 0.0
      %vm1052 = vcmp.gt.f32.partialorder %v958, 0.0
      %vm1053 = vcmp.gt.f32.partialorder %v963, 0.0
      %vm1054 = vcmp.gt.f32.partialorder %v966, 0.0
      %vm1055 = vcmp.gt.f32.partialorder %v971, 0.0
      %vm1056 = vcmp.gt.f32.partialorder %v974, 0.0
      %vm1057 = vcmp.gt.f32.partialorder %v979, 0.0
      %vm1058 = vcmp.gt.f32.partialorder %v982, 0.0
      %vm1059 = vcmp.gt.f32.partialorder %v987, 0.0
      %vm1060 = vcmp.gt.f32.partialorder %v990, 0.0
      %vm1061 = vcmp.gt.f32.partialorder %v995, 0.0
      %vm1062 = vcmp.gt.f32.partialorder %v998, 0.0
      %vm1063 = vcmp.gt.f32.partialorder %v1003, 0.0
      %vm1064 = vcmp.gt.f32.partialorder %v1006, 0.0
      %vm1065 = vcmp.gt.f32.partialorder %v1011, 0.0
      %vm1066 = vcmp.gt.f32.partialorder %v1014, 0.0
      %vm1067 = vcmp.gt.f32.partialorder %v1019, 0.0
      %vm1068 = vcmp.gt.f32.partialorder %v1022, 0.0
      %vm1069 = vcmp.gt.f32.partialorder %v1027, 0.0
      %vm1070 = vcmp.gt.f32.partialorder %v1030, 0.0
      %vm1071 = vcmp.gt.f32.partialorder %v1035, 0.0
      %vm1072 = vcmp.gt.f32.partialorder %v1038, 0.0
      %v1073 = vmul.f32 %v915, 0.1
      %v1074 = vmul.f32 %v918, 0.1
      %v1075 = vmul.f32 %v923, 0.1
      %v1076 = vmul.f32 %v926, 0.1
      %v1077 = vmul.f32 %v931, 0.1
      %v1078 = vmul.f32 %v934, 0.1
      %v1079 = vmul.f32 %v939, 0.1
      %v1080 = vmul.f32 %v942, 0.1
      %v1081 = vmul.f32 %v947, 0.1
      %v1082 = vmul.f32 %v950, 0.1
      %v1083 = vmul.f32 %v955, 0.1
      %v1084 = vmul.f32 %v958, 0.1
      %v1085 = vmul.f32 %v963, 0.1
      %v1086 = vmul.f32 %v966, 0.1
      %v1087 = vmul.f32 %v971, 0.1
      %v1088 = vmul.f32 %v974, 0.1
      %v1089 = vmul.f32 %v979, 0.1
      %v1090 = vmul.f32 %v982, 0.1
      %v1091 = vmul.f32 %v987, 0.1
      %v1092 = vmul.f32 %v990, 0.1
      %v1093 = vmul.f32 %v995, 0.1
      %v1094 = vmul.f32 %v998, 0.1
      %v1095 = vmul.f32 %v1003, 0.1
      %v1096 = vmul.f32 %v1006, 0.1
      %v1097 = vmul.f32 %v1011, 0.1
      %v1098 = vmul.f32 %v1014, 0.1
      %v1099 = vmul.f32 %v1019, 0.1
      %v1100 = vmul.f32 %v1022, 0.1
      %v1101 = vmul.f32 %v1027, 0.1
      %v1102 = vmul.f32 %v1030, 0.1
      %v1103 = vmul.f32 %v1035, 0.1
      %v1104 = vmul.f32 %v1038, 0.1
      %v1105 = vsel %vm1041, %v915, %v1073
      %v1106 = vsel %vm1042, %v918, %v1074
      %v1107 = vsel %vm1043, %v923, %v1075
      %v1108 = vsel %vm1044, %v926, %v1076
      %v1109 = vsel %vm1045, %v931, %v1077
      %v1110 = vsel %vm1046, %v934, %v1078
      %v1111 = vsel %vm1047, %v939, %v1079
      %v1112 = vsel %vm1048, %v942, %v1080
      %v1113 = vsel %vm1049, %v947, %v1081
      %v1114 = vsel %vm1050, %v950, %v1082
      %v1115 = vsel %vm1051, %v955, %v1083
      %v1116 = vsel %vm1052, %v958, %v1084
      %v1117 = vsel %vm1053, %v963, %v1085
      %v1118 = vsel %vm1054, %v966, %v1086
      %v1119 = vsel %vm1055, %v971, %v1087
      %v1120 = vsel %vm1056, %v974, %v1088
      %v1121 = vsel %vm1057, %v979, %v1089
      %v1122 = vsel %vm1058, %v982, %v1090
      %v1123 = vsel %vm1059, %v987, %v1091
      %v1124 = vsel %vm1060, %v990, %v1092
      %v1125 = vsel %vm1061, %v995, %v1093
      %v1126 = vsel %vm1062, %v998, %v1094
      %v1127 = vsel %vm1063, %v1003, %v1095
      %v1128 = vsel %vm1064, %v1006, %v1096
      %v1129 = vsel %vm1065, %v1011, %v1097
      %v1130 = vsel %vm1066, %v1014, %v1098
      %v1131 = vsel %vm1067, %v1019, %v1099
      %v1132 = vsel %vm1068, %v1022, %v1100
      %v1133 = vsel %vm1069, %v1027, %v1101
      %v1134 = vsel %vm1070, %v1030, %v1102
      %v1135 = vsel %vm1071, %v1035, %v1103
      %v1136 = vsel %vm1072, %v1038, %v1104
      %v1137 = vpack.c.bf16 %v1106, %v1105
      %v1138 = vpack.c.bf16 %v1108, %v1107
      %v1139 = vpack.c.bf16 %v1110, %v1109
      %v1140 = vpack.c.bf16 %v1112, %v1111
      %v1141 = vpack.c.bf16 %v1114, %v1113
      %v1142 = vpack.c.bf16 %v1116, %v1115
      %v1143 = vpack.c.bf16 %v1118, %v1117
      %v1144 = vpack.c.bf16 %v1120, %v1119
      %v1145 = vpack.c.bf16 %v1122, %v1121
      %v1146 = vpack.c.bf16 %v1124, %v1123
      %v1147 = vpack.c.bf16 %v1126, %v1125
      %v1148 = vpack.c.bf16 %v1128, %v1127
      %v1149 = vpack.c.bf16 %v1130, %v1129
      %v1150 = vpack.c.bf16 %v1132, %v1131
      %v1151 = vpack.c.bf16 %v1134, %v1133
      %v1152 = vpack.c.bf16 %v1136, %v1135
      %v1153 = vld [vmem:[%s10] sm:$0xff]
      %v1154 = vld [vmem:[%s10 + $0x8] sm:$0xff]
      %v1155 = vld [vmem:[%s10 + $0x10] sm:$0xff]
      %v1156 = vld [vmem:[%s10 + $0x18] sm:$0xff]
      %v1157 = vld [vmem:[%s10 + $0x20] sm:$0xff]
      %v1158 = vld [vmem:[%s10 + $0x28] sm:$0xff]
      %v1159 = vld [vmem:[%s10 + $0x30] sm:$0xff]
      %v1160 = vld [vmem:[%s10 + $0x38] sm:$0xff]
      %v1161 = vld [vmem:[%s10 + $0x40] sm:$0xff]
      %v1162 = vld [vmem:[%s10 + $0x48] sm:$0xff]
      %v1163 = vld [vmem:[%s10 + $0x50] sm:$0xff]
      %v1164 = vld [vmem:[%s10 + $0x58] sm:$0xff]
      %v1165 = vld [vmem:[%s10 + $0x60] sm:$0xff]
      %v1166 = vld [vmem:[%s10 + $0x68] sm:$0xff]
      %v1167 = vld [vmem:[%s10 + $0x70] sm:$0xff]
      %v1168 = vld [vmem:[%s10 + $0x78] sm:$0xff]
      %v1169 = vld [vmem:[%s10 + $0x80] sm:$0xff]
      %v1170 = vld [vmem:[%s10 + $0x88] sm:$0xff]
      %v1171 = vld [vmem:[%s10 + $0x90] sm:$0xff]
      %v1172 = vld [vmem:[%s10 + $0x98] sm:$0xff]
      %v1173 = vld [vmem:[%s10 + $0xa0] sm:$0xff]
      %v1174 = vld [vmem:[%s10 + $0xa8] sm:$0xff]
      %v1175 = vld [vmem:[%s10 + $0xb0] sm:$0xff]
      %v1176 = vld [vmem:[%s10 + $0xb8] sm:$0xff]
      %v1177 = vld [vmem:[%s10 + $0xc0] sm:$0xff]
      %v1178 = vld [vmem:[%s10 + $0xc8] sm:$0xff]
      %v1179 = vld [vmem:[%s10 + $0xd0] sm:$0xff]
      %v1180 = vld [vmem:[%s10 + $0xd8] sm:$0xff]
      %v1181 = vld [vmem:[%s10 + $0xe0] sm:$0xff]
      %v1182 = vld [vmem:[%s10 + $0xe8] sm:$0xff]
      %v1183 = vld [vmem:[%s10 + $0xf0] sm:$0xff]
      %v1184 = vld [vmem:[%s10 + $0xf8] sm:$0xff]
      %v1185 = vld [vmem:[%s10 + $0x100] sm:$0xff]
      %v1186 = vld [vmem:[%s10 + $0x108] sm:$0xff]
      %v1187 = vld [vmem:[%s10 + $0x110] sm:$0xff]
      %v1188 = vld [vmem:[%s10 + $0x118] sm:$0xff]
      %v1189 = vld [vmem:[%s10 + $0x120] sm:$0xff]
      %v1190 = vld [vmem:[%s10 + $0x128] sm:$0xff]
      %v1191 = vld [vmem:[%s10 + $0x130] sm:$0xff]
      %v1192 = vld [vmem:[%s10 + $0x138] sm:$0xff]
      %v1193 = vld [vmem:[%s10 + $0x140] sm:$0xff]
      %v1194 = vld [vmem:[%s10 + $0x148] sm:$0xff]
      %v1195 = vld [vmem:[%s10 + $0x150] sm:$0xff]
      %v1196 = vld [vmem:[%s10 + $0x158] sm:$0xff]
      %v1197 = vld [vmem:[%s10 + $0x160] sm:$0xff]
      %v1198 = vld [vmem:[%s10 + $0x168] sm:$0xff]
      %v1199 = vld [vmem:[%s10 + $0x170] sm:$0xff]
      %v1200 = vld [vmem:[%s10 + $0x178] sm:$0xff]
      %v1201 = vld [vmem:[%s10 + $0x180] sm:$0xff]
      %v1202 = vld [vmem:[%s10 + $0x188] sm:$0xff]
      %v1203 = vld [vmem:[%s10 + $0x190] sm:$0xff]
      %v1204 = vld [vmem:[%s10 + $0x198] sm:$0xff]
      %v1205 = vld [vmem:[%s10 + $0x1a0] sm:$0xff]
      %v1206 = vld [vmem:[%s10 + $0x1a8] sm:$0xff]
      %v1207 = vld [vmem:[%s10 + $0x1b0] sm:$0xff]
      %v1208 = vld [vmem:[%s10 + $0x1b8] sm:$0xff]
      %v1209 = vld [vmem:[%s10 + $0x1c0] sm:$0xff]
      %v1210 = vld [vmem:[%s10 + $0x1c8] sm:$0xff]
      %v1211 = vld [vmem:[%s10 + $0x1d0] sm:$0xff]
      %v1212 = vld [vmem:[%s10 + $0x1d8] sm:$0xff]
      %v1213 = vld [vmem:[%s10 + $0x1e0] sm:$0xff]
      %v1214 = vld [vmem:[%s10 + $0x1e8] sm:$0xff]
      %v1215 = vld [vmem:[%s10 + $0x1f0] sm:$0xff]
      %v1216 = vld [vmem:[%s10 + $0x1f8] sm:$0xff]
      %v1217 = vld [vmem:[%s10 + $0x200] sm:$0xff]
      %v1218 = vld [vmem:[%s10 + $0x208] sm:$0xff]
      %v1219 = vld [vmem:[%s10 + $0x210] sm:$0xff]
      %v1220 = vld [vmem:[%s10 + $0x218] sm:$0xff]
      %v1221 = vld [vmem:[%s10 + $0x220] sm:$0xff]
      %v1222 = vld [vmem:[%s10 + $0x228] sm:$0xff]
      %v1223 = vld [vmem:[%s10 + $0x230] sm:$0xff]
      %v1224 = vld [vmem:[%s10 + $0x238] sm:$0xff]
      %v1225 = vld [vmem:[%s10 + $0x240] sm:$0xff]
      %v1226 = vld [vmem:[%s10 + $0x248] sm:$0xff]
      %v1227 = vld [vmem:[%s10 + $0x250] sm:$0xff]
      %v1228 = vld [vmem:[%s10 + $0x258] sm:$0xff]
      %v1229 = vld [vmem:[%s10 + $0x260] sm:$0xff]
      %v1230 = vld [vmem:[%s10 + $0x268] sm:$0xff]
      %v1231 = vld [vmem:[%s10 + $0x270] sm:$0xff]
      %v1232 = vld [vmem:[%s10 + $0x278] sm:$0xff]
      %v1233 = vld [vmem:[%s10 + $0x280] sm:$0xff]
      %v1234 = vld [vmem:[%s10 + $0x288] sm:$0xff]
      %v1235 = vld [vmem:[%s10 + $0x290] sm:$0xff]
      %v1236 = vld [vmem:[%s10 + $0x298] sm:$0xff]
      %v1237 = vld [vmem:[%s10 + $0x2a0] sm:$0xff]
      %v1238 = vld [vmem:[%s10 + $0x2a8] sm:$0xff]
      %v1239 = vld [vmem:[%s10 + $0x2b0] sm:$0xff]
      %v1240 = vld [vmem:[%s10 + $0x2b8] sm:$0xff]
      %v1241 = vld [vmem:[%s10 + $0x2c0] sm:$0xff]
      %v1242 = vld [vmem:[%s10 + $0x2c8] sm:$0xff]
      %v1243 = vld [vmem:[%s10 + $0x2d0] sm:$0xff]
      %v1244 = vld [vmem:[%s10 + $0x2d8] sm:$0xff]
      %v1245 = vld [vmem:[%s10 + $0x2e0] sm:$0xff]
      %v1246 = vld [vmem:[%s10 + $0x2e8] sm:$0xff]
      %v1247 = vld [vmem:[%s10 + $0x2f0] sm:$0xff]
      %v1248 = vld [vmem:[%s10 + $0x2f8] sm:$0xff]
      %v1249 = vld [vmem:[%s10 + $0x300] sm:$0xff]
      %v1250 = vld [vmem:[%s10 + $0x308] sm:$0xff]
      %v1251 = vld [vmem:[%s10 + $0x310] sm:$0xff]
      %v1252 = vld [vmem:[%s10 + $0x318] sm:$0xff]
      %v1253 = vld [vmem:[%s10 + $0x320] sm:$0xff]
      %v1254 = vld [vmem:[%s10 + $0x328] sm:$0xff]
      %v1255 = vld [vmem:[%s10 + $0x330] sm:$0xff]
      %v1256 = vld [vmem:[%s10 + $0x338] sm:$0xff]
      %v1257 = vld [vmem:[%s10 + $0x340] sm:$0xff]
      %v1258 = vld [vmem:[%s10 + $0x348] sm:$0xff]
      %v1259 = vld [vmem:[%s10 + $0x350] sm:$0xff]
      %v1260 = vld [vmem:[%s10 + $0x358] sm:$0xff]
      %v1261 = vld [vmem:[%s10 + $0x360] sm:$0xff]
      %v1262 = vld [vmem:[%s10 + $0x368] sm:$0xff]
      %v1263 = vld [vmem:[%s10 + $0x370] sm:$0xff]
      %v1264 = vld [vmem:[%s10 + $0x378] sm:$0xff]
      %v1265 = vld [vmem:[%s10 + $0x380] sm:$0xff]
      %v1266 = vld [vmem:[%s10 + $0x388] sm:$0xff]
      %v1267 = vld [vmem:[%s10 + $0x390] sm:$0xff]
      %v1268 = vld [vmem:[%s10 + $0x398] sm:$0xff]
      %v1269 = vld [vmem:[%s10 + $0x3a0] sm:$0xff]
      %v1270 = vld [vmem:[%s10 + $0x3a8] sm:$0xff]
      %v1271 = vld [vmem:[%s10 + $0x3b0] sm:$0xff]
      %v1272 = vld [vmem:[%s10 + $0x3b8] sm:$0xff]
      %v1273 = vld [vmem:[%s10 + $0x3c0] sm:$0xff]
      %v1274 = vld [vmem:[%s10 + $0x3c8] sm:$0xff]
      %v1275 = vld [vmem:[%s10 + $0x3d0] sm:$0xff]
      %v1276 = vld [vmem:[%s10 + $0x3d8] sm:$0xff]
      %v1277 = vld [vmem:[%s10 + $0x3e0] sm:$0xff]
      %v1278 = vld [vmem:[%s10 + $0x3e8] sm:$0xff]
      %v1279 = vld [vmem:[%s10 + $0x3f0] sm:$0xff]
      %v1280 = vld [vmem:[%s10 + $0x3f8] sm:$0xff]
      %v1409 = vunpack.c.l.b16 %v1153
      %v1410 = vunpack.c.h.b16 %v1153
      %v1411 = vunpack.c.l.b16 %v1154
      %v1412 = vunpack.c.h.b16 %v1154
      %v1413 = vunpack.c.l.b16 %v1155
      %v1414 = vunpack.c.h.b16 %v1155
      %v1415 = vunpack.c.l.b16 %v1156
      %v1416 = vunpack.c.h.b16 %v1156
      %v1417 = vunpack.c.l.b16 %v1157
      %v1418 = vunpack.c.h.b16 %v1157
      %v1419 = vunpack.c.l.b16 %v1158
      %v1420 = vunpack.c.h.b16 %v1158
      %v1421 = vunpack.c.l.b16 %v1159
      %v1422 = vunpack.c.h.b16 %v1159
      %v1423 = vunpack.c.l.b16 %v1160
      %v1424 = vunpack.c.h.b16 %v1160
      %v1425 = vunpack.c.l.b16 %v1161
      %v1426 = vunpack.c.h.b16 %v1161
      %v1427 = vunpack.c.l.b16 %v1162
      %v1428 = vunpack.c.h.b16 %v1162
      %v1429 = vunpack.c.l.b16 %v1163
      %v1430 = vunpack.c.h.b16 %v1163
      %v1431 = vunpack.c.l.b16 %v1164
      %v1432 = vunpack.c.h.b16 %v1164
      %v1433 = vunpack.c.l.b16 %v1165
      %v1434 = vunpack.c.h.b16 %v1165
      %v1435 = vunpack.c.l.b16 %v1166
      %v1436 = vunpack.c.h.b16 %v1166
      %v1437 = vunpack.c.l.b16 %v1167
      %v1438 = vunpack.c.h.b16 %v1167
      %v1439 = vunpack.c.l.b16 %v1168
      %v1440 = vunpack.c.h.b16 %v1168
      %v1441 = vunpack.c.l.b16 %v1169
      %v1442 = vunpack.c.h.b16 %v1169
      %v1443 = vunpack.c.l.b16 %v1170
      %v1444 = vunpack.c.h.b16 %v1170
      %v1445 = vunpack.c.l.b16 %v1171
      %v1446 = vunpack.c.h.b16 %v1171
      %v1447 = vunpack.c.l.b16 %v1172
      %v1448 = vunpack.c.h.b16 %v1172
      %v1449 = vunpack.c.l.b16 %v1173
      %v1450 = vunpack.c.h.b16 %v1173
      %v1451 = vunpack.c.l.b16 %v1174
      %v1452 = vunpack.c.h.b16 %v1174
      %v1453 = vunpack.c.l.b16 %v1175
      %v1454 = vunpack.c.h.b16 %v1175
      %v1455 = vunpack.c.l.b16 %v1176
      %v1456 = vunpack.c.h.b16 %v1176
      %v1457 = vunpack.c.l.b16 %v1177
      %v1458 = vunpack.c.h.b16 %v1177
      %v1459 = vunpack.c.l.b16 %v1178
      %v1460 = vunpack.c.h.b16 %v1178
      %v1461 = vunpack.c.l.b16 %v1179
      %v1462 = vunpack.c.h.b16 %v1179
      %v1463 = vunpack.c.l.b16 %v1180
      %v1464 = vunpack.c.h.b16 %v1180
      %v1465 = vunpack.c.l.b16 %v1181
      %v1466 = vunpack.c.h.b16 %v1181
      %v1467 = vunpack.c.l.b16 %v1182
      %v1468 = vunpack.c.h.b16 %v1182
      %v1469 = vunpack.c.l.b16 %v1183
      %v1470 = vunpack.c.h.b16 %v1183
      %v1471 = vunpack.c.l.b16 %v1184
      %v1472 = vunpack.c.h.b16 %v1184
      %v1473 = vunpack.c.l.b16 %v1185
      %v1474 = vunpack.c.h.b16 %v1185
      %v1475 = vunpack.c.l.b16 %v1186
      %v1476 = vunpack.c.h.b16 %v1186
      %v1477 = vunpack.c.l.b16 %v1187
      %v1478 = vunpack.c.h.b16 %v1187
      %v1479 = vunpack.c.l.b16 %v1188
      %v1480 = vunpack.c.h.b16 %v1188
      %v1481 = vunpack.c.l.b16 %v1189
      %v1482 = vunpack.c.h.b16 %v1189
      %v1483 = vunpack.c.l.b16 %v1190
      %v1484 = vunpack.c.h.b16 %v1190
      %v1485 = vunpack.c.l.b16 %v1191
      %v1486 = vunpack.c.h.b16 %v1191
      %v1487 = vunpack.c.l.b16 %v1192
      %v1488 = vunpack.c.h.b16 %v1192
      %v1489 = vunpack.c.l.b16 %v1193
      %v1490 = vunpack.c.h.b16 %v1193
      %v1491 = vunpack.c.l.b16 %v1194
      %v1492 = vunpack.c.h.b16 %v1194
      %v1493 = vunpack.c.l.b16 %v1195
      %v1494 = vunpack.c.h.b16 %v1195
      %v1495 = vunpack.c.l.b16 %v1196
      %v1496 = vunpack.c.h.b16 %v1196
      %v1497 = vunpack.c.l.b16 %v1197
      %v1498 = vunpack.c.h.b16 %v1197
      %v1499 = vunpack.c.l.b16 %v1198
      %v1500 = vunpack.c.h.b16 %v1198
      %v1501 = vunpack.c.l.b16 %v1199
      %v1502 = vunpack.c.h.b16 %v1199
      %v1503 = vunpack.c.l.b16 %v1200
      %v1504 = vunpack.c.h.b16 %v1200
      %v1505 = vunpack.c.l.b16 %v1201
      %v1506 = vunpack.c.h.b16 %v1201
      %v1507 = vunpack.c.l.b16 %v1202
      %v1508 = vunpack.c.h.b16 %v1202
      %v1509 = vunpack.c.l.b16 %v1203
      %v1510 = vunpack.c.h.b16 %v1203
      %v1511 = vunpack.c.l.b16 %v1204
      %v1512 = vunpack.c.h.b16 %v1204
      %v1513 = vunpack.c.l.b16 %v1205
      %v1514 = vunpack.c.h.b16 %v1205
      %v1515 = vunpack.c.l.b16 %v1206
      %v1516 = vunpack.c.h.b16 %v1206
      %v1517 = vunpack.c.l.b16 %v1207
      %v1518 = vunpack.c.h.b16 %v1207
      %v1519 = vunpack.c.l.b16 %v1208
      %v1520 = vunpack.c.h.b16 %v1208
      %v1521 = vunpack.c.l.b16 %v1209
      %v1522 = vunpack.c.h.b16 %v1209
      %v1523 = vunpack.c.l.b16 %v1210
      %v1524 = vunpack.c.h.b16 %v1210
      %v1525 = vunpack.c.l.b16 %v1211
      %v1526 = vunpack.c.h.b16 %v1211
      %v1527 = vunpack.c.l.b16 %v1212
      %v1528 = vunpack.c.h.b16 %v1212
      %v1529 = vunpack.c.l.b16 %v1213
      %v1530 = vunpack.c.h.b16 %v1213
      %v1531 = vunpack.c.l.b16 %v1214
      %v1532 = vunpack.c.h.b16 %v1214
      %v1533 = vunpack.c.l.b16 %v1215
      %v1534 = vunpack.c.h.b16 %v1215
      %v1535 = vunpack.c.l.b16 %v1216
      %v1536 = vunpack.c.h.b16 %v1216
      %v1537 = vunpack.c.l.b16 %v1217
      %v1538 = vunpack.c.h.b16 %v1217
      %v1539 = vunpack.c.l.b16 %v1218
      %v1540 = vunpack.c.h.b16 %v1218
      %v1541 = vunpack.c.l.b16 %v1219
      %v1542 = vunpack.c.h.b16 %v1219
      %v1543 = vunpack.c.l.b16 %v1220
      %v1544 = vunpack.c.h.b16 %v1220
      %v1545 = vunpack.c.l.b16 %v1221
      %v1546 = vunpack.c.h.b16 %v1221
      %v1547 = vunpack.c.l.b16 %v1222
      %v1548 = vunpack.c.h.b16 %v1222
      %v1549 = vunpack.c.l.b16 %v1223
      %v1550 = vunpack.c.h.b16 %v1223
      %v1551 = vunpack.c.l.b16 %v1224
      %v1552 = vunpack.c.h.b16 %v1224
      %v1553 = vunpack.c.l.b16 %v1225
      %v1554 = vunpack.c.h.b16 %v1225
      %v1555 = vunpack.c.l.b16 %v1226
      %v1556 = vunpack.c.h.b16 %v1226
      %v1557 = vunpack.c.l.b16 %v1227
      %v1558 = vunpack.c.h.b16 %v1227
      %v1559 = vunpack.c.l.b16 %v1228
      %v1560 = vunpack.c.h.b16 %v1228
      %v1561 = vunpack.c.l.b16 %v1229
      %v1562 = vunpack.c.h.b16 %v1229
      %v1563 = vunpack.c.l.b16 %v1230
      %v1564 = vunpack.c.h.b16 %v1230
      %v1565 = vunpack.c.l.b16 %v1231
      %v1566 = vunpack.c.h.b16 %v1231
      %v1567 = vunpack.c.l.b16 %v1232
      %v1568 = vunpack.c.h.b16 %v1232
      %v1569 = vunpack.c.l.b16 %v1233
      %v1570 = vunpack.c.h.b16 %v1233
      %v1571 = vunpack.c.l.b16 %v1234
      %v1572 = vunpack.c.h.b16 %v1234
      %v1573 = vunpack.c.l.b16 %v1235
      %v1574 = vunpack.c.h.b16 %v1235
      %v1575 = vunpack.c.l.b16 %v1236
      %v1576 = vunpack.c.h.b16 %v1236
      %v1577 = vunpack.c.l.b16 %v1237
      %v1578 = vunpack.c.h.b16 %v1237
      %v1579 = vunpack.c.l.b16 %v1238
      %v1580 = vunpack.c.h.b16 %v1238
      %v1581 = vunpack.c.l.b16 %v1239
      %v1582 = vunpack.c.h.b16 %v1239
      %v1583 = vunpack.c.l.b16 %v1240
      %v1584 = vunpack.c.h.b16 %v1240
      %v1585 = vunpack.c.l.b16 %v1241
      %v1586 = vunpack.c.h.b16 %v1241
      %v1587 = vunpack.c.l.b16 %v1242
      %v1588 = vunpack.c.h.b16 %v1242
      %v1589 = vunpack.c.l.b16 %v1243
      %v1590 = vunpack.c.h.b16 %v1243
      %v1591 = vunpack.c.l.b16 %v1244
      %v1592 = vunpack.c.h.b16 %v1244
      %v1593 = vunpack.c.l.b16 %v1245
      %v1594 = vunpack.c.h.b16 %v1245
      %v1595 = vunpack.c.l.b16 %v1246
      %v1596 = vunpack.c.h.b16 %v1246
      %v1597 = vunpack.c.l.b16 %v1247
      %v1598 = vunpack.c.h.b16 %v1247
      %v1599 = vunpack.c.l.b16 %v1248
      %v1600 = vunpack.c.h.b16 %v1248
      %v1601 = vunpack.c.l.b16 %v1249
      %v1602 = vunpack.c.h.b16 %v1249
      %v1603 = vunpack.c.l.b16 %v1250
      %v1604 = vunpack.c.h.b16 %v1250
      %v1605 = vunpack.c.l.b16 %v1251
      %v1606 = vunpack.c.h.b16 %v1251
      %v1607 = vunpack.c.l.b16 %v1252
      %v1608 = vunpack.c.h.b16 %v1252
      %v1609 = vunpack.c.l.b16 %v1253
      %v1610 = vunpack.c.h.b16 %v1253
      %v1611 = vunpack.c.l.b16 %v1254
      %v1612 = vunpack.c.h.b16 %v1254
      %v1613 = vunpack.c.l.b16 %v1255
      %v1614 = vunpack.c.h.b16 %v1255
      %v1615 = vunpack.c.l.b16 %v1256
      %v1616 = vunpack.c.h.b16 %v1256
      %v1617 = vunpack.c.l.b16 %v1257
      %v1618 = vunpack.c.h.b16 %v1257
      %v1619 = vunpack.c.l.b16 %v1258
      %v1620 = vunpack.c.h.b16 %v1258
      %v1621 = vunpack.c.l.b16 %v1259
      %v1622 = vunpack.c.h.b16 %v1259
      %v1623 = vunpack.c.l.b16 %v1260
      %v1624 = vunpack.c.h.b16 %v1260
      %v1625 = vunpack.c.l.b16 %v1261
      %v1626 = vunpack.c.h.b16 %v1261
      %v1627 = vunpack.c.l.b16 %v1262
      %v1628 = vunpack.c.h.b16 %v1262
      %v1629 = vunpack.c.l.b16 %v1263
      %v1630 = vunpack.c.h.b16 %v1263
      %v1631 = vunpack.c.l.b16 %v1264
      %v1632 = vunpack.c.h.b16 %v1264
      %v1633 = vunpack.c.l.b16 %v1265
      %v1634 = vunpack.c.h.b16 %v1265
      %v1635 = vunpack.c.l.b16 %v1266
      %v1636 = vunpack.c.h.b16 %v1266
      %v1637 = vunpack.c.l.b16 %v1267
      %v1638 = vunpack.c.h.b16 %v1267
      %v1639 = vunpack.c.l.b16 %v1268
      %v1640 = vunpack.c.h.b16 %v1268
      %v1641 = vunpack.c.l.b16 %v1269
      %v1642 = vunpack.c.h.b16 %v1269
      %v1643 = vunpack.c.l.b16 %v1270
      %v1644 = vunpack.c.h.b16 %v1270
      %v1645 = vunpack.c.l.b16 %v1271
      %v1646 = vunpack.c.h.b16 %v1271
      %v1647 = vunpack.c.l.b16 %v1272
      %v1648 = vunpack.c.h.b16 %v1272
      %v1649 = vunpack.c.l.b16 %v1273
      %v1650 = vunpack.c.h.b16 %v1273
      %v1651 = vunpack.c.l.b16 %v1274
      %v1652 = vunpack.c.h.b16 %v1274
      %v1653 = vunpack.c.l.b16 %v1275
      %v1654 = vunpack.c.h.b16 %v1275
      %v1655 = vunpack.c.l.b16 %v1276
      %v1656 = vunpack.c.h.b16 %v1276
      %v1657 = vunpack.c.l.b16 %v1277
      %v1658 = vunpack.c.h.b16 %v1277
      %v1659 = vunpack.c.l.b16 %v1278
      %v1660 = vunpack.c.h.b16 %v1278
      %v1661 = vunpack.c.l.b16 %v1279
      %v1662 = vunpack.c.h.b16 %v1279
      %v1663 = vunpack.c.l.b16 %v1280
      %v1664 = vunpack.c.h.b16 %v1280
      %v1665 = vpack.c.b16 %v1411, %v1409
      %v1666 = vpack.c.b16 %v1412, %v1410
      %v1667 = vpack.c.b16 %v1415, %v1413
      %v1668 = vpack.c.b16 %v1416, %v1414
      %v1669 = vpack.c.b16 %v1419, %v1417
      %v1670 = vpack.c.b16 %v1420, %v1418
      %v1671 = vpack.c.b16 %v1423, %v1421
      %v1672 = vpack.c.b16 %v1424, %v1422
      %v1673 = vpack.c.b16 %v1427, %v1425
      %v1674 = vpack.c.b16 %v1428, %v1426
      %v1675 = vpack.c.b16 %v1431, %v1429
      %v1676 = vpack.c.b16 %v1432, %v1430
      %v1677 = vpack.c.b16 %v1435, %v1433
      %v1678 = vpack.c.b16 %v1436, %v1434
      %v1679 = vpack.c.b16 %v1439, %v1437
      %v1680 = vpack.c.b16 %v1440, %v1438
      %v1681 = vpack.c.b16 %v1443, %v1441
      %v1682 = vpack.c.b16 %v1444, %v1442
      %v1683 = vpack.c.b16 %v1447, %v1445
      %v1684 = vpack.c.b16 %v1448, %v1446
      %v1685 = vpack.c.b16 %v1451, %v1449
      %v1686 = vpack.c.b16 %v1452, %v1450
      %v1687 = vpack.c.b16 %v1455, %v1453
      %v1688 = vpack.c.b16 %v1456, %v1454
      %v1689 = vpack.c.b16 %v1459, %v1457
      %v1690 = vpack.c.b16 %v1460, %v1458
      %v1691 = vpack.c.b16 %v1463, %v1461
      %v1692 = vpack.c.b16 %v1464, %v1462
      %v1693 = vpack.c.b16 %v1467, %v1465
      %v1694 = vpack.c.b16 %v1468, %v1466
      %v1695 = vpack.c.b16 %v1471, %v1469
      %v1696 = vpack.c.b16 %v1472, %v1470
      %v1697 = vpack.c.b16 %v1475, %v1473
      %v1698 = vpack.c.b16 %v1476, %v1474
      %v1699 = vpack.c.b16 %v1479, %v1477
      %v1700 = vpack.c.b16 %v1480, %v1478
      %v1701 = vpack.c.b16 %v1483, %v1481
      %v1702 = vpack.c.b16 %v1484, %v1482
      %v1703 = vpack.c.b16 %v1487, %v1485
      %v1704 = vpack.c.b16 %v1488, %v1486
      %v1705 = vpack.c.b16 %v1491, %v1489
      %v1706 = vpack.c.b16 %v1492, %v1490
      %v1707 = vpack.c.b16 %v1495, %v1493
      %v1708 = vpack.c.b16 %v1496, %v1494
      %v1709 = vpack.c.b16 %v1499, %v1497
      %v1710 = vpack.c.b16 %v1500, %v1498
      %v1711 = vpack.c.b16 %v1503, %v1501
      %v1712 = vpack.c.b16 %v1504, %v1502
      %v1713 = vpack.c.b16 %v1507, %v1505
      %v1714 = vpack.c.b16 %v1508, %v1506
      %v1715 = vpack.c.b16 %v1511, %v1509
      %v1716 = vpack.c.b16 %v1512, %v1510
      %v1717 = vpack.c.b16 %v1515, %v1513
      %v1718 = vpack.c.b16 %v1516, %v1514
      %v1719 = vpack.c.b16 %v1519, %v1517
      %v1720 = vpack.c.b16 %v1520, %v1518
      %v1721 = vpack.c.b16 %v1523, %v1521
      %v1722 = vpack.c.b16 %v1524, %v1522
      %v1723 = vpack.c.b16 %v1527, %v1525
      %v1724 = vpack.c.b16 %v1528, %v1526
      %v1725 = vpack.c.b16 %v1531, %v1529
      %v1726 = vpack.c.b16 %v1532, %v1530
      %v1727 = vpack.c.b16 %v1535, %v1533
      %v1728 = vpack.c.b16 %v1536, %v1534
      %v1729 = vpack.c.b16 %v1539, %v1537
      %v1730 = vpack.c.b16 %v1540, %v1538
      %v1731 = vpack.c.b16 %v1543, %v1541
      %v1732 = vpack.c.b16 %v1544, %v1542
      %v1733 = vpack.c.b16 %v1547, %v1545
      %v1734 = vpack.c.b16 %v1548, %v1546
      %v1735 = vpack.c.b16 %v1551, %v1549
      %v1736 = vpack.c.b16 %v1552, %v1550
      %v1737 = vpack.c.b16 %v1555, %v1553
      %v1738 = vpack.c.b16 %v1556, %v1554
      %v1739 = vpack.c.b16 %v1559, %v1557
      %v1740 = vpack.c.b16 %v1560, %v1558
      %v1741 = vpack.c.b16 %v1563, %v1561
      %v1742 = vpack.c.b16 %v1564, %v1562
      %v1743 = vpack.c.b16 %v1567, %v1565
      %v1744 = vpack.c.b16 %v1568, %v1566
      %v1745 = vpack.c.b16 %v1571, %v1569
      %v1746 = vpack.c.b16 %v1572, %v1570
      %v1747 = vpack.c.b16 %v1575, %v1573
      %v1748 = vpack.c.b16 %v1576, %v1574
      %v1749 = vpack.c.b16 %v1579, %v1577
      %v1750 = vpack.c.b16 %v1580, %v1578
      %v1751 = vpack.c.b16 %v1583, %v1581
      %v1752 = vpack.c.b16 %v1584, %v1582
      %v1753 = vpack.c.b16 %v1587, %v1585
      %v1754 = vpack.c.b16 %v1588, %v1586
      %v1755 = vpack.c.b16 %v1591, %v1589
      %v1756 = vpack.c.b16 %v1592, %v1590
      %v1757 = vpack.c.b16 %v1595, %v1593
      %v1758 = vpack.c.b16 %v1596, %v1594
      %v1759 = vpack.c.b16 %v1599, %v1597
      %v1760 = vpack.c.b16 %v1600, %v1598
      %v1761 = vpack.c.b16 %v1603, %v1601
      %v1762 = vpack.c.b16 %v1604, %v1602
      %v1763 = vpack.c.b16 %v1607, %v1605
      %v1764 = vpack.c.b16 %v1608, %v1606
      %v1765 = vpack.c.b16 %v1611, %v1609
      %v1766 = vpack.c.b16 %v1612, %v1610
      %v1767 = vpack.c.b16 %v1615, %v1613
      %v1768 = vpack.c.b16 %v1616, %v1614
      %v1769 = vpack.c.b16 %v1619, %v1617
      %v1770 = vpack.c.b16 %v1620, %v1618
      %v1771 = vpack.c.b16 %v1623, %v1621
      %v1772 = vpack.c.b16 %v1624, %v1622
      %v1773 = vpack.c.b16 %v1627, %v1625
      %v1774 = vpack.c.b16 %v1628, %v1626
      %v1775 = vpack.c.b16 %v1631, %v1629
      %v1776 = vpack.c.b16 %v1632, %v1630
      %v1777 = vpack.c.b16 %v1635, %v1633
      %v1778 = vpack.c.b16 %v1636, %v1634
      %v1779 = vpack.c.b16 %v1639, %v1637
      %v1780 = vpack.c.b16 %v1640, %v1638
      %v1781 = vpack.c.b16 %v1643, %v1641
      %v1782 = vpack.c.b16 %v1644, %v1642
      %v1783 = vpack.c.b16 %v1647, %v1645
      %v1784 = vpack.c.b16 %v1648, %v1646
      %v1785 = vpack.c.b16 %v1651, %v1649
      %v1786 = vpack.c.b16 %v1652, %v1650
      %v1787 = vpack.c.b16 %v1655, %v1653
      %v1788 = vpack.c.b16 %v1656, %v1654
      %v1789 = vpack.c.b16 %v1659, %v1657
      %v1790 = vpack.c.b16 %v1660, %v1658
      %v1791 = vpack.c.b16 %v1663, %v1661
      %v1792 = vpack.c.b16 %v1664, %v1662
      %1921 = vmatprep.subr.bf16.mxu0 0
      %1922 = vmatpush1.bf16.msra.mxu0 %v1144
      %1923 = vmatprep.subr.bf16.mxu0 0
      %1924 = vmatpush1.bf16.msra.mxu0 %v1143
      %1925 = vmatprep.subr.bf16.mxu0 0
      %1926 = vmatpush1.bf16.msra.mxu0 %v1142
      %1927 = vmatprep.subr.bf16.mxu0 0
      %1928 = vmatpush1.bf16.msra.mxu0 %v1141
      %1929 = vmatprep.subr.bf16.mxu0 0
      %1930 = vmatpush1.bf16.msra.mxu0 %v1140
      %1931 = vmatprep.subr.bf16.mxu0 0
      %1932 = vmatpush1.bf16.msra.mxu0 %v1139
      %1933 = vmatprep.subr.bf16.mxu0 0
      %1934 = vmatpush1.bf16.msra.mxu0 %v1138
      %1935 = vmatprep.subr.bf16.mxu0 0
      %1936 = vmatpush1.bf16.msra.mxu0 %v1137
      %1937 = vmatprep.subr.bf16.mxu0 0
      %1938 = vmatpush2.bf16.msra.mxu0 %v1152
      %1939 = vmatprep.subr.bf16.mxu0 0
      %1940 = vmatpush2.bf16.msra.mxu0 %v1151
      %1941 = vmatprep.subr.bf16.mxu0 0
      %1942 = vmatpush2.bf16.msra.mxu0 %v1150
      %1943 = vmatprep.subr.bf16.mxu0 0
      %1944 = vmatpush2.bf16.msra.mxu0 %v1149
      %1945 = vmatprep.subr.bf16.mxu0 0
      %1946 = vmatpush2.bf16.msra.mxu0 %v1148
      %1947 = vmatprep.subr.bf16.mxu0 0
      %1948 = vmatpush2.bf16.msra.mxu0 %v1147
      %1949 = vmatprep.subr.bf16.mxu0 0
      %1950 = vmatpush2.bf16.msra.mxu0 %v1146
      %1951 = vmatprep.subr.bf16.mxu0 0
      %1952 = vmatpush2.bf16.msra.mxu0 %v1145
      %1953 = vmatprep.mubr.bf16.mxu0 %v1666
      %1954 = vmatmul.mubr.bf16.gmra.mxu0 %v1665
      %v1955 = vpop.f32.mrf.mxu0
      %v1956 = vadd.f32 0.0, %v1955
      %v1957 = vpop.f32.mrf.mxu0
      %v1958 = vpop.f32.mrf.mxu0
      %v1959 = vadd.f32 0.0, %v1958
      %v1960 = vpop.f32.mrf.mxu0
      %1961 = vmatprep.mubr.bf16.mxu0 %v1668
      %1962 = vmatmul.mubr.bf16.gmra.mxu0 %v1667
      %v1963 = vpop.f32.mrf.mxu0
      %v1964 = vadd.f32 0.0, %v1963
      %v1965 = vpop.f32.mrf.mxu0
      %v1966 = vpop.f32.mrf.mxu0
      %v1967 = vadd.f32 0.0, %v1966
      %v1968 = vpop.f32.mrf.mxu0
      %1969 = vmatprep.mubr.bf16.mxu0 %v1670
      %1970 = vmatmul.mubr.bf16.gmra.mxu0 %v1669
      %v1971 = vpop.f32.mrf.mxu0
      %v1972 = vadd.f32 0.0, %v1971
      %v1973 = vpop.f32.mrf.mxu0
      %v1974 = vpop.f32.mrf.mxu0
      %v1975 = vadd.f32 0.0, %v1974
      %v1976 = vpop.f32.mrf.mxu0
      %1977 = vmatprep.mubr.bf16.mxu0 %v1672
      %1978 = vmatmul.mubr.bf16.gmra.mxu0 %v1671
      %v1979 = vpop.f32.mrf.mxu0
      %v1980 = vadd.f32 0.0, %v1979
      %v1981 = vpop.f32.mrf.mxu0
      %v1982 = vpop.f32.mrf.mxu0
      %v1983 = vadd.f32 0.0, %v1982
      %v1984 = vpop.f32.mrf.mxu0
      %1985 = vmatprep.mubr.bf16.mxu0 %v1674
      %1986 = vmatmul.mubr.bf16.gmra.mxu0 %v1673
      %v1987 = vpop.f32.mrf.mxu0
      %v1988 = vadd.f32 0.0, %v1987
      %v1989 = vpop.f32.mrf.mxu0
      %v1990 = vpop.f32.mrf.mxu0
      %v1991 = vadd.f32 0.0, %v1990
      %v1992 = vpop.f32.mrf.mxu0
      %1993 = vmatprep.mubr.bf16.mxu0 %v1676
      %1994 = vmatmul.mubr.bf16.gmra.mxu0 %v1675
      %v1995 = vpop.f32.mrf.mxu0
      %v1996 = vadd.f32 0.0, %v1995
      %v1997 = vpop.f32.mrf.mxu0
      %v1998 = vpop.f32.mrf.mxu0
      %v1999 = vadd.f32 0.0, %v1998
      %v2000 = vpop.f32.mrf.mxu0
      %2001 = vmatprep.mubr.bf16.mxu0 %v1678
      %2002 = vmatmul.mubr.bf16.gmra.mxu0 %v1677
      %v2003 = vpop.f32.mrf.mxu0
      %v2004 = vadd.f32 0.0, %v2003
      %v2005 = vpop.f32.mrf.mxu0
      %v2006 = vpop.f32.mrf.mxu0
      %v2007 = vadd.f32 0.0, %v2006
      %v2008 = vpop.f32.mrf.mxu0
      %2009 = vmatprep.mubr.bf16.mxu0 %v1680
      %2010 = vmatmul.mubr.bf16.gmra.mxu0 %v1679
      %v2011 = vpop.f32.mrf.mxu0
      %v2012 = vadd.f32 0.0, %v2011
      %v2013 = vpop.f32.mrf.mxu0
      %v2014 = vpop.f32.mrf.mxu0
      %v2015 = vadd.f32 0.0, %v2014
      %v2016 = vpop.f32.mrf.mxu0
      %2017 = vmatprep.mubr.bf16.mxu0 %v1682
      %2018 = vmatmul.mubr.bf16.gmra.mxu0 %v1681
      %v2019 = vpop.f32.mrf.mxu0
      %v2020 = vadd.f32 0.0, %v2019
      %v2021 = vpop.f32.mrf.mxu0
      %v2022 = vpop.f32.mrf.mxu0
      %v2023 = vadd.f32 0.0, %v2022
      %v2024 = vpop.f32.mrf.mxu0
      %2025 = vmatprep.mubr.bf16.mxu0 %v1684
      %2026 = vmatmul.mubr.bf16.gmra.mxu0 %v1683
      %v2027 = vpop.f32.mrf.mxu0
      %v2028 = vadd.f32 0.0, %v2027
      %v2029 = vpop.f32.mrf.mxu0
      %v2030 = vpop.f32.mrf.mxu0
      %v2031 = vadd.f32 0.0, %v2030
      %v2032 = vpop.f32.mrf.mxu0
      %2033 = vmatprep.mubr.bf16.mxu0 %v1686
      %2034 = vmatmul.mubr.bf16.gmra.mxu0 %v1685
      %v2035 = vpop.f32.mrf.mxu0
      %v2036 = vadd.f32 0.0, %v2035
      %v2037 = vpop.f32.mrf.mxu0
      %v2038 = vpop.f32.mrf.mxu0
      %v2039 = vadd.f32 0.0, %v2038
      %v2040 = vpop.f32.mrf.mxu0
      %2041 = vmatprep.mubr.bf16.mxu0 %v1688
      %2042 = vmatmul.mubr.bf16.gmra.mxu0 %v1687
      %v2043 = vpop.f32.mrf.mxu0
      %v2044 = vadd.f32 0.0, %v2043
      %v2045 = vpop.f32.mrf.mxu0
      %v2046 = vpop.f32.mrf.mxu0
      %v2047 = vadd.f32 0.0, %v2046
      %v2048 = vpop.f32.mrf.mxu0
      %2049 = vmatprep.mubr.bf16.mxu0 %v1690
      %2050 = vmatmul.mubr.bf16.gmra.mxu0 %v1689
      %v2051 = vpop.f32.mrf.mxu0
      %v2052 = vadd.f32 0.0, %v2051
      %v2053 = vpop.f32.mrf.mxu0
      %v2054 = vpop.f32.mrf.mxu0
      %v2055 = vadd.f32 0.0, %v2054
      %v2056 = vpop.f32.mrf.mxu0
      %2057 = vmatprep.mubr.bf16.mxu0 %v1692
      %2058 = vmatmul.mubr.bf16.gmra.mxu0 %v1691
      %v2059 = vpop.f32.mrf.mxu0
      %v2060 = vadd.f32 0.0, %v2059
      %v2061 = vpop.f32.mrf.mxu0
      %v2062 = vpop.f32.mrf.mxu0
      %v2063 = vadd.f32 0.0, %v2062
      %v2064 = vpop.f32.mrf.mxu0
      %2065 = vmatprep.mubr.bf16.mxu0 %v1694
      %2066 = vmatmul.mubr.bf16.gmra.mxu0 %v1693
      %v2067 = vpop.f32.mrf.mxu0
      %v2068 = vadd.f32 0.0, %v2067
      %v2069 = vpop.f32.mrf.mxu0
      %v2070 = vpop.f32.mrf.mxu0
      %v2071 = vadd.f32 0.0, %v2070
      %v2072 = vpop.f32.mrf.mxu0
      %2073 = vmatprep.mubr.bf16.mxu0 %v1696
      %2074 = vmatmul.mubr.bf16.gmra.mxu0 %v1695
      %v2075 = vpop.f32.mrf.mxu0
      %v2076 = vadd.f32 0.0, %v2075
      %v2077 = vpop.f32.mrf.mxu0
      %v2078 = vpop.f32.mrf.mxu0
      %v2079 = vadd.f32 0.0, %v2078
      %v2080 = vpop.f32.mrf.mxu0
      %2081 = vmatprep.mubr.bf16.mxu0 %v1698
      %2082 = vmatmul.mubr.bf16.gmra.mxu0 %v1697
      %v2083 = vpop.f32.mrf.mxu0
      %v2084 = vadd.f32 0.0, %v2083
      %v2085 = vpop.f32.mrf.mxu0
      %v2086 = vpop.f32.mrf.mxu0
      %v2087 = vadd.f32 0.0, %v2086
      %v2088 = vpop.f32.mrf.mxu0
      %2089 = vmatprep.mubr.bf16.mxu0 %v1700
      %2090 = vmatmul.mubr.bf16.gmra.mxu0 %v1699
      %v2091 = vpop.f32.mrf.mxu0
      %v2092 = vadd.f32 0.0, %v2091
      %v2093 = vpop.f32.mrf.mxu0
      %v2094 = vpop.f32.mrf.mxu0
      %v2095 = vadd.f32 0.0, %v2094
      %v2096 = vpop.f32.mrf.mxu0
      %2097 = vmatprep.mubr.bf16.mxu0 %v1702
      %2098 = vmatmul.mubr.bf16.gmra.mxu0 %v1701
      %v2099 = vpop.f32.mrf.mxu0
      %v2100 = vadd.f32 0.0, %v2099
      %v2101 = vpop.f32.mrf.mxu0
      %v2102 = vpop.f32.mrf.mxu0
      %v2103 = vadd.f32 0.0, %v2102
      %v2104 = vpop.f32.mrf.mxu0
      %2105 = vmatprep.mubr.bf16.mxu0 %v1704
      %2106 = vmatmul.mubr.bf16.gmra.mxu0 %v1703
      %v2107 = vpop.f32.mrf.mxu0
      %v2108 = vadd.f32 0.0, %v2107
      %v2109 = vpop.f32.mrf.mxu0
      %v2110 = vpop.f32.mrf.mxu0
      %v2111 = vadd.f32 0.0, %v2110
      %v2112 = vpop.f32.mrf.mxu0
      %2113 = vmatprep.mubr.bf16.mxu0 %v1706
      %2114 = vmatmul.mubr.bf16.gmra.mxu0 %v1705
      %v2115 = vpop.f32.mrf.mxu0
      %v2116 = vadd.f32 0.0, %v2115
      %v2117 = vpop.f32.mrf.mxu0
      %v2118 = vpop.f32.mrf.mxu0
      %v2119 = vadd.f32 0.0, %v2118
      %v2120 = vpop.f32.mrf.mxu0
      %2121 = vmatprep.mubr.bf16.mxu0 %v1708
      %2122 = vmatmul.mubr.bf16.gmra.mxu0 %v1707
      %v2123 = vpop.f32.mrf.mxu0
      %v2124 = vadd.f32 0.0, %v2123
      %v2125 = vpop.f32.mrf.mxu0
      %v2126 = vpop.f32.mrf.mxu0
      %v2127 = vadd.f32 0.0, %v2126
      %v2128 = vpop.f32.mrf.mxu0
      %2129 = vmatprep.mubr.bf16.mxu0 %v1710
      %2130 = vmatmul.mubr.bf16.gmra.mxu0 %v1709
      %v2131 = vpop.f32.mrf.mxu0
      %v2132 = vadd.f32 0.0, %v2131
      %v2133 = vpop.f32.mrf.mxu0
      %v2134 = vpop.f32.mrf.mxu0
      %v2135 = vadd.f32 0.0, %v2134
      %v2136 = vpop.f32.mrf.mxu0
      %2137 = vmatprep.mubr.bf16.mxu0 %v1712
      %2138 = vmatmul.mubr.bf16.gmra.mxu0 %v1711
      %v2139 = vpop.f32.mrf.mxu0
      %v2140 = vadd.f32 0.0, %v2139
      %v2141 = vpop.f32.mrf.mxu0
      %v2142 = vpop.f32.mrf.mxu0
      %v2143 = vadd.f32 0.0, %v2142
      %v2144 = vpop.f32.mrf.mxu0
      %2145 = vmatprep.mubr.bf16.mxu0 %v1714
      %2146 = vmatmul.mubr.bf16.gmra.mxu0 %v1713
      %v2147 = vpop.f32.mrf.mxu0
      %v2148 = vadd.f32 0.0, %v2147
      %v2149 = vpop.f32.mrf.mxu0
      %v2150 = vpop.f32.mrf.mxu0
      %v2151 = vadd.f32 0.0, %v2150
      %v2152 = vpop.f32.mrf.mxu0
      %2153 = vmatprep.mubr.bf16.mxu0 %v1716
      %2154 = vmatmul.mubr.bf16.gmra.mxu0 %v1715
      %v2155 = vpop.f32.mrf.mxu0
      %v2156 = vadd.f32 0.0, %v2155
      %v2157 = vpop.f32.mrf.mxu0
      %v2158 = vpop.f32.mrf.mxu0
      %v2159 = vadd.f32 0.0, %v2158
      %v2160 = vpop.f32.mrf.mxu0
      %2161 = vmatprep.mubr.bf16.mxu0 %v1718
      %2162 = vmatmul.mubr.bf16.gmra.mxu0 %v1717
      %v2163 = vpop.f32.mrf.mxu0
      %v2164 = vadd.f32 0.0, %v2163
      %v2165 = vpop.f32.mrf.mxu0
      %v2166 = vpop.f32.mrf.mxu0
      %v2167 = vadd.f32 0.0, %v2166
      %v2168 = vpop.f32.mrf.mxu0
      %2169 = vmatprep.mubr.bf16.mxu0 %v1720
      %2170 = vmatmul.mubr.bf16.gmra.mxu0 %v1719
      %v2171 = vpop.f32.mrf.mxu0
      %v2172 = vadd.f32 0.0, %v2171
      %v2173 = vpop.f32.mrf.mxu0
      %v2174 = vpop.f32.mrf.mxu0
      %v2175 = vadd.f32 0.0, %v2174
      %v2176 = vpop.f32.mrf.mxu0
      %2177 = vmatprep.mubr.bf16.mxu0 %v1722
      %2178 = vmatmul.mubr.bf16.gmra.mxu0 %v1721
      %v2179 = vpop.f32.mrf.mxu0
      %v2180 = vadd.f32 0.0, %v2179
      %v2181 = vpop.f32.mrf.mxu0
      %v2182 = vpop.f32.mrf.mxu0
      %v2183 = vadd.f32 0.0, %v2182
      %v2184 = vpop.f32.mrf.mxu0
      %2185 = vmatprep.mubr.bf16.mxu0 %v1724
      %2186 = vmatmul.mubr.bf16.gmra.mxu0 %v1723
      %v2187 = vpop.f32.mrf.mxu0
      %v2188 = vadd.f32 0.0, %v2187
      %v2189 = vpop.f32.mrf.mxu0
      %v2190 = vpop.f32.mrf.mxu0
      %v2191 = vadd.f32 0.0, %v2190
      %v2192 = vpop.f32.mrf.mxu0
      %2193 = vmatprep.mubr.bf16.mxu0 %v1726
      %2194 = vmatmul.mubr.bf16.gmra.mxu0 %v1725
      %v2195 = vpop.f32.mrf.mxu0
      %v2196 = vadd.f32 0.0, %v2195
      %v2197 = vpop.f32.mrf.mxu0
      %v2198 = vpop.f32.mrf.mxu0
      %v2199 = vadd.f32 0.0, %v2198
      %v2200 = vpop.f32.mrf.mxu0
      %2201 = vmatprep.mubr.bf16.mxu0 %v1728
      %2202 = vmatmul.mubr.bf16.gmra.mxu0 %v1727
      %v2203 = vpop.f32.mrf.mxu0
      %v2204 = vadd.f32 0.0, %v2203
      %v2205 = vpop.f32.mrf.mxu0
      %v2206 = vpop.f32.mrf.mxu0
      %v2207 = vadd.f32 0.0, %v2206
      %v2208 = vpop.f32.mrf.mxu0
      %2209 = vmatprep.mubr.bf16.mxu0 %v1730
      %2210 = vmatmul.mubr.bf16.gmra.mxu0 %v1729
      %v2211 = vpop.f32.mrf.mxu0
      %v2212 = vadd.f32 0.0, %v2211
      %v2213 = vpop.f32.mrf.mxu0
      %v2214 = vpop.f32.mrf.mxu0
      %v2215 = vadd.f32 0.0, %v2214
      %v2216 = vpop.f32.mrf.mxu0
      %2217 = vmatprep.mubr.bf16.mxu0 %v1732
      %2218 = vmatmul.mubr.bf16.gmra.mxu0 %v1731
      %v2219 = vpop.f32.mrf.mxu0
      %v2220 = vadd.f32 0.0, %v2219
      %v2221 = vpop.f32.mrf.mxu0
      %v2222 = vpop.f32.mrf.mxu0
      %v2223 = vadd.f32 0.0, %v2222
      %v2224 = vpop.f32.mrf.mxu0
      %2225 = vmatprep.mubr.bf16.mxu0 %v1734
      %2226 = vmatmul.mubr.bf16.gmra.mxu0 %v1733
      %v2227 = vpop.f32.mrf.mxu0
      %v2228 = vadd.f32 0.0, %v2227
      %v2229 = vpop.f32.mrf.mxu0
      %v2230 = vpop.f32.mrf.mxu0
      %v2231 = vadd.f32 0.0, %v2230
      %v2232 = vpop.f32.mrf.mxu0
      %2233 = vmatprep.mubr.bf16.mxu0 %v1736
      %2234 = vmatmul.mubr.bf16.gmra.mxu0 %v1735
      %v2235 = vpop.f32.mrf.mxu0
      %v2236 = vadd.f32 0.0, %v2235
      %v2237 = vpop.f32.mrf.mxu0
      %v2238 = vpop.f32.mrf.mxu0
      %v2239 = vadd.f32 0.0, %v2238
      %v2240 = vpop.f32.mrf.mxu0
      %2241 = vmatprep.mubr.bf16.mxu0 %v1738
      %2242 = vmatmul.mubr.bf16.gmra.mxu0 %v1737
      %v2243 = vpop.f32.mrf.mxu0
      %v2244 = vadd.f32 0.0, %v2243
      %v2245 = vpop.f32.mrf.mxu0
      %v2246 = vpop.f32.mrf.mxu0
      %v2247 = vadd.f32 0.0, %v2246
      %v2248 = vpop.f32.mrf.mxu0
      %2249 = vmatprep.mubr.bf16.mxu0 %v1740
      %2250 = vmatmul.mubr.bf16.gmra.mxu0 %v1739
      %v2251 = vpop.f32.mrf.mxu0
      %v2252 = vadd.f32 0.0, %v2251
      %v2253 = vpop.f32.mrf.mxu0
      %v2254 = vpop.f32.mrf.mxu0
      %v2255 = vadd.f32 0.0, %v2254
      %v2256 = vpop.f32.mrf.mxu0
      %2257 = vmatprep.mubr.bf16.mxu0 %v1742
      %2258 = vmatmul.mubr.bf16.gmra.mxu0 %v1741
      %v2259 = vpop.f32.mrf.mxu0
      %v2260 = vadd.f32 0.0, %v2259
      %v2261 = vpop.f32.mrf.mxu0
      %v2262 = vpop.f32.mrf.mxu0
      %v2263 = vadd.f32 0.0, %v2262
      %v2264 = vpop.f32.mrf.mxu0
      %2265 = vmatprep.mubr.bf16.mxu0 %v1744
      %2266 = vmatmul.mubr.bf16.gmra.mxu0 %v1743
      %v2267 = vpop.f32.mrf.mxu0
      %v2268 = vadd.f32 0.0, %v2267
      %v2269 = vpop.f32.mrf.mxu0
      %v2270 = vpop.f32.mrf.mxu0
      %v2271 = vadd.f32 0.0, %v2270
      %v2272 = vpop.f32.mrf.mxu0
      %2273 = vmatprep.mubr.bf16.mxu0 %v1746
      %2274 = vmatmul.mubr.bf16.gmra.mxu0 %v1745
      %v2275 = vpop.f32.mrf.mxu0
      %v2276 = vadd.f32 0.0, %v2275
      %v2277 = vpop.f32.mrf.mxu0
      %v2278 = vpop.f32.mrf.mxu0
      %v2279 = vadd.f32 0.0, %v2278
      %v2280 = vpop.f32.mrf.mxu0
      %2281 = vmatprep.mubr.bf16.mxu0 %v1748
      %2282 = vmatmul.mubr.bf16.gmra.mxu0 %v1747
      %v2283 = vpop.f32.mrf.mxu0
      %v2284 = vadd.f32 0.0, %v2283
      %v2285 = vpop.f32.mrf.mxu0
      %v2286 = vpop.f32.mrf.mxu0
      %v2287 = vadd.f32 0.0, %v2286
      %v2288 = vpop.f32.mrf.mxu0
      %2289 = vmatprep.mubr.bf16.mxu0 %v1750
      %2290 = vmatmul.mubr.bf16.gmra.mxu0 %v1749
      %v2291 = vpop.f32.mrf.mxu0
      %v2292 = vadd.f32 0.0, %v2291
      %v2293 = vpop.f32.mrf.mxu0
      %v2294 = vpop.f32.mrf.mxu0
      %v2295 = vadd.f32 0.0, %v2294
      %v2296 = vpop.f32.mrf.mxu0
      %2297 = vmatprep.mubr.bf16.mxu0 %v1752
      %2298 = vmatmul.mubr.bf16.gmra.mxu0 %v1751
      %v2299 = vpop.f32.mrf.mxu0
      %v2300 = vadd.f32 0.0, %v2299
      %v2301 = vpop.f32.mrf.mxu0
      %v2302 = vpop.f32.mrf.mxu0
      %v2303 = vadd.f32 0.0, %v2302
      %v2304 = vpop.f32.mrf.mxu0
      %2305 = vmatprep.mubr.bf16.mxu0 %v1754
      %2306 = vmatmul.mubr.bf16.gmra.mxu0 %v1753
      %v2307 = vpop.f32.mrf.mxu0
      %v2308 = vadd.f32 0.0, %v2307
      %v2309 = vpop.f32.mrf.mxu0
      %v2310 = vpop.f32.mrf.mxu0
      %v2311 = vadd.f32 0.0, %v2310
      %v2312 = vpop.f32.mrf.mxu0
      %2313 = vmatprep.mubr.bf16.mxu0 %v1756
      %2314 = vmatmul.mubr.bf16.gmra.mxu0 %v1755
      %v2315 = vpop.f32.mrf.mxu0
      %v2316 = vadd.f32 0.0, %v2315
      %v2317 = vpop.f32.mrf.mxu0
      %v2318 = vpop.f32.mrf.mxu0
      %v2319 = vadd.f32 0.0, %v2318
      %v2320 = vpop.f32.mrf.mxu0
      %2321 = vmatprep.mubr.bf16.mxu0 %v1758
      %2322 = vmatmul.mubr.bf16.gmra.mxu0 %v1757
      %v2323 = vpop.f32.mrf.mxu0
      %v2324 = vadd.f32 0.0, %v2323
      %v2325 = vpop.f32.mrf.mxu0
      %v2326 = vpop.f32.mrf.mxu0
      %v2327 = vadd.f32 0.0, %v2326
      %v2328 = vpop.f32.mrf.mxu0
      %2329 = vmatprep.mubr.bf16.mxu0 %v1760
      %2330 = vmatmul.mubr.bf16.gmra.mxu0 %v1759
      %v2331 = vpop.f32.mrf.mxu0
      %v2332 = vadd.f32 0.0, %v2331
      %v2333 = vpop.f32.mrf.mxu0
      %v2334 = vpop.f32.mrf.mxu0
      %v2335 = vadd.f32 0.0, %v2334
      %v2336 = vpop.f32.mrf.mxu0
      %2337 = vmatprep.mubr.bf16.mxu0 %v1762
      %2338 = vmatmul.mubr.bf16.gmra.mxu0 %v1761
      %v2339 = vpop.f32.mrf.mxu0
      %v2340 = vadd.f32 0.0, %v2339
      %v2341 = vpop.f32.mrf.mxu0
      %v2342 = vpop.f32.mrf.mxu0
      %v2343 = vadd.f32 0.0, %v2342
      %v2344 = vpop.f32.mrf.mxu0
      %2345 = vmatprep.mubr.bf16.mxu0 %v1764
      %2346 = vmatmul.mubr.bf16.gmra.mxu0 %v1763
      %v2347 = vpop.f32.mrf.mxu0
      %v2348 = vadd.f32 0.0, %v2347
      %v2349 = vpop.f32.mrf.mxu0
      %v2350 = vpop.f32.mrf.mxu0
      %v2351 = vadd.f32 0.0, %v2350
      %v2352 = vpop.f32.mrf.mxu0
      %2353 = vmatprep.mubr.bf16.mxu0 %v1766
      %2354 = vmatmul.mubr.bf16.gmra.mxu0 %v1765
      %v2355 = vpop.f32.mrf.mxu0
      %v2356 = vadd.f32 0.0, %v2355
      %v2357 = vpop.f32.mrf.mxu0
      %v2358 = vpop.f32.mrf.mxu0
      %v2359 = vadd.f32 0.0, %v2358
      %v2360 = vpop.f32.mrf.mxu0
      %2361 = vmatprep.mubr.bf16.mxu0 %v1768
      %2362 = vmatmul.mubr.bf16.gmra.mxu0 %v1767
      %v2363 = vpop.f32.mrf.mxu0
      %v2364 = vadd.f32 0.0, %v2363
      %v2365 = vpop.f32.mrf.mxu0
      %v2366 = vpop.f32.mrf.mxu0
      %v2367 = vadd.f32 0.0, %v2366
      %v2368 = vpop.f32.mrf.mxu0
      %2369 = vmatprep.mubr.bf16.mxu0 %v1770
      %2370 = vmatmul.mubr.bf16.gmra.mxu0 %v1769
      %v2371 = vpop.f32.mrf.mxu0
      %v2372 = vadd.f32 0.0, %v2371
      %v2373 = vpop.f32.mrf.mxu0
      %v2374 = vpop.f32.mrf.mxu0
      %v2375 = vadd.f32 0.0, %v2374
      %v2376 = vpop.f32.mrf.mxu0
      %2377 = vmatprep.mubr.bf16.mxu0 %v1772
      %2378 = vmatmul.mubr.bf16.gmra.mxu0 %v1771
      %v2379 = vpop.f32.mrf.mxu0
      %v2380 = vadd.f32 0.0, %v2379
      %v2381 = vpop.f32.mrf.mxu0
      %v2382 = vpop.f32.mrf.mxu0
      %v2383 = vadd.f32 0.0, %v2382
      %v2384 = vpop.f32.mrf.mxu0
      %2385 = vmatprep.mubr.bf16.mxu0 %v1774
      %2386 = vmatmul.mubr.bf16.gmra.mxu0 %v1773
      %v2387 = vpop.f32.mrf.mxu0
      %v2388 = vadd.f32 0.0, %v2387
      %v2389 = vpop.f32.mrf.mxu0
      %v2390 = vpop.f32.mrf.mxu0
      %v2391 = vadd.f32 0.0, %v2390
      %v2392 = vpop.f32.mrf.mxu0
      %2393 = vmatprep.mubr.bf16.mxu0 %v1776
      %2394 = vmatmul.mubr.bf16.gmra.mxu0 %v1775
      %v2395 = vpop.f32.mrf.mxu0
      %v2396 = vadd.f32 0.0, %v2395
      %v2397 = vpop.f32.mrf.mxu0
      %v2398 = vpop.f32.mrf.mxu0
      %v2399 = vadd.f32 0.0, %v2398
      %v2400 = vpop.f32.mrf.mxu0
      %2401 = vmatprep.mubr.bf16.mxu0 %v1778
      %2402 = vmatmul.mubr.bf16.gmra.mxu0 %v1777
      %v2403 = vpop.f32.mrf.mxu0
      %v2404 = vadd.f32 0.0, %v2403
      %v2405 = vpop.f32.mrf.mxu0
      %v2406 = vpop.f32.mrf.mxu0
      %v2407 = vadd.f32 0.0, %v2406
      %v2408 = vpop.f32.mrf.mxu0
      %2409 = vmatprep.mubr.bf16.mxu0 %v1780
      %2410 = vmatmul.mubr.bf16.gmra.mxu0 %v1779
      %v2411 = vpop.f32.mrf.mxu0
      %v2412 = vadd.f32 0.0, %v2411
      %v2413 = vpop.f32.mrf.mxu0
      %v2414 = vpop.f32.mrf.mxu0
      %v2415 = vadd.f32 0.0, %v2414
      %v2416 = vpop.f32.mrf.mxu0
      %2417 = vmatprep.mubr.bf16.mxu0 %v1782
      %2418 = vmatmul.mubr.bf16.gmra.mxu0 %v1781
      %v2419 = vpop.f32.mrf.mxu0
      %v2420 = vadd.f32 0.0, %v2419
      %v2421 = vpop.f32.mrf.mxu0
      %v2422 = vpop.f32.mrf.mxu0
      %v2423 = vadd.f32 0.0, %v2422
      %v2424 = vpop.f32.mrf.mxu0
      %2425 = vmatprep.mubr.bf16.mxu0 %v1784
      %2426 = vmatmul.mubr.bf16.gmra.mxu0 %v1783
      %v2427 = vpop.f32.mrf.mxu0
      %v2428 = vadd.f32 0.0, %v2427
      %v2429 = vpop.f32.mrf.mxu0
      %v2430 = vpop.f32.mrf.mxu0
      %v2431 = vadd.f32 0.0, %v2430
      %v2432 = vpop.f32.mrf.mxu0
      %2433 = vmatprep.mubr.bf16.mxu0 %v1786
      %2434 = vmatmul.mubr.bf16.gmra.mxu0 %v1785
      %v2435 = vpop.f32.mrf.mxu0
      %v2436 = vadd.f32 0.0, %v2435
      %v2437 = vpop.f32.mrf.mxu0
      %v2438 = vpop.f32.mrf.mxu0
      %v2439 = vadd.f32 0.0, %v2438
      %v2440 = vpop.f32.mrf.mxu0
      %2441 = vmatprep.mubr.bf16.mxu0 %v1788
      %2442 = vmatmul.mubr.bf16.gmra.mxu0 %v1787
      %v2443 = vpop.f32.mrf.mxu0
      %v2444 = vadd.f32 0.0, %v2443
      %v2445 = vpop.f32.mrf.mxu0
      %v2446 = vpop.f32.mrf.mxu0
      %v2447 = vadd.f32 0.0, %v2446
      %v2448 = vpop.f32.mrf.mxu0
      %2449 = vmatprep.mubr.bf16.mxu0 %v1790
      %2450 = vmatmul.mubr.bf16.gmra.mxu0 %v1789
      %v2451 = vpop.f32.mrf.mxu0
      %v2452 = vadd.f32 0.0, %v2451
      %v2453 = vpop.f32.mrf.mxu0
      %v2454 = vpop.f32.mrf.mxu0
      %v2455 = vadd.f32 0.0, %v2454
      %v2456 = vpop.f32.mrf.mxu0
      %2457 = vmatprep.mubr.bf16.mxu0 %v1792
      %2458 = vmatmul.mubr.bf16.gmra.mxu0 %v1791
      %v2459 = vpop.f32.mrf.mxu0
      %v2460 = vadd.f32 0.0, %v2459
      %v2461 = vpop.f32.mrf.mxu0
      %v2462 = vpop.f32.mrf.mxu0
      %v2463 = vadd.f32 0.0, %v2462
      %v2464 = vpop.f32.mrf.mxu0
      %2465 = vdwg.mxu0
      %v2466 = vpack.c.bf16 %v1959, %v1956
      %v2467 = vpack.c.bf16 %v1967, %v1964
      %v2468 = vpack.c.bf16 %v1975, %v1972
      %v2469 = vpack.c.bf16 %v1983, %v1980
      %v2470 = vpack.c.bf16 %v1991, %v1988
      %v2471 = vpack.c.bf16 %v1999, %v1996
      %v2472 = vpack.c.bf16 %v2007, %v2004
      %v2473 = vpack.c.bf16 %v2015, %v2012
      %v2474 = vpack.c.bf16 %v2023, %v2020
      %v2475 = vpack.c.bf16 %v2031, %v2028
      %v2476 = vpack.c.bf16 %v2039, %v2036
      %v2477 = vpack.c.bf16 %v2047, %v2044
      %v2478 = vpack.c.bf16 %v2055, %v2052
      %v2479 = vpack.c.bf16 %v2063, %v2060
      %v2480 = vpack.c.bf16 %v2071, %v2068
      %v2481 = vpack.c.bf16 %v2079, %v2076
      %v2482 = vpack.c.bf16 %v2087, %v2084
      %v2483 = vpack.c.bf16 %v2095, %v2092
      %v2484 = vpack.c.bf16 %v2103, %v2100
      %v2485 = vpack.c.bf16 %v2111, %v2108
      %v2486 = vpack.c.bf16 %v2119, %v2116
      %v2487 = vpack.c.bf16 %v2127, %v2124
      %v2488 = vpack.c.bf16 %v2135, %v2132
      %v2489 = vpack.c.bf16 %v2143, %v2140
      %v2490 = vpack.c.bf16 %v2151, %v2148
      %v2491 = vpack.c.bf16 %v2159, %v2156
      %v2492 = vpack.c.bf16 %v2167, %v2164
      %v2493 = vpack.c.bf16 %v2175, %v2172
      %v2494 = vpack.c.bf16 %v2183, %v2180
      %v2495 = vpack.c.bf16 %v2191, %v2188
      %v2496 = vpack.c.bf16 %v2199, %v2196
      %v2497 = vpack.c.bf16 %v2207, %v2204
      %v2498 = vpack.c.bf16 %v2215, %v2212
      %v2499 = vpack.c.bf16 %v2223, %v2220
      %v2500 = vpack.c.bf16 %v2231, %v2228
      %v2501 = vpack.c.bf16 %v2239, %v2236
      %v2502 = vpack.c.bf16 %v2247, %v2244
      %v2503 = vpack.c.bf16 %v2255, %v2252
      %v2504 = vpack.c.bf16 %v2263, %v2260
      %v2505 = vpack.c.bf16 %v2271, %v2268
      %v2506 = vpack.c.bf16 %v2279, %v2276
      %v2507 = vpack.c.bf16 %v2287, %v2284
      %v2508 = vpack.c.bf16 %v2295, %v2292
      %v2509 = vpack.c.bf16 %v2303, %v2300
      %v2510 = vpack.c.bf16 %v2311, %v2308
      %v2511 = vpack.c.bf16 %v2319, %v2316
      %v2512 = vpack.c.bf16 %v2327, %v2324
      %v2513 = vpack.c.bf16 %v2335, %v2332
      %v2514 = vpack.c.bf16 %v2343, %v2340
      %v2515 = vpack.c.bf16 %v2351, %v2348
      %v2516 = vpack.c.bf16 %v2359, %v2356
      %v2517 = vpack.c.bf16 %v2367, %v2364
      %v2518 = vpack.c.bf16 %v2375, %v2372
      %v2519 = vpack.c.bf16 %v2383, %v2380
      %v2520 = vpack.c.bf16 %v2391, %v2388
      %v2521 = vpack.c.bf16 %v2399, %v2396
      %v2522 = vpack.c.bf16 %v2407, %v2404
      %v2523 = vpack.c.bf16 %v2415, %v2412
      %v2524 = vpack.c.bf16 %v2423, %v2420
      %v2525 = vpack.c.bf16 %v2431, %v2428
      %v2526 = vpack.c.bf16 %v2439, %v2436
      %v2527 = vpack.c.bf16 %v2447, %v2444
      %v2528 = vpack.c.bf16 %v2455, %v2452
      %v2529 = vpack.c.bf16 %v2463, %v2460
      %v2530 = vld [vmem:[%s4] sm:$0xf]
      %v2531 = vld [vmem:[%s4 + $0x4] sm:$0xf]
      %v2532 = vld [vmem:[%s4 + $0x8] sm:$0xf]
      %v2533 = vld [vmem:[%s4 + $0xc] sm:$0xf]
      %v2534 = vld [vmem:[%s4 + $0x10] sm:$0xf]
      %v2535 = vld [vmem:[%s4 + $0x14] sm:$0xf]
      %v2536 = vld [vmem:[%s4 + $0x18] sm:$0xf]
      %v2537 = vld [vmem:[%s4 + $0x1c] sm:$0xf]
      %v2538 = vld [vmem:[%s4 + $0x20] sm:$0xf]
      %v2539 = vld [vmem:[%s4 + $0x24] sm:$0xf]
      %v2540 = vld [vmem:[%s4 + $0x28] sm:$0xf]
      %v2541 = vld [vmem:[%s4 + $0x2c] sm:$0xf]
      %v2542 = vld [vmem:[%s4 + $0x30] sm:$0xf]
      %v2543 = vld [vmem:[%s4 + $0x34] sm:$0xf]
      %v2544 = vld [vmem:[%s4 + $0x38] sm:$0xf]
      %v2545 = vld [vmem:[%s4 + $0x3c] sm:$0xf]
      %v2554 = vunpack.c.l.b16 %v2538
      %v2555 = vunpack.c.l.b16 %v2539
      %v2556 = vunpack.c.l.b16 %v2540
      %v2557 = vunpack.c.l.b16 %v2541
      %v2558 = vunpack.c.l.b16 %v2542
      %v2559 = vunpack.c.l.b16 %v2543
      %v2560 = vunpack.c.l.b16 %v2544
      %v2561 = vunpack.c.l.b16 %v2545
      %v2562 = vpack.c.b16 %v2555, %v2554
      %v2563 = vpack.c.b16 %v2557, %v2556
      %v2564 = vpack.c.b16 %v2559, %v2558
      %v2565 = vpack.c.b16 %v2561, %v2560
      %vm2570 = vcmask 523264
      %v2572 = vsel %vm2570, %v2470, 0
      %v2575 = vsel %vm2570, %v2471, 0
      %v2578 = vsel %vm2570, %v2472, 0
      %v2581 = vsel %vm2570, %v2473, 0
      %2583 = vmatprep.subr.bf16.mxu0 0
      %2584 = vmatpush1.bf16.msra.mxu0 0
      %2585 = vmatprep.subr.bf16.mxu0 0
      %2586 = vmatpush1.bf16.msra.mxu0 0
      %2587 = vmatprep.subr.bf16.mxu0 0
      %2588 = vmatpush1.bf16.msra.mxu0 0
      %2589 = vmatprep.subr.bf16.mxu0 0
      %2590 = vmatpush1.bf16.msra.mxu0 0
      %2591 = vmatprep.subr.bf16.mxu0 0
      %2592 = vmatpush1.bf16.msra.mxu0 %v2565
      %2593 = vmatprep.subr.bf16.mxu0 0
      %2594 = vmatpush1.bf16.msra.mxu0 %v2564
      %2595 = vmatprep.subr.bf16.mxu0 0
      %2596 = vmatpush1.bf16.msra.mxu0 %v2563
      %2597 = vmatprep.subr.bf16.mxu0 0
      %2598 = vmatpush1.bf16.msra.mxu0 %v2562
      %2599 = vmatprep.subr.bf16.mxu0 0
      %2600 = vmatpush2.bf16.msra.mxu0 0
      %2601 = vmatprep.subr.bf16.mxu0 0
      %2602 = vmatpush2.bf16.msra.mxu0 0
      %2603 = vmatprep.subr.bf16.mxu0 0
      %2604 = vmatpush2.bf16.msra.mxu0 0
      %2605 = vmatprep.subr.bf16.mxu0 0
      %2606 = vmatpush2.bf16.msra.mxu0 0
      %2607 = vmatprep.subr.bf16.mxu0 0
      %2608 = vmatpush2.bf16.msra.mxu0 0
      %2609 = vmatprep.subr.bf16.mxu0 0
      %2610 = vmatpush2.bf16.msra.mxu0 0
      %2611 = vmatprep.subr.bf16.mxu0 0
      %2612 = vmatpush2.bf16.msra.mxu0 0
      %2613 = vmatprep.subr.bf16.mxu0 0
      %2614 = vmatpush2.bf16.msra.mxu0 0
      %2615 = vmatprep.mubr.bf16.mxu0 0
      %2616 = vmatmul.mubr.bf16.gmra.mxu0 %v2572
      %v2617 = vpop.f32.mrf.mxu0
      %v2618 = vadd.f32 0.0, %v2617
      %v2619 = vpop.f32.mrf.mxu0
      %v2620 = vpop.f32.mrf.mxu0
      %v2621 = vadd.f32 0.0, %v2620
      %v2622 = vpop.f32.mrf.mxu0
      %2623 = vmatprep.mubr.bf16.mxu0 0
      %2624 = vmatmul.mubr.bf16.gmra.mxu0 %v2575
      %v2625 = vpop.f32.mrf.mxu0
      %v2626 = vadd.f32 0.0, %v2625
      %v2627 = vpop.f32.mrf.mxu0
      %v2628 = vpop.f32.mrf.mxu0
      %v2629 = vadd.f32 0.0, %v2628
      %v2630 = vpop.f32.mrf.mxu0
      %2631 = vmatprep.mubr.bf16.mxu0 0
      %2632 = vmatmul.mubr.bf16.gmra.mxu0 %v2578
      %v2633 = vpop.f32.mrf.mxu0
      %v2634 = vadd.f32 0.0, %v2633
      %v2635 = vpop.f32.mrf.mxu0
      %v2636 = vpop.f32.mrf.mxu0
      %v2637 = vadd.f32 0.0, %v2636
      %v2638 = vpop.f32.mrf.mxu0
      %2639 = vmatprep.mubr.bf16.mxu0 0
      %2640 = vmatmul.mubr.bf16.gmra.mxu0 %v2581
      %v2641 = vpop.f32.mrf.mxu0
      %v2642 = vadd.f32 0.0, %v2641
      %v2643 = vpop.f32.mrf.mxu0
      %v2644 = vpop.f32.mrf.mxu0
      %v2645 = vadd.f32 0.0, %v2644
      %v2646 = vpop.f32.mrf.mxu0
      %2647 = vdwg.mxu0
      %v2656 = vunpack.c.l.b16 %v2530
      %v2657 = vunpack.c.l.b16 %v2531
      %v2658 = vunpack.c.l.b16 %v2532
      %v2659 = vunpack.c.l.b16 %v2533
      %v2660 = vunpack.c.l.b16 %v2534
      %v2661 = vunpack.c.l.b16 %v2535
      %v2662 = vunpack.c.l.b16 %v2536
      %v2663 = vunpack.c.l.b16 %v2537
      %v2664 = vpack.c.b16 %v2657, %v2656
      %v2665 = vpack.c.b16 %v2659, %v2658
      %v2666 = vpack.c.b16 %v2661, %v2660
      %v2667 = vpack.c.b16 %v2663, %v2662
      %v2673 = vsel %vm2570, %v2466, 0
      %v2676 = vsel %vm2570, %v2467, 0
      %v2679 = vsel %vm2570, %v2468, 0
      %v2682 = vsel %vm2570, %v2469, 0
      %2684 = vmatprep.subr.bf16.mxu0 0
      %2685 = vmatpush1.bf16.msra.mxu0 0
      %2686 = vmatprep.subr.bf16.mxu0 0
      %2687 = vmatpush1.bf16.msra.mxu0 0
      %2688 = vmatprep.subr.bf16.mxu0 0
      %2689 = vmatpush1.bf16.msra.mxu0 0
      %2690 = vmatprep.subr.bf16.mxu0 0
      %2691 = vmatpush1.bf16.msra.mxu0 0
      %2692 = vmatprep.subr.bf16.mxu0 0
      %2693 = vmatpush1.bf16.msra.mxu0 %v2667
      %2694 = vmatprep.subr.bf16.mxu0 0
      %2695 = vmatpush1.bf16.msra.mxu0 %v2666
      %2696 = vmatprep.subr.bf16.mxu0 0
      %2697 = vmatpush1.bf16.msra.mxu0 %v2665
      %2698 = vmatprep.subr.bf16.mxu0 0
      %2699 = vmatpush1.bf16.msra.mxu0 %v2664
      %2700 = vmatprep.subr.bf16.mxu0 0
      %2701 = vmatpush2.bf16.msra.mxu0 0
      %2702 = vmatprep.subr.bf16.mxu0 0
      %2703 = vmatpush2.bf16.msra.mxu0 0
      %2704 = vmatprep.subr.bf16.mxu0 0
      %2705 = vmatpush2.bf16.msra.mxu0 0
      %2706 = vmatprep.subr.bf16.mxu0 0
      %2707 = vmatpush2.bf16.msra.mxu0 0
      %2708 = vmatprep.subr.bf16.mxu0 0
      %2709 = vmatpush2.bf16.msra.mxu0 0
      %2710 = vmatprep.subr.bf16.mxu0 0
      %2711 = vmatpush2.bf16.msra.mxu0 0
      %2712 = vmatprep.subr.bf16.mxu0 0
      %2713 = vmatpush2.bf16.msra.mxu0 0
      %2714 = vmatprep.subr.bf16.mxu0 0
      %2715 = vmatpush2.bf16.msra.mxu0 0
      %2716 = vmatprep.mubr.bf16.mxu0 0
      %2717 = vmatmul.mubr.bf16.gmra.mxu0 %v2673
      %v2718 = vpop.f32.mrf.mxu0
      %v2719 = vadd.f32 %v2618, %v2718
      %v2720 = vpop.f32.mrf.mxu0
      %v2721 = vpop.f32.mrf.mxu0
      %v2722 = vadd.f32 %v2621, %v2721
      %v2723 = vpop.f32.mrf.mxu0
      %2724 = vmatprep.mubr.bf16.mxu0 0
      %2725 = vmatmul.mubr.bf16.gmra.mxu0 %v2676
      %v2726 = vpop.f32.mrf.mxu0
      %v2727 = vadd.f32 %v2626, %v2726
      %v2728 = vpop.f32.mrf.mxu0
      %v2729 = vpop.f32.mrf.mxu0
      %v2730 = vadd.f32 %v2629, %v2729
      %v2731 = vpop.f32.mrf.mxu0
      %2732 = vmatprep.mubr.bf16.mxu0 0
      %2733 = vmatmul.mubr.bf16.gmra.mxu0 %v2679
      %v2734 = vpop.f32.mrf.mxu0
      %v2735 = vadd.f32 %v2634, %v2734
      %v2736 = vpop.f32.mrf.mxu0
      %v2737 = vpop.f32.mrf.mxu0
      %v2738 = vadd.f32 %v2637, %v2737
      %v2739 = vpop.f32.mrf.mxu0
      %2740 = vmatprep.mubr.bf16.mxu0 0
      %2741 = vmatmul.mubr.bf16.gmra.mxu0 %v2682
      %v2742 = vpop.f32.mrf.mxu0
      %v2743 = vadd.f32 %v2642, %v2742
      %v2744 = vpop.f32.mrf.mxu0
      %v2745 = vpop.f32.mrf.mxu0
      %v2746 = vadd.f32 %v2645, %v2745
      %v2747 = vpop.f32.mrf.mxu0
      %2748 = vdwg.mxu0
      %v2749 = vld [vmem:[%s4 + $0x40] sm:$0xf]
      %v2750 = vld [vmem:[%s4 + $0x44] sm:$0xf]
      %v2751 = vld [vmem:[%s4 + $0x48] sm:$0xf]
      %v2752 = vld [vmem:[%s4 + $0x4c] sm:$0xf]
      %v2753 = vld [vmem:[%s4 + $0x50] sm:$0xf]
      %v2754 = vld [vmem:[%s4 + $0x54] sm:$0xf]
      %v2755 = vld [vmem:[%s4 + $0x58] sm:$0xf]
      %v2756 = vld [vmem:[%s4 + $0x5c] sm:$0xf]
      %v2765 = vunpack.c.l.b16 %v2749
      %v2766 = vunpack.c.l.b16 %v2750
      %v2767 = vunpack.c.l.b16 %v2751
      %v2768 = vunpack.c.l.b16 %v2752
      %v2769 = vunpack.c.l.b16 %v2753
      %v2770 = vunpack.c.l.b16 %v2754
      %v2771 = vunpack.c.l.b16 %v2755
      %v2772 = vunpack.c.l.b16 %v2756
      %v2773 = vpack.c.b16 %v2766, %v2765
      %v2774 = vpack.c.b16 %v2768, %v2767
      %v2775 = vpack.c.b16 %v2770, %v2769
      %v2776 = vpack.c.b16 %v2772, %v2771
      %v2782 = vsel %vm2570, %v2474, 0
      %v2785 = vsel %vm2570, %v2475, 0
      %v2788 = vsel %vm2570, %v2476, 0
      %v2791 = vsel %vm2570, %v2477, 0
      %2793 = vmatprep.subr.bf16.mxu0 0
      %2794 = vmatpush1.bf16.msra.mxu0 0
      %2795 = vmatprep.subr.bf16.mxu0 0
      %2796 = vmatpush1.bf16.msra.mxu0 0
      %2797 = vmatprep.subr.bf16.mxu0 0
      %2798 = vmatpush1.bf16.msra.mxu0 0
      %2799 = vmatprep.subr.bf16.mxu0 0
      %2800 = vmatpush1.bf16.msra.mxu0 0
      %2801 = vmatprep.subr.bf16.mxu0 0
      %2802 = vmatpush1.bf16.msra.mxu0 %v2776
      %2803 = vmatprep.subr.bf16.mxu0 0
      %2804 = vmatpush1.bf16.msra.mxu0 %v2775
      %2805 = vmatprep.subr.bf16.mxu0 0
      %2806 = vmatpush1.bf16.msra.mxu0 %v2774
      %2807 = vmatprep.subr.bf16.mxu0 0
      %2808 = vmatpush1.bf16.msra.mxu0 %v2773
      %2809 = vmatprep.subr.bf16.mxu0 0
      %2810 = vmatpush2.bf16.msra.mxu0 0
      %2811 = vmatprep.subr.bf16.mxu0 0
      %2812 = vmatpush2.bf16.msra.mxu0 0
      %2813 = vmatprep.subr.bf16.mxu0 0
      %2814 = vmatpush2.bf16.msra.mxu0 0
      %2815 = vmatprep.subr.bf16.mxu0 0
      %2816 = vmatpush2.bf16.msra.mxu0 0
      %2817 = vmatprep.subr.bf16.mxu0 0
      %2818 = vmatpush2.bf16.msra.mxu0 0
      %2819 = vmatprep.subr.bf16.mxu0 0
      %2820 = vmatpush2.bf16.msra.mxu0 0
      %2821 = vmatprep.subr.bf16.mxu0 0
      %2822 = vmatpush2.bf16.msra.mxu0 0
      %2823 = vmatprep.subr.bf16.mxu0 0
      %2824 = vmatpush2.bf16.msra.mxu0 0
      %2825 = vmatprep.mubr.bf16.mxu0 0
      %2826 = vmatmul.mubr.bf16.gmra.mxu0 %v2782
      %v2827 = vpop.f32.mrf.mxu0
      %v2828 = vadd.f32 0.0, %v2827
      %v2829 = vpop.f32.mrf.mxu0
      %v2830 = vpop.f32.mrf.mxu0
      %v2831 = vadd.f32 0.0, %v2830
      %v2832 = vpop.f32.mrf.mxu0
      %2833 = vmatprep.mubr.bf16.mxu0 0
      %2834 = vmatmul.mubr.bf16.gmra.mxu0 %v2785
      %v2835 = vpop.f32.mrf.mxu0
      %v2836 = vadd.f32 0.0, %v2835
      %v2837 = vpop.f32.mrf.mxu0
      %v2838 = vpop.f32.mrf.mxu0
      %v2839 = vadd.f32 0.0, %v2838
      %v2840 = vpop.f32.mrf.mxu0
      %2841 = vmatprep.mubr.bf16.mxu0 0
      %2842 = vmatmul.mubr.bf16.gmra.mxu0 %v2788
      %v2843 = vpop.f32.mrf.mxu0
      %v2844 = vadd.f32 0.0, %v2843
      %v2845 = vpop.f32.mrf.mxu0
      %v2846 = vpop.f32.mrf.mxu0
      %v2847 = vadd.f32 0.0, %v2846
      %v2848 = vpop.f32.mrf.mxu0
      %2849 = vmatprep.mubr.bf16.mxu0 0
      %2850 = vmatmul.mubr.bf16.gmra.mxu0 %v2791
      %v2851 = vpop.f32.mrf.mxu0
      %v2852 = vadd.f32 0.0, %v2851
      %v2853 = vpop.f32.mrf.mxu0
      %v2854 = vpop.f32.mrf.mxu0
      %v2855 = vadd.f32 0.0, %v2854
      %v2856 = vpop.f32.mrf.mxu0
      %2857 = vdwg.mxu0
      %v2858 = vadd.f32 %v2719, %v2828
      %v2859 = vadd.f32 %v2722, %v2831
      %v2860 = vadd.f32 %v2727, %v2836
      %v2861 = vadd.f32 %v2730, %v2839
      %v2862 = vadd.f32 %v2735, %v2844
      %v2863 = vadd.f32 %v2738, %v2847
      %v2864 = vadd.f32 %v2743, %v2852
      %v2865 = vadd.f32 %v2746, %v2855
      %v2866 = vld [vmem:[%s4 + $0x60] sm:$0xf]
      %v2867 = vld [vmem:[%s4 + $0x64] sm:$0xf]
      %v2868 = vld [vmem:[%s4 + $0x68] sm:$0xf]
      %v2869 = vld [vmem:[%s4 + $0x6c] sm:$0xf]
      %v2870 = vld [vmem:[%s4 + $0x70] sm:$0xf]
      %v2871 = vld [vmem:[%s4 + $0x74] sm:$0xf]
      %v2872 = vld [vmem:[%s4 + $0x78] sm:$0xf]
      %v2873 = vld [vmem:[%s4 + $0x7c] sm:$0xf]
      %v2882 = vunpack.c.l.b16 %v2866
      %v2883 = vunpack.c.l.b16 %v2867
      %v2884 = vunpack.c.l.b16 %v2868
      %v2885 = vunpack.c.l.b16 %v2869
      %v2886 = vunpack.c.l.b16 %v2870
      %v2887 = vunpack.c.l.b16 %v2871
      %v2888 = vunpack.c.l.b16 %v2872
      %v2889 = vunpack.c.l.b16 %v2873
      %v2890 = vpack.c.b16 %v2883, %v2882
      %v2891 = vpack.c.b16 %v2885, %v2884
      %v2892 = vpack.c.b16 %v2887, %v2886
      %v2893 = vpack.c.b16 %v2889, %v2888
      %v2899 = vsel %vm2570, %v2478, 0
      %v2902 = vsel %vm2570, %v2479, 0
      %v2905 = vsel %vm2570, %v2480, 0
      %v2908 = vsel %vm2570, %v2481, 0
      %2910 = vmatprep.subr.bf16.mxu0 0
      %2911 = vmatpush1.bf16.msra.mxu0 0
      %2912 = vmatprep.subr.bf16.mxu0 0
      %2913 = vmatpush1.bf16.msra.mxu0 0
      %2914 = vmatprep.subr.bf16.mxu0 0
      %2915 = vmatpush1.bf16.msra.mxu0 0
      %2916 = vmatprep.subr.bf16.mxu0 0
      %2917 = vmatpush1.bf16.msra.mxu0 0
      %2918 = vmatprep.subr.bf16.mxu0 0
      %2919 = vmatpush1.bf16.msra.mxu0 %v2893
      %2920 = vmatprep.subr.bf16.mxu0 0
      %2921 = vmatpush1.bf16.msra.mxu0 %v2892
      %2922 = vmatprep.subr.bf16.mxu0 0
      %2923 = vmatpush1.bf16.msra.mxu0 %v2891
      %2924 = vmatprep.subr.bf16.mxu0 0
      %2925 = vmatpush1.bf16.msra.mxu0 %v2890
      %2926 = vmatprep.subr.bf16.mxu0 0
      %2927 = vmatpush2.bf16.msra.mxu0 0
      %2928 = vmatprep.subr.bf16.mxu0 0
      %2929 = vmatpush2.bf16.msra.mxu0 0
      %2930 = vmatprep.subr.bf16.mxu0 0
      %2931 = vmatpush2.bf16.msra.mxu0 0
      %2932 = vmatprep.subr.bf16.mxu0 0
      %2933 = vmatpush2.bf16.msra.mxu0 0
      %2934 = vmatprep.subr.bf16.mxu0 0
      %2935 = vmatpush2.bf16.msra.mxu0 0
      %2936 = vmatprep.subr.bf16.mxu0 0
      %2937 = vmatpush2.bf16.msra.mxu0 0
      %2938 = vmatprep.subr.bf16.mxu0 0
      %2939 = vmatpush2.bf16.msra.mxu0 0
      %2940 = vmatprep.subr.bf16.mxu0 0
      %2941 = vmatpush2.bf16.msra.mxu0 0
      %2942 = vmatprep.mubr.bf16.mxu0 0
      %2943 = vmatmul.mubr.bf16.gmra.mxu0 %v2899
      %v2944 = vpop.f32.mrf.mxu0
      %v2945 = vadd.f32 0.0, %v2944
      %v2946 = vpop.f32.mrf.mxu0
      %v2947 = vpop.f32.mrf.mxu0
      %v2948 = vadd.f32 0.0, %v2947
      %v2949 = vpop.f32.mrf.mxu0
      %2950 = vmatprep.mubr.bf16.mxu0 0
      %2951 = vmatmul.mubr.bf16.gmra.mxu0 %v2902
      %v2952 = vpop.f32.mrf.mxu0
      %v2953 = vadd.f32 0.0, %v2952
      %v2954 = vpop.f32.mrf.mxu0
      %v2955 = vpop.f32.mrf.mxu0
      %v2956 = vadd.f32 0.0, %v2955
      %v2957 = vpop.f32.mrf.mxu0
      %2958 = vmatprep.mubr.bf16.mxu0 0
      %2959 = vmatmul.mubr.bf16.gmra.mxu0 %v2905
      %v2960 = vpop.f32.mrf.mxu0
      %v2961 = vadd.f32 0.0, %v2960
      %v2962 = vpop.f32.mrf.mxu0
      %v2963 = vpop.f32.mrf.mxu0
      %v2964 = vadd.f32 0.0, %v2963
      %v2965 = vpop.f32.mrf.mxu0
      %2966 = vmatprep.mubr.bf16.mxu0 0
      %2967 = vmatmul.mubr.bf16.gmra.mxu0 %v2908
      %v2968 = vpop.f32.mrf.mxu0
      %v2969 = vadd.f32 0.0, %v2968
      %v2970 = vpop.f32.mrf.mxu0
      %v2971 = vpop.f32.mrf.mxu0
      %v2972 = vadd.f32 0.0, %v2971
      %v2973 = vpop.f32.mrf.mxu0
      %2974 = vdwg.mxu0
      %v2975 = vadd.f32 %v2858, %v2945
      %v2976 = vadd.f32 %v2859, %v2948
      %v2977 = vadd.f32 %v2860, %v2953
      %v2978 = vadd.f32 %v2861, %v2956
      %v2979 = vadd.f32 %v2862, %v2961
      %v2980 = vadd.f32 %v2863, %v2964
      %v2981 = vadd.f32 %v2864, %v2969
      %v2982 = vadd.f32 %v2865, %v2972
      %v2983 = vld [vmem:[%s4 + $0x80] sm:$0xf]
      %v2984 = vld [vmem:[%s4 + $0x84] sm:$0xf]
      %v2985 = vld [vmem:[%s4 + $0x88] sm:$0xf]
      %v2986 = vld [vmem:[%s4 + $0x8c] sm:$0xf]
      %v2987 = vld [vmem:[%s4 + $0x90] sm:$0xf]
      %v2988 = vld [vmem:[%s4 + $0x94] sm:$0xf]
      %v2989 = vld [vmem:[%s4 + $0x98] sm:$0xf]
      %v2990 = vld [vmem:[%s4 + $0x9c] sm:$0xf]
      %v2999 = vunpack.c.l.b16 %v2983
      %v3000 = vunpack.c.l.b16 %v2984
      %v3001 = vunpack.c.l.b16 %v2985
      %v3002 = vunpack.c.l.b16 %v2986
      %v3003 = vunpack.c.l.b16 %v2987
      %v3004 = vunpack.c.l.b16 %v2988
      %v3005 = vunpack.c.l.b16 %v2989
      %v3006 = vunpack.c.l.b16 %v2990
      %v3007 = vpack.c.b16 %v3000, %v2999
      %v3008 = vpack.c.b16 %v3002, %v3001
      %v3009 = vpack.c.b16 %v3004, %v3003
      %v3010 = vpack.c.b16 %v3006, %v3005
      %v3016 = vsel %vm2570, %v2482, 0
      %v3019 = vsel %vm2570, %v2483, 0
      %v3022 = vsel %vm2570, %v2484, 0
      %v3025 = vsel %vm2570, %v2485, 0
      %3027 = vmatprep.subr.bf16.mxu0 0
      %3028 = vmatpush1.bf16.msra.mxu0 0
      %3029 = vmatprep.subr.bf16.mxu0 0
      %3030 = vmatpush1.bf16.msra.mxu0 0
      %3031 = vmatprep.subr.bf16.mxu0 0
      %3032 = vmatpush1.bf16.msra.mxu0 0
      %3033 = vmatprep.subr.bf16.mxu0 0
      %3034 = vmatpush1.bf16.msra.mxu0 0
      %3035 = vmatprep.subr.bf16.mxu0 0
      %3036 = vmatpush1.bf16.msra.mxu0 %v3010
      %3037 = vmatprep.subr.bf16.mxu0 0
      %3038 = vmatpush1.bf16.msra.mxu0 %v3009
      %3039 = vmatprep.subr.bf16.mxu0 0
      %3040 = vmatpush1.bf16.msra.mxu0 %v3008
      %3041 = vmatprep.subr.bf16.mxu0 0
      %3042 = vmatpush1.bf16.msra.mxu0 %v3007
      %3043 = vmatprep.subr.bf16.mxu0 0
      %3044 = vmatpush2.bf16.msra.mxu0 0
      %3045 = vmatprep.subr.bf16.mxu0 0
      %3046 = vmatpush2.bf16.msra.mxu0 0
      %3047 = vmatprep.subr.bf16.mxu0 0
      %3048 = vmatpush2.bf16.msra.mxu0 0
      %3049 = vmatprep.subr.bf16.mxu0 0
      %3050 = vmatpush2.bf16.msra.mxu0 0
      %3051 = vmatprep.subr.bf16.mxu0 0
      %3052 = vmatpush2.bf16.msra.mxu0 0
      %3053 = vmatprep.subr.bf16.mxu0 0
      %3054 = vmatpush2.bf16.msra.mxu0 0
      %3055 = vmatprep.subr.bf16.mxu0 0
      %3056 = vmatpush2.bf16.msra.mxu0 0
      %3057 = vmatprep.subr.bf16.mxu0 0
      %3058 = vmatpush2.bf16.msra.mxu0 0
      %3059 = vmatprep.mubr.bf16.mxu0 0
      %3060 = vmatmul.mubr.bf16.gmra.mxu0 %v3016
      %v3061 = vpop.f32.mrf.mxu0
      %v3062 = vadd.f32 0.0, %v3061
      %v3063 = vpop.f32.mrf.mxu0
      %v3064 = vpop.f32.mrf.mxu0
      %v3065 = vadd.f32 0.0, %v3064
      %v3066 = vpop.f32.mrf.mxu0
      %3067 = vmatprep.mubr.bf16.mxu0 0
      %3068 = vmatmul.mubr.bf16.gmra.mxu0 %v3019
      %v3069 = vpop.f32.mrf.mxu0
      %v3070 = vadd.f32 0.0, %v3069
      %v3071 = vpop.f32.mrf.mxu0
      %v3072 = vpop.f32.mrf.mxu0
      %v3073 = vadd.f32 0.0, %v3072
      %v3074 = vpop.f32.mrf.mxu0
      %3075 = vmatprep.mubr.bf16.mxu0 0
      %3076 = vmatmul.mubr.bf16.gmra.mxu0 %v3022
      %v3077 = vpop.f32.mrf.mxu0
      %v3078 = vadd.f32 0.0, %v3077
      %v3079 = vpop.f32.mrf.mxu0
      %v3080 = vpop.f32.mrf.mxu0
      %v3081 = vadd.f32 0.0, %v3080
      %v3082 = vpop.f32.mrf.mxu0
      %3083 = vmatprep.mubr.bf16.mxu0 0
      %3084 = vmatmul.mubr.bf16.gmra.mxu0 %v3025
      %v3085 = vpop.f32.mrf.mxu0
      %v3086 = vadd.f32 0.0, %v3085
      %v3087 = vpop.f32.mrf.mxu0
      %v3088 = vpop.f32.mrf.mxu0
      %v3089 = vadd.f32 0.0, %v3088
      %v3090 = vpop.f32.mrf.mxu0
      %3091 = vdwg.mxu0
      %v3092 = vadd.f32 %v2975, %v3062
      %v3093 = vadd.f32 %v2976, %v3065
      %v3094 = vadd.f32 %v2977, %v3070
      %v3095 = vadd.f32 %v2978, %v3073
      %v3096 = vadd.f32 %v2979, %v3078
      %v3097 = vadd.f32 %v2980, %v3081
      %v3098 = vadd.f32 %v2981, %v3086
      %v3099 = vadd.f32 %v2982, %v3089
      %v3100 = vld [vmem:[%s4 + $0xa0] sm:$0xf]
      %v3101 = vld [vmem:[%s4 + $0xa4] sm:$0xf]
      %v3102 = vld [vmem:[%s4 + $0xa8] sm:$0xf]
      %v3103 = vld [vmem:[%s4 + $0xac] sm:$0xf]
      %v3104 = vld [vmem:[%s4 + $0xb0] sm:$0xf]
      %v3105 = vld [vmem:[%s4 + $0xb4] sm:$0xf]
      %v3106 = vld [vmem:[%s4 + $0xb8] sm:$0xf]
      %v3107 = vld [vmem:[%s4 + $0xbc] sm:$0xf]
      %v3116 = vunpack.c.l.b16 %v3100
      %v3117 = vunpack.c.l.b16 %v3101
      %v3118 = vunpack.c.l.b16 %v3102
      %v3119 = vunpack.c.l.b16 %v3103
      %v3120 = vunpack.c.l.b16 %v3104
      %v3121 = vunpack.c.l.b16 %v3105
      %v3122 = vunpack.c.l.b16 %v3106
      %v3123 = vunpack.c.l.b16 %v3107
      %v3124 = vpack.c.b16 %v3117, %v3116
      %v3125 = vpack.c.b16 %v3119, %v3118
      %v3126 = vpack.c.b16 %v3121, %v3120
      %v3127 = vpack.c.b16 %v3123, %v3122
      %v3133 = vsel %vm2570, %v2486, 0
      %v3136 = vsel %vm2570, %v2487, 0
      %v3139 = vsel %vm2570, %v2488, 0
      %v3142 = vsel %vm2570, %v2489, 0
      %3144 = vmatprep.subr.bf16.mxu0 0
      %3145 = vmatpush1.bf16.msra.mxu0 0
      %3146 = vmatprep.subr.bf16.mxu0 0
      %3147 = vmatpush1.bf16.msra.mxu0 0
      %3148 = vmatprep.subr.bf16.mxu0 0
      %3149 = vmatpush1.bf16.msra.mxu0 0
      %3150 = vmatprep.subr.bf16.mxu0 0
      %3151 = vmatpush1.bf16.msra.mxu0 0
      %3152 = vmatprep.subr.bf16.mxu0 0
      %3153 = vmatpush1.bf16.msra.mxu0 %v3127
      %3154 = vmatprep.subr.bf16.mxu0 0
      %3155 = vmatpush1.bf16.msra.mxu0 %v3126
      %3156 = vmatprep.subr.bf16.mxu0 0
      %3157 = vmatpush1.bf16.msra.mxu0 %v3125
      %3158 = vmatprep.subr.bf16.mxu0 0
      %3159 = vmatpush1.bf16.msra.mxu0 %v3124
      %3160 = vmatprep.subr.bf16.mxu0 0
      %3161 = vmatpush2.bf16.msra.mxu0 0
      %3162 = vmatprep.subr.bf16.mxu0 0
      %3163 = vmatpush2.bf16.msra.mxu0 0
      %3164 = vmatprep.subr.bf16.mxu0 0
      %3165 = vmatpush2.bf16.msra.mxu0 0
      %3166 = vmatprep.subr.bf16.mxu0 0
      %3167 = vmatpush2.bf16.msra.mxu0 0
      %3168 = vmatprep.subr.bf16.mxu0 0
      %3169 = vmatpush2.bf16.msra.mxu0 0
      %3170 = vmatprep.subr.bf16.mxu0 0
      %3171 = vmatpush2.bf16.msra.mxu0 0
      %3172 = vmatprep.subr.bf16.mxu0 0
      %3173 = vmatpush2.bf16.msra.mxu0 0
      %3174 = vmatprep.subr.bf16.mxu0 0
      %3175 = vmatpush2.bf16.msra.mxu0 0
      %3176 = vmatprep.mubr.bf16.mxu0 0
      %3177 = vmatmul.mubr.bf16.gmra.mxu0 %v3133
      %v3178 = vpop.f32.mrf.mxu0
      %v3179 = vadd.f32 0.0, %v3178
      %v3180 = vpop.f32.mrf.mxu0
      %v3181 = vpop.f32.mrf.mxu0
      %v3182 = vadd.f32 0.0, %v3181
      %v3183 = vpop.f32.mrf.mxu0
      %3184 = vmatprep.mubr.bf16.mxu0 0
      %3185 = vmatmul.mubr.bf16.gmra.mxu0 %v3136
      %v3186 = vpop.f32.mrf.mxu0
      %v3187 = vadd.f32 0.0, %v3186
      %v3188 = vpop.f32.mrf.mxu0
      %v3189 = vpop.f32.mrf.mxu0
      %v3190 = vadd.f32 0.0, %v3189
      %v3191 = vpop.f32.mrf.mxu0
      %3192 = vmatprep.mubr.bf16.mxu0 0
      %3193 = vmatmul.mubr.bf16.gmra.mxu0 %v3139
      %v3194 = vpop.f32.mrf.mxu0
      %v3195 = vadd.f32 0.0, %v3194
      %v3196 = vpop.f32.mrf.mxu0
      %v3197 = vpop.f32.mrf.mxu0
      %v3198 = vadd.f32 0.0, %v3197
      %v3199 = vpop.f32.mrf.mxu0
      %3200 = vmatprep.mubr.bf16.mxu0 0
      %3201 = vmatmul.mubr.bf16.gmra.mxu0 %v3142
      %v3202 = vpop.f32.mrf.mxu0
      %v3203 = vadd.f32 0.0, %v3202
      %v3204 = vpop.f32.mrf.mxu0
      %v3205 = vpop.f32.mrf.mxu0
      %v3206 = vadd.f32 0.0, %v3205
      %v3207 = vpop.f32.mrf.mxu0
      %3208 = vdwg.mxu0
      %v3209 = vadd.f32 %v3092, %v3179
      %v3210 = vadd.f32 %v3093, %v3182
      %v3211 = vadd.f32 %v3094, %v3187
      %v3212 = vadd.f32 %v3095, %v3190
      %v3213 = vadd.f32 %v3096, %v3195
      %v3214 = vadd.f32 %v3097, %v3198
      %v3215 = vadd.f32 %v3098, %v3203
      %v3216 = vadd.f32 %v3099, %v3206
      %v3217 = vld [vmem:[%s4 + $0xc0] sm:$0xf]
      %v3218 = vld [vmem:[%s4 + $0xc4] sm:$0xf]
      %v3219 = vld [vmem:[%s4 + $0xc8] sm:$0xf]
      %v3220 = vld [vmem:[%s4 + $0xcc] sm:$0xf]
      %v3221 = vld [vmem:[%s4 + $0xd0] sm:$0xf]
      %v3222 = vld [vmem:[%s4 + $0xd4] sm:$0xf]
      %v3223 = vld [vmem:[%s4 + $0xd8] sm:$0xf]
      %v3224 = vld [vmem:[%s4 + $0xdc] sm:$0xf]
      %v3233 = vunpack.c.l.b16 %v3217
      %v3234 = vunpack.c.l.b16 %v3218
      %v3235 = vunpack.c.l.b16 %v3219
      %v3236 = vunpack.c.l.b16 %v3220
      %v3237 = vunpack.c.l.b16 %v3221
      %v3238 = vunpack.c.l.b16 %v3222
      %v3239 = vunpack.c.l.b16 %v3223
      %v3240 = vunpack.c.l.b16 %v3224
      %v3241 = vpack.c.b16 %v3234, %v3233
      %v3242 = vpack.c.b16 %v3236, %v3235
      %v3243 = vpack.c.b16 %v3238, %v3237
      %v3244 = vpack.c.b16 %v3240, %v3239
      %v3250 = vsel %vm2570, %v2490, 0
      %v3253 = vsel %vm2570, %v2491, 0
      %v3256 = vsel %vm2570, %v2492, 0
      %v3259 = vsel %vm2570, %v2493, 0
      %3261 = vmatprep.subr.bf16.mxu0 0
      %3262 = vmatpush1.bf16.msra.mxu0 0
      %3263 = vmatprep.subr.bf16.mxu0 0
      %3264 = vmatpush1.bf16.msra.mxu0 0
      %3265 = vmatprep.subr.bf16.mxu0 0
      %3266 = vmatpush1.bf16.msra.mxu0 0
      %3267 = vmatprep.subr.bf16.mxu0 0
      %3268 = vmatpush1.bf16.msra.mxu0 0
      %3269 = vmatprep.subr.bf16.mxu0 0
      %3270 = vmatpush1.bf16.msra.mxu0 %v3244
      %3271 = vmatprep.subr.bf16.mxu0 0
      %3272 = vmatpush1.bf16.msra.mxu0 %v3243
      %3273 = vmatprep.subr.bf16.mxu0 0
      %3274 = vmatpush1.bf16.msra.mxu0 %v3242
      %3275 = vmatprep.subr.bf16.mxu0 0
      %3276 = vmatpush1.bf16.msra.mxu0 %v3241
      %3277 = vmatprep.subr.bf16.mxu0 0
      %3278 = vmatpush2.bf16.msra.mxu0 0
      %3279 = vmatprep.subr.bf16.mxu0 0
      %3280 = vmatpush2.bf16.msra.mxu0 0
      %3281 = vmatprep.subr.bf16.mxu0 0
      %3282 = vmatpush2.bf16.msra.mxu0 0
      %3283 = vmatprep.subr.bf16.mxu0 0
      %3284 = vmatpush2.bf16.msra.mxu0 0
      %3285 = vmatprep.subr.bf16.mxu0 0
      %3286 = vmatpush2.bf16.msra.mxu0 0
      %3287 = vmatprep.subr.bf16.mxu0 0
      %3288 = vmatpush2.bf16.msra.mxu0 0
      %3289 = vmatprep.subr.bf16.mxu0 0
      %3290 = vmatpush2.bf16.msra.mxu0 0
      %3291 = vmatprep.subr.bf16.mxu0 0
      %3292 = vmatpush2.bf16.msra.mxu0 0
      %3293 = vmatprep.mubr.bf16.mxu0 0
      %3294 = vmatmul.mubr.bf16.gmra.mxu0 %v3250
      %v3295 = vpop.f32.mrf.mxu0
      %v3296 = vadd.f32 0.0, %v3295
      %v3297 = vpop.f32.mrf.mxu0
      %v3298 = vpop.f32.mrf.mxu0
      %v3299 = vadd.f32 0.0, %v3298
      %v3300 = vpop.f32.mrf.mxu0
      %3301 = vmatprep.mubr.bf16.mxu0 0
      %3302 = vmatmul.mubr.bf16.gmra.mxu0 %v3253
      %v3303 = vpop.f32.mrf.mxu0
      %v3304 = vadd.f32 0.0, %v3303
      %v3305 = vpop.f32.mrf.mxu0
      %v3306 = vpop.f32.mrf.mxu0
      %v3307 = vadd.f32 0.0, %v3306
      %v3308 = vpop.f32.mrf.mxu0
      %3309 = vmatprep.mubr.bf16.mxu0 0
      %3310 = vmatmul.mubr.bf16.gmra.mxu0 %v3256
      %v3311 = vpop.f32.mrf.mxu0
      %v3312 = vadd.f32 0.0, %v3311
      %v3313 = vpop.f32.mrf.mxu0
      %v3314 = vpop.f32.mrf.mxu0
      %v3315 = vadd.f32 0.0, %v3314
      %v3316 = vpop.f32.mrf.mxu0
      %3317 = vmatprep.mubr.bf16.mxu0 0
      %3318 = vmatmul.mubr.bf16.gmra.mxu0 %v3259
      %v3319 = vpop.f32.mrf.mxu0
      %v3320 = vadd.f32 0.0, %v3319
      %v3321 = vpop.f32.mrf.mxu0
      %v3322 = vpop.f32.mrf.mxu0
      %v3323 = vadd.f32 0.0, %v3322
      %v3324 = vpop.f32.mrf.mxu0
      %3325 = vdwg.mxu0
      %v3326 = vadd.f32 %v3209, %v3296
      %v3327 = vadd.f32 %v3210, %v3299
      %v3328 = vadd.f32 %v3211, %v3304
      %v3329 = vadd.f32 %v3212, %v3307
      %v3330 = vadd.f32 %v3213, %v3312
      %v3331 = vadd.f32 %v3214, %v3315
      %v3332 = vadd.f32 %v3215, %v3320
      %v3333 = vadd.f32 %v3216, %v3323
      %v3334 = vld [vmem:[%s4 + $0xe0] sm:$0xf]
      %v3335 = vld [vmem:[%s4 + $0xe4] sm:$0xf]
      %v3336 = vld [vmem:[%s4 + $0xe8] sm:$0xf]
      %v3337 = vld [vmem:[%s4 + $0xec] sm:$0xf]
      %v3338 = vld [vmem:[%s4 + $0xf0] sm:$0xf]
      %v3339 = vld [vmem:[%s4 + $0xf4] sm:$0xf]
      %v3340 = vld [vmem:[%s4 + $0xf8] sm:$0xf]
      %v3341 = vld [vmem:[%s4 + $0xfc] sm:$0xf]
      %v3350 = vunpack.c.l.b16 %v3334
      %v3351 = vunpack.c.l.b16 %v3335
      %v3352 = vunpack.c.l.b16 %v3336
      %v3353 = vunpack.c.l.b16 %v3337
      %v3354 = vunpack.c.l.b16 %v3338
      %v3355 = vunpack.c.l.b16 %v3339
      %v3356 = vunpack.c.l.b16 %v3340
      %v3357 = vunpack.c.l.b16 %v3341
      %v3358 = vpack.c.b16 %v3351, %v3350
      %v3359 = vpack.c.b16 %v3353, %v3352
      %v3360 = vpack.c.b16 %v3355, %v3354
      %v3361 = vpack.c.b16 %v3357, %v3356
      %v3367 = vsel %vm2570, %v2494, 0
      %v3370 = vsel %vm2570, %v2495, 0
      %v3373 = vsel %vm2570, %v2496, 0
      %v3376 = vsel %vm2570, %v2497, 0
      %3378 = vmatprep.subr.bf16.mxu0 0
      %3379 = vmatpush1.bf16.msra.mxu0 0
      %3380 = vmatprep.subr.bf16.mxu0 0
      %3381 = vmatpush1.bf16.msra.mxu0 0
      %3382 = vmatprep.subr.bf16.mxu0 0
      %3383 = vmatpush1.bf16.msra.mxu0 0
      %3384 = vmatprep.subr.bf16.mxu0 0
      %3385 = vmatpush1.bf16.msra.mxu0 0
      %3386 = vmatprep.subr.bf16.mxu0 0
      %3387 = vmatpush1.bf16.msra.mxu0 %v3361
      %3388 = vmatprep.subr.bf16.mxu0 0
      %3389 = vmatpush1.bf16.msra.mxu0 %v3360
      %3390 = vmatprep.subr.bf16.mxu0 0
      %3391 = vmatpush1.bf16.msra.mxu0 %v3359
      %3392 = vmatprep.subr.bf16.mxu0 0
      %3393 = vmatpush1.bf16.msra.mxu0 %v3358
      %3394 = vmatprep.subr.bf16.mxu0 0
      %3395 = vmatpush2.bf16.msra.mxu0 0
      %3396 = vmatprep.subr.bf16.mxu0 0
      %3397 = vmatpush2.bf16.msra.mxu0 0
      %3398 = vmatprep.subr.bf16.mxu0 0
      %3399 = vmatpush2.bf16.msra.mxu0 0
      %3400 = vmatprep.subr.bf16.mxu0 0
      %3401 = vmatpush2.bf16.msra.mxu0 0
      %3402 = vmatprep.subr.bf16.mxu0 0
      %3403 = vmatpush2.bf16.msra.mxu0 0
      %3404 = vmatprep.subr.bf16.mxu0 0
      %3405 = vmatpush2.bf16.msra.mxu0 0
      %3406 = vmatprep.subr.bf16.mxu0 0
      %3407 = vmatpush2.bf16.msra.mxu0 0
      %3408 = vmatprep.subr.bf16.mxu0 0
      %3409 = vmatpush2.bf16.msra.mxu0 0
      %3410 = vmatprep.mubr.bf16.mxu0 0
      %3411 = vmatmul.mubr.bf16.gmra.mxu0 %v3367
      %v3412 = vpop.f32.mrf.mxu0
      %v3413 = vadd.f32 0.0, %v3412
      %v3414 = vpop.f32.mrf.mxu0
      %v3415 = vpop.f32.mrf.mxu0
      %v3416 = vadd.f32 0.0, %v3415
      %v3417 = vpop.f32.mrf.mxu0
      %3418 = vmatprep.mubr.bf16.mxu0 0
      %3419 = vmatmul.mubr.bf16.gmra.mxu0 %v3370
      %v3420 = vpop.f32.mrf.mxu0
      %v3421 = vadd.f32 0.0, %v3420
      %v3422 = vpop.f32.mrf.mxu0
      %v3423 = vpop.f32.mrf.mxu0
      %v3424 = vadd.f32 0.0, %v3423
      %v3425 = vpop.f32.mrf.mxu0
      %3426 = vmatprep.mubr.bf16.mxu0 0
      %3427 = vmatmul.mubr.bf16.gmra.mxu0 %v3373
      %v3428 = vpop.f32.mrf.mxu0
      %v3429 = vadd.f32 0.0, %v3428
      %v3430 = vpop.f32.mrf.mxu0
      %v3431 = vpop.f32.mrf.mxu0
      %v3432 = vadd.f32 0.0, %v3431
      %v3433 = vpop.f32.mrf.mxu0
      %3434 = vmatprep.mubr.bf16.mxu0 0
      %3435 = vmatmul.mubr.bf16.gmra.mxu0 %v3376
      %v3436 = vpop.f32.mrf.mxu0
      %v3437 = vadd.f32 0.0, %v3436
      %v3438 = vpop.f32.mrf.mxu0
      %v3439 = vpop.f32.mrf.mxu0
      %v3440 = vadd.f32 0.0, %v3439
      %v3441 = vpop.f32.mrf.mxu0
      %3442 = vdwg.mxu0
      %v3443 = vadd.f32 %v3326, %v3413
      %v3444 = vadd.f32 %v3327, %v3416
      %v3445 = vadd.f32 %v3328, %v3421
      %v3446 = vadd.f32 %v3329, %v3424
      %v3447 = vadd.f32 %v3330, %v3429
      %v3448 = vadd.f32 %v3331, %v3432
      %v3449 = vadd.f32 %v3332, %v3437
      %v3450 = vadd.f32 %v3333, %v3440
      %v3451 = vld [vmem:[%s4 + $0x100] sm:$0xf]
      %v3452 = vld [vmem:[%s4 + $0x104] sm:$0xf]
      %v3453 = vld [vmem:[%s4 + $0x108] sm:$0xf]
      %v3454 = vld [vmem:[%s4 + $0x10c] sm:$0xf]
      %v3455 = vld [vmem:[%s4 + $0x110] sm:$0xf]
      %v3456 = vld [vmem:[%s4 + $0x114] sm:$0xf]
      %v3457 = vld [vmem:[%s4 + $0x118] sm:$0xf]
      %v3458 = vld [vmem:[%s4 + $0x11c] sm:$0xf]
      %v3467 = vunpack.c.l.b16 %v3451
      %v3468 = vunpack.c.l.b16 %v3452
      %v3469 = vunpack.c.l.b16 %v3453
      %v3470 = vunpack.c.l.b16 %v3454
      %v3471 = vunpack.c.l.b16 %v3455
      %v3472 = vunpack.c.l.b16 %v3456
      %v3473 = vunpack.c.l.b16 %v3457
      %v3474 = vunpack.c.l.b16 %v3458
      %v3475 = vpack.c.b16 %v3468, %v3467
      %v3476 = vpack.c.b16 %v3470, %v3469
      %v3477 = vpack.c.b16 %v3472, %v3471
      %v3478 = vpack.c.b16 %v3474, %v3473
      %v3484 = vsel %vm2570, %v2498, 0
      %v3487 = vsel %vm2570, %v2499, 0
      %v3490 = vsel %vm2570, %v2500, 0
      %v3493 = vsel %vm2570, %v2501, 0
      %3495 = vmatprep.subr.bf16.mxu0 0
      %3496 = vmatpush1.bf16.msra.mxu0 0
      %3497 = vmatprep.subr.bf16.mxu0 0
      %3498 = vmatpush1.bf16.msra.mxu0 0
      %3499 = vmatprep.subr.bf16.mxu0 0
      %3500 = vmatpush1.bf16.msra.mxu0 0
      %3501 = vmatprep.subr.bf16.mxu0 0
      %3502 = vmatpush1.bf16.msra.mxu0 0
      %3503 = vmatprep.subr.bf16.mxu0 0
      %3504 = vmatpush1.bf16.msra.mxu0 %v3478
      %3505 = vmatprep.subr.bf16.mxu0 0
      %3506 = vmatpush1.bf16.msra.mxu0 %v3477
      %3507 = vmatprep.subr.bf16.mxu0 0
      %3508 = vmatpush1.bf16.msra.mxu0 %v3476
      %3509 = vmatprep.subr.bf16.mxu0 0
      %3510 = vmatpush1.bf16.msra.mxu0 %v3475
      %3511 = vmatprep.subr.bf16.mxu0 0
      %3512 = vmatpush2.bf16.msra.mxu0 0
      %3513 = vmatprep.subr.bf16.mxu0 0
      %3514 = vmatpush2.bf16.msra.mxu0 0
      %3515 = vmatprep.subr.bf16.mxu0 0
      %3516 = vmatpush2.bf16.msra.mxu0 0
      %3517 = vmatprep.subr.bf16.mxu0 0
      %3518 = vmatpush2.bf16.msra.mxu0 0
      %3519 = vmatprep.subr.bf16.mxu0 0
      %3520 = vmatpush2.bf16.msra.mxu0 0
      %3521 = vmatprep.subr.bf16.mxu0 0
      %3522 = vmatpush2.bf16.msra.mxu0 0
      %3523 = vmatprep.subr.bf16.mxu0 0
      %3524 = vmatpush2.bf16.msra.mxu0 0
      %3525 = vmatprep.subr.bf16.mxu0 0
      %3526 = vmatpush2.bf16.msra.mxu0 0
      %3527 = vmatprep.mubr.bf16.mxu0 0
      %3528 = vmatmul.mubr.bf16.gmra.mxu0 %v3484
      %v3529 = vpop.f32.mrf.mxu0
      %v3530 = vadd.f32 0.0, %v3529
      %v3531 = vpop.f32.mrf.mxu0
      %v3532 = vpop.f32.mrf.mxu0
      %v3533 = vadd.f32 0.0, %v3532
      %v3534 = vpop.f32.mrf.mxu0
      %3535 = vmatprep.mubr.bf16.mxu0 0
      %3536 = vmatmul.mubr.bf16.gmra.mxu0 %v3487
      %v3537 = vpop.f32.mrf.mxu0
      %v3538 = vadd.f32 0.0, %v3537
      %v3539 = vpop.f32.mrf.mxu0
      %v3540 = vpop.f32.mrf.mxu0
      %v3541 = vadd.f32 0.0, %v3540
      %v3542 = vpop.f32.mrf.mxu0
      %3543 = vmatprep.mubr.bf16.mxu0 0
      %3544 = vmatmul.mubr.bf16.gmra.mxu0 %v3490
      %v3545 = vpop.f32.mrf.mxu0
      %v3546 = vadd.f32 0.0, %v3545
      %v3547 = vpop.f32.mrf.mxu0
      %v3548 = vpop.f32.mrf.mxu0
      %v3549 = vadd.f32 0.0, %v3548
      %v3550 = vpop.f32.mrf.mxu0
      %3551 = vmatprep.mubr.bf16.mxu0 0
      %3552 = vmatmul.mubr.bf16.gmra.mxu0 %v3493
      %v3553 = vpop.f32.mrf.mxu0
      %v3554 = vadd.f32 0.0, %v3553
      %v3555 = vpop.f32.mrf.mxu0
      %v3556 = vpop.f32.mrf.mxu0
      %v3557 = vadd.f32 0.0, %v3556
      %v3558 = vpop.f32.mrf.mxu0
      %3559 = vdwg.mxu0
      %v3560 = vadd.f32 %v3443, %v3530
      %v3561 = vadd.f32 %v3444, %v3533
      %v3562 = vadd.f32 %v3445, %v3538
      %v3563 = vadd.f32 %v3446, %v3541
      %v3564 = vadd.f32 %v3447, %v3546
      %v3565 = vadd.f32 %v3448, %v3549
      %v3566 = vadd.f32 %v3449, %v3554
      %v3567 = vadd.f32 %v3450, %v3557
      %v3568 = vld [vmem:[%s4 + $0x120] sm:$0xf]
      %v3569 = vld [vmem:[%s4 + $0x124] sm:$0xf]
      %v3570 = vld [vmem:[%s4 + $0x128] sm:$0xf]
      %v3571 = vld [vmem:[%s4 + $0x12c] sm:$0xf]
      %v3572 = vld [vmem:[%s4 + $0x130] sm:$0xf]
      %v3573 = vld [vmem:[%s4 + $0x134] sm:$0xf]
      %v3574 = vld [vmem:[%s4 + $0x138] sm:$0xf]
      %v3575 = vld [vmem:[%s4 + $0x13c] sm:$0xf]
      %v3584 = vunpack.c.l.b16 %v3568
      %v3585 = vunpack.c.l.b16 %v3569
      %v3586 = vunpack.c.l.b16 %v3570
      %v3587 = vunpack.c.l.b16 %v3571
      %v3588 = vunpack.c.l.b16 %v3572
      %v3589 = vunpack.c.l.b16 %v3573
      %v3590 = vunpack.c.l.b16 %v3574
      %v3591 = vunpack.c.l.b16 %v3575
      %v3592 = vpack.c.b16 %v3585, %v3584
      %v3593 = vpack.c.b16 %v3587, %v3586
      %v3594 = vpack.c.b16 %v3589, %v3588
      %v3595 = vpack.c.b16 %v3591, %v3590
      %v3601 = vsel %vm2570, %v2502, 0
      %v3604 = vsel %vm2570, %v2503, 0
      %v3607 = vsel %vm2570, %v2504, 0
      %v3610 = vsel %vm2570, %v2505, 0
      %3612 = vmatprep.subr.bf16.mxu0 0
      %3613 = vmatpush1.bf16.msra.mxu0 0
      %3614 = vmatprep.subr.bf16.mxu0 0
      %3615 = vmatpush1.bf16.msra.mxu0 0
      %3616 = vmatprep.subr.bf16.mxu0 0
      %3617 = vmatpush1.bf16.msra.mxu0 0
      %3618 = vmatprep.subr.bf16.mxu0 0
      %3619 = vmatpush1.bf16.msra.mxu0 0
      %3620 = vmatprep.subr.bf16.mxu0 0
      %3621 = vmatpush1.bf16.msra.mxu0 %v3595
      %3622 = vmatprep.subr.bf16.mxu0 0
      %3623 = vmatpush1.bf16.msra.mxu0 %v3594
      %3624 = vmatprep.subr.bf16.mxu0 0
      %3625 = vmatpush1.bf16.msra.mxu0 %v3593
      %3626 = vmatprep.subr.bf16.mxu0 0
      %3627 = vmatpush1.bf16.msra.mxu0 %v3592
      %3628 = vmatprep.subr.bf16.mxu0 0
      %3629 = vmatpush2.bf16.msra.mxu0 0
      %3630 = vmatprep.subr.bf16.mxu0 0
      %3631 = vmatpush2.bf16.msra.mxu0 0
      %3632 = vmatprep.subr.bf16.mxu0 0
      %3633 = vmatpush2.bf16.msra.mxu0 0
      %3634 = vmatprep.subr.bf16.mxu0 0
      %3635 = vmatpush2.bf16.msra.mxu0 0
      %3636 = vmatprep.subr.bf16.mxu0 0
      %3637 = vmatpush2.bf16.msra.mxu0 0
      %3638 = vmatprep.subr.bf16.mxu0 0
      %3639 = vmatpush2.bf16.msra.mxu0 0
      %3640 = vmatprep.subr.bf16.mxu0 0
      %3641 = vmatpush2.bf16.msra.mxu0 0
      %3642 = vmatprep.subr.bf16.mxu0 0
      %3643 = vmatpush2.bf16.msra.mxu0 0
      %3644 = vmatprep.mubr.bf16.mxu0 0
      %3645 = vmatmul.mubr.bf16.gmra.mxu0 %v3601
      %v3646 = vpop.f32.mrf.mxu0
      %v3647 = vadd.f32 0.0, %v3646
      %v3648 = vpop.f32.mrf.mxu0
      %v3649 = vpop.f32.mrf.mxu0
      %v3650 = vadd.f32 0.0, %v3649
      %v3651 = vpop.f32.mrf.mxu0
      %3652 = vmatprep.mubr.bf16.mxu0 0
      %3653 = vmatmul.mubr.bf16.gmra.mxu0 %v3604
      %v3654 = vpop.f32.mrf.mxu0
      %v3655 = vadd.f32 0.0, %v3654
      %v3656 = vpop.f32.mrf.mxu0
      %v3657 = vpop.f32.mrf.mxu0
      %v3658 = vadd.f32 0.0, %v3657
      %v3659 = vpop.f32.mrf.mxu0
      %3660 = vmatprep.mubr.bf16.mxu0 0
      %3661 = vmatmul.mubr.bf16.gmra.mxu0 %v3607
      %v3662 = vpop.f32.mrf.mxu0
      %v3663 = vadd.f32 0.0, %v3662
      %v3664 = vpop.f32.mrf.mxu0
      %v3665 = vpop.f32.mrf.mxu0
      %v3666 = vadd.f32 0.0, %v3665
      %v3667 = vpop.f32.mrf.mxu0
      %3668 = vmatprep.mubr.bf16.mxu0 0
      %3669 = vmatmul.mubr.bf16.gmra.mxu0 %v3610
      %v3670 = vpop.f32.mrf.mxu0
      %v3671 = vadd.f32 0.0, %v3670
      %v3672 = vpop.f32.mrf.mxu0
      %v3673 = vpop.f32.mrf.mxu0
      %v3674 = vadd.f32 0.0, %v3673
      %v3675 = vpop.f32.mrf.mxu0
      %3676 = vdwg.mxu0
      %v3677 = vadd.f32 %v3560, %v3647
      %v3678 = vadd.f32 %v3561, %v3650
      %v3679 = vadd.f32 %v3562, %v3655
      %v3680 = vadd.f32 %v3563, %v3658
      %v3681 = vadd.f32 %v3564, %v3663
      %v3682 = vadd.f32 %v3565, %v3666
      %v3683 = vadd.f32 %v3566, %v3671
      %v3684 = vadd.f32 %v3567, %v3674
      %v3685 = vld [vmem:[%s4 + $0x140] sm:$0xf]
      %v3686 = vld [vmem:[%s4 + $0x144] sm:$0xf]
      %v3687 = vld [vmem:[%s4 + $0x148] sm:$0xf]
      %v3688 = vld [vmem:[%s4 + $0x14c] sm:$0xf]
      %v3689 = vld [vmem:[%s4 + $0x150] sm:$0xf]
      %v3690 = vld [vmem:[%s4 + $0x154] sm:$0xf]
      %v3691 = vld [vmem:[%s4 + $0x158] sm:$0xf]
      %v3692 = vld [vmem:[%s4 + $0x15c] sm:$0xf]
      %v3701 = vunpack.c.l.b16 %v3685
      %v3702 = vunpack.c.l.b16 %v3686
      %v3703 = vunpack.c.l.b16 %v3687
      %v3704 = vunpack.c.l.b16 %v3688
      %v3705 = vunpack.c.l.b16 %v3689
      %v3706 = vunpack.c.l.b16 %v3690
      %v3707 = vunpack.c.l.b16 %v3691
      %v3708 = vunpack.c.l.b16 %v3692
      %v3709 = vpack.c.b16 %v3702, %v3701
      %v3710 = vpack.c.b16 %v3704, %v3703
      %v3711 = vpack.c.b16 %v3706, %v3705
      %v3712 = vpack.c.b16 %v3708, %v3707
      %v3718 = vsel %vm2570, %v2506, 0
      %v3721 = vsel %vm2570, %v2507, 0
      %v3724 = vsel %vm2570, %v2508, 0
      %v3727 = vsel %vm2570, %v2509, 0
      %3729 = vmatprep.subr.bf16.mxu0 0
      %3730 = vmatpush1.bf16.msra.mxu0 0
      %3731 = vmatprep.subr.bf16.mxu0 0
      %3732 = vmatpush1.bf16.msra.mxu0 0
      %3733 = vmatprep.subr.bf16.mxu0 0
      %3734 = vmatpush1.bf16.msra.mxu0 0
      %3735 = vmatprep.subr.bf16.mxu0 0
      %3736 = vmatpush1.bf16.msra.mxu0 0
      %3737 = vmatprep.subr.bf16.mxu0 0
      %3738 = vmatpush1.bf16.msra.mxu0 %v3712
      %3739 = vmatprep.subr.bf16.mxu0 0
      %3740 = vmatpush1.bf16.msra.mxu0 %v3711
      %3741 = vmatprep.subr.bf16.mxu0 0
      %3742 = vmatpush1.bf16.msra.mxu0 %v3710
      %3743 = vmatprep.subr.bf16.mxu0 0
      %3744 = vmatpush1.bf16.msra.mxu0 %v3709
      %3745 = vmatprep.subr.bf16.mxu0 0
      %3746 = vmatpush2.bf16.msra.mxu0 0
      %3747 = vmatprep.subr.bf16.mxu0 0
      %3748 = vmatpush2.bf16.msra.mxu0 0
      %3749 = vmatprep.subr.bf16.mxu0 0
      %3750 = vmatpush2.bf16.msra.mxu0 0
      %3751 = vmatprep.subr.bf16.mxu0 0
      %3752 = vmatpush2.bf16.msra.mxu0 0
      %3753 = vmatprep.subr.bf16.mxu0 0
      %3754 = vmatpush2.bf16.msra.mxu0 0
      %3755 = vmatprep.subr.bf16.mxu0 0
      %3756 = vmatpush2.bf16.msra.mxu0 0
      %3757 = vmatprep.subr.bf16.mxu0 0
      %3758 = vmatpush2.bf16.msra.mxu0 0
      %3759 = vmatprep.subr.bf16.mxu0 0
      %3760 = vmatpush2.bf16.msra.mxu0 0
      %3761 = vmatprep.mubr.bf16.mxu0 0
      %3762 = vmatmul.mubr.bf16.gmra.mxu0 %v3718
      %v3763 = vpop.f32.mrf.mxu0
      %v3764 = vadd.f32 0.0, %v3763
      %v3765 = vpop.f32.mrf.mxu0
      %v3766 = vpop.f32.mrf.mxu0
      %v3767 = vadd.f32 0.0, %v3766
      %v3768 = vpop.f32.mrf.mxu0
      %3769 = vmatprep.mubr.bf16.mxu0 0
      %3770 = vmatmul.mubr.bf16.gmra.mxu0 %v3721
      %v3771 = vpop.f32.mrf.mxu0
      %v3772 = vadd.f32 0.0, %v3771
      %v3773 = vpop.f32.mrf.mxu0
      %v3774 = vpop.f32.mrf.mxu0
      %v3775 = vadd.f32 0.0, %v3774
      %v3776 = vpop.f32.mrf.mxu0
      %3777 = vmatprep.mubr.bf16.mxu0 0
      %3778 = vmatmul.mubr.bf16.gmra.mxu0 %v3724
      %v3779 = vpop.f32.mrf.mxu0
      %v3780 = vadd.f32 0.0, %v3779
      %v3781 = vpop.f32.mrf.mxu0
      %v3782 = vpop.f32.mrf.mxu0
      %v3783 = vadd.f32 0.0, %v3782
      %v3784 = vpop.f32.mrf.mxu0
      %3785 = vmatprep.mubr.bf16.mxu0 0
      %3786 = vmatmul.mubr.bf16.gmra.mxu0 %v3727
      %v3787 = vpop.f32.mrf.mxu0
      %v3788 = vadd.f32 0.0, %v3787
      %v3789 = vpop.f32.mrf.mxu0
      %v3790 = vpop.f32.mrf.mxu0
      %v3791 = vadd.f32 0.0, %v3790
      %v3792 = vpop.f32.mrf.mxu0
      %3793 = vdwg.mxu0
      %v3794 = vadd.f32 %v3677, %v3764
      %v3795 = vadd.f32 %v3678, %v3767
      %v3796 = vadd.f32 %v3679, %v3772
      %v3797 = vadd.f32 %v3680, %v3775
      %v3798 = vadd.f32 %v3681, %v3780
      %v3799 = vadd.f32 %v3682, %v3783
      %v3800 = vadd.f32 %v3683, %v3788
      %v3801 = vadd.f32 %v3684, %v3791
      %v3802 = vld [vmem:[%s4 + $0x160] sm:$0xf]
      %v3803 = vld [vmem:[%s4 + $0x164] sm:$0xf]
      %v3804 = vld [vmem:[%s4 + $0x168] sm:$0xf]
      %v3805 = vld [vmem:[%s4 + $0x16c] sm:$0xf]
      %v3806 = vld [vmem:[%s4 + $0x170] sm:$0xf]
      %v3807 = vld [vmem:[%s4 + $0x174] sm:$0xf]
      %v3808 = vld [vmem:[%s4 + $0x178] sm:$0xf]
      %v3809 = vld [vmem:[%s4 + $0x17c] sm:$0xf]
      %v3818 = vunpack.c.l.b16 %v3802
      %v3819 = vunpack.c.l.b16 %v3803
      %v3820 = vunpack.c.l.b16 %v3804
      %v3821 = vunpack.c.l.b16 %v3805
      %v3822 = vunpack.c.l.b16 %v3806
      %v3823 = vunpack.c.l.b16 %v3807
      %v3824 = vunpack.c.l.b16 %v3808
      %v3825 = vunpack.c.l.b16 %v3809
      %v3826 = vpack.c.b16 %v3819, %v3818
      %v3827 = vpack.c.b16 %v3821, %v3820
      %v3828 = vpack.c.b16 %v3823, %v3822
      %v3829 = vpack.c.b16 %v3825, %v3824
      %v3835 = vsel %vm2570, %v2510, 0
      %v3838 = vsel %vm2570, %v2511, 0
      %v3841 = vsel %vm2570, %v2512, 0
      %v3844 = vsel %vm2570, %v2513, 0
      %3846 = vmatprep.subr.bf16.mxu0 0
      %3847 = vmatpush1.bf16.msra.mxu0 0
      %3848 = vmatprep.subr.bf16.mxu0 0
      %3849 = vmatpush1.bf16.msra.mxu0 0
      %3850 = vmatprep.subr.bf16.mxu0 0
      %3851 = vmatpush1.bf16.msra.mxu0 0
      %3852 = vmatprep.subr.bf16.mxu0 0
      %3853 = vmatpush1.bf16.msra.mxu0 0
      %3854 = vmatprep.subr.bf16.mxu0 0
      %3855 = vmatpush1.bf16.msra.mxu0 %v3829
      %3856 = vmatprep.subr.bf16.mxu0 0
      %3857 = vmatpush1.bf16.msra.mxu0 %v3828
      %3858 = vmatprep.subr.bf16.mxu0 0
      %3859 = vmatpush1.bf16.msra.mxu0 %v3827
      %3860 = vmatprep.subr.bf16.mxu0 0
      %3861 = vmatpush1.bf16.msra.mxu0 %v3826
      %3862 = vmatprep.subr.bf16.mxu0 0
      %3863 = vmatpush2.bf16.msra.mxu0 0
      %3864 = vmatprep.subr.bf16.mxu0 0
      %3865 = vmatpush2.bf16.msra.mxu0 0
      %3866 = vmatprep.subr.bf16.mxu0 0
      %3867 = vmatpush2.bf16.msra.mxu0 0
      %3868 = vmatprep.subr.bf16.mxu0 0
      %3869 = vmatpush2.bf16.msra.mxu0 0
      %3870 = vmatprep.subr.bf16.mxu0 0
      %3871 = vmatpush2.bf16.msra.mxu0 0
      %3872 = vmatprep.subr.bf16.mxu0 0
      %3873 = vmatpush2.bf16.msra.mxu0 0
      %3874 = vmatprep.subr.bf16.mxu0 0
      %3875 = vmatpush2.bf16.msra.mxu0 0
      %3876 = vmatprep.subr.bf16.mxu0 0
      %3877 = vmatpush2.bf16.msra.mxu0 0
      %3878 = vmatprep.mubr.bf16.mxu0 0
      %3879 = vmatmul.mubr.bf16.gmra.mxu0 %v3835
      %v3880 = vpop.f32.mrf.mxu0
      %v3881 = vadd.f32 0.0, %v3880
      %v3882 = vpop.f32.mrf.mxu0
      %v3883 = vpop.f32.mrf.mxu0
      %v3884 = vadd.f32 0.0, %v3883
      %v3885 = vpop.f32.mrf.mxu0
      %3886 = vmatprep.mubr.bf16.mxu0 0
      %3887 = vmatmul.mubr.bf16.gmra.mxu0 %v3838
      %v3888 = vpop.f32.mrf.mxu0
      %v3889 = vadd.f32 0.0, %v3888
      %v3890 = vpop.f32.mrf.mxu0
      %v3891 = vpop.f32.mrf.mxu0
      %v3892 = vadd.f32 0.0, %v3891
      %v3893 = vpop.f32.mrf.mxu0
      %3894 = vmatprep.mubr.bf16.mxu0 0
      %3895 = vmatmul.mubr.bf16.gmra.mxu0 %v3841
      %v3896 = vpop.f32.mrf.mxu0
      %v3897 = vadd.f32 0.0, %v3896
      %v3898 = vpop.f32.mrf.mxu0
      %v3899 = vpop.f32.mrf.mxu0
      %v3900 = vadd.f32 0.0, %v3899
      %v3901 = vpop.f32.mrf.mxu0
      %3902 = vmatprep.mubr.bf16.mxu0 0
      %3903 = vmatmul.mubr.bf16.gmra.mxu0 %v3844
      %v3904 = vpop.f32.mrf.mxu0
      %v3905 = vadd.f32 0.0, %v3904
      %v3906 = vpop.f32.mrf.mxu0
      %v3907 = vpop.f32.mrf.mxu0
      %v3908 = vadd.f32 0.0, %v3907
      %v3909 = vpop.f32.mrf.mxu0
      %3910 = vdwg.mxu0
      %v3911 = vadd.f32 %v3794, %v3881
      %v3912 = vadd.f32 %v3795, %v3884
      %v3913 = vadd.f32 %v3796, %v3889
      %v3914 = vadd.f32 %v3797, %v3892
      %v3915 = vadd.f32 %v3798, %v3897
      %v3916 = vadd.f32 %v3799, %v3900
      %v3917 = vadd.f32 %v3800, %v3905
      %v3918 = vadd.f32 %v3801, %v3908
      %v3919 = vld [vmem:[%s4 + $0x180] sm:$0xf]
      %v3920 = vld [vmem:[%s4 + $0x184] sm:$0xf]
      %v3921 = vld [vmem:[%s4 + $0x188] sm:$0xf]
      %v3922 = vld [vmem:[%s4 + $0x18c] sm:$0xf]
      %v3923 = vld [vmem:[%s4 + $0x190] sm:$0xf]
      %v3924 = vld [vmem:[%s4 + $0x194] sm:$0xf]
      %v3925 = vld [vmem:[%s4 + $0x198] sm:$0xf]
      %v3926 = vld [vmem:[%s4 + $0x19c] sm:$0xf]
      %v3935 = vunpack.c.l.b16 %v3919
      %v3936 = vunpack.c.l.b16 %v3920
      %v3937 = vunpack.c.l.b16 %v3921
      %v3938 = vunpack.c.l.b16 %v3922
      %v3939 = vunpack.c.l.b16 %v3923
      %v3940 = vunpack.c.l.b16 %v3924
      %v3941 = vunpack.c.l.b16 %v3925
      %v3942 = vunpack.c.l.b16 %v3926
      %v3943 = vpack.c.b16 %v3936, %v3935
      %v3944 = vpack.c.b16 %v3938, %v3937
      %v3945 = vpack.c.b16 %v3940, %v3939
      %v3946 = vpack.c.b16 %v3942, %v3941
      %v3952 = vsel %vm2570, %v2514, 0
      %v3955 = vsel %vm2570, %v2515, 0
      %v3958 = vsel %vm2570, %v2516, 0
      %v3961 = vsel %vm2570, %v2517, 0
      %3963 = vmatprep.subr.bf16.mxu0 0
      %3964 = vmatpush1.bf16.msra.mxu0 0
      %3965 = vmatprep.subr.bf16.mxu0 0
      %3966 = vmatpush1.bf16.msra.mxu0 0
      %3967 = vmatprep.subr.bf16.mxu0 0
      %3968 = vmatpush1.bf16.msra.mxu0 0
      %3969 = vmatprep.subr.bf16.mxu0 0
      %3970 = vmatpush1.bf16.msra.mxu0 0
      %3971 = vmatprep.subr.bf16.mxu0 0
      %3972 = vmatpush1.bf16.msra.mxu0 %v3946
      %3973 = vmatprep.subr.bf16.mxu0 0
      %3974 = vmatpush1.bf16.msra.mxu0 %v3945
      %3975 = vmatprep.subr.bf16.mxu0 0
      %3976 = vmatpush1.bf16.msra.mxu0 %v3944
      %3977 = vmatprep.subr.bf16.mxu0 0
      %3978 = vmatpush1.bf16.msra.mxu0 %v3943
      %3979 = vmatprep.subr.bf16.mxu0 0
      %3980 = vmatpush2.bf16.msra.mxu0 0
      %3981 = vmatprep.subr.bf16.mxu0 0
      %3982 = vmatpush2.bf16.msra.mxu0 0
      %3983 = vmatprep.subr.bf16.mxu0 0
      %3984 = vmatpush2.bf16.msra.mxu0 0
      %3985 = vmatprep.subr.bf16.mxu0 0
      %3986 = vmatpush2.bf16.msra.mxu0 0
      %3987 = vmatprep.subr.bf16.mxu0 0
      %3988 = vmatpush2.bf16.msra.mxu0 0
      %3989 = vmatprep.subr.bf16.mxu0 0
      %3990 = vmatpush2.bf16.msra.mxu0 0
      %3991 = vmatprep.subr.bf16.mxu0 0
      %3992 = vmatpush2.bf16.msra.mxu0 0
      %3993 = vmatprep.subr.bf16.mxu0 0
      %3994 = vmatpush2.bf16.msra.mxu0 0
      %3995 = vmatprep.mubr.bf16.mxu0 0
      %3996 = vmatmul.mubr.bf16.gmra.mxu0 %v3952
      %v3997 = vpop.f32.mrf.mxu0
      %v3998 = vadd.f32 0.0, %v3997
      %v3999 = vpop.f32.mrf.mxu0
      %v4000 = vpop.f32.mrf.mxu0
      %v4001 = vadd.f32 0.0, %v4000
      %v4002 = vpop.f32.mrf.mxu0
      %4003 = vmatprep.mubr.bf16.mxu0 0
      %4004 = vmatmul.mubr.bf16.gmra.mxu0 %v3955
      %v4005 = vpop.f32.mrf.mxu0
      %v4006 = vadd.f32 0.0, %v4005
      %v4007 = vpop.f32.mrf.mxu0
      %v4008 = vpop.f32.mrf.mxu0
      %v4009 = vadd.f32 0.0, %v4008
      %v4010 = vpop.f32.mrf.mxu0
      %4011 = vmatprep.mubr.bf16.mxu0 0
      %4012 = vmatmul.mubr.bf16.gmra.mxu0 %v3958
      %v4013 = vpop.f32.mrf.mxu0
      %v4014 = vadd.f32 0.0, %v4013
      %v4015 = vpop.f32.mrf.mxu0
      %v4016 = vpop.f32.mrf.mxu0
      %v4017 = vadd.f32 0.0, %v4016
      %v4018 = vpop.f32.mrf.mxu0
      %4019 = vmatprep.mubr.bf16.mxu0 0
      %4020 = vmatmul.mubr.bf16.gmra.mxu0 %v3961
      %v4021 = vpop.f32.mrf.mxu0
      %v4022 = vadd.f32 0.0, %v4021
      %v4023 = vpop.f32.mrf.mxu0
      %v4024 = vpop.f32.mrf.mxu0
      %v4025 = vadd.f32 0.0, %v4024
      %v4026 = vpop.f32.mrf.mxu0
      %4027 = vdwg.mxu0
      %v4028 = vadd.f32 %v3911, %v3998
      %v4029 = vadd.f32 %v3912, %v4001
      %v4030 = vadd.f32 %v3913, %v4006
      %v4031 = vadd.f32 %v3914, %v4009
      %v4032 = vadd.f32 %v3915, %v4014
      %v4033 = vadd.f32 %v3916, %v4017
      %v4034 = vadd.f32 %v3917, %v4022
      %v4035 = vadd.f32 %v3918, %v4025
      %v4036 = vld [vmem:[%s4 + $0x1a0] sm:$0xf]
      %v4037 = vld [vmem:[%s4 + $0x1a4] sm:$0xf]
      %v4038 = vld [vmem:[%s4 + $0x1a8] sm:$0xf]
      %v4039 = vld [vmem:[%s4 + $0x1ac] sm:$0xf]
      %v4040 = vld [vmem:[%s4 + $0x1b0] sm:$0xf]
      %v4041 = vld [vmem:[%s4 + $0x1b4] sm:$0xf]
      %v4042 = vld [vmem:[%s4 + $0x1b8] sm:$0xf]
      %v4043 = vld [vmem:[%s4 + $0x1bc] sm:$0xf]
      %v4052 = vunpack.c.l.b16 %v4036
      %v4053 = vunpack.c.l.b16 %v4037
      %v4054 = vunpack.c.l.b16 %v4038
      %v4055 = vunpack.c.l.b16 %v4039
      %v4056 = vunpack.c.l.b16 %v4040
      %v4057 = vunpack.c.l.b16 %v4041
      %v4058 = vunpack.c.l.b16 %v4042
      %v4059 = vunpack.c.l.b16 %v4043
      %v4060 = vpack.c.b16 %v4053, %v4052
      %v4061 = vpack.c.b16 %v4055, %v4054
      %v4062 = vpack.c.b16 %v4057, %v4056
      %v4063 = vpack.c.b16 %v4059, %v4058
      %v4069 = vsel %vm2570, %v2518, 0
      %v4072 = vsel %vm2570, %v2519, 0
      %v4075 = vsel %vm2570, %v2520, 0
      %v4078 = vsel %vm2570, %v2521, 0
      %4080 = vmatprep.subr.bf16.mxu0 0
      %4081 = vmatpush1.bf16.msra.mxu0 0
      %4082 = vmatprep.subr.bf16.mxu0 0
      %4083 = vmatpush1.bf16.msra.mxu0 0
      %4084 = vmatprep.subr.bf16.mxu0 0
      %4085 = vmatpush1.bf16.msra.mxu0 0
      %4086 = vmatprep.subr.bf16.mxu0 0
      %4087 = vmatpush1.bf16.msra.mxu0 0
      %4088 = vmatprep.subr.bf16.mxu0 0
      %4089 = vmatpush1.bf16.msra.mxu0 %v4063
      %4090 = vmatprep.subr.bf16.mxu0 0
      %4091 = vmatpush1.bf16.msra.mxu0 %v4062
      %4092 = vmatprep.subr.bf16.mxu0 0
      %4093 = vmatpush1.bf16.msra.mxu0 %v4061
      %4094 = vmatprep.subr.bf16.mxu0 0
      %4095 = vmatpush1.bf16.msra.mxu0 %v4060
      %4096 = vmatprep.subr.bf16.mxu0 0
      %4097 = vmatpush2.bf16.msra.mxu0 0
      %4098 = vmatprep.subr.bf16.mxu0 0
      %4099 = vmatpush2.bf16.msra.mxu0 0
      %4100 = vmatprep.subr.bf16.mxu0 0
      %4101 = vmatpush2.bf16.msra.mxu0 0
      %4102 = vmatprep.subr.bf16.mxu0 0
      %4103 = vmatpush2.bf16.msra.mxu0 0
      %4104 = vmatprep.subr.bf16.mxu0 0
      %4105 = vmatpush2.bf16.msra.mxu0 0
      %4106 = vmatprep.subr.bf16.mxu0 0
      %4107 = vmatpush2.bf16.msra.mxu0 0
      %4108 = vmatprep.subr.bf16.mxu0 0
      %4109 = vmatpush2.bf16.msra.mxu0 0
      %4110 = vmatprep.subr.bf16.mxu0 0
      %4111 = vmatpush2.bf16.msra.mxu0 0
      %4112 = vmatprep.mubr.bf16.mxu0 0
      %4113 = vmatmul.mubr.bf16.gmra.mxu0 %v4069
      %v4114 = vpop.f32.mrf.mxu0
      %v4115 = vadd.f32 0.0, %v4114
      %v4116 = vpop.f32.mrf.mxu0
      %v4117 = vpop.f32.mrf.mxu0
      %v4118 = vadd.f32 0.0, %v4117
      %v4119 = vpop.f32.mrf.mxu0
      %4120 = vmatprep.mubr.bf16.mxu0 0
      %4121 = vmatmul.mubr.bf16.gmra.mxu0 %v4072
      %v4122 = vpop.f32.mrf.mxu0
      %v4123 = vadd.f32 0.0, %v4122
      %v4124 = vpop.f32.mrf.mxu0
      %v4125 = vpop.f32.mrf.mxu0
      %v4126 = vadd.f32 0.0, %v4125
      %v4127 = vpop.f32.mrf.mxu0
      %4128 = vmatprep.mubr.bf16.mxu0 0
      %4129 = vmatmul.mubr.bf16.gmra.mxu0 %v4075
      %v4130 = vpop.f32.mrf.mxu0
      %v4131 = vadd.f32 0.0, %v4130
      %v4132 = vpop.f32.mrf.mxu0
      %v4133 = vpop.f32.mrf.mxu0
      %v4134 = vadd.f32 0.0, %v4133
      %v4135 = vpop.f32.mrf.mxu0
      %4136 = vmatprep.mubr.bf16.mxu0 0
      %4137 = vmatmul.mubr.bf16.gmra.mxu0 %v4078
      %v4138 = vpop.f32.mrf.mxu0
      %v4139 = vadd.f32 0.0, %v4138
      %v4140 = vpop.f32.mrf.mxu0
      %v4141 = vpop.f32.mrf.mxu0
      %v4142 = vadd.f32 0.0, %v4141
      %v4143 = vpop.f32.mrf.mxu0
      %4144 = vdwg.mxu0
      %v4145 = vadd.f32 %v4028, %v4115
      %v4146 = vadd.f32 %v4029, %v4118
      %v4147 = vadd.f32 %v4030, %v4123
      %v4148 = vadd.f32 %v4031, %v4126
      %v4149 = vadd.f32 %v4032, %v4131
      %v4150 = vadd.f32 %v4033, %v4134
      %v4151 = vadd.f32 %v4034, %v4139
      %v4152 = vadd.f32 %v4035, %v4142
      %v4153 = vld [vmem:[%s4 + $0x1c0] sm:$0xf]
      %v4154 = vld [vmem:[%s4 + $0x1c4] sm:$0xf]
      %v4155 = vld [vmem:[%s4 + $0x1c8] sm:$0xf]
      %v4156 = vld [vmem:[%s4 + $0x1cc] sm:$0xf]
      %v4157 = vld [vmem:[%s4 + $0x1d0] sm:$0xf]
      %v4158 = vld [vmem:[%s4 + $0x1d4] sm:$0xf]
      %v4159 = vld [vmem:[%s4 + $0x1d8] sm:$0xf]
      %v4160 = vld [vmem:[%s4 + $0x1dc] sm:$0xf]
      %v4169 = vunpack.c.l.b16 %v4153
      %v4170 = vunpack.c.l.b16 %v4154
      %v4171 = vunpack.c.l.b16 %v4155
      %v4172 = vunpack.c.l.b16 %v4156
      %v4173 = vunpack.c.l.b16 %v4157
      %v4174 = vunpack.c.l.b16 %v4158
      %v4175 = vunpack.c.l.b16 %v4159
      %v4176 = vunpack.c.l.b16 %v4160
      %v4177 = vpack.c.b16 %v4170, %v4169
      %v4178 = vpack.c.b16 %v4172, %v4171
      %v4179 = vpack.c.b16 %v4174, %v4173
      %v4180 = vpack.c.b16 %v4176, %v4175
      %v4186 = vsel %vm2570, %v2522, 0
      %v4189 = vsel %vm2570, %v2523, 0
      %v4192 = vsel %vm2570, %v2524, 0
      %v4195 = vsel %vm2570, %v2525, 0
      %4197 = vmatprep.subr.bf16.mxu0 0
      %4198 = vmatpush1.bf16.msra.mxu0 0
      %4199 = vmatprep.subr.bf16.mxu0 0
      %4200 = vmatpush1.bf16.msra.mxu0 0
      %4201 = vmatprep.subr.bf16.mxu0 0
      %4202 = vmatpush1.bf16.msra.mxu0 0
      %4203 = vmatprep.subr.bf16.mxu0 0
      %4204 = vmatpush1.bf16.msra.mxu0 0
      %4205 = vmatprep.subr.bf16.mxu0 0
      %4206 = vmatpush1.bf16.msra.mxu0 %v4180
      %4207 = vmatprep.subr.bf16.mxu0 0
      %4208 = vmatpush1.bf16.msra.mxu0 %v4179
      %4209 = vmatprep.subr.bf16.mxu0 0
      %4210 = vmatpush1.bf16.msra.mxu0 %v4178
      %4211 = vmatprep.subr.bf16.mxu0 0
      %4212 = vmatpush1.bf16.msra.mxu0 %v4177
      %4213 = vmatprep.subr.bf16.mxu0 0
      %4214 = vmatpush2.bf16.msra.mxu0 0
      %4215 = vmatprep.subr.bf16.mxu0 0
      %4216 = vmatpush2.bf16.msra.mxu0 0
      %4217 = vmatprep.subr.bf16.mxu0 0
      %4218 = vmatpush2.bf16.msra.mxu0 0
      %4219 = vmatprep.subr.bf16.mxu0 0
      %4220 = vmatpush2.bf16.msra.mxu0 0
      %4221 = vmatprep.subr.bf16.mxu0 0
      %4222 = vmatpush2.bf16.msra.mxu0 0
      %4223 = vmatprep.subr.bf16.mxu0 0
      %4224 = vmatpush2.bf16.msra.mxu0 0
      %4225 = vmatprep.subr.bf16.mxu0 0
      %4226 = vmatpush2.bf16.msra.mxu0 0
      %4227 = vmatprep.subr.bf16.mxu0 0
      %4228 = vmatpush2.bf16.msra.mxu0 0
      %4229 = vmatprep.mubr.bf16.mxu0 0
      %4230 = vmatmul.mubr.bf16.gmra.mxu0 %v4186
      %v4231 = vpop.f32.mrf.mxu0
      %v4232 = vadd.f32 0.0, %v4231
      %v4233 = vpop.f32.mrf.mxu0
      %v4234 = vpop.f32.mrf.mxu0
      %v4235 = vadd.f32 0.0, %v4234
      %v4236 = vpop.f32.mrf.mxu0
      %4237 = vmatprep.mubr.bf16.mxu0 0
      %4238 = vmatmul.mubr.bf16.gmra.mxu0 %v4189
      %v4239 = vpop.f32.mrf.mxu0
      %v4240 = vadd.f32 0.0, %v4239
      %v4241 = vpop.f32.mrf.mxu0
      %v4242 = vpop.f32.mrf.mxu0
      %v4243 = vadd.f32 0.0, %v4242
      %v4244 = vpop.f32.mrf.mxu0
      %4245 = vmatprep.mubr.bf16.mxu0 0
      %4246 = vmatmul.mubr.bf16.gmra.mxu0 %v4192
      %v4247 = vpop.f32.mrf.mxu0
      %v4248 = vadd.f32 0.0, %v4247
      %v4249 = vpop.f32.mrf.mxu0
      %v4250 = vpop.f32.mrf.mxu0
      %v4251 = vadd.f32 0.0, %v4250
      %v4252 = vpop.f32.mrf.mxu0
      %4253 = vmatprep.mubr.bf16.mxu0 0
      %4254 = vmatmul.mubr.bf16.gmra.mxu0 %v4195
      %v4255 = vpop.f32.mrf.mxu0
      %v4256 = vadd.f32 0.0, %v4255
      %v4257 = vpop.f32.mrf.mxu0
      %v4258 = vpop.f32.mrf.mxu0
      %v4259 = vadd.f32 0.0, %v4258
      %v4260 = vpop.f32.mrf.mxu0
      %4261 = vdwg.mxu0
      %v4262 = vadd.f32 %v4145, %v4232
      %v4263 = vadd.f32 %v4146, %v4235
      %v4264 = vadd.f32 %v4147, %v4240
      %v4265 = vadd.f32 %v4148, %v4243
      %v4266 = vadd.f32 %v4149, %v4248
      %v4267 = vadd.f32 %v4150, %v4251
      %v4268 = vadd.f32 %v4151, %v4256
      %v4269 = vadd.f32 %v4152, %v4259
      %v4270 = vld [vmem:[%s4 + $0x1e0] sm:$0xf]
      %v4271 = vld [vmem:[%s4 + $0x1e4] sm:$0xf]
      %v4272 = vld [vmem:[%s4 + $0x1e8] sm:$0xf]
      %v4273 = vld [vmem:[%s4 + $0x1ec] sm:$0xf]
      %v4274 = vld [vmem:[%s4 + $0x1f0] sm:$0xf]
      %v4275 = vld [vmem:[%s4 + $0x1f4] sm:$0xf]
      %v4276 = vld [vmem:[%s4 + $0x1f8] sm:$0xf]
      %v4277 = vld [vmem:[%s4 + $0x1fc] sm:$0xf]
      %v4286 = vunpack.c.l.b16 %v4270
      %v4287 = vunpack.c.l.b16 %v4271
      %v4288 = vunpack.c.l.b16 %v4272
      %v4289 = vunpack.c.l.b16 %v4273
      %v4290 = vunpack.c.l.b16 %v4274
      %v4291 = vunpack.c.l.b16 %v4275
      %v4292 = vunpack.c.l.b16 %v4276
      %v4293 = vunpack.c.l.b16 %v4277
      %v4294 = vpack.c.b16 %v4287, %v4286
      %v4295 = vpack.c.b16 %v4289, %v4288
      %v4296 = vpack.c.b16 %v4291, %v4290
      %v4297 = vpack.c.b16 %v4293, %v4292
      %v4303 = vsel %vm2570, %v2526, 0
      %v4306 = vsel %vm2570, %v2527, 0
      %v4309 = vsel %vm2570, %v2528, 0
      %v4312 = vsel %vm2570, %v2529, 0
      %4314 = vmatprep.subr.bf16.mxu0 0
      %4315 = vmatpush1.bf16.msra.mxu0 0
      %4316 = vmatprep.subr.bf16.mxu0 0
      %4317 = vmatpush1.bf16.msra.mxu0 0
      %4318 = vmatprep.subr.bf16.mxu0 0
      %4319 = vmatpush1.bf16.msra.mxu0 0
      %4320 = vmatprep.subr.bf16.mxu0 0
      %4321 = vmatpush1.bf16.msra.mxu0 0
      %4322 = vmatprep.subr.bf16.mxu0 0
      %4323 = vmatpush1.bf16.msra.mxu0 %v4297
      %4324 = vmatprep.subr.bf16.mxu0 0
      %4325 = vmatpush1.bf16.msra.mxu0 %v4296
      %4326 = vmatprep.subr.bf16.mxu0 0
      %4327 = vmatpush1.bf16.msra.mxu0 %v4295
      %4328 = vmatprep.subr.bf16.mxu0 0
      %4329 = vmatpush1.bf16.msra.mxu0 %v4294
      %4330 = vmatprep.subr.bf16.mxu0 0
      %4331 = vmatpush2.bf16.msra.mxu0 0
      %4332 = vmatprep.subr.bf16.mxu0 0
      %4333 = vmatpush2.bf16.msra.mxu0 0
      %4334 = vmatprep.subr.bf16.mxu0 0
      %4335 = vmatpush2.bf16.msra.mxu0 0
      %4336 = vmatprep.subr.bf16.mxu0 0
      %4337 = vmatpush2.bf16.msra.mxu0 0
      %4338 = vmatprep.subr.bf16.mxu0 0
      %4339 = vmatpush2.bf16.msra.mxu0 0
      %4340 = vmatprep.subr.bf16.mxu0 0
      %4341 = vmatpush2.bf16.msra.mxu0 0
      %4342 = vmatprep.subr.bf16.mxu0 0
      %4343 = vmatpush2.bf16.msra.mxu0 0
      %4344 = vmatprep.subr.bf16.mxu0 0
      %4345 = vmatpush2.bf16.msra.mxu0 0
      %4346 = vmatprep.mubr.bf16.mxu0 0
      %4347 = vmatmul.mubr.bf16.gmra.mxu0 %v4303
      %v4348 = vpop.f32.mrf.mxu0
      %v4349 = vadd.f32 0.0, %v4348
      %v4350 = vpop.f32.mrf.mxu0
      %v4351 = vpop.f32.mrf.mxu0
      %v4352 = vadd.f32 0.0, %v4351
      %v4353 = vpop.f32.mrf.mxu0
      %4354 = vmatprep.mubr.bf16.mxu0 0
      %4355 = vmatmul.mubr.bf16.gmra.mxu0 %v4306
      %v4356 = vpop.f32.mrf.mxu0
      %v4357 = vadd.f32 0.0, %v4356
      %v4358 = vpop.f32.mrf.mxu0
      %v4359 = vpop.f32.mrf.mxu0
      %v4360 = vadd.f32 0.0, %v4359
      %v4361 = vpop.f32.mrf.mxu0
      %4362 = vmatprep.mubr.bf16.mxu0 0
      %4363 = vmatmul.mubr.bf16.gmra.mxu0 %v4309
      %v4364 = vpop.f32.mrf.mxu0
      %v4365 = vadd.f32 0.0, %v4364
      %v4366 = vpop.f32.mrf.mxu0
      %v4367 = vpop.f32.mrf.mxu0
      %v4368 = vadd.f32 0.0, %v4367
      %v4369 = vpop.f32.mrf.mxu0
      %4370 = vmatprep.mubr.bf16.mxu0 0
      %4371 = vmatmul.mubr.bf16.gmra.mxu0 %v4312
      %v4372 = vpop.f32.mrf.mxu0
      %v4373 = vadd.f32 0.0, %v4372
      %v4374 = vpop.f32.mrf.mxu0
      %v4375 = vpop.f32.mrf.mxu0
      %v4376 = vadd.f32 0.0, %v4375
      %v4377 = vpop.f32.mrf.mxu0
      %4378 = vdwg.mxu0
      %v4379 = vadd.f32 %v4262, %v4349
      %v4380 = vadd.f32 %v4263, %v4352
      %v4381 = vadd.f32 %v4264, %v4357
      %v4382 = vadd.f32 %v4265, %v4360
      %v4383 = vadd.f32 %v4266, %v4365
      %v4384 = vadd.f32 %v4267, %v4368
      %v4385 = vadd.f32 %v4268, %v4373
      %v4386 = vadd.f32 %v4269, %v4376
      %v4387 = vld [vmem:[%s5] sm:$0x1]
      %v4389 = vlaneseq
      %v4390 = vshrl.u32 %v4389, 7
      %v4391 = vsub.s32 0, %v4390
      %v4392 = vrot.slane %v4387, %v4391
      %v4394 = vadd.f32 %v4379, %v4392
      %v4395 = vadd.f32 %v4380, %v4392
      %v4396 = vadd.f32 %v4381, %v4392
      %v4397 = vadd.f32 %v4382, %v4392
      %v4398 = vadd.f32 %v4383, %v4392
      %v4399 = vadd.f32 %v4384, %v4392
      %v4400 = vadd.f32 %v4385, %v4392
      %v4401 = vadd.f32 %v4386, %v4392
      %v4402 = vsel %vm2570, %v4394, 0.0
      %v4403 = vsel %vm2570, %v4395, 0.0
      %v4404 = vadd.f32 %v4402, %v4403
      %v4405 = vsel %vm2570, %v4396, 0.0
      %v4406 = vadd.f32 %v4404, %v4405
      %v4407 = vsel %vm2570, %v4397, 0.0
      %v4408 = vadd.f32 %v4406, %v4407
      %v4409 = vsel %vm2570, %v4398, 0.0
      %v4410 = vadd.f32 %v4408, %v4409
      %v4411 = vsel %vm2570, %v4399, 0.0
      %v4412 = vadd.f32 %v4410, %v4411
      %v4413 = vsel %vm2570, %v4400, 0.0
      %v4414 = vadd.f32 %v4412, %v4413
      %v4415 = vsel %vm2570, %v4401, 0.0
      %v4416 = vadd.f32 %v4414, %v4415
      %v4417 = vrot.slane %v4416, 4
      %v4418 = vadd.f32 %v4416, %v4417
      %v4419 = vrot.slane %v4418, 2
      %v4420 = vadd.f32 %v4418, %v4419
      %v4421 = vrot.slane %v4420, 1
      %v4422 = vadd.f32 %v4420, %v4421
      %v4423 = vrcp.pop 64.0
      %v4424 = vmul.f32 %v4422, %v4423
      %v4425 = vsub.f32 %v4394, %v4424
      %v4426 = vsub.f32 %v4395, %v4424
      %v4427 = vsub.f32 %v4396, %v4424
      %v4428 = vsub.f32 %v4397, %v4424
      %v4429 = vsub.f32 %v4398, %v4424
      %v4430 = vsub.f32 %v4399, %v4424
      %v4431 = vsub.f32 %v4400, %v4424
      %v4432 = vsub.f32 %v4401, %v4424
      %v4433 = vmul.f32 %v4425, %v4425
      %v4434 = vmul.f32 %v4426, %v4426
      %v4435 = vmul.f32 %v4427, %v4427
      %v4436 = vmul.f32 %v4428, %v4428
      %v4437 = vmul.f32 %v4429, %v4429
      %v4438 = vmul.f32 %v4430, %v4430
      %v4439 = vmul.f32 %v4431, %v4431
      %v4440 = vmul.f32 %v4432, %v4432
      %v4441 = vsel %vm2570, %v4433, 0.0
      %v4442 = vsel %vm2570, %v4434, 0.0
      %v4443 = vadd.f32 %v4441, %v4442
      %v4444 = vsel %vm2570, %v4435, 0.0
      %v4445 = vadd.f32 %v4443, %v4444
      %v4446 = vsel %vm2570, %v4436, 0.0
      %v4447 = vadd.f32 %v4445, %v4446
      %v4448 = vsel %vm2570, %v4437, 0.0
      %v4449 = vadd.f32 %v4447, %v4448
      %v4450 = vsel %vm2570, %v4438, 0.0
      %v4451 = vadd.f32 %v4449, %v4450
      %v4452 = vsel %vm2570, %v4439, 0.0
      %v4453 = vadd.f32 %v4451, %v4452
      %v4454 = vsel %vm2570, %v4440, 0.0
      %v4455 = vadd.f32 %v4453, %v4454
      %v4456 = vrot.slane %v4455, 4
      %v4457 = vadd.f32 %v4455, %v4456
      %v4458 = vrot.slane %v4457, 2
      %v4459 = vadd.f32 %v4457, %v4458
      %v4460 = vrot.slane %v4459, 1
      %v4461 = vadd.f32 %v4459, %v4460
      %v4462 = vmul.f32 %v4461, %v4423
      %v4463 = vadd.f32 %v4462, 1e-05
      %v4464 = vrsqrt.pop %v4463
      %v4465 = vmul.f32 %v4425, %v4464
      %v4466 = vmul.f32 %v4426, %v4464
      %v4467 = vmul.f32 %v4427, %v4464
      %v4468 = vmul.f32 %v4428, %v4464
      %v4469 = vmul.f32 %v4429, %v4464
      %v4470 = vmul.f32 %v4430, %v4464
      %v4471 = vmul.f32 %v4431, %v4464
      %v4472 = vmul.f32 %v4432, %v4464
      %vm4473 = vcmp.gt.f32.partialorder %v4465, 0.0
      %vm4474 = vcmp.gt.f32.partialorder %v4466, 0.0
      %vm4475 = vcmp.gt.f32.partialorder %v4467, 0.0
      %vm4476 = vcmp.gt.f32.partialorder %v4468, 0.0
      %vm4477 = vcmp.gt.f32.partialorder %v4469, 0.0
      %vm4478 = vcmp.gt.f32.partialorder %v4470, 0.0
      %vm4479 = vcmp.gt.f32.partialorder %v4471, 0.0
      %vm4480 = vcmp.gt.f32.partialorder %v4472, 0.0
      %v4481 = vmul.f32 %v4465, 0.1
      %v4482 = vmul.f32 %v4466, 0.1
      %v4483 = vmul.f32 %v4467, 0.1
      %v4484 = vmul.f32 %v4468, 0.1
      %v4485 = vmul.f32 %v4469, 0.1
      %v4486 = vmul.f32 %v4470, 0.1
      %v4487 = vmul.f32 %v4471, 0.1
      %v4488 = vmul.f32 %v4472, 0.1
      %v4489 = vsel %vm4473, %v4465, %v4481
      %v4490 = vsel %vm4474, %v4466, %v4482
      %v4491 = vsel %vm4475, %v4467, %v4483
      %v4492 = vsel %vm4476, %v4468, %v4484
      %v4493 = vsel %vm4477, %v4469, %v4485
      %v4494 = vsel %vm4478, %v4470, %v4486
      %v4495 = vsel %vm4479, %v4471, %v4487
      %v4496 = vsel %vm4480, %v4472, %v4488
      %v4497 = vpack.c.bf16 %v4490, %v4489
      %v4498 = vpack.c.bf16 %v4492, %v4491
      %v4499 = vpack.c.bf16 %v4494, %v4493
      %v4500 = vpack.c.bf16 %v4496, %v4495
      %v4501 = vld [vmem:[%s11] sm:$0xf]
      %v4502 = vld [vmem:[%s11 + $0x4] sm:$0xf]
      %v4503 = vld [vmem:[%s11 + $0x8] sm:$0xf]
      %v4504 = vld [vmem:[%s11 + $0xc] sm:$0xf]
      %v4505 = vld [vmem:[%s11 + $0x10] sm:$0xf]
      %v4506 = vld [vmem:[%s11 + $0x14] sm:$0xf]
      %v4507 = vld [vmem:[%s11 + $0x18] sm:$0xf]
      %v4508 = vld [vmem:[%s11 + $0x1c] sm:$0xf]
      %v4509 = vld [vmem:[%s11 + $0x20] sm:$0xf]
      %v4510 = vld [vmem:[%s11 + $0x24] sm:$0xf]
      %v4511 = vld [vmem:[%s11 + $0x28] sm:$0xf]
      %v4512 = vld [vmem:[%s11 + $0x2c] sm:$0xf]
      %v4513 = vld [vmem:[%s11 + $0x30] sm:$0xf]
      %v4514 = vld [vmem:[%s11 + $0x34] sm:$0xf]
      %v4515 = vld [vmem:[%s11 + $0x38] sm:$0xf]
      %v4516 = vld [vmem:[%s11 + $0x3c] sm:$0xf]
      %v4517 = vld [vmem:[%s11 + $0x40] sm:$0xf]
      %v4518 = vld [vmem:[%s11 + $0x44] sm:$0xf]
      %v4519 = vld [vmem:[%s11 + $0x48] sm:$0xf]
      %v4520 = vld [vmem:[%s11 + $0x4c] sm:$0xf]
      %v4521 = vld [vmem:[%s11 + $0x50] sm:$0xf]
      %v4522 = vld [vmem:[%s11 + $0x54] sm:$0xf]
      %v4523 = vld [vmem:[%s11 + $0x58] sm:$0xf]
      %v4524 = vld [vmem:[%s11 + $0x5c] sm:$0xf]
      %v4525 = vld [vmem:[%s11 + $0x60] sm:$0xf]
      %v4526 = vld [vmem:[%s11 + $0x64] sm:$0xf]
      %v4527 = vld [vmem:[%s11 + $0x68] sm:$0xf]
      %v4528 = vld [vmem:[%s11 + $0x6c] sm:$0xf]
      %v4529 = vld [vmem:[%s11 + $0x70] sm:$0xf]
      %v4530 = vld [vmem:[%s11 + $0x74] sm:$0xf]
      %v4531 = vld [vmem:[%s11 + $0x78] sm:$0xf]
      %v4532 = vld [vmem:[%s11 + $0x7c] sm:$0xf]
      %v4565 = vunpack.c.l.b16 %v4501
      %v4566 = vunpack.c.l.b16 %v4502
      %v4567 = vunpack.c.l.b16 %v4503
      %v4568 = vunpack.c.l.b16 %v4504
      %v4569 = vunpack.c.l.b16 %v4505
      %v4570 = vunpack.c.l.b16 %v4506
      %v4571 = vunpack.c.l.b16 %v4507
      %v4572 = vunpack.c.l.b16 %v4508
      %v4573 = vunpack.c.l.b16 %v4509
      %v4574 = vunpack.c.l.b16 %v4510
      %v4575 = vunpack.c.l.b16 %v4511
      %v4576 = vunpack.c.l.b16 %v4512
      %v4577 = vunpack.c.l.b16 %v4513
      %v4578 = vunpack.c.l.b16 %v4514
      %v4579 = vunpack.c.l.b16 %v4515
      %v4580 = vunpack.c.l.b16 %v4516
      %v4581 = vunpack.c.l.b16 %v4517
      %v4582 = vunpack.c.l.b16 %v4518
      %v4583 = vunpack.c.l.b16 %v4519
      %v4584 = vunpack.c.l.b16 %v4520
      %v4585 = vunpack.c.l.b16 %v4521
      %v4586 = vunpack.c.l.b16 %v4522
      %v4587 = vunpack.c.l.b16 %v4523
      %v4588 = vunpack.c.l.b16 %v4524
      %v4589 = vunpack.c.l.b16 %v4525
      %v4590 = vunpack.c.l.b16 %v4526
      %v4591 = vunpack.c.l.b16 %v4527
      %v4592 = vunpack.c.l.b16 %v4528
      %v4593 = vunpack.c.l.b16 %v4529
      %v4594 = vunpack.c.l.b16 %v4530
      %v4595 = vunpack.c.l.b16 %v4531
      %v4596 = vunpack.c.l.b16 %v4532
      %v4597 = vpack.c.b16 %v4566, %v4565
      %v4598 = vpack.c.b16 %v4568, %v4567
      %v4599 = vpack.c.b16 %v4570, %v4569
      %v4600 = vpack.c.b16 %v4572, %v4571
      %v4601 = vpack.c.b16 %v4574, %v4573
      %v4602 = vpack.c.b16 %v4576, %v4575
      %v4603 = vpack.c.b16 %v4578, %v4577
      %v4604 = vpack.c.b16 %v4580, %v4579
      %v4605 = vpack.c.b16 %v4582, %v4581
      %v4606 = vpack.c.b16 %v4584, %v4583
      %v4607 = vpack.c.b16 %v4586, %v4585
      %v4608 = vpack.c.b16 %v4588, %v4587
      %v4609 = vpack.c.b16 %v4590, %v4589
      %v4610 = vpack.c.b16 %v4592, %v4591
      %v4611 = vpack.c.b16 %v4594, %v4593
      %v4612 = vpack.c.b16 %v4596, %v4595
      %v4614 = vsel %vm2570, %v4597, 0
      %v4617 = vsel %vm2570, %v4598, 0
      %v4620 = vsel %vm2570, %v4599, 0
      %v4623 = vsel %vm2570, %v4600, 0
      %v4626 = vsel %vm2570, %v4601, 0
      %v4629 = vsel %vm2570, %v4602, 0
      %v4632 = vsel %vm2570, %v4603, 0
      %v4635 = vsel %vm2570, %v4604, 0
      %v4638 = vsel %vm2570, %v4605, 0
      %v4641 = vsel %vm2570, %v4606, 0
      %v4644 = vsel %vm2570, %v4607, 0
      %v4647 = vsel %vm2570, %v4608, 0
      %v4650 = vsel %vm2570, %v4609, 0
      %v4653 = vsel %vm2570, %v4610, 0
      %v4656 = vsel %vm2570, %v4611, 0
      %v4659 = vsel %vm2570, %v4612, 0
      %4661 = vmatprep.subr.bf16.mxu0 0
      %4662 = vmatpush1.bf16.msra.mxu0 0
      %4663 = vmatprep.subr.bf16.mxu0 0
      %4664 = vmatpush1.bf16.msra.mxu0 0
      %4665 = vmatprep.subr.bf16.mxu0 0
      %4666 = vmatpush1.bf16.msra.mxu0 0
      %4667 = vmatprep.subr.bf16.mxu0 0
      %4668 = vmatpush1.bf16.msra.mxu0 0
      %4669 = vmatprep.subr.bf16.mxu0 0
      %4670 = vmatpush1.bf16.msra.mxu0 %v4500
      %4671 = vmatprep.subr.bf16.mxu0 0
      %4672 = vmatpush1.bf16.msra.mxu0 %v4499
      %4673 = vmatprep.subr.bf16.mxu0 0
      %4674 = vmatpush1.bf16.msra.mxu0 %v4498
      %4675 = vmatprep.subr.bf16.mxu0 0
      %4676 = vmatpush1.bf16.msra.mxu0 %v4497
      %4677 = vmatprep.subr.bf16.mxu0 0
      %4678 = vmatpush2.bf16.msra.mxu0 0
      %4679 = vmatprep.subr.bf16.mxu0 0
      %4680 = vmatpush2.bf16.msra.mxu0 0
      %4681 = vmatprep.subr.bf16.mxu0 0
      %4682 = vmatpush2.bf16.msra.mxu0 0
      %4683 = vmatprep.subr.bf16.mxu0 0
      %4684 = vmatpush2.bf16.msra.mxu0 0
      %4685 = vmatprep.subr.bf16.mxu0 0
      %4686 = vmatpush2.bf16.msra.mxu0 0
      %4687 = vmatprep.subr.bf16.mxu0 0
      %4688 = vmatpush2.bf16.msra.mxu0 0
      %4689 = vmatprep.subr.bf16.mxu0 0
      %4690 = vmatpush2.bf16.msra.mxu0 0
      %4691 = vmatprep.subr.bf16.mxu0 0
      %4692 = vmatpush2.bf16.msra.mxu0 0
      %4693 = vmatprep.mubr.bf16.mxu0 0
      %4694 = vmatmul.mubr.bf16.gmra.mxu0 %v4614
      %v4695 = vpop.f32.mrf.mxu0
      %v4696 = vadd.f32 0.0, %v4695
      %v4697 = vpop.f32.mrf.mxu0
      %v4698 = vpop.f32.mrf.mxu0
      %v4699 = vadd.f32 0.0, %v4698
      %v4700 = vpop.f32.mrf.mxu0
      %4701 = vmatprep.mubr.bf16.mxu0 0
      %4702 = vmatmul.mubr.bf16.gmra.mxu0 %v4617
      %v4703 = vpop.f32.mrf.mxu0
      %v4704 = vadd.f32 0.0, %v4703
      %v4705 = vpop.f32.mrf.mxu0
      %v4706 = vpop.f32.mrf.mxu0
      %v4707 = vadd.f32 0.0, %v4706
      %v4708 = vpop.f32.mrf.mxu0
      %4709 = vmatprep.mubr.bf16.mxu0 0
      %4710 = vmatmul.mubr.bf16.gmra.mxu0 %v4620
      %v4711 = vpop.f32.mrf.mxu0
      %v4712 = vadd.f32 0.0, %v4711
      %v4713 = vpop.f32.mrf.mxu0
      %v4714 = vpop.f32.mrf.mxu0
      %v4715 = vadd.f32 0.0, %v4714
      %v4716 = vpop.f32.mrf.mxu0
      %4717 = vmatprep.mubr.bf16.mxu0 0
      %4718 = vmatmul.mubr.bf16.gmra.mxu0 %v4623
      %v4719 = vpop.f32.mrf.mxu0
      %v4720 = vadd.f32 0.0, %v4719
      %v4721 = vpop.f32.mrf.mxu0
      %v4722 = vpop.f32.mrf.mxu0
      %v4723 = vadd.f32 0.0, %v4722
      %v4724 = vpop.f32.mrf.mxu0
      %4725 = vmatprep.mubr.bf16.mxu0 0
      %4726 = vmatmul.mubr.bf16.gmra.mxu0 %v4626
      %v4727 = vpop.f32.mrf.mxu0
      %v4728 = vadd.f32 0.0, %v4727
      %v4729 = vpop.f32.mrf.mxu0
      %v4730 = vpop.f32.mrf.mxu0
      %v4731 = vadd.f32 0.0, %v4730
      %v4732 = vpop.f32.mrf.mxu0
      %4733 = vmatprep.mubr.bf16.mxu0 0
      %4734 = vmatmul.mubr.bf16.gmra.mxu0 %v4629
      %v4735 = vpop.f32.mrf.mxu0
      %v4736 = vadd.f32 0.0, %v4735
      %v4737 = vpop.f32.mrf.mxu0
      %v4738 = vpop.f32.mrf.mxu0
      %v4739 = vadd.f32 0.0, %v4738
      %v4740 = vpop.f32.mrf.mxu0
      %4741 = vmatprep.mubr.bf16.mxu0 0
      %4742 = vmatmul.mubr.bf16.gmra.mxu0 %v4632
      %v4743 = vpop.f32.mrf.mxu0
      %v4744 = vadd.f32 0.0, %v4743
      %v4745 = vpop.f32.mrf.mxu0
      %v4746 = vpop.f32.mrf.mxu0
      %v4747 = vadd.f32 0.0, %v4746
      %v4748 = vpop.f32.mrf.mxu0
      %4749 = vmatprep.mubr.bf16.mxu0 0
      %4750 = vmatmul.mubr.bf16.gmra.mxu0 %v4635
      %v4751 = vpop.f32.mrf.mxu0
      %v4752 = vadd.f32 0.0, %v4751
      %v4753 = vpop.f32.mrf.mxu0
      %v4754 = vpop.f32.mrf.mxu0
      %v4755 = vadd.f32 0.0, %v4754
      %v4756 = vpop.f32.mrf.mxu0
      %4757 = vmatprep.mubr.bf16.mxu0 0
      %4758 = vmatmul.mubr.bf16.gmra.mxu0 %v4638
      %v4759 = vpop.f32.mrf.mxu0
      %v4760 = vadd.f32 0.0, %v4759
      %v4761 = vpop.f32.mrf.mxu0
      %v4762 = vpop.f32.mrf.mxu0
      %v4763 = vadd.f32 0.0, %v4762
      %v4764 = vpop.f32.mrf.mxu0
      %4765 = vmatprep.mubr.bf16.mxu0 0
      %4766 = vmatmul.mubr.bf16.gmra.mxu0 %v4641
      %v4767 = vpop.f32.mrf.mxu0
      %v4768 = vadd.f32 0.0, %v4767
      %v4769 = vpop.f32.mrf.mxu0
      %v4770 = vpop.f32.mrf.mxu0
      %v4771 = vadd.f32 0.0, %v4770
      %v4772 = vpop.f32.mrf.mxu0
      %4773 = vmatprep.mubr.bf16.mxu0 0
      %4774 = vmatmul.mubr.bf16.gmra.mxu0 %v4644
      %v4775 = vpop.f32.mrf.mxu0
      %v4776 = vadd.f32 0.0, %v4775
      %v4777 = vpop.f32.mrf.mxu0
      %v4778 = vpop.f32.mrf.mxu0
      %v4779 = vadd.f32 0.0, %v4778
      %v4780 = vpop.f32.mrf.mxu0
      %4781 = vmatprep.mubr.bf16.mxu0 0
      %4782 = vmatmul.mubr.bf16.gmra.mxu0 %v4647
      %v4783 = vpop.f32.mrf.mxu0
      %v4784 = vadd.f32 0.0, %v4783
      %v4785 = vpop.f32.mrf.mxu0
      %v4786 = vpop.f32.mrf.mxu0
      %v4787 = vadd.f32 0.0, %v4786
      %v4788 = vpop.f32.mrf.mxu0
      %4789 = vmatprep.mubr.bf16.mxu0 0
      %4790 = vmatmul.mubr.bf16.gmra.mxu0 %v4650
      %v4791 = vpop.f32.mrf.mxu0
      %v4792 = vadd.f32 0.0, %v4791
      %v4793 = vpop.f32.mrf.mxu0
      %v4794 = vpop.f32.mrf.mxu0
      %v4795 = vadd.f32 0.0, %v4794
      %v4796 = vpop.f32.mrf.mxu0
      %4797 = vmatprep.mubr.bf16.mxu0 0
      %4798 = vmatmul.mubr.bf16.gmra.mxu0 %v4653
      %v4799 = vpop.f32.mrf.mxu0
      %v4800 = vadd.f32 0.0, %v4799
      %v4801 = vpop.f32.mrf.mxu0
      %v4802 = vpop.f32.mrf.mxu0
      %v4803 = vadd.f32 0.0, %v4802
      %v4804 = vpop.f32.mrf.mxu0
      %4805 = vmatprep.mubr.bf16.mxu0 0
      %4806 = vmatmul.mubr.bf16.gmra.mxu0 %v4656
      %v4807 = vpop.f32.mrf.mxu0
      %v4808 = vadd.f32 0.0, %v4807
      %v4809 = vpop.f32.mrf.mxu0
      %v4810 = vpop.f32.mrf.mxu0
      %v4811 = vadd.f32 0.0, %v4810
      %v4812 = vpop.f32.mrf.mxu0
      %4813 = vmatprep.mubr.bf16.mxu0 0
      %4814 = vmatmul.mubr.bf16.gmra.mxu0 %v4659
      %v4815 = vpop.f32.mrf.mxu0
      %v4816 = vadd.f32 0.0, %v4815
      %v4817 = vpop.f32.mrf.mxu0
      %v4818 = vpop.f32.mrf.mxu0
      %v4819 = vadd.f32 0.0, %v4818
      %v4820 = vpop.f32.mrf.mxu0
      %4821 = vdwg.mxu0
      %v4822 = vpack.c.bf16 %v4699, %v4696
      %v4823 = vpack.c.bf16 %v4707, %v4704
      %v4824 = vpack.c.bf16 %v4715, %v4712
      %v4825 = vpack.c.bf16 %v4723, %v4720
      %v4826 = vpack.c.bf16 %v4731, %v4728
      %v4827 = vpack.c.bf16 %v4739, %v4736
      %v4828 = vpack.c.bf16 %v4747, %v4744
      %v4829 = vpack.c.bf16 %v4755, %v4752
      %v4830 = vpack.c.bf16 %v4763, %v4760
      %v4831 = vpack.c.bf16 %v4771, %v4768
      %v4832 = vpack.c.bf16 %v4779, %v4776
      %v4833 = vpack.c.bf16 %v4787, %v4784
      %v4834 = vpack.c.bf16 %v4795, %v4792
      %v4835 = vpack.c.bf16 %v4803, %v4800
      %v4836 = vpack.c.bf16 %v4811, %v4808
      %v4837 = vpack.c.bf16 %v4819, %v4816
      %v4838 = vld [vmem:[%s6] sm:$0xf]
      %v4839 = vld [vmem:[%s6 + $0x4] sm:$0xf]
      %v4840 = vld [vmem:[%s6 + $0x8] sm:$0xf]
      %v4841 = vld [vmem:[%s6 + $0xc] sm:$0xf]
      %v4842 = vld [vmem:[%s6 + $0x10] sm:$0xf]
      %v4843 = vld [vmem:[%s6 + $0x14] sm:$0xf]
      %v4844 = vld [vmem:[%s6 + $0x18] sm:$0xf]
      %v4845 = vld [vmem:[%s6 + $0x1c] sm:$0xf]
      %v4846 = vld [vmem:[%s6 + $0x20] sm:$0xf]
      %v4847 = vld [vmem:[%s6 + $0x24] sm:$0xf]
      %v4848 = vld [vmem:[%s6 + $0x28] sm:$0xf]
      %v4849 = vld [vmem:[%s6 + $0x2c] sm:$0xf]
      %v4850 = vld [vmem:[%s6 + $0x30] sm:$0xf]
      %v4851 = vld [vmem:[%s6 + $0x34] sm:$0xf]
      %v4852 = vld [vmem:[%s6 + $0x38] sm:$0xf]
      %v4853 = vld [vmem:[%s6 + $0x3c] sm:$0xf]
      %v4862 = vunpack.c.l.b16 %v4846
      %v4863 = vunpack.c.l.b16 %v4847
      %v4864 = vunpack.c.l.b16 %v4848
      %v4865 = vunpack.c.l.b16 %v4849
      %v4866 = vunpack.c.l.b16 %v4850
      %v4867 = vunpack.c.l.b16 %v4851
      %v4868 = vunpack.c.l.b16 %v4852
      %v4869 = vunpack.c.l.b16 %v4853
      %v4870 = vpack.c.b16 %v4863, %v4862
      %v4871 = vpack.c.b16 %v4865, %v4864
      %v4872 = vpack.c.b16 %v4867, %v4866
      %v4873 = vpack.c.b16 %v4869, %v4868
      %v4879 = vsel %vm2570, %v4823, 0
      %4881 = vmatprep.subr.bf16.mxu0 0
      %4882 = vmatpush1.bf16.msra.mxu0 0
      %4883 = vmatprep.subr.bf16.mxu0 0
      %4884 = vmatpush1.bf16.msra.mxu0 0
      %4885 = vmatprep.subr.bf16.mxu0 0
      %4886 = vmatpush1.bf16.msra.mxu0 0
      %4887 = vmatprep.subr.bf16.mxu0 0
      %4888 = vmatpush1.bf16.msra.mxu0 0
      %4889 = vmatprep.subr.bf16.mxu0 0
      %4890 = vmatpush1.bf16.msra.mxu0 %v4873
      %4891 = vmatprep.subr.bf16.mxu0 0
      %4892 = vmatpush1.bf16.msra.mxu0 %v4872
      %4893 = vmatprep.subr.bf16.mxu0 0
      %4894 = vmatpush1.bf16.msra.mxu0 %v4871
      %4895 = vmatprep.subr.bf16.mxu0 0
      %4896 = vmatpush1.bf16.msra.mxu0 %v4870
      %4897 = vmatprep.subr.bf16.mxu0 0
      %4898 = vmatpush2.bf16.msra.mxu0 0
      %4899 = vmatprep.subr.bf16.mxu0 0
      %4900 = vmatpush2.bf16.msra.mxu0 0
      %4901 = vmatprep.subr.bf16.mxu0 0
      %4902 = vmatpush2.bf16.msra.mxu0 0
      %4903 = vmatprep.subr.bf16.mxu0 0
      %4904 = vmatpush2.bf16.msra.mxu0 0
      %4905 = vmatprep.subr.bf16.mxu0 0
      %4906 = vmatpush2.bf16.msra.mxu0 0
      %4907 = vmatprep.subr.bf16.mxu0 0
      %4908 = vmatpush2.bf16.msra.mxu0 0
      %4909 = vmatprep.subr.bf16.mxu0 0
      %4910 = vmatpush2.bf16.msra.mxu0 0
      %4911 = vmatprep.subr.bf16.mxu0 0
      %4912 = vmatpush2.bf16.msra.mxu0 0
      %4913 = vmatprep.mubr.bf16.mxu0 0
      %4914 = vmatmul.mubr.bf16.gmra.mxu0 %v4879
      %v4915 = vpop.f32.mrf.mxu0
      %v4916 = vadd.f32 0.0, %v4915
      %v4917 = vpop.f32.mrf.mxu0
      %v4918 = vpop.f32.mrf.mxu0
      %v4919 = vadd.f32 0.0, %v4918
      %v4920 = vpop.f32.mrf.mxu0
      %4921 = vdwg.mxu0
      %v4930 = vunpack.c.l.b16 %v4838
      %v4931 = vunpack.c.l.b16 %v4839
      %v4932 = vunpack.c.l.b16 %v4840
      %v4933 = vunpack.c.l.b16 %v4841
      %v4934 = vunpack.c.l.b16 %v4842
      %v4935 = vunpack.c.l.b16 %v4843
      %v4936 = vunpack.c.l.b16 %v4844
      %v4937 = vunpack.c.l.b16 %v4845
      %v4938 = vpack.c.b16 %v4931, %v4930
      %v4939 = vpack.c.b16 %v4933, %v4932
      %v4940 = vpack.c.b16 %v4935, %v4934
      %v4941 = vpack.c.b16 %v4937, %v4936
      %v4947 = vsel %vm2570, %v4822, 0
      %4949 = vmatprep.subr.bf16.mxu0 0
      %4950 = vmatpush1.bf16.msra.mxu0 0
      %4951 = vmatprep.subr.bf16.mxu0 0
      %4952 = vmatpush1.bf16.msra.mxu0 0
      %4953 = vmatprep.subr.bf16.mxu0 0
      %4954 = vmatpush1.bf16.msra.mxu0 0
      %4955 = vmatprep.subr.bf16.mxu0 0
      %4956 = vmatpush1.bf16.msra.mxu0 0
      %4957 = vmatprep.subr.bf16.mxu0 0
      %4958 = vmatpush1.bf16.msra.mxu0 %v4941
      %4959 = vmatprep.subr.bf16.mxu0 0
      %4960 = vmatpush1.bf16.msra.mxu0 %v4940
      %4961 = vmatprep.subr.bf16.mxu0 0
      %4962 = vmatpush1.bf16.msra.mxu0 %v4939
      %4963 = vmatprep.subr.bf16.mxu0 0
      %4964 = vmatpush1.bf16.msra.mxu0 %v4938
      %4965 = vmatprep.subr.bf16.mxu0 0
      %4966 = vmatpush2.bf16.msra.mxu0 0
      %4967 = vmatprep.subr.bf16.mxu0 0
      %4968 = vmatpush2.bf16.msra.mxu0 0
      %4969 = vmatprep.subr.bf16.mxu0 0
      %4970 = vmatpush2.bf16.msra.mxu0 0
      %4971 = vmatprep.subr.bf16.mxu0 0
      %4972 = vmatpush2.bf16.msra.mxu0 0
      %4973 = vmatprep.subr.bf16.mxu0 0
      %4974 = vmatpush2.bf16.msra.mxu0 0
      %4975 = vmatprep.subr.bf16.mxu0 0
      %4976 = vmatpush2.bf16.msra.mxu0 0
      %4977 = vmatprep.subr.bf16.mxu0 0
      %4978 = vmatpush2.bf16.msra.mxu0 0
      %4979 = vmatprep.subr.bf16.mxu0 0
      %4980 = vmatpush2.bf16.msra.mxu0 0
      %4981 = vmatprep.mubr.bf16.mxu0 0
      %4982 = vmatmul.mubr.bf16.gmra.mxu0 %v4947
      %v4983 = vpop.f32.mrf.mxu0
      %v4984 = vadd.f32 %v4916, %v4983
      %v4985 = vpop.f32.mrf.mxu0
      %v4986 = vpop.f32.mrf.mxu0
      %v4987 = vadd.f32 %v4919, %v4986
      %v4988 = vpop.f32.mrf.mxu0
      %4989 = vdwg.mxu0
      %v4990 = vld [vmem:[%s6 + $0x40] sm:$0xf]
      %v4991 = vld [vmem:[%s6 + $0x44] sm:$0xf]
      %v4992 = vld [vmem:[%s6 + $0x48] sm:$0xf]
      %v4993 = vld [vmem:[%s6 + $0x4c] sm:$0xf]
      %v4994 = vld [vmem:[%s6 + $0x50] sm:$0xf]
      %v4995 = vld [vmem:[%s6 + $0x54] sm:$0xf]
      %v4996 = vld [vmem:[%s6 + $0x58] sm:$0xf]
      %v4997 = vld [vmem:[%s6 + $0x5c] sm:$0xf]
      %v5006 = vunpack.c.l.b16 %v4990
      %v5007 = vunpack.c.l.b16 %v4991
      %v5008 = vunpack.c.l.b16 %v4992
      %v5009 = vunpack.c.l.b16 %v4993
      %v5010 = vunpack.c.l.b16 %v4994
      %v5011 = vunpack.c.l.b16 %v4995
      %v5012 = vunpack.c.l.b16 %v4996
      %v5013 = vunpack.c.l.b16 %v4997
      %v5014 = vpack.c.b16 %v5007, %v5006
      %v5015 = vpack.c.b16 %v5009, %v5008
      %v5016 = vpack.c.b16 %v5011, %v5010
      %v5017 = vpack.c.b16 %v5013, %v5012
      %v5023 = vsel %vm2570, %v4824, 0
      %5025 = vmatprep.subr.bf16.mxu0 0
      %5026 = vmatpush1.bf16.msra.mxu0 0
      %5027 = vmatprep.subr.bf16.mxu0 0
      %5028 = vmatpush1.bf16.msra.mxu0 0
      %5029 = vmatprep.subr.bf16.mxu0 0
      %5030 = vmatpush1.bf16.msra.mxu0 0
      %5031 = vmatprep.subr.bf16.mxu0 0
      %5032 = vmatpush1.bf16.msra.mxu0 0
      %5033 = vmatprep.subr.bf16.mxu0 0
      %5034 = vmatpush1.bf16.msra.mxu0 %v5017
      %5035 = vmatprep.subr.bf16.mxu0 0
      %5036 = vmatpush1.bf16.msra.mxu0 %v5016
      %5037 = vmatprep.subr.bf16.mxu0 0
      %5038 = vmatpush1.bf16.msra.mxu0 %v5015
      %5039 = vmatprep.subr.bf16.mxu0 0
      %5040 = vmatpush1.bf16.msra.mxu0 %v5014
      %5041 = vmatprep.subr.bf16.mxu0 0
      %5042 = vmatpush2.bf16.msra.mxu0 0
      %5043 = vmatprep.subr.bf16.mxu0 0
      %5044 = vmatpush2.bf16.msra.mxu0 0
      %5045 = vmatprep.subr.bf16.mxu0 0
      %5046 = vmatpush2.bf16.msra.mxu0 0
      %5047 = vmatprep.subr.bf16.mxu0 0
      %5048 = vmatpush2.bf16.msra.mxu0 0
      %5049 = vmatprep.subr.bf16.mxu0 0
      %5050 = vmatpush2.bf16.msra.mxu0 0
      %5051 = vmatprep.subr.bf16.mxu0 0
      %5052 = vmatpush2.bf16.msra.mxu0 0
      %5053 = vmatprep.subr.bf16.mxu0 0
      %5054 = vmatpush2.bf16.msra.mxu0 0
      %5055 = vmatprep.subr.bf16.mxu0 0
      %5056 = vmatpush2.bf16.msra.mxu0 0
      %5057 = vmatprep.mubr.bf16.mxu0 0
      %5058 = vmatmul.mubr.bf16.gmra.mxu0 %v5023
      %v5059 = vpop.f32.mrf.mxu0
      %v5060 = vadd.f32 0.0, %v5059
      %v5061 = vpop.f32.mrf.mxu0
      %v5062 = vpop.f32.mrf.mxu0
      %v5063 = vadd.f32 0.0, %v5062
      %v5064 = vpop.f32.mrf.mxu0
      %5065 = vdwg.mxu0
      %v5066 = vadd.f32 %v4984, %v5060
      %v5067 = vadd.f32 %v4987, %v5063
      %v5068 = vld [vmem:[%s6 + $0x60] sm:$0xf]
      %v5069 = vld [vmem:[%s6 + $0x64] sm:$0xf]
      %v5070 = vld [vmem:[%s6 + $0x68] sm:$0xf]
      %v5071 = vld [vmem:[%s6 + $0x6c] sm:$0xf]
      %v5072 = vld [vmem:[%s6 + $0x70] sm:$0xf]
      %v5073 = vld [vmem:[%s6 + $0x74] sm:$0xf]
      %v5074 = vld [vmem:[%s6 + $0x78] sm:$0xf]
      %v5075 = vld [vmem:[%s6 + $0x7c] sm:$0xf]
      %v5084 = vunpack.c.l.b16 %v5068
      %v5085 = vunpack.c.l.b16 %v5069
      %v5086 = vunpack.c.l.b16 %v5070
      %v5087 = vunpack.c.l.b16 %v5071
      %v5088 = vunpack.c.l.b16 %v5072
      %v5089 = vunpack.c.l.b16 %v5073
      %v5090 = vunpack.c.l.b16 %v5074
      %v5091 = vunpack.c.l.b16 %v5075
      %v5092 = vpack.c.b16 %v5085, %v5084
      %v5093 = vpack.c.b16 %v5087, %v5086
      %v5094 = vpack.c.b16 %v5089, %v5088
      %v5095 = vpack.c.b16 %v5091, %v5090
      %v5101 = vsel %vm2570, %v4825, 0
      %5103 = vmatprep.subr.bf16.mxu0 0
      %5104 = vmatpush1.bf16.msra.mxu0 0
      %5105 = vmatprep.subr.bf16.mxu0 0
      %5106 = vmatpush1.bf16.msra.mxu0 0
      %5107 = vmatprep.subr.bf16.mxu0 0
      %5108 = vmatpush1.bf16.msra.mxu0 0
      %5109 = vmatprep.subr.bf16.mxu0 0
      %5110 = vmatpush1.bf16.msra.mxu0 0
      %5111 = vmatprep.subr.bf16.mxu0 0
      %5112 = vmatpush1.bf16.msra.mxu0 %v5095
      %5113 = vmatprep.subr.bf16.mxu0 0
      %5114 = vmatpush1.bf16.msra.mxu0 %v5094
      %5115 = vmatprep.subr.bf16.mxu0 0
      %5116 = vmatpush1.bf16.msra.mxu0 %v5093
      %5117 = vmatprep.subr.bf16.mxu0 0
      %5118 = vmatpush1.bf16.msra.mxu0 %v5092
      %5119 = vmatprep.subr.bf16.mxu0 0
      %5120 = vmatpush2.bf16.msra.mxu0 0
      %5121 = vmatprep.subr.bf16.mxu0 0
      %5122 = vmatpush2.bf16.msra.mxu0 0
      %5123 = vmatprep.subr.bf16.mxu0 0
      %5124 = vmatpush2.bf16.msra.mxu0 0
      %5125 = vmatprep.subr.bf16.mxu0 0
      %5126 = vmatpush2.bf16.msra.mxu0 0
      %5127 = vmatprep.subr.bf16.mxu0 0
      %5128 = vmatpush2.bf16.msra.mxu0 0
      %5129 = vmatprep.subr.bf16.mxu0 0
      %5130 = vmatpush2.bf16.msra.mxu0 0
      %5131 = vmatprep.subr.bf16.mxu0 0
      %5132 = vmatpush2.bf16.msra.mxu0 0
      %5133 = vmatprep.subr.bf16.mxu0 0
      %5134 = vmatpush2.bf16.msra.mxu0 0
      %5135 = vmatprep.mubr.bf16.mxu0 0
      %5136 = vmatmul.mubr.bf16.gmra.mxu0 %v5101
      %v5137 = vpop.f32.mrf.mxu0
      %v5138 = vadd.f32 0.0, %v5137
      %v5139 = vpop.f32.mrf.mxu0
      %v5140 = vpop.f32.mrf.mxu0
      %v5141 = vadd.f32 0.0, %v5140
      %v5142 = vpop.f32.mrf.mxu0
      %5143 = vdwg.mxu0
      %v5144 = vadd.f32 %v5066, %v5138
      %v5145 = vadd.f32 %v5067, %v5141
      %v5146 = vld [vmem:[%s6 + $0x80] sm:$0xf]
      %v5147 = vld [vmem:[%s6 + $0x84] sm:$0xf]
      %v5148 = vld [vmem:[%s6 + $0x88] sm:$0xf]
      %v5149 = vld [vmem:[%s6 + $0x8c] sm:$0xf]
      %v5150 = vld [vmem:[%s6 + $0x90] sm:$0xf]
      %v5151 = vld [vmem:[%s6 + $0x94] sm:$0xf]
      %v5152 = vld [vmem:[%s6 + $0x98] sm:$0xf]
      %v5153 = vld [vmem:[%s6 + $0x9c] sm:$0xf]
      %v5162 = vunpack.c.l.b16 %v5146
      %v5163 = vunpack.c.l.b16 %v5147
      %v5164 = vunpack.c.l.b16 %v5148
      %v5165 = vunpack.c.l.b16 %v5149
      %v5166 = vunpack.c.l.b16 %v5150
      %v5167 = vunpack.c.l.b16 %v5151
      %v5168 = vunpack.c.l.b16 %v5152
      %v5169 = vunpack.c.l.b16 %v5153
      %v5170 = vpack.c.b16 %v5163, %v5162
      %v5171 = vpack.c.b16 %v5165, %v5164
      %v5172 = vpack.c.b16 %v5167, %v5166
      %v5173 = vpack.c.b16 %v5169, %v5168
      %v5179 = vsel %vm2570, %v4826, 0
      %5181 = vmatprep.subr.bf16.mxu0 0
      %5182 = vmatpush1.bf16.msra.mxu0 0
      %5183 = vmatprep.subr.bf16.mxu0 0
      %5184 = vmatpush1.bf16.msra.mxu0 0
      %5185 = vmatprep.subr.bf16.mxu0 0
      %5186 = vmatpush1.bf16.msra.mxu0 0
      %5187 = vmatprep.subr.bf16.mxu0 0
      %5188 = vmatpush1.bf16.msra.mxu0 0
      %5189 = vmatprep.subr.bf16.mxu0 0
      %5190 = vmatpush1.bf16.msra.mxu0 %v5173
      %5191 = vmatprep.subr.bf16.mxu0 0
      %5192 = vmatpush1.bf16.msra.mxu0 %v5172
      %5193 = vmatprep.subr.bf16.mxu0 0
      %5194 = vmatpush1.bf16.msra.mxu0 %v5171
      %5195 = vmatprep.subr.bf16.mxu0 0
      %5196 = vmatpush1.bf16.msra.mxu0 %v5170
      %5197 = vmatprep.subr.bf16.mxu0 0
      %5198 = vmatpush2.bf16.msra.mxu0 0
      %5199 = vmatprep.subr.bf16.mxu0 0
      %5200 = vmatpush2.bf16.msra.mxu0 0
      %5201 = vmatprep.subr.bf16.mxu0 0
      %5202 = vmatpush2.bf16.msra.mxu0 0
      %5203 = vmatprep.subr.bf16.mxu0 0
      %5204 = vmatpush2.bf16.msra.mxu0 0
      %5205 = vmatprep.subr.bf16.mxu0 0
      %5206 = vmatpush2.bf16.msra.mxu0 0
      %5207 = vmatprep.subr.bf16.mxu0 0
      %5208 = vmatpush2.bf16.msra.mxu0 0
      %5209 = vmatprep.subr.bf16.mxu0 0
      %5210 = vmatpush2.bf16.msra.mxu0 0
      %5211 = vmatprep.subr.bf16.mxu0 0
      %5212 = vmatpush2.bf16.msra.mxu0 0
      %5213 = vmatprep.mubr.bf16.mxu0 0
      %5214 = vmatmul.mubr.bf16.gmra.mxu0 %v5179
      %v5215 = vpop.f32.mrf.mxu0
      %v5216 = vadd.f32 0.0, %v5215
      %v5217 = vpop.f32.mrf.mxu0
      %v5218 = vpop.f32.mrf.mxu0
      %v5219 = vadd.f32 0.0, %v5218
      %v5220 = vpop.f32.mrf.mxu0
      %5221 = vdwg.mxu0
      %v5222 = vadd.f32 %v5144, %v5216
      %v5223 = vadd.f32 %v5145, %v5219
      %v5224 = vld [vmem:[%s6 + $0xa0] sm:$0xf]
      %v5225 = vld [vmem:[%s6 + $0xa4] sm:$0xf]
      %v5226 = vld [vmem:[%s6 + $0xa8] sm:$0xf]
      %v5227 = vld [vmem:[%s6 + $0xac] sm:$0xf]
      %v5228 = vld [vmem:[%s6 + $0xb0] sm:$0xf]
      %v5229 = vld [vmem:[%s6 + $0xb4] sm:$0xf]
      %v5230 = vld [vmem:[%s6 + $0xb8] sm:$0xf]
      %v5231 = vld [vmem:[%s6 + $0xbc] sm:$0xf]
      %v5240 = vunpack.c.l.b16 %v5224
      %v5241 = vunpack.c.l.b16 %v5225
      %v5242 = vunpack.c.l.b16 %v5226
      %v5243 = vunpack.c.l.b16 %v5227
      %v5244 = vunpack.c.l.b16 %v5228
      %v5245 = vunpack.c.l.b16 %v5229
      %v5246 = vunpack.c.l.b16 %v5230
      %v5247 = vunpack.c.l.b16 %v5231
      %v5248 = vpack.c.b16 %v5241, %v5240
      %v5249 = vpack.c.b16 %v5243, %v5242
      %v5250 = vpack.c.b16 %v5245, %v5244
      %v5251 = vpack.c.b16 %v5247, %v5246
      %v5257 = vsel %vm2570, %v4827, 0
      %5259 = vmatprep.subr.bf16.mxu0 0
      %5260 = vmatpush1.bf16.msra.mxu0 0
      %5261 = vmatprep.subr.bf16.mxu0 0
      %5262 = vmatpush1.bf16.msra.mxu0 0
      %5263 = vmatprep.subr.bf16.mxu0 0
      %5264 = vmatpush1.bf16.msra.mxu0 0
      %5265 = vmatprep.subr.bf16.mxu0 0
      %5266 = vmatpush1.bf16.msra.mxu0 0
      %5267 = vmatprep.subr.bf16.mxu0 0
      %5268 = vmatpush1.bf16.msra.mxu0 %v5251
      %5269 = vmatprep.subr.bf16.mxu0 0
      %5270 = vmatpush1.bf16.msra.mxu0 %v5250
      %5271 = vmatprep.subr.bf16.mxu0 0
      %5272 = vmatpush1.bf16.msra.mxu0 %v5249
      %5273 = vmatprep.subr.bf16.mxu0 0
      %5274 = vmatpush1.bf16.msra.mxu0 %v5248
      %5275 = vmatprep.subr.bf16.mxu0 0
      %5276 = vmatpush2.bf16.msra.mxu0 0
      %5277 = vmatprep.subr.bf16.mxu0 0
      %5278 = vmatpush2.bf16.msra.mxu0 0
      %5279 = vmatprep.subr.bf16.mxu0 0
      %5280 = vmatpush2.bf16.msra.mxu0 0
      %5281 = vmatprep.subr.bf16.mxu0 0
      %5282 = vmatpush2.bf16.msra.mxu0 0
      %5283 = vmatprep.subr.bf16.mxu0 0
      %5284 = vmatpush2.bf16.msra.mxu0 0
      %5285 = vmatprep.subr.bf16.mxu0 0
      %5286 = vmatpush2.bf16.msra.mxu0 0
      %5287 = vmatprep.subr.bf16.mxu0 0
      %5288 = vmatpush2.bf16.msra.mxu0 0
      %5289 = vmatprep.subr.bf16.mxu0 0
      %5290 = vmatpush2.bf16.msra.mxu0 0
      %5291 = vmatprep.mubr.bf16.mxu0 0
      %5292 = vmatmul.mubr.bf16.gmra.mxu0 %v5257
      %v5293 = vpop.f32.mrf.mxu0
      %v5294 = vadd.f32 0.0, %v5293
      %v5295 = vpop.f32.mrf.mxu0
      %v5296 = vpop.f32.mrf.mxu0
      %v5297 = vadd.f32 0.0, %v5296
      %v5298 = vpop.f32.mrf.mxu0
      %5299 = vdwg.mxu0
      %v5300 = vadd.f32 %v5222, %v5294
      %v5301 = vadd.f32 %v5223, %v5297
      %v5302 = vld [vmem:[%s6 + $0xc0] sm:$0xf]
      %v5303 = vld [vmem:[%s6 + $0xc4] sm:$0xf]
      %v5304 = vld [vmem:[%s6 + $0xc8] sm:$0xf]
      %v5305 = vld [vmem:[%s6 + $0xcc] sm:$0xf]
      %v5306 = vld [vmem:[%s6 + $0xd0] sm:$0xf]
      %v5307 = vld [vmem:[%s6 + $0xd4] sm:$0xf]
      %v5308 = vld [vmem:[%s6 + $0xd8] sm:$0xf]
      %v5309 = vld [vmem:[%s6 + $0xdc] sm:$0xf]
      %v5318 = vunpack.c.l.b16 %v5302
      %v5319 = vunpack.c.l.b16 %v5303
      %v5320 = vunpack.c.l.b16 %v5304
      %v5321 = vunpack.c.l.b16 %v5305
      %v5322 = vunpack.c.l.b16 %v5306
      %v5323 = vunpack.c.l.b16 %v5307
      %v5324 = vunpack.c.l.b16 %v5308
      %v5325 = vunpack.c.l.b16 %v5309
      %v5326 = vpack.c.b16 %v5319, %v5318
      %v5327 = vpack.c.b16 %v5321, %v5320
      %v5328 = vpack.c.b16 %v5323, %v5322
      %v5329 = vpack.c.b16 %v5325, %v5324
      %v5335 = vsel %vm2570, %v4828, 0
      %5337 = vmatprep.subr.bf16.mxu0 0
      %5338 = vmatpush1.bf16.msra.mxu0 0
      %5339 = vmatprep.subr.bf16.mxu0 0
      %5340 = vmatpush1.bf16.msra.mxu0 0
      %5341 = vmatprep.subr.bf16.mxu0 0
      %5342 = vmatpush1.bf16.msra.mxu0 0
      %5343 = vmatprep.subr.bf16.mxu0 0
      %5344 = vmatpush1.bf16.msra.mxu0 0
      %5345 = vmatprep.subr.bf16.mxu0 0
      %5346 = vmatpush1.bf16.msra.mxu0 %v5329
      %5347 = vmatprep.subr.bf16.mxu0 0
      %5348 = vmatpush1.bf16.msra.mxu0 %v5328
      %5349 = vmatprep.subr.bf16.mxu0 0
      %5350 = vmatpush1.bf16.msra.mxu0 %v5327
      %5351 = vmatprep.subr.bf16.mxu0 0
      %5352 = vmatpush1.bf16.msra.mxu0 %v5326
      %5353 = vmatprep.subr.bf16.mxu0 0
      %5354 = vmatpush2.bf16.msra.mxu0 0
      %5355 = vmatprep.subr.bf16.mxu0 0
      %5356 = vmatpush2.bf16.msra.mxu0 0
      %5357 = vmatprep.subr.bf16.mxu0 0
      %5358 = vmatpush2.bf16.msra.mxu0 0
      %5359 = vmatprep.subr.bf16.mxu0 0
      %5360 = vmatpush2.bf16.msra.mxu0 0
      %5361 = vmatprep.subr.bf16.mxu0 0
      %5362 = vmatpush2.bf16.msra.mxu0 0
      %5363 = vmatprep.subr.bf16.mxu0 0
      %5364 = vmatpush2.bf16.msra.mxu0 0
      %5365 = vmatprep.subr.bf16.mxu0 0
      %5366 = vmatpush2.bf16.msra.mxu0 0
      %5367 = vmatprep.subr.bf16.mxu0 0
      %5368 = vmatpush2.bf16.msra.mxu0 0
      %5369 = vmatprep.mubr.bf16.mxu0 0
      %5370 = vmatmul.mubr.bf16.gmra.mxu0 %v5335
      %v5371 = vpop.f32.mrf.mxu0
      %v5372 = vadd.f32 0.0, %v5371
      %v5373 = vpop.f32.mrf.mxu0
      %v5374 = vpop.f32.mrf.mxu0
      %v5375 = vadd.f32 0.0, %v5374
      %v5376 = vpop.f32.mrf.mxu0
      %5377 = vdwg.mxu0
      %v5378 = vadd.f32 %v5300, %v5372
      %v5379 = vadd.f32 %v5301, %v5375
      %v5380 = vld [vmem:[%s6 + $0xe0] sm:$0xf]
      %v5381 = vld [vmem:[%s6 + $0xe4] sm:$0xf]
      %v5382 = vld [vmem:[%s6 + $0xe8] sm:$0xf]
      %v5383 = vld [vmem:[%s6 + $0xec] sm:$0xf]
      %v5384 = vld [vmem:[%s6 + $0xf0] sm:$0xf]
      %v5385 = vld [vmem:[%s6 + $0xf4] sm:$0xf]
      %v5386 = vld [vmem:[%s6 + $0xf8] sm:$0xf]
      %v5387 = vld [vmem:[%s6 + $0xfc] sm:$0xf]
      %v5396 = vunpack.c.l.b16 %v5380
      %v5397 = vunpack.c.l.b16 %v5381
      %v5398 = vunpack.c.l.b16 %v5382
      %v5399 = vunpack.c.l.b16 %v5383
      %v5400 = vunpack.c.l.b16 %v5384
      %v5401 = vunpack.c.l.b16 %v5385
      %v5402 = vunpack.c.l.b16 %v5386
      %v5403 = vunpack.c.l.b16 %v5387
      %v5404 = vpack.c.b16 %v5397, %v5396
      %v5405 = vpack.c.b16 %v5399, %v5398
      %v5406 = vpack.c.b16 %v5401, %v5400
      %v5407 = vpack.c.b16 %v5403, %v5402
      %v5413 = vsel %vm2570, %v4829, 0
      %5415 = vmatprep.subr.bf16.mxu0 0
      %5416 = vmatpush1.bf16.msra.mxu0 0
      %5417 = vmatprep.subr.bf16.mxu0 0
      %5418 = vmatpush1.bf16.msra.mxu0 0
      %5419 = vmatprep.subr.bf16.mxu0 0
      %5420 = vmatpush1.bf16.msra.mxu0 0
      %5421 = vmatprep.subr.bf16.mxu0 0
      %5422 = vmatpush1.bf16.msra.mxu0 0
      %5423 = vmatprep.subr.bf16.mxu0 0
      %5424 = vmatpush1.bf16.msra.mxu0 %v5407
      %5425 = vmatprep.subr.bf16.mxu0 0
      %5426 = vmatpush1.bf16.msra.mxu0 %v5406
      %5427 = vmatprep.subr.bf16.mxu0 0
      %5428 = vmatpush1.bf16.msra.mxu0 %v5405
      %5429 = vmatprep.subr.bf16.mxu0 0
      %5430 = vmatpush1.bf16.msra.mxu0 %v5404
      %5431 = vmatprep.subr.bf16.mxu0 0
      %5432 = vmatpush2.bf16.msra.mxu0 0
      %5433 = vmatprep.subr.bf16.mxu0 0
      %5434 = vmatpush2.bf16.msra.mxu0 0
      %5435 = vmatprep.subr.bf16.mxu0 0
      %5436 = vmatpush2.bf16.msra.mxu0 0
      %5437 = vmatprep.subr.bf16.mxu0 0
      %5438 = vmatpush2.bf16.msra.mxu0 0
      %5439 = vmatprep.subr.bf16.mxu0 0
      %5440 = vmatpush2.bf16.msra.mxu0 0
      %5441 = vmatprep.subr.bf16.mxu0 0
      %5442 = vmatpush2.bf16.msra.mxu0 0
      %5443 = vmatprep.subr.bf16.mxu0 0
      %5444 = vmatpush2.bf16.msra.mxu0 0
      %5445 = vmatprep.subr.bf16.mxu0 0
      %5446 = vmatpush2.bf16.msra.mxu0 0
      %5447 = vmatprep.mubr.bf16.mxu0 0
      %5448 = vmatmul.mubr.bf16.gmra.mxu0 %v5413
      %v5449 = vpop.f32.mrf.mxu0
      %v5450 = vadd.f32 0.0, %v5449
      %v5451 = vpop.f32.mrf.mxu0
      %v5452 = vpop.f32.mrf.mxu0
      %v5453 = vadd.f32 0.0, %v5452
      %v5454 = vpop.f32.mrf.mxu0
      %5455 = vdwg.mxu0
      %v5456 = vadd.f32 %v5378, %v5450
      %v5457 = vadd.f32 %v5379, %v5453
      %v5458 = vld [vmem:[%s6 + $0x100] sm:$0xf]
      %v5459 = vld [vmem:[%s6 + $0x104] sm:$0xf]
      %v5460 = vld [vmem:[%s6 + $0x108] sm:$0xf]
      %v5461 = vld [vmem:[%s6 + $0x10c] sm:$0xf]
      %v5462 = vld [vmem:[%s6 + $0x110] sm:$0xf]
      %v5463 = vld [vmem:[%s6 + $0x114] sm:$0xf]
      %v5464 = vld [vmem:[%s6 + $0x118] sm:$0xf]
      %v5465 = vld [vmem:[%s6 + $0x11c] sm:$0xf]
      %v5474 = vunpack.c.l.b16 %v5458
      %v5475 = vunpack.c.l.b16 %v5459
      %v5476 = vunpack.c.l.b16 %v5460
      %v5477 = vunpack.c.l.b16 %v5461
      %v5478 = vunpack.c.l.b16 %v5462
      %v5479 = vunpack.c.l.b16 %v5463
      %v5480 = vunpack.c.l.b16 %v5464
      %v5481 = vunpack.c.l.b16 %v5465
      %v5482 = vpack.c.b16 %v5475, %v5474
      %v5483 = vpack.c.b16 %v5477, %v5476
      %v5484 = vpack.c.b16 %v5479, %v5478
      %v5485 = vpack.c.b16 %v5481, %v5480
      %v5491 = vsel %vm2570, %v4830, 0
      %5493 = vmatprep.subr.bf16.mxu0 0
      %5494 = vmatpush1.bf16.msra.mxu0 0
      %5495 = vmatprep.subr.bf16.mxu0 0
      %5496 = vmatpush1.bf16.msra.mxu0 0
      %5497 = vmatprep.subr.bf16.mxu0 0
      %5498 = vmatpush1.bf16.msra.mxu0 0
      %5499 = vmatprep.subr.bf16.mxu0 0
      %5500 = vmatpush1.bf16.msra.mxu0 0
      %5501 = vmatprep.subr.bf16.mxu0 0
      %5502 = vmatpush1.bf16.msra.mxu0 %v5485
      %5503 = vmatprep.subr.bf16.mxu0 0
      %5504 = vmatpush1.bf16.msra.mxu0 %v5484
      %5505 = vmatprep.subr.bf16.mxu0 0
      %5506 = vmatpush1.bf16.msra.mxu0 %v5483
      %5507 = vmatprep.subr.bf16.mxu0 0
      %5508 = vmatpush1.bf16.msra.mxu0 %v5482
      %5509 = vmatprep.subr.bf16.mxu0 0
      %5510 = vmatpush2.bf16.msra.mxu0 0
      %5511 = vmatprep.subr.bf16.mxu0 0
      %5512 = vmatpush2.bf16.msra.mxu0 0
      %5513 = vmatprep.subr.bf16.mxu0 0
      %5514 = vmatpush2.bf16.msra.mxu0 0
      %5515 = vmatprep.subr.bf16.mxu0 0
      %5516 = vmatpush2.bf16.msra.mxu0 0
      %5517 = vmatprep.subr.bf16.mxu0 0
      %5518 = vmatpush2.bf16.msra.mxu0 0
      %5519 = vmatprep.subr.bf16.mxu0 0
      %5520 = vmatpush2.bf16.msra.mxu0 0
      %5521 = vmatprep.subr.bf16.mxu0 0
      %5522 = vmatpush2.bf16.msra.mxu0 0
      %5523 = vmatprep.subr.bf16.mxu0 0
      %5524 = vmatpush2.bf16.msra.mxu0 0
      %5525 = vmatprep.mubr.bf16.mxu0 0
      %5526 = vmatmul.mubr.bf16.gmra.mxu0 %v5491
      %v5527 = vpop.f32.mrf.mxu0
      %v5528 = vadd.f32 0.0, %v5527
      %v5529 = vpop.f32.mrf.mxu0
      %v5530 = vpop.f32.mrf.mxu0
      %v5531 = vadd.f32 0.0, %v5530
      %v5532 = vpop.f32.mrf.mxu0
      %5533 = vdwg.mxu0
      %v5534 = vadd.f32 %v5456, %v5528
      %v5535 = vadd.f32 %v5457, %v5531
      %v5536 = vld [vmem:[%s6 + $0x120] sm:$0xf]
      %v5537 = vld [vmem:[%s6 + $0x124] sm:$0xf]
      %v5538 = vld [vmem:[%s6 + $0x128] sm:$0xf]
      %v5539 = vld [vmem:[%s6 + $0x12c] sm:$0xf]
      %v5540 = vld [vmem:[%s6 + $0x130] sm:$0xf]
      %v5541 = vld [vmem:[%s6 + $0x134] sm:$0xf]
      %v5542 = vld [vmem:[%s6 + $0x138] sm:$0xf]
      %v5543 = vld [vmem:[%s6 + $0x13c] sm:$0xf]
      %v5552 = vunpack.c.l.b16 %v5536
      %v5553 = vunpack.c.l.b16 %v5537
      %v5554 = vunpack.c.l.b16 %v5538
      %v5555 = vunpack.c.l.b16 %v5539
      %v5556 = vunpack.c.l.b16 %v5540
      %v5557 = vunpack.c.l.b16 %v5541
      %v5558 = vunpack.c.l.b16 %v5542
      %v5559 = vunpack.c.l.b16 %v5543
      %v5560 = vpack.c.b16 %v5553, %v5552
      %v5561 = vpack.c.b16 %v5555, %v5554
      %v5562 = vpack.c.b16 %v5557, %v5556
      %v5563 = vpack.c.b16 %v5559, %v5558
      %v5569 = vsel %vm2570, %v4831, 0
      %5571 = vmatprep.subr.bf16.mxu0 0
      %5572 = vmatpush1.bf16.msra.mxu0 0
      %5573 = vmatprep.subr.bf16.mxu0 0
      %5574 = vmatpush1.bf16.msra.mxu0 0
      %5575 = vmatprep.subr.bf16.mxu0 0
      %5576 = vmatpush1.bf16.msra.mxu0 0
      %5577 = vmatprep.subr.bf16.mxu0 0
      %5578 = vmatpush1.bf16.msra.mxu0 0
      %5579 = vmatprep.subr.bf16.mxu0 0
      %5580 = vmatpush1.bf16.msra.mxu0 %v5563
      %5581 = vmatprep.subr.bf16.mxu0 0
      %5582 = vmatpush1.bf16.msra.mxu0 %v5562
      %5583 = vmatprep.subr.bf16.mxu0 0
      %5584 = vmatpush1.bf16.msra.mxu0 %v5561
      %5585 = vmatprep.subr.bf16.mxu0 0
      %5586 = vmatpush1.bf16.msra.mxu0 %v5560
      %5587 = vmatprep.subr.bf16.mxu0 0
      %5588 = vmatpush2.bf16.msra.mxu0 0
      %5589 = vmatprep.subr.bf16.mxu0 0
      %5590 = vmatpush2.bf16.msra.mxu0 0
      %5591 = vmatprep.subr.bf16.mxu0 0
      %5592 = vmatpush2.bf16.msra.mxu0 0
      %5593 = vmatprep.subr.bf16.mxu0 0
      %5594 = vmatpush2.bf16.msra.mxu0 0
      %5595 = vmatprep.subr.bf16.mxu0 0
      %5596 = vmatpush2.bf16.msra.mxu0 0
      %5597 = vmatprep.subr.bf16.mxu0 0
      %5598 = vmatpush2.bf16.msra.mxu0 0
      %5599 = vmatprep.subr.bf16.mxu0 0
      %5600 = vmatpush2.bf16.msra.mxu0 0
      %5601 = vmatprep.subr.bf16.mxu0 0
      %5602 = vmatpush2.bf16.msra.mxu0 0
      %5603 = vmatprep.mubr.bf16.mxu0 0
      %5604 = vmatmul.mubr.bf16.gmra.mxu0 %v5569
      %v5605 = vpop.f32.mrf.mxu0
      %v5606 = vadd.f32 0.0, %v5605
      %v5607 = vpop.f32.mrf.mxu0
      %v5608 = vpop.f32.mrf.mxu0
      %v5609 = vadd.f32 0.0, %v5608
      %v5610 = vpop.f32.mrf.mxu0
      %5611 = vdwg.mxu0
      %v5612 = vadd.f32 %v5534, %v5606
      %v5613 = vadd.f32 %v5535, %v5609
      %v5614 = vld [vmem:[%s6 + $0x140] sm:$0xf]
      %v5615 = vld [vmem:[%s6 + $0x144] sm:$0xf]
      %v5616 = vld [vmem:[%s6 + $0x148] sm:$0xf]
      %v5617 = vld [vmem:[%s6 + $0x14c] sm:$0xf]
      %v5618 = vld [vmem:[%s6 + $0x150] sm:$0xf]
      %v5619 = vld [vmem:[%s6 + $0x154] sm:$0xf]
      %v5620 = vld [vmem:[%s6 + $0x158] sm:$0xf]
      %v5621 = vld [vmem:[%s6 + $0x15c] sm:$0xf]
      %v5630 = vunpack.c.l.b16 %v5614
      %v5631 = vunpack.c.l.b16 %v5615
      %v5632 = vunpack.c.l.b16 %v5616
      %v5633 = vunpack.c.l.b16 %v5617
      %v5634 = vunpack.c.l.b16 %v5618
      %v5635 = vunpack.c.l.b16 %v5619
      %v5636 = vunpack.c.l.b16 %v5620
      %v5637 = vunpack.c.l.b16 %v5621
      %v5638 = vpack.c.b16 %v5631, %v5630
      %v5639 = vpack.c.b16 %v5633, %v5632
      %v5640 = vpack.c.b16 %v5635, %v5634
      %v5641 = vpack.c.b16 %v5637, %v5636
      %v5647 = vsel %vm2570, %v4832, 0
      %5649 = vmatprep.subr.bf16.mxu0 0
      %5650 = vmatpush1.bf16.msra.mxu0 0
      %5651 = vmatprep.subr.bf16.mxu0 0
      %5652 = vmatpush1.bf16.msra.mxu0 0
      %5653 = vmatprep.subr.bf16.mxu0 0
      %5654 = vmatpush1.bf16.msra.mxu0 0
      %5655 = vmatprep.subr.bf16.mxu0 0
      %5656 = vmatpush1.bf16.msra.mxu0 0
      %5657 = vmatprep.subr.bf16.mxu0 0
      %5658 = vmatpush1.bf16.msra.mxu0 %v5641
      %5659 = vmatprep.subr.bf16.mxu0 0
      %5660 = vmatpush1.bf16.msra.mxu0 %v5640
      %5661 = vmatprep.subr.bf16.mxu0 0
      %5662 = vmatpush1.bf16.msra.mxu0 %v5639
      %5663 = vmatprep.subr.bf16.mxu0 0
      %5664 = vmatpush1.bf16.msra.mxu0 %v5638
      %5665 = vmatprep.subr.bf16.mxu0 0
      %5666 = vmatpush2.bf16.msra.mxu0 0
      %5667 = vmatprep.subr.bf16.mxu0 0
      %5668 = vmatpush2.bf16.msra.mxu0 0
      %5669 = vmatprep.subr.bf16.mxu0 0
      %5670 = vmatpush2.bf16.msra.mxu0 0
      %5671 = vmatprep.subr.bf16.mxu0 0
      %5672 = vmatpush2.bf16.msra.mxu0 0
      %5673 = vmatprep.subr.bf16.mxu0 0
      %5674 = vmatpush2.bf16.msra.mxu0 0
      %5675 = vmatprep.subr.bf16.mxu0 0
      %5676 = vmatpush2.bf16.msra.mxu0 0
      %5677 = vmatprep.subr.bf16.mxu0 0
      %5678 = vmatpush2.bf16.msra.mxu0 0
      %5679 = vmatprep.subr.bf16.mxu0 0
      %5680 = vmatpush2.bf16.msra.mxu0 0
      %5681 = vmatprep.mubr.bf16.mxu0 0
      %5682 = vmatmul.mubr.bf16.gmra.mxu0 %v5647
      %v5683 = vpop.f32.mrf.mxu0
      %v5684 = vadd.f32 0.0, %v5683
      %v5685 = vpop.f32.mrf.mxu0
      %v5686 = vpop.f32.mrf.mxu0
      %v5687 = vadd.f32 0.0, %v5686
      %v5688 = vpop.f32.mrf.mxu0
      %5689 = vdwg.mxu0
      %v5690 = vadd.f32 %v5612, %v5684
      %v5691 = vadd.f32 %v5613, %v5687
      %v5692 = vld [vmem:[%s6 + $0x160] sm:$0xf]
      %v5693 = vld [vmem:[%s6 + $0x164] sm:$0xf]
      %v5694 = vld [vmem:[%s6 + $0x168] sm:$0xf]
      %v5695 = vld [vmem:[%s6 + $0x16c] sm:$0xf]
      %v5696 = vld [vmem:[%s6 + $0x170] sm:$0xf]
      %v5697 = vld [vmem:[%s6 + $0x174] sm:$0xf]
      %v5698 = vld [vmem:[%s6 + $0x178] sm:$0xf]
      %v5699 = vld [vmem:[%s6 + $0x17c] sm:$0xf]
      %v5708 = vunpack.c.l.b16 %v5692
      %v5709 = vunpack.c.l.b16 %v5693
      %v5710 = vunpack.c.l.b16 %v5694
      %v5711 = vunpack.c.l.b16 %v5695
      %v5712 = vunpack.c.l.b16 %v5696
      %v5713 = vunpack.c.l.b16 %v5697
      %v5714 = vunpack.c.l.b16 %v5698
      %v5715 = vunpack.c.l.b16 %v5699
      %v5716 = vpack.c.b16 %v5709, %v5708
      %v5717 = vpack.c.b16 %v5711, %v5710
      %v5718 = vpack.c.b16 %v5713, %v5712
      %v5719 = vpack.c.b16 %v5715, %v5714
      %v5725 = vsel %vm2570, %v4833, 0
      %5727 = vmatprep.subr.bf16.mxu0 0
      %5728 = vmatpush1.bf16.msra.mxu0 0
      %5729 = vmatprep.subr.bf16.mxu0 0
      %5730 = vmatpush1.bf16.msra.mxu0 0
      %5731 = vmatprep.subr.bf16.mxu0 0
      %5732 = vmatpush1.bf16.msra.mxu0 0
      %5733 = vmatprep.subr.bf16.mxu0 0
      %5734 = vmatpush1.bf16.msra.mxu0 0
      %5735 = vmatprep.subr.bf16.mxu0 0
      %5736 = vmatpush1.bf16.msra.mxu0 %v5719
      %5737 = vmatprep.subr.bf16.mxu0 0
      %5738 = vmatpush1.bf16.msra.mxu0 %v5718
      %5739 = vmatprep.subr.bf16.mxu0 0
      %5740 = vmatpush1.bf16.msra.mxu0 %v5717
      %5741 = vmatprep.subr.bf16.mxu0 0
      %5742 = vmatpush1.bf16.msra.mxu0 %v5716
      %5743 = vmatprep.subr.bf16.mxu0 0
      %5744 = vmatpush2.bf16.msra.mxu0 0
      %5745 = vmatprep.subr.bf16.mxu0 0
      %5746 = vmatpush2.bf16.msra.mxu0 0
      %5747 = vmatprep.subr.bf16.mxu0 0
      %5748 = vmatpush2.bf16.msra.mxu0 0
      %5749 = vmatprep.subr.bf16.mxu0 0
      %5750 = vmatpush2.bf16.msra.mxu0 0
      %5751 = vmatprep.subr.bf16.mxu0 0
      %5752 = vmatpush2.bf16.msra.mxu0 0
      %5753 = vmatprep.subr.bf16.mxu0 0
      %5754 = vmatpush2.bf16.msra.mxu0 0
      %5755 = vmatprep.subr.bf16.mxu0 0
      %5756 = vmatpush2.bf16.msra.mxu0 0
      %5757 = vmatprep.subr.bf16.mxu0 0
      %5758 = vmatpush2.bf16.msra.mxu0 0
      %5759 = vmatprep.mubr.bf16.mxu0 0
      %5760 = vmatmul.mubr.bf16.gmra.mxu0 %v5725
      %v5761 = vpop.f32.mrf.mxu0
      %v5762 = vadd.f32 0.0, %v5761
      %v5763 = vpop.f32.mrf.mxu0
      %v5764 = vpop.f32.mrf.mxu0
      %v5765 = vadd.f32 0.0, %v5764
      %v5766 = vpop.f32.mrf.mxu0
      %5767 = vdwg.mxu0
      %v5768 = vadd.f32 %v5690, %v5762
      %v5769 = vadd.f32 %v5691, %v5765
      %v5770 = vld [vmem:[%s6 + $0x180] sm:$0xf]
      %v5771 = vld [vmem:[%s6 + $0x184] sm:$0xf]
      %v5772 = vld [vmem:[%s6 + $0x188] sm:$0xf]
      %v5773 = vld [vmem:[%s6 + $0x18c] sm:$0xf]
      %v5774 = vld [vmem:[%s6 + $0x190] sm:$0xf]
      %v5775 = vld [vmem:[%s6 + $0x194] sm:$0xf]
      %v5776 = vld [vmem:[%s6 + $0x198] sm:$0xf]
      %v5777 = vld [vmem:[%s6 + $0x19c] sm:$0xf]
      %v5786 = vunpack.c.l.b16 %v5770
      %v5787 = vunpack.c.l.b16 %v5771
      %v5788 = vunpack.c.l.b16 %v5772
      %v5789 = vunpack.c.l.b16 %v5773
      %v5790 = vunpack.c.l.b16 %v5774
      %v5791 = vunpack.c.l.b16 %v5775
      %v5792 = vunpack.c.l.b16 %v5776
      %v5793 = vunpack.c.l.b16 %v5777
      %v5794 = vpack.c.b16 %v5787, %v5786
      %v5795 = vpack.c.b16 %v5789, %v5788
      %v5796 = vpack.c.b16 %v5791, %v5790
      %v5797 = vpack.c.b16 %v5793, %v5792
      %v5803 = vsel %vm2570, %v4834, 0
      %5805 = vmatprep.subr.bf16.mxu0 0
      %5806 = vmatpush1.bf16.msra.mxu0 0
      %5807 = vmatprep.subr.bf16.mxu0 0
      %5808 = vmatpush1.bf16.msra.mxu0 0
      %5809 = vmatprep.subr.bf16.mxu0 0
      %5810 = vmatpush1.bf16.msra.mxu0 0
      %5811 = vmatprep.subr.bf16.mxu0 0
      %5812 = vmatpush1.bf16.msra.mxu0 0
      %5813 = vmatprep.subr.bf16.mxu0 0
      %5814 = vmatpush1.bf16.msra.mxu0 %v5797
      %5815 = vmatprep.subr.bf16.mxu0 0
      %5816 = vmatpush1.bf16.msra.mxu0 %v5796
      %5817 = vmatprep.subr.bf16.mxu0 0
      %5818 = vmatpush1.bf16.msra.mxu0 %v5795
      %5819 = vmatprep.subr.bf16.mxu0 0
      %5820 = vmatpush1.bf16.msra.mxu0 %v5794
      %5821 = vmatprep.subr.bf16.mxu0 0
      %5822 = vmatpush2.bf16.msra.mxu0 0
      %5823 = vmatprep.subr.bf16.mxu0 0
      %5824 = vmatpush2.bf16.msra.mxu0 0
      %5825 = vmatprep.subr.bf16.mxu0 0
      %5826 = vmatpush2.bf16.msra.mxu0 0
      %5827 = vmatprep.subr.bf16.mxu0 0
      %5828 = vmatpush2.bf16.msra.mxu0 0
      %5829 = vmatprep.subr.bf16.mxu0 0
      %5830 = vmatpush2.bf16.msra.mxu0 0
      %5831 = vmatprep.subr.bf16.mxu0 0
      %5832 = vmatpush2.bf16.msra.mxu0 0
      %5833 = vmatprep.subr.bf16.mxu0 0
      %5834 = vmatpush2.bf16.msra.mxu0 0
      %5835 = vmatprep.subr.bf16.mxu0 0
      %5836 = vmatpush2.bf16.msra.mxu0 0
      %5837 = vmatprep.mubr.bf16.mxu0 0
      %5838 = vmatmul.mubr.bf16.gmra.mxu0 %v5803
      %v5839 = vpop.f32.mrf.mxu0
      %v5840 = vadd.f32 0.0, %v5839
      %v5841 = vpop.f32.mrf.mxu0
      %v5842 = vpop.f32.mrf.mxu0
      %v5843 = vadd.f32 0.0, %v5842
      %v5844 = vpop.f32.mrf.mxu0
      %5845 = vdwg.mxu0
      %v5846 = vadd.f32 %v5768, %v5840
      %v5847 = vadd.f32 %v5769, %v5843
      %v5848 = vld [vmem:[%s6 + $0x1a0] sm:$0xf]
      %v5849 = vld [vmem:[%s6 + $0x1a4] sm:$0xf]
      %v5850 = vld [vmem:[%s6 + $0x1a8] sm:$0xf]
      %v5851 = vld [vmem:[%s6 + $0x1ac] sm:$0xf]
      %v5852 = vld [vmem:[%s6 + $0x1b0] sm:$0xf]
      %v5853 = vld [vmem:[%s6 + $0x1b4] sm:$0xf]
      %v5854 = vld [vmem:[%s6 + $0x1b8] sm:$0xf]
      %v5855 = vld [vmem:[%s6 + $0x1bc] sm:$0xf]
      %v5864 = vunpack.c.l.b16 %v5848
      %v5865 = vunpack.c.l.b16 %v5849
      %v5866 = vunpack.c.l.b16 %v5850
      %v5867 = vunpack.c.l.b16 %v5851
      %v5868 = vunpack.c.l.b16 %v5852
      %v5869 = vunpack.c.l.b16 %v5853
      %v5870 = vunpack.c.l.b16 %v5854
      %v5871 = vunpack.c.l.b16 %v5855
      %v5872 = vpack.c.b16 %v5865, %v5864
      %v5873 = vpack.c.b16 %v5867, %v5866
      %v5874 = vpack.c.b16 %v5869, %v5868
      %v5875 = vpack.c.b16 %v5871, %v5870
      %v5881 = vsel %vm2570, %v4835, 0
      %5883 = vmatprep.subr.bf16.mxu0 0
      %5884 = vmatpush1.bf16.msra.mxu0 0
      %5885 = vmatprep.subr.bf16.mxu0 0
      %5886 = vmatpush1.bf16.msra.mxu0 0
      %5887 = vmatprep.subr.bf16.mxu0 0
      %5888 = vmatpush1.bf16.msra.mxu0 0
      %5889 = vmatprep.subr.bf16.mxu0 0
      %5890 = vmatpush1.bf16.msra.mxu0 0
      %5891 = vmatprep.subr.bf16.mxu0 0
      %5892 = vmatpush1.bf16.msra.mxu0 %v5875
      %5893 = vmatprep.subr.bf16.mxu0 0
      %5894 = vmatpush1.bf16.msra.mxu0 %v5874
      %5895 = vmatprep.subr.bf16.mxu0 0
      %5896 = vmatpush1.bf16.msra.mxu0 %v5873
      %5897 = vmatprep.subr.bf16.mxu0 0
      %5898 = vmatpush1.bf16.msra.mxu0 %v5872
      %5899 = vmatprep.subr.bf16.mxu0 0
      %5900 = vmatpush2.bf16.msra.mxu0 0
      %5901 = vmatprep.subr.bf16.mxu0 0
      %5902 = vmatpush2.bf16.msra.mxu0 0
      %5903 = vmatprep.subr.bf16.mxu0 0
      %5904 = vmatpush2.bf16.msra.mxu0 0
      %5905 = vmatprep.subr.bf16.mxu0 0
      %5906 = vmatpush2.bf16.msra.mxu0 0
      %5907 = vmatprep.subr.bf16.mxu0 0
      %5908 = vmatpush2.bf16.msra.mxu0 0
      %5909 = vmatprep.subr.bf16.mxu0 0
      %5910 = vmatpush2.bf16.msra.mxu0 0
      %5911 = vmatprep.subr.bf16.mxu0 0
      %5912 = vmatpush2.bf16.msra.mxu0 0
      %5913 = vmatprep.subr.bf16.mxu0 0
      %5914 = vmatpush2.bf16.msra.mxu0 0
      %5915 = vmatprep.mubr.bf16.mxu0 0
      %5916 = vmatmul.mubr.bf16.gmra.mxu0 %v5881
      %v5917 = vpop.f32.mrf.mxu0
      %v5918 = vadd.f32 0.0, %v5917
      %v5919 = vpop.f32.mrf.mxu0
      %v5920 = vpop.f32.mrf.mxu0
      %v5921 = vadd.f32 0.0, %v5920
      %v5922 = vpop.f32.mrf.mxu0
      %5923 = vdwg.mxu0
      %v5924 = vadd.f32 %v5846, %v5918
      %v5925 = vadd.f32 %v5847, %v5921
      %v5926 = vld [vmem:[%s6 + $0x1c0] sm:$0xf]
      %v5927 = vld [vmem:[%s6 + $0x1c4] sm:$0xf]
      %v5928 = vld [vmem:[%s6 + $0x1c8] sm:$0xf]
      %v5929 = vld [vmem:[%s6 + $0x1cc] sm:$0xf]
      %v5930 = vld [vmem:[%s6 + $0x1d0] sm:$0xf]
      %v5931 = vld [vmem:[%s6 + $0x1d4] sm:$0xf]
      %v5932 = vld [vmem:[%s6 + $0x1d8] sm:$0xf]
      %v5933 = vld [vmem:[%s6 + $0x1dc] sm:$0xf]
      %v5942 = vunpack.c.l.b16 %v5926
      %v5943 = vunpack.c.l.b16 %v5927
      %v5944 = vunpack.c.l.b16 %v5928
      %v5945 = vunpack.c.l.b16 %v5929
      %v5946 = vunpack.c.l.b16 %v5930
      %v5947 = vunpack.c.l.b16 %v5931
      %v5948 = vunpack.c.l.b16 %v5932
      %v5949 = vunpack.c.l.b16 %v5933
      %v5950 = vpack.c.b16 %v5943, %v5942
      %v5951 = vpack.c.b16 %v5945, %v5944
      %v5952 = vpack.c.b16 %v5947, %v5946
      %v5953 = vpack.c.b16 %v5949, %v5948
      %v5959 = vsel %vm2570, %v4836, 0
      %5961 = vmatprep.subr.bf16.mxu0 0
      %5962 = vmatpush1.bf16.msra.mxu0 0
      %5963 = vmatprep.subr.bf16.mxu0 0
      %5964 = vmatpush1.bf16.msra.mxu0 0
      %5965 = vmatprep.subr.bf16.mxu0 0
      %5966 = vmatpush1.bf16.msra.mxu0 0
      %5967 = vmatprep.subr.bf16.mxu0 0
      %5968 = vmatpush1.bf16.msra.mxu0 0
      %5969 = vmatprep.subr.bf16.mxu0 0
      %5970 = vmatpush1.bf16.msra.mxu0 %v5953
      %5971 = vmatprep.subr.bf16.mxu0 0
      %5972 = vmatpush1.bf16.msra.mxu0 %v5952
      %5973 = vmatprep.subr.bf16.mxu0 0
      %5974 = vmatpush1.bf16.msra.mxu0 %v5951
      %5975 = vmatprep.subr.bf16.mxu0 0
      %5976 = vmatpush1.bf16.msra.mxu0 %v5950
      %5977 = vmatprep.subr.bf16.mxu0 0
      %5978 = vmatpush2.bf16.msra.mxu0 0
      %5979 = vmatprep.subr.bf16.mxu0 0
      %5980 = vmatpush2.bf16.msra.mxu0 0
      %5981 = vmatprep.subr.bf16.mxu0 0
      %5982 = vmatpush2.bf16.msra.mxu0 0
      %5983 = vmatprep.subr.bf16.mxu0 0
      %5984 = vmatpush2.bf16.msra.mxu0 0
      %5985 = vmatprep.subr.bf16.mxu0 0
      %5986 = vmatpush2.bf16.msra.mxu0 0
      %5987 = vmatprep.subr.bf16.mxu0 0
      %5988 = vmatpush2.bf16.msra.mxu0 0
      %5989 = vmatprep.subr.bf16.mxu0 0
      %5990 = vmatpush2.bf16.msra.mxu0 0
      %5991 = vmatprep.subr.bf16.mxu0 0
      %5992 = vmatpush2.bf16.msra.mxu0 0
      %5993 = vmatprep.mubr.bf16.mxu0 0
      %5994 = vmatmul.mubr.bf16.gmra.mxu0 %v5959
      %v5995 = vpop.f32.mrf.mxu0
      %v5996 = vadd.f32 0.0, %v5995
      %v5997 = vpop.f32.mrf.mxu0
      %v5998 = vpop.f32.mrf.mxu0
      %v5999 = vadd.f32 0.0, %v5998
      %v6000 = vpop.f32.mrf.mxu0
      %6001 = vdwg.mxu0
      %v6002 = vadd.f32 %v5924, %v5996
      %v6003 = vadd.f32 %v5925, %v5999
      %v6004 = vld [vmem:[%s6 + $0x1e0] sm:$0xf]
      %v6005 = vld [vmem:[%s6 + $0x1e4] sm:$0xf]
      %v6006 = vld [vmem:[%s6 + $0x1e8] sm:$0xf]
      %v6007 = vld [vmem:[%s6 + $0x1ec] sm:$0xf]
      %v6008 = vld [vmem:[%s6 + $0x1f0] sm:$0xf]
      %v6009 = vld [vmem:[%s6 + $0x1f4] sm:$0xf]
      %v6010 = vld [vmem:[%s6 + $0x1f8] sm:$0xf]
      %v6011 = vld [vmem:[%s6 + $0x1fc] sm:$0xf]
      %v6020 = vunpack.c.l.b16 %v6004
      %v6021 = vunpack.c.l.b16 %v6005
      %v6022 = vunpack.c.l.b16 %v6006
      %v6023 = vunpack.c.l.b16 %v6007
      %v6024 = vunpack.c.l.b16 %v6008
      %v6025 = vunpack.c.l.b16 %v6009
      %v6026 = vunpack.c.l.b16 %v6010
      %v6027 = vunpack.c.l.b16 %v6011
      %v6028 = vpack.c.b16 %v6021, %v6020
      %v6029 = vpack.c.b16 %v6023, %v6022
      %v6030 = vpack.c.b16 %v6025, %v6024
      %v6031 = vpack.c.b16 %v6027, %v6026
      %v6037 = vsel %vm2570, %v4837, 0
      %6039 = vmatprep.subr.bf16.mxu0 0
      %6040 = vmatpush1.bf16.msra.mxu0 0
      %6041 = vmatprep.subr.bf16.mxu0 0
      %6042 = vmatpush1.bf16.msra.mxu0 0
      %6043 = vmatprep.subr.bf16.mxu0 0
      %6044 = vmatpush1.bf16.msra.mxu0 0
      %6045 = vmatprep.subr.bf16.mxu0 0
      %6046 = vmatpush1.bf16.msra.mxu0 0
      %6047 = vmatprep.subr.bf16.mxu0 0
      %6048 = vmatpush1.bf16.msra.mxu0 %v6031
      %6049 = vmatprep.subr.bf16.mxu0 0
      %6050 = vmatpush1.bf16.msra.mxu0 %v6030
      %6051 = vmatprep.subr.bf16.mxu0 0
      %6052 = vmatpush1.bf16.msra.mxu0 %v6029
      %6053 = vmatprep.subr.bf16.mxu0 0
      %6054 = vmatpush1.bf16.msra.mxu0 %v6028
      %6055 = vmatprep.subr.bf16.mxu0 0
      %6056 = vmatpush2.bf16.msra.mxu0 0
      %6057 = vmatprep.subr.bf16.mxu0 0
      %6058 = vmatpush2.bf16.msra.mxu0 0
      %6059 = vmatprep.subr.bf16.mxu0 0
      %6060 = vmatpush2.bf16.msra.mxu0 0
      %6061 = vmatprep.subr.bf16.mxu0 0
      %6062 = vmatpush2.bf16.msra.mxu0 0
      %6063 = vmatprep.subr.bf16.mxu0 0
      %6064 = vmatpush2.bf16.msra.mxu0 0
      %6065 = vmatprep.subr.bf16.mxu0 0
      %6066 = vmatpush2.bf16.msra.mxu0 0
      %6067 = vmatprep.subr.bf16.mxu0 0
      %6068 = vmatpush2.bf16.msra.mxu0 0
      %6069 = vmatprep.subr.bf16.mxu0 0
      %6070 = vmatpush2.bf16.msra.mxu0 0
      %6071 = vmatprep.mubr.bf16.mxu0 0
      %6072 = vmatmul.mubr.bf16.gmra.mxu0 %v6037
      %v6073 = vpop.f32.mrf.mxu0
      %v6074 = vadd.f32 0.0, %v6073
      %v6075 = vpop.f32.mrf.mxu0
      %v6076 = vpop.f32.mrf.mxu0
      %v6077 = vadd.f32 0.0, %v6076
      %v6078 = vpop.f32.mrf.mxu0
      %6079 = vdwg.mxu0
      %v6080 = vadd.f32 %v6002, %v6074
      %v6081 = vadd.f32 %v6003, %v6077
      %v6082 = vld [vmem:[%s7] sm:$0x1]
      %v6084 = vlaneseq
      %v6085 = vshrl.u32 %v6084, 7
      %v6086 = vsub.s32 0, %v6085
      %v6087 = vrot.slane %v6082, %v6086
      %v6089 = vadd.f32 %v6080, %v6087
      %v6090 = vadd.f32 %v6081, %v6087
      %v6091 = vsel %vm2570, %v6089, 0.0
      %v6092 = vsel %vm2570, %v6090, 0.0
      %v6093 = vadd.f32 %v6091, %v6092
      %v6094 = vrot.slane %v6093, 4
      %v6095 = vadd.f32 %v6093, %v6094
      %v6096 = vrot.slane %v6095, 2
      %v6097 = vadd.f32 %v6095, %v6096
      %v6098 = vrot.slane %v6097, 1
      %v6099 = vadd.f32 %v6097, %v6098
      %v6100 = vrcp.pop 16.0
      %v6101 = vmul.f32 %v6099, %v6100
      %v6102 = vsub.f32 %v6089, %v6101
      %v6103 = vsub.f32 %v6090, %v6101
      %v6104 = vmul.f32 %v6102, %v6102
      %v6105 = vmul.f32 %v6103, %v6103
      %v6106 = vsel %vm2570, %v6104, 0.0
      %v6107 = vsel %vm2570, %v6105, 0.0
      %v6108 = vadd.f32 %v6106, %v6107
      %v6109 = vrot.slane %v6108, 4
      %v6110 = vadd.f32 %v6108, %v6109
      %v6111 = vrot.slane %v6110, 2
      %v6112 = vadd.f32 %v6110, %v6111
      %v6113 = vrot.slane %v6112, 1
      %v6114 = vadd.f32 %v6112, %v6113
      %v6115 = vmul.f32 %v6114, %v6100
      %v6116 = vadd.f32 %v6115, 1e-05
      %v6117 = vrsqrt.pop %v6116
      %v6118 = vmul.f32 %v6102, %v6117
      %v6119 = vmul.f32 %v6103, %v6117
      %vm6120 = vcmp.gt.f32.partialorder %v6118, 0.0
      %vm6121 = vcmp.gt.f32.partialorder %v6119, 0.0
      %v6122 = vmul.f32 %v6118, 0.1
      %v6123 = vmul.f32 %v6119, 0.1
      %v6124 = vsel %vm6120, %v6118, %v6122
      %v6125 = vsel %vm6121, %v6119, %v6123
      %v6126 = vpack.c.bf16 %v6125, %v6124
      %v6127 = vld [vmem:[%s12] sm:$0x3]
      %vm6128 = vcmask 130048
      %v6130 = vsel %vm6128, %v6127, 0
      %6132 = vmatprep.subr.bf16.mxu0 0
      %6133 = vmatpush1.bf16.msra.mxu0 0
      %6134 = vmatprep.subr.bf16.mxu0 0
      %6135 = vmatpush1.bf16.msra.mxu0 0
      %6136 = vmatprep.subr.bf16.mxu0 0
      %6137 = vmatpush1.bf16.msra.mxu0 0
      %6138 = vmatprep.subr.bf16.mxu0 0
      %6139 = vmatpush1.bf16.msra.mxu0 0
      %6140 = vmatprep.subr.bf16.mxu0 0
      %6141 = vmatpush1.bf16.msra.mxu0 0
      %6142 = vmatprep.subr.bf16.mxu0 0
      %6143 = vmatpush1.bf16.msra.mxu0 0
      %6144 = vmatprep.subr.bf16.mxu0 0
      %6145 = vmatpush1.bf16.msra.mxu0 0
      %6146 = vmatprep.subr.bf16.mxu0 0
      %6147 = vmatpush1.bf16.msra.mxu0 %v6126
      %6148 = vmatprep.subr.bf16.mxu0 0
      %6149 = vmatpush2.bf16.msra.mxu0 0
      %6150 = vmatprep.subr.bf16.mxu0 0
      %6151 = vmatpush2.bf16.msra.mxu0 0
      %6152 = vmatprep.subr.bf16.mxu0 0
      %6153 = vmatpush2.bf16.msra.mxu0 0
      %6154 = vmatprep.subr.bf16.mxu0 0
      %6155 = vmatpush2.bf16.msra.mxu0 0
      %6156 = vmatprep.subr.bf16.mxu0 0
      %6157 = vmatpush2.bf16.msra.mxu0 0
      %6158 = vmatprep.subr.bf16.mxu0 0
      %6159 = vmatpush2.bf16.msra.mxu0 0
      %6160 = vmatprep.subr.bf16.mxu0 0
      %6161 = vmatpush2.bf16.msra.mxu0 0
      %6162 = vmatprep.subr.bf16.mxu0 0
      %6163 = vmatpush2.bf16.msra.mxu0 0
      %6164 = vmatprep.mubr.bf16.mxu0 0
      %6165 = vmatmul.mubr.bf16.gmra.mxu0 %v6130
      %v6166 = vpop.f32.mrf.mxu0
      %v6167 = vadd.f32 0.0, %v6166
      %v6168 = vpop.f32.mrf.mxu0
      %v6169 = vpop.f32.mrf.mxu0
      %v6170 = vpop.f32.mrf.mxu0
      %6171 = vdwg.mxu0
      %v6172 = vpack.c.bf16 %v6167, %v6167
      %v6173 = vld [vmem:[%s8] sm:$0xf]
      %v6174 = vld [vmem:[%s8 + $0x4] sm:$0xf]
      %v6175 = vld [vmem:[%s8 + $0x8] sm:$0xf]
      %v6176 = vld [vmem:[%s8 + $0xc] sm:$0xf]
      %v6177 = vld [vmem:[%s8 + $0x10] sm:$0xf]
      %v6178 = vld [vmem:[%s8 + $0x14] sm:$0xf]
      %v6179 = vld [vmem:[%s8 + $0x18] sm:$0xf]
      %v6180 = vld [vmem:[%s8 + $0x1c] sm:$0xf]
      %s6181 = scalar_lea.vmem %s12, 2
      %v6182 = vld [vmem:[%s6181] sm:$0x3]
      %v6184 = vsel %vm6128, %v6182, 0
      %6186 = vmatprep.subr.bf16.mxu0 0
      %6187 = vmatpush1.bf16.msra.mxu0 0
      %6188 = vmatprep.subr.bf16.mxu0 0
      %6189 = vmatpush1.bf16.msra.mxu0 0
      %6190 = vmatprep.subr.bf16.mxu0 0
      %6191 = vmatpush1.bf16.msra.mxu0 0
      %6192 = vmatprep.subr.bf16.mxu0 0
      %6193 = vmatpush1.bf16.msra.mxu0 0
      %6194 = vmatprep.subr.bf16.mxu0 0
      %6195 = vmatpush1.bf16.msra.mxu0 0
      %6196 = vmatprep.subr.bf16.mxu0 0
      %6197 = vmatpush1.bf16.msra.mxu0 0
      %6198 = vmatprep.subr.bf16.mxu0 0
      %6199 = vmatpush1.bf16.msra.mxu0 0
      %6200 = vmatprep.subr.bf16.mxu0 0
      %6201 = vmatpush1.bf16.msra.mxu0 %v6126
      %6202 = vmatprep.subr.bf16.mxu0 0
      %6203 = vmatpush2.bf16.msra.mxu0 0
      %6204 = vmatprep.subr.bf16.mxu0 0
      %6205 = vmatpush2.bf16.msra.mxu0 0
      %6206 = vmatprep.subr.bf16.mxu0 0
      %6207 = vmatpush2.bf16.msra.mxu0 0
      %6208 = vmatprep.subr.bf16.mxu0 0
      %6209 = vmatpush2.bf16.msra.mxu0 0
      %6210 = vmatprep.subr.bf16.mxu0 0
      %6211 = vmatpush2.bf16.msra.mxu0 0
      %6212 = vmatprep.subr.bf16.mxu0 0
      %6213 = vmatpush2.bf16.msra.mxu0 0
      %6214 = vmatprep.subr.bf16.mxu0 0
      %6215 = vmatpush2.bf16.msra.mxu0 0
      %6216 = vmatprep.subr.bf16.mxu0 0
      %6217 = vmatpush2.bf16.msra.mxu0 0
      %6218 = vmatprep.mubr.bf16.mxu0 0
      %6219 = vmatmul.mubr.bf16.gmra.mxu0 %v6184
      %v6220 = vpop.f32.mrf.mxu0
      %v6221 = vadd.f32 0.0, %v6220
      %v6222 = vpop.f32.mrf.mxu0
      %v6223 = vpop.f32.mrf.mxu0
      %v6224 = vpop.f32.mrf.mxu0
      %6225 = vdwg.mxu0
      %v6226 = vpack.c.bf16 %v6221, %v6221
      %v6227 = vld [vmem:[%s8 + $0x20] sm:$0xf]
      %v6228 = vld [vmem:[%s8 + $0x24] sm:$0xf]
      %v6229 = vld [vmem:[%s8 + $0x28] sm:$0xf]
      %v6230 = vld [vmem:[%s8 + $0x2c] sm:$0xf]
      %v6231 = vld [vmem:[%s8 + $0x30] sm:$0xf]
      %v6232 = vld [vmem:[%s8 + $0x34] sm:$0xf]
      %v6233 = vld [vmem:[%s8 + $0x38] sm:$0xf]
      %v6234 = vld [vmem:[%s8 + $0x3c] sm:$0xf]
      %v6243 = vunpack.c.l.b16 %v6227
      %v6244 = vunpack.c.l.b16 %v6228
      %v6245 = vunpack.c.l.b16 %v6229
      %v6246 = vunpack.c.l.b16 %v6230
      %v6247 = vunpack.c.l.b16 %v6231
      %v6248 = vunpack.c.l.b16 %v6232
      %v6249 = vunpack.c.l.b16 %v6233
      %v6250 = vunpack.c.l.b16 %v6234
      %v6251 = vpack.c.b16 %v6244, %v6243
      %v6252 = vpack.c.b16 %v6246, %v6245
      %v6253 = vpack.c.b16 %v6248, %v6247
      %v6254 = vpack.c.b16 %v6250, %v6249
      %v6260 = vsel %vm2570, %v6226, 0
      %6262 = vmatprep.subr.bf16.mxu0 0
      %6263 = vmatpush1.bf16.msra.mxu0 0
      %6264 = vmatprep.subr.bf16.mxu0 0
      %6265 = vmatpush1.bf16.msra.mxu0 0
      %6266 = vmatprep.subr.bf16.mxu0 0
      %6267 = vmatpush1.bf16.msra.mxu0 0
      %6268 = vmatprep.subr.bf16.mxu0 0
      %6269 = vmatpush1.bf16.msra.mxu0 0
      %6270 = vmatprep.subr.bf16.mxu0 0
      %6271 = vmatpush1.bf16.msra.mxu0 %v6254
      %6272 = vmatprep.subr.bf16.mxu0 0
      %6273 = vmatpush1.bf16.msra.mxu0 %v6253
      %6274 = vmatprep.subr.bf16.mxu0 0
      %6275 = vmatpush1.bf16.msra.mxu0 %v6252
      %6276 = vmatprep.subr.bf16.mxu0 0
      %6277 = vmatpush1.bf16.msra.mxu0 %v6251
      %6278 = vmatprep.subr.bf16.mxu0 0
      %6279 = vmatpush2.bf16.msra.mxu0 0
      %6280 = vmatprep.subr.bf16.mxu0 0
      %6281 = vmatpush2.bf16.msra.mxu0 0
      %6282 = vmatprep.subr.bf16.mxu0 0
      %6283 = vmatpush2.bf16.msra.mxu0 0
      %6284 = vmatprep.subr.bf16.mxu0 0
      %6285 = vmatpush2.bf16.msra.mxu0 0
      %6286 = vmatprep.subr.bf16.mxu0 0
      %6287 = vmatpush2.bf16.msra.mxu0 0
      %6288 = vmatprep.subr.bf16.mxu0 0
      %6289 = vmatpush2.bf16.msra.mxu0 0
      %6290 = vmatprep.subr.bf16.mxu0 0
      %6291 = vmatpush2.bf16.msra.mxu0 0
      %6292 = vmatprep.subr.bf16.mxu0 0
      %6293 = vmatpush2.bf16.msra.mxu0 0
      %6294 = vmatprep.mubr.bf16.mxu0 0
      %6295 = vmatmul.mubr.bf16.gmra.mxu0 %v6260
      %v6296 = vpop.f32.mrf.mxu0
      %v6297 = vadd.f32 0.0, %v6296
      %v6298 = vpop.f32.mrf.mxu0
      %v6299 = vpop.f32.mrf.mxu0
      %v6300 = vpop.f32.mrf.mxu0
      %6301 = vdwg.mxu0
      %v6310 = vunpack.c.l.b16 %v6173
      %v6311 = vunpack.c.l.b16 %v6174
      %v6312 = vunpack.c.l.b16 %v6175
      %v6313 = vunpack.c.l.b16 %v6176
      %v6314 = vunpack.c.l.b16 %v6177
      %v6315 = vunpack.c.l.b16 %v6178
      %v6316 = vunpack.c.l.b16 %v6179
      %v6317 = vunpack.c.l.b16 %v6180
      %v6318 = vpack.c.b16 %v6311, %v6310
      %v6319 = vpack.c.b16 %v6313, %v6312
      %v6320 = vpack.c.b16 %v6315, %v6314
      %v6321 = vpack.c.b16 %v6317, %v6316
      %v6327 = vsel %vm2570, %v6172, 0
      %6329 = vmatprep.subr.bf16.mxu0 0
      %6330 = vmatpush1.bf16.msra.mxu0 0
      %6331 = vmatprep.subr.bf16.mxu0 0
      %6332 = vmatpush1.bf16.msra.mxu0 0
      %6333 = vmatprep.subr.bf16.mxu0 0
      %6334 = vmatpush1.bf16.msra.mxu0 0
      %6335 = vmatprep.subr.bf16.mxu0 0
      %6336 = vmatpush1.bf16.msra.mxu0 0
      %6337 = vmatprep.subr.bf16.mxu0 0
      %6338 = vmatpush1.bf16.msra.mxu0 %v6321
      %6339 = vmatprep.subr.bf16.mxu0 0
      %6340 = vmatpush1.bf16.msra.mxu0 %v6320
      %6341 = vmatprep.subr.bf16.mxu0 0
      %6342 = vmatpush1.bf16.msra.mxu0 %v6319
      %6343 = vmatprep.subr.bf16.mxu0 0
      %6344 = vmatpush1.bf16.msra.mxu0 %v6318
      %6345 = vmatprep.subr.bf16.mxu0 0
      %6346 = vmatpush2.bf16.msra.mxu0 0
      %6347 = vmatprep.subr.bf16.mxu0 0
      %6348 = vmatpush2.bf16.msra.mxu0 0
      %6349 = vmatprep.subr.bf16.mxu0 0
      %6350 = vmatpush2.bf16.msra.mxu0 0
      %6351 = vmatprep.subr.bf16.mxu0 0
      %6352 = vmatpush2.bf16.msra.mxu0 0
      %6353 = vmatprep.subr.bf16.mxu0 0
      %6354 = vmatpush2.bf16.msra.mxu0 0
      %6355 = vmatprep.subr.bf16.mxu0 0
      %6356 = vmatpush2.bf16.msra.mxu0 0
      %6357 = vmatprep.subr.bf16.mxu0 0
      %6358 = vmatpush2.bf16.msra.mxu0 0
      %6359 = vmatprep.subr.bf16.mxu0 0
      %6360 = vmatpush2.bf16.msra.mxu0 0
      %6361 = vmatprep.mubr.bf16.mxu0 0
      %6362 = vmatmul.mubr.bf16.gmra.mxu0 %v6327
      %v6363 = vpop.f32.mrf.mxu0
      %v6364 = vadd.f32 %v6297, %v6363
      %v6365 = vpop.f32.mrf.mxu0
      %v6366 = vpop.f32.mrf.mxu0
      %v6367 = vpop.f32.mrf.mxu0
      %6368 = vdwg.mxu0
      %s6369 = scalar_lea.vmem %s12, 4
      %v6370 = vld [vmem:[%s6369] sm:$0x3]
      %v6372 = vsel %vm6128, %v6370, 0
      %6374 = vmatprep.subr.bf16.mxu0 0
      %6375 = vmatpush1.bf16.msra.mxu0 0
      %6376 = vmatprep.subr.bf16.mxu0 0
      %6377 = vmatpush1.bf16.msra.mxu0 0
      %6378 = vmatprep.subr.bf16.mxu0 0
      %6379 = vmatpush1.bf16.msra.mxu0 0
      %6380 = vmatprep.subr.bf16.mxu0 0
      %6381 = vmatpush1.bf16.msra.mxu0 0
      %6382 = vmatprep.subr.bf16.mxu0 0
      %6383 = vmatpush1.bf16.msra.mxu0 0
      %6384 = vmatprep.subr.bf16.mxu0 0
      %6385 = vmatpush1.bf16.msra.mxu0 0
      %6386 = vmatprep.subr.bf16.mxu0 0
      %6387 = vmatpush1.bf16.msra.mxu0 0
      %6388 = vmatprep.subr.bf16.mxu0 0
      %6389 = vmatpush1.bf16.msra.mxu0 %v6126
      %6390 = vmatprep.subr.bf16.mxu0 0
      %6391 = vmatpush2.bf16.msra.mxu0 0
      %6392 = vmatprep.subr.bf16.mxu0 0
      %6393 = vmatpush2.bf16.msra.mxu0 0
      %6394 = vmatprep.subr.bf16.mxu0 0
      %6395 = vmatpush2.bf16.msra.mxu0 0
      %6396 = vmatprep.subr.bf16.mxu0 0
      %6397 = vmatpush2.bf16.msra.mxu0 0
      %6398 = vmatprep.subr.bf16.mxu0 0
      %6399 = vmatpush2.bf16.msra.mxu0 0
      %6400 = vmatprep.subr.bf16.mxu0 0
      %6401 = vmatpush2.bf16.msra.mxu0 0
      %6402 = vmatprep.subr.bf16.mxu0 0
      %6403 = vmatpush2.bf16.msra.mxu0 0
      %6404 = vmatprep.subr.bf16.mxu0 0
      %6405 = vmatpush2.bf16.msra.mxu0 0
      %6406 = vmatprep.mubr.bf16.mxu0 0
      %6407 = vmatmul.mubr.bf16.gmra.mxu0 %v6372
      %v6408 = vpop.f32.mrf.mxu0
      %v6409 = vadd.f32 0.0, %v6408
      %v6410 = vpop.f32.mrf.mxu0
      %v6411 = vpop.f32.mrf.mxu0
      %v6412 = vpop.f32.mrf.mxu0
      %6413 = vdwg.mxu0
      %v6414 = vpack.c.bf16 %v6409, %v6409
      %v6415 = vld [vmem:[%s8 + $0x40] sm:$0xf]
      %v6416 = vld [vmem:[%s8 + $0x44] sm:$0xf]
      %v6417 = vld [vmem:[%s8 + $0x48] sm:$0xf]
      %v6418 = vld [vmem:[%s8 + $0x4c] sm:$0xf]
      %v6419 = vld [vmem:[%s8 + $0x50] sm:$0xf]
      %v6420 = vld [vmem:[%s8 + $0x54] sm:$0xf]
      %v6421 = vld [vmem:[%s8 + $0x58] sm:$0xf]
      %v6422 = vld [vmem:[%s8 + $0x5c] sm:$0xf]
      %v6431 = vunpack.c.l.b16 %v6415
      %v6432 = vunpack.c.l.b16 %v6416
      %v6433 = vunpack.c.l.b16 %v6417
      %v6434 = vunpack.c.l.b16 %v6418
      %v6435 = vunpack.c.l.b16 %v6419
      %v6436 = vunpack.c.l.b16 %v6420
      %v6437 = vunpack.c.l.b16 %v6421
      %v6438 = vunpack.c.l.b16 %v6422
      %v6439 = vpack.c.b16 %v6432, %v6431
      %v6440 = vpack.c.b16 %v6434, %v6433
      %v6441 = vpack.c.b16 %v6436, %v6435
      %v6442 = vpack.c.b16 %v6438, %v6437
      %v6448 = vsel %vm2570, %v6414, 0
      %6450 = vmatprep.subr.bf16.mxu0 0
      %6451 = vmatpush1.bf16.msra.mxu0 0
      %6452 = vmatprep.subr.bf16.mxu0 0
      %6453 = vmatpush1.bf16.msra.mxu0 0
      %6454 = vmatprep.subr.bf16.mxu0 0
      %6455 = vmatpush1.bf16.msra.mxu0 0
      %6456 = vmatprep.subr.bf16.mxu0 0
      %6457 = vmatpush1.bf16.msra.mxu0 0
      %6458 = vmatprep.subr.bf16.mxu0 0
      %6459 = vmatpush1.bf16.msra.mxu0 %v6442
      %6460 = vmatprep.subr.bf16.mxu0 0
      %6461 = vmatpush1.bf16.msra.mxu0 %v6441
      %6462 = vmatprep.subr.bf16.mxu0 0
      %6463 = vmatpush1.bf16.msra.mxu0 %v6440
      %6464 = vmatprep.subr.bf16.mxu0 0
      %6465 = vmatpush1.bf16.msra.mxu0 %v6439
      %6466 = vmatprep.subr.bf16.mxu0 0
      %6467 = vmatpush2.bf16.msra.mxu0 0
      %6468 = vmatprep.subr.bf16.mxu0 0
      %6469 = vmatpush2.bf16.msra.mxu0 0
      %6470 = vmatprep.subr.bf16.mxu0 0
      %6471 = vmatpush2.bf16.msra.mxu0 0
      %6472 = vmatprep.subr.bf16.mxu0 0
      %6473 = vmatpush2.bf16.msra.mxu0 0
      %6474 = vmatprep.subr.bf16.mxu0 0
      %6475 = vmatpush2.bf16.msra.mxu0 0
      %6476 = vmatprep.subr.bf16.mxu0 0
      %6477 = vmatpush2.bf16.msra.mxu0 0
      %6478 = vmatprep.subr.bf16.mxu0 0
      %6479 = vmatpush2.bf16.msra.mxu0 0
      %6480 = vmatprep.subr.bf16.mxu0 0
      %6481 = vmatpush2.bf16.msra.mxu0 0
      %6482 = vmatprep.mubr.bf16.mxu0 0
      %6483 = vmatmul.mubr.bf16.gmra.mxu0 %v6448
      %v6484 = vpop.f32.mrf.mxu0
      %v6485 = vadd.f32 0.0, %v6484
      %v6486 = vpop.f32.mrf.mxu0
      %v6487 = vpop.f32.mrf.mxu0
      %v6488 = vpop.f32.mrf.mxu0
      %6489 = vdwg.mxu0
      %v6490 = vadd.f32 %v6364, %v6485
      %s6491 = scalar_lea.vmem %s12, 6
      %v6492 = vld [vmem:[%s6491] sm:$0x3]
      %v6494 = vsel %vm6128, %v6492, 0
      %6496 = vmatprep.subr.bf16.mxu0 0
      %6497 = vmatpush1.bf16.msra.mxu0 0
      %6498 = vmatprep.subr.bf16.mxu0 0
      %6499 = vmatpush1.bf16.msra.mxu0 0
      %6500 = vmatprep.subr.bf16.mxu0 0
      %6501 = vmatpush1.bf16.msra.mxu0 0
      %6502 = vmatprep.subr.bf16.mxu0 0
      %6503 = vmatpush1.bf16.msra.mxu0 0
      %6504 = vmatprep.subr.bf16.mxu0 0
      %6505 = vmatpush1.bf16.msra.mxu0 0
      %6506 = vmatprep.subr.bf16.mxu0 0
      %6507 = vmatpush1.bf16.msra.mxu0 0
      %6508 = vmatprep.subr.bf16.mxu0 0
      %6509 = vmatpush1.bf16.msra.mxu0 0
      %6510 = vmatprep.subr.bf16.mxu0 0
      %6511 = vmatpush1.bf16.msra.mxu0 %v6126
      %6512 = vmatprep.subr.bf16.mxu0 0
      %6513 = vmatpush2.bf16.msra.mxu0 0
      %6514 = vmatprep.subr.bf16.mxu0 0
      %6515 = vmatpush2.bf16.msra.mxu0 0
      %6516 = vmatprep.subr.bf16.mxu0 0
      %6517 = vmatpush2.bf16.msra.mxu0 0
      %6518 = vmatprep.subr.bf16.mxu0 0
      %6519 = vmatpush2.bf16.msra.mxu0 0
      %6520 = vmatprep.subr.bf16.mxu0 0
      %6521 = vmatpush2.bf16.msra.mxu0 0
      %6522 = vmatprep.subr.bf16.mxu0 0
      %6523 = vmatpush2.bf16.msra.mxu0 0
      %6524 = vmatprep.subr.bf16.mxu0 0
      %6525 = vmatpush2.bf16.msra.mxu0 0
      %6526 = vmatprep.subr.bf16.mxu0 0
      %6527 = vmatpush2.bf16.msra.mxu0 0
      %6528 = vmatprep.mubr.bf16.mxu0 0
      %6529 = vmatmul.mubr.bf16.gmra.mxu0 %v6494
      %v6530 = vpop.f32.mrf.mxu0
      %v6531 = vadd.f32 0.0, %v6530
      %v6532 = vpop.f32.mrf.mxu0
      %v6533 = vpop.f32.mrf.mxu0
      %v6534 = vpop.f32.mrf.mxu0
      %6535 = vdwg.mxu0
      %v6536 = vpack.c.bf16 %v6531, %v6531
      %v6537 = vld [vmem:[%s8 + $0x60] sm:$0xf]
      %v6538 = vld [vmem:[%s8 + $0x64] sm:$0xf]
      %v6539 = vld [vmem:[%s8 + $0x68] sm:$0xf]
      %v6540 = vld [vmem:[%s8 + $0x6c] sm:$0xf]
      %v6541 = vld [vmem:[%s8 + $0x70] sm:$0xf]
      %v6542 = vld [vmem:[%s8 + $0x74] sm:$0xf]
      %v6543 = vld [vmem:[%s8 + $0x78] sm:$0xf]
      %v6544 = vld [vmem:[%s8 + $0x7c] sm:$0xf]
      %v6553 = vunpack.c.l.b16 %v6537
      %v6554 = vunpack.c.l.b16 %v6538
      %v6555 = vunpack.c.l.b16 %v6539
      %v6556 = vunpack.c.l.b16 %v6540
      %v6557 = vunpack.c.l.b16 %v6541
      %v6558 = vunpack.c.l.b16 %v6542
      %v6559 = vunpack.c.l.b16 %v6543
      %v6560 = vunpack.c.l.b16 %v6544
      %v6561 = vpack.c.b16 %v6554, %v6553
      %v6562 = vpack.c.b16 %v6556, %v6555
      %v6563 = vpack.c.b16 %v6558, %v6557
      %v6564 = vpack.c.b16 %v6560, %v6559
      %v6570 = vsel %vm2570, %v6536, 0
      %6572 = vmatprep.subr.bf16.mxu0 0
      %6573 = vmatpush1.bf16.msra.mxu0 0
      %6574 = vmatprep.subr.bf16.mxu0 0
      %6575 = vmatpush1.bf16.msra.mxu0 0
      %6576 = vmatprep.subr.bf16.mxu0 0
      %6577 = vmatpush1.bf16.msra.mxu0 0
      %6578 = vmatprep.subr.bf16.mxu0 0
      %6579 = vmatpush1.bf16.msra.mxu0 0
      %6580 = vmatprep.subr.bf16.mxu0 0
      %6581 = vmatpush1.bf16.msra.mxu0 %v6564
      %6582 = vmatprep.subr.bf16.mxu0 0
      %6583 = vmatpush1.bf16.msra.mxu0 %v6563
      %6584 = vmatprep.subr.bf16.mxu0 0
      %6585 = vmatpush1.bf16.msra.mxu0 %v6562
      %6586 = vmatprep.subr.bf16.mxu0 0
      %6587 = vmatpush1.bf16.msra.mxu0 %v6561
      %6588 = vmatprep.subr.bf16.mxu0 0
      %6589 = vmatpush2.bf16.msra.mxu0 0
      %6590 = vmatprep.subr.bf16.mxu0 0
      %6591 = vmatpush2.bf16.msra.mxu0 0
      %6592 = vmatprep.subr.bf16.mxu0 0
      %6593 = vmatpush2.bf16.msra.mxu0 0
      %6594 = vmatprep.subr.bf16.mxu0 0
      %6595 = vmatpush2.bf16.msra.mxu0 0
      %6596 = vmatprep.subr.bf16.mxu0 0
      %6597 = vmatpush2.bf16.msra.mxu0 0
      %6598 = vmatprep.subr.bf16.mxu0 0
      %6599 = vmatpush2.bf16.msra.mxu0 0
      %6600 = vmatprep.subr.bf16.mxu0 0
      %6601 = vmatpush2.bf16.msra.mxu0 0
      %6602 = vmatprep.subr.bf16.mxu0 0
      %6603 = vmatpush2.bf16.msra.mxu0 0
      %6604 = vmatprep.mubr.bf16.mxu0 0
      %6605 = vmatmul.mubr.bf16.gmra.mxu0 %v6570
      %v6606 = vpop.f32.mrf.mxu0
      %v6607 = vadd.f32 0.0, %v6606
      %v6608 = vpop.f32.mrf.mxu0
      %v6609 = vpop.f32.mrf.mxu0
      %v6610 = vpop.f32.mrf.mxu0
      %6611 = vdwg.mxu0
      %v6612 = vadd.f32 %v6490, %v6607
      %s6613 = scalar_lea.vmem %s12, 8
      %v6614 = vld [vmem:[%s6613] sm:$0x3]
      %v6616 = vsel %vm6128, %v6614, 0
      %6618 = vmatprep.subr.bf16.mxu0 0
      %6619 = vmatpush1.bf16.msra.mxu0 0
      %6620 = vmatprep.subr.bf16.mxu0 0
      %6621 = vmatpush1.bf16.msra.mxu0 0
      %6622 = vmatprep.subr.bf16.mxu0 0
      %6623 = vmatpush1.bf16.msra.mxu0 0
      %6624 = vmatprep.subr.bf16.mxu0 0
      %6625 = vmatpush1.bf16.msra.mxu0 0
      %6626 = vmatprep.subr.bf16.mxu0 0
      %6627 = vmatpush1.bf16.msra.mxu0 0
      %6628 = vmatprep.subr.bf16.mxu0 0
      %6629 = vmatpush1.bf16.msra.mxu0 0
      %6630 = vmatprep.subr.bf16.mxu0 0
      %6631 = vmatpush1.bf16.msra.mxu0 0
      %6632 = vmatprep.subr.bf16.mxu0 0
      %6633 = vmatpush1.bf16.msra.mxu0 %v6126
      %6634 = vmatprep.subr.bf16.mxu0 0
      %6635 = vmatpush2.bf16.msra.mxu0 0
      %6636 = vmatprep.subr.bf16.mxu0 0
      %6637 = vmatpush2.bf16.msra.mxu0 0
      %6638 = vmatprep.subr.bf16.mxu0 0
      %6639 = vmatpush2.bf16.msra.mxu0 0
      %6640 = vmatprep.subr.bf16.mxu0 0
      %6641 = vmatpush2.bf16.msra.mxu0 0
      %6642 = vmatprep.subr.bf16.mxu0 0
      %6643 = vmatpush2.bf16.msra.mxu0 0
      %6644 = vmatprep.subr.bf16.mxu0 0
      %6645 = vmatpush2.bf16.msra.mxu0 0
      %6646 = vmatprep.subr.bf16.mxu0 0
      %6647 = vmatpush2.bf16.msra.mxu0 0
      %6648 = vmatprep.subr.bf16.mxu0 0
      %6649 = vmatpush2.bf16.msra.mxu0 0
      %6650 = vmatprep.mubr.bf16.mxu0 0
      %6651 = vmatmul.mubr.bf16.gmra.mxu0 %v6616
      %v6652 = vpop.f32.mrf.mxu0
      %v6653 = vadd.f32 0.0, %v6652
      %v6654 = vpop.f32.mrf.mxu0
      %v6655 = vpop.f32.mrf.mxu0
      %v6656 = vpop.f32.mrf.mxu0
      %6657 = vdwg.mxu0
      %v6658 = vpack.c.bf16 %v6653, %v6653
      %v6659 = vld [vmem:[%s8 + $0x80] sm:$0xf]
      %v6660 = vld [vmem:[%s8 + $0x84] sm:$0xf]
      %v6661 = vld [vmem:[%s8 + $0x88] sm:$0xf]
      %v6662 = vld [vmem:[%s8 + $0x8c] sm:$0xf]
      %v6663 = vld [vmem:[%s8 + $0x90] sm:$0xf]
      %v6664 = vld [vmem:[%s8 + $0x94] sm:$0xf]
      %v6665 = vld [vmem:[%s8 + $0x98] sm:$0xf]
      %v6666 = vld [vmem:[%s8 + $0x9c] sm:$0xf]
      %v6675 = vunpack.c.l.b16 %v6659
      %v6676 = vunpack.c.l.b16 %v6660
      %v6677 = vunpack.c.l.b16 %v6661
      %v6678 = vunpack.c.l.b16 %v6662
      %v6679 = vunpack.c.l.b16 %v6663
      %v6680 = vunpack.c.l.b16 %v6664
      %v6681 = vunpack.c.l.b16 %v6665
      %v6682 = vunpack.c.l.b16 %v6666
      %v6683 = vpack.c.b16 %v6676, %v6675
      %v6684 = vpack.c.b16 %v6678, %v6677
      %v6685 = vpack.c.b16 %v6680, %v6679
      %v6686 = vpack.c.b16 %v6682, %v6681
      %v6692 = vsel %vm2570, %v6658, 0
      %6694 = vmatprep.subr.bf16.mxu0 0
      %6695 = vmatpush1.bf16.msra.mxu0 0
      %6696 = vmatprep.subr.bf16.mxu0 0
      %6697 = vmatpush1.bf16.msra.mxu0 0
      %6698 = vmatprep.subr.bf16.mxu0 0
      %6699 = vmatpush1.bf16.msra.mxu0 0
      %6700 = vmatprep.subr.bf16.mxu0 0
      %6701 = vmatpush1.bf16.msra.mxu0 0
      %6702 = vmatprep.subr.bf16.mxu0 0
      %6703 = vmatpush1.bf16.msra.mxu0 %v6686
      %6704 = vmatprep.subr.bf16.mxu0 0
      %6705 = vmatpush1.bf16.msra.mxu0 %v6685
      %6706 = vmatprep.subr.bf16.mxu0 0
      %6707 = vmatpush1.bf16.msra.mxu0 %v6684
      %6708 = vmatprep.subr.bf16.mxu0 0
      %6709 = vmatpush1.bf16.msra.mxu0 %v6683
      %6710 = vmatprep.subr.bf16.mxu0 0
      %6711 = vmatpush2.bf16.msra.mxu0 0
      %6712 = vmatprep.subr.bf16.mxu0 0
      %6713 = vmatpush2.bf16.msra.mxu0 0
      %6714 = vmatprep.subr.bf16.mxu0 0
      %6715 = vmatpush2.bf16.msra.mxu0 0
      %6716 = vmatprep.subr.bf16.mxu0 0
      %6717 = vmatpush2.bf16.msra.mxu0 0
      %6718 = vmatprep.subr.bf16.mxu0 0
      %6719 = vmatpush2.bf16.msra.mxu0 0
      %6720 = vmatprep.subr.bf16.mxu0 0
      %6721 = vmatpush2.bf16.msra.mxu0 0
      %6722 = vmatprep.subr.bf16.mxu0 0
      %6723 = vmatpush2.bf16.msra.mxu0 0
      %6724 = vmatprep.subr.bf16.mxu0 0
      %6725 = vmatpush2.bf16.msra.mxu0 0
      %6726 = vmatprep.mubr.bf16.mxu0 0
      %6727 = vmatmul.mubr.bf16.gmra.mxu0 %v6692
      %v6728 = vpop.f32.mrf.mxu0
      %v6729 = vadd.f32 0.0, %v6728
      %v6730 = vpop.f32.mrf.mxu0
      %v6731 = vpop.f32.mrf.mxu0
      %v6732 = vpop.f32.mrf.mxu0
      %6733 = vdwg.mxu0
      %v6734 = vadd.f32 %v6612, %v6729
      %s6735 = scalar_lea.vmem %s12, 10
      %v6736 = vld [vmem:[%s6735] sm:$0x3]
      %v6738 = vsel %vm6128, %v6736, 0
      %6740 = vmatprep.subr.bf16.mxu0 0
      %6741 = vmatpush1.bf16.msra.mxu0 0
      %6742 = vmatprep.subr.bf16.mxu0 0
      %6743 = vmatpush1.bf16.msra.mxu0 0
      %6744 = vmatprep.subr.bf16.mxu0 0
      %6745 = vmatpush1.bf16.msra.mxu0 0
      %6746 = vmatprep.subr.bf16.mxu0 0
      %6747 = vmatpush1.bf16.msra.mxu0 0
      %6748 = vmatprep.subr.bf16.mxu0 0
      %6749 = vmatpush1.bf16.msra.mxu0 0
      %6750 = vmatprep.subr.bf16.mxu0 0
      %6751 = vmatpush1.bf16.msra.mxu0 0
      %6752 = vmatprep.subr.bf16.mxu0 0
      %6753 = vmatpush1.bf16.msra.mxu0 0
      %6754 = vmatprep.subr.bf16.mxu0 0
      %6755 = vmatpush1.bf16.msra.mxu0 %v6126
      %6756 = vmatprep.subr.bf16.mxu0 0
      %6757 = vmatpush2.bf16.msra.mxu0 0
      %6758 = vmatprep.subr.bf16.mxu0 0
      %6759 = vmatpush2.bf16.msra.mxu0 0
      %6760 = vmatprep.subr.bf16.mxu0 0
      %6761 = vmatpush2.bf16.msra.mxu0 0
      %6762 = vmatprep.subr.bf16.mxu0 0
      %6763 = vmatpush2.bf16.msra.mxu0 0
      %6764 = vmatprep.subr.bf16.mxu0 0
      %6765 = vmatpush2.bf16.msra.mxu0 0
      %6766 = vmatprep.subr.bf16.mxu0 0
      %6767 = vmatpush2.bf16.msra.mxu0 0
      %6768 = vmatprep.subr.bf16.mxu0 0
      %6769 = vmatpush2.bf16.msra.mxu0 0
      %6770 = vmatprep.subr.bf16.mxu0 0
      %6771 = vmatpush2.bf16.msra.mxu0 0
      %6772 = vmatprep.mubr.bf16.mxu0 0
      %6773 = vmatmul.mubr.bf16.gmra.mxu0 %v6738
      %v6774 = vpop.f32.mrf.mxu0
      %v6775 = vadd.f32 0.0, %v6774
      %v6776 = vpop.f32.mrf.mxu0
      %v6777 = vpop.f32.mrf.mxu0
      %v6778 = vpop.f32.mrf.mxu0
      %6779 = vdwg.mxu0
      %v6780 = vpack.c.bf16 %v6775, %v6775
      %v6781 = vld [vmem:[%s8 + $0xa0] sm:$0xf]
      %v6782 = vld [vmem:[%s8 + $0xa4] sm:$0xf]
      %v6783 = vld [vmem:[%s8 + $0xa8] sm:$0xf]
      %v6784 = vld [vmem:[%s8 + $0xac] sm:$0xf]
      %v6785 = vld [vmem:[%s8 + $0xb0] sm:$0xf]
      %v6786 = vld [vmem:[%s8 + $0xb4] sm:$0xf]
      %v6787 = vld [vmem:[%s8 + $0xb8] sm:$0xf]
      %v6788 = vld [vmem:[%s8 + $0xbc] sm:$0xf]
      %v6797 = vunpack.c.l.b16 %v6781
      %v6798 = vunpack.c.l.b16 %v6782
      %v6799 = vunpack.c.l.b16 %v6783
      %v6800 = vunpack.c.l.b16 %v6784
      %v6801 = vunpack.c.l.b16 %v6785
      %v6802 = vunpack.c.l.b16 %v6786
      %v6803 = vunpack.c.l.b16 %v6787
      %v6804 = vunpack.c.l.b16 %v6788
      %v6805 = vpack.c.b16 %v6798, %v6797
      %v6806 = vpack.c.b16 %v6800, %v6799
      %v6807 = vpack.c.b16 %v6802, %v6801
      %v6808 = vpack.c.b16 %v6804, %v6803
      %v6814 = vsel %vm2570, %v6780, 0
      %6816 = vmatprep.subr.bf16.mxu0 0
      %6817 = vmatpush1.bf16.msra.mxu0 0
      %6818 = vmatprep.subr.bf16.mxu0 0
      %6819 = vmatpush1.bf16.msra.mxu0 0
      %6820 = vmatprep.subr.bf16.mxu0 0
      %6821 = vmatpush1.bf16.msra.mxu0 0
      %6822 = vmatprep.subr.bf16.mxu0 0
      %6823 = vmatpush1.bf16.msra.mxu0 0
      %6824 = vmatprep.subr.bf16.mxu0 0
      %6825 = vmatpush1.bf16.msra.mxu0 %v6808
      %6826 = vmatprep.subr.bf16.mxu0 0
      %6827 = vmatpush1.bf16.msra.mxu0 %v6807
      %6828 = vmatprep.subr.bf16.mxu0 0
      %6829 = vmatpush1.bf16.msra.mxu0 %v6806
      %6830 = vmatprep.subr.bf16.mxu0 0
      %6831 = vmatpush1.bf16.msra.mxu0 %v6805
      %6832 = vmatprep.subr.bf16.mxu0 0
      %6833 = vmatpush2.bf16.msra.mxu0 0
      %6834 = vmatprep.subr.bf16.mxu0 0
      %6835 = vmatpush2.bf16.msra.mxu0 0
      %6836 = vmatprep.subr.bf16.mxu0 0
      %6837 = vmatpush2.bf16.msra.mxu0 0
      %6838 = vmatprep.subr.bf16.mxu0 0
      %6839 = vmatpush2.bf16.msra.mxu0 0
      %6840 = vmatprep.subr.bf16.mxu0 0
      %6841 = vmatpush2.bf16.msra.mxu0 0
      %6842 = vmatprep.subr.bf16.mxu0 0
      %6843 = vmatpush2.bf16.msra.mxu0 0
      %6844 = vmatprep.subr.bf16.mxu0 0
      %6845 = vmatpush2.bf16.msra.mxu0 0
      %6846 = vmatprep.subr.bf16.mxu0 0
      %6847 = vmatpush2.bf16.msra.mxu0 0
      %6848 = vmatprep.mubr.bf16.mxu0 0
      %6849 = vmatmul.mubr.bf16.gmra.mxu0 %v6814
      %v6850 = vpop.f32.mrf.mxu0
      %v6851 = vadd.f32 0.0, %v6850
      %v6852 = vpop.f32.mrf.mxu0
      %v6853 = vpop.f32.mrf.mxu0
      %v6854 = vpop.f32.mrf.mxu0
      %6855 = vdwg.mxu0
      %v6856 = vadd.f32 %v6734, %v6851
      %s6857 = scalar_lea.vmem %s12, 12
      %v6858 = vld [vmem:[%s6857] sm:$0x3]
      %v6860 = vsel %vm6128, %v6858, 0
      %6862 = vmatprep.subr.bf16.mxu0 0
      %6863 = vmatpush1.bf16.msra.mxu0 0
      %6864 = vmatprep.subr.bf16.mxu0 0
      %6865 = vmatpush1.bf16.msra.mxu0 0
      %6866 = vmatprep.subr.bf16.mxu0 0
      %6867 = vmatpush1.bf16.msra.mxu0 0
      %6868 = vmatprep.subr.bf16.mxu0 0
      %6869 = vmatpush1.bf16.msra.mxu0 0
      %6870 = vmatprep.subr.bf16.mxu0 0
      %6871 = vmatpush1.bf16.msra.mxu0 0
      %6872 = vmatprep.subr.bf16.mxu0 0
      %6873 = vmatpush1.bf16.msra.mxu0 0
      %6874 = vmatprep.subr.bf16.mxu0 0
      %6875 = vmatpush1.bf16.msra.mxu0 0
      %6876 = vmatprep.subr.bf16.mxu0 0
      %6877 = vmatpush1.bf16.msra.mxu0 %v6126
      %6878 = vmatprep.subr.bf16.mxu0 0
      %6879 = vmatpush2.bf16.msra.mxu0 0
      %6880 = vmatprep.subr.bf16.mxu0 0
      %6881 = vmatpush2.bf16.msra.mxu0 0
      %6882 = vmatprep.subr.bf16.mxu0 0
      %6883 = vmatpush2.bf16.msra.mxu0 0
      %6884 = vmatprep.subr.bf16.mxu0 0
      %6885 = vmatpush2.bf16.msra.mxu0 0
      %6886 = vmatprep.subr.bf16.mxu0 0
      %6887 = vmatpush2.bf16.msra.mxu0 0
      %6888 = vmatprep.subr.bf16.mxu0 0
      %6889 = vmatpush2.bf16.msra.mxu0 0
      %6890 = vmatprep.subr.bf16.mxu0 0
      %6891 = vmatpush2.bf16.msra.mxu0 0
      %6892 = vmatprep.subr.bf16.mxu0 0
      %6893 = vmatpush2.bf16.msra.mxu0 0
      %6894 = vmatprep.mubr.bf16.mxu0 0
      %6895 = vmatmul.mubr.bf16.gmra.mxu0 %v6860
      %v6896 = vpop.f32.mrf.mxu0
      %v6897 = vadd.f32 0.0, %v6896
      %v6898 = vpop.f32.mrf.mxu0
      %v6899 = vpop.f32.mrf.mxu0
      %v6900 = vpop.f32.mrf.mxu0
      %6901 = vdwg.mxu0
      %v6902 = vpack.c.bf16 %v6897, %v6897
      %v6903 = vld [vmem:[%s8 + $0xc0] sm:$0xf]
      %v6904 = vld [vmem:[%s8 + $0xc4] sm:$0xf]
      %v6905 = vld [vmem:[%s8 + $0xc8] sm:$0xf]
      %v6906 = vld [vmem:[%s8 + $0xcc] sm:$0xf]
      %v6907 = vld [vmem:[%s8 + $0xd0] sm:$0xf]
      %v6908 = vld [vmem:[%s8 + $0xd4] sm:$0xf]
      %v6909 = vld [vmem:[%s8 + $0xd8] sm:$0xf]
      %v6910 = vld [vmem:[%s8 + $0xdc] sm:$0xf]
      %v6919 = vunpack.c.l.b16 %v6903
      %v6920 = vunpack.c.l.b16 %v6904
      %v6921 = vunpack.c.l.b16 %v6905
      %v6922 = vunpack.c.l.b16 %v6906
      %v6923 = vunpack.c.l.b16 %v6907
      %v6924 = vunpack.c.l.b16 %v6908
      %v6925 = vunpack.c.l.b16 %v6909
      %v6926 = vunpack.c.l.b16 %v6910
      %v6927 = vpack.c.b16 %v6920, %v6919
      %v6928 = vpack.c.b16 %v6922, %v6921
      %v6929 = vpack.c.b16 %v6924, %v6923
      %v6930 = vpack.c.b16 %v6926, %v6925
      %v6936 = vsel %vm2570, %v6902, 0
      %6938 = vmatprep.subr.bf16.mxu0 0
      %6939 = vmatpush1.bf16.msra.mxu0 0
      %6940 = vmatprep.subr.bf16.mxu0 0
      %6941 = vmatpush1.bf16.msra.mxu0 0
      %6942 = vmatprep.subr.bf16.mxu0 0
      %6943 = vmatpush1.bf16.msra.mxu0 0
      %6944 = vmatprep.subr.bf16.mxu0 0
      %6945 = vmatpush1.bf16.msra.mxu0 0
      %6946 = vmatprep.subr.bf16.mxu0 0
      %6947 = vmatpush1.bf16.msra.mxu0 %v6930
      %6948 = vmatprep.subr.bf16.mxu0 0
      %6949 = vmatpush1.bf16.msra.mxu0 %v6929
      %6950 = vmatprep.subr.bf16.mxu0 0
      %6951 = vmatpush1.bf16.msra.mxu0 %v6928
      %6952 = vmatprep.subr.bf16.mxu0 0
      %6953 = vmatpush1.bf16.msra.mxu0 %v6927
      %6954 = vmatprep.subr.bf16.mxu0 0
      %6955 = vmatpush2.bf16.msra.mxu0 0
      %6956 = vmatprep.subr.bf16.mxu0 0
      %6957 = vmatpush2.bf16.msra.mxu0 0
      %6958 = vmatprep.subr.bf16.mxu0 0
      %6959 = vmatpush2.bf16.msra.mxu0 0
      %6960 = vmatprep.subr.bf16.mxu0 0
      %6961 = vmatpush2.bf16.msra.mxu0 0
      %6962 = vmatprep.subr.bf16.mxu0 0
      %6963 = vmatpush2.bf16.msra.mxu0 0
      %6964 = vmatprep.subr.bf16.mxu0 0
      %6965 = vmatpush2.bf16.msra.mxu0 0
      %6966 = vmatprep.subr.bf16.mxu0 0
      %6967 = vmatpush2.bf16.msra.mxu0 0
      %6968 = vmatprep.subr.bf16.mxu0 0
      %6969 = vmatpush2.bf16.msra.mxu0 0
      %6970 = vmatprep.mubr.bf16.mxu0 0
      %6971 = vmatmul.mubr.bf16.gmra.mxu0 %v6936
      %v6972 = vpop.f32.mrf.mxu0
      %v6973 = vadd.f32 0.0, %v6972
      %v6974 = vpop.f32.mrf.mxu0
      %v6975 = vpop.f32.mrf.mxu0
      %v6976 = vpop.f32.mrf.mxu0
      %6977 = vdwg.mxu0
      %v6978 = vadd.f32 %v6856, %v6973
      %s6979 = scalar_lea.vmem %s12, 14
      %v6980 = vld [vmem:[%s6979] sm:$0x3]
      %v6982 = vsel %vm6128, %v6980, 0
      %6984 = vmatprep.subr.bf16.mxu0 0
      %6985 = vmatpush1.bf16.msra.mxu0 0
      %6986 = vmatprep.subr.bf16.mxu0 0
      %6987 = vmatpush1.bf16.msra.mxu0 0
      %6988 = vmatprep.subr.bf16.mxu0 0
      %6989 = vmatpush1.bf16.msra.mxu0 0
      %6990 = vmatprep.subr.bf16.mxu0 0
      %6991 = vmatpush1.bf16.msra.mxu0 0
      %6992 = vmatprep.subr.bf16.mxu0 0
      %6993 = vmatpush1.bf16.msra.mxu0 0
      %6994 = vmatprep.subr.bf16.mxu0 0
      %6995 = vmatpush1.bf16.msra.mxu0 0
      %6996 = vmatprep.subr.bf16.mxu0 0
      %6997 = vmatpush1.bf16.msra.mxu0 0
      %6998 = vmatprep.subr.bf16.mxu0 0
      %6999 = vmatpush1.bf16.msra.mxu0 %v6126
      %7000 = vmatprep.subr.bf16.mxu0 0
      %7001 = vmatpush2.bf16.msra.mxu0 0
      %7002 = vmatprep.subr.bf16.mxu0 0
      %7003 = vmatpush2.bf16.msra.mxu0 0
      %7004 = vmatprep.subr.bf16.mxu0 0
      %7005 = vmatpush2.bf16.msra.mxu0 0
      %7006 = vmatprep.subr.bf16.mxu0 0
      %7007 = vmatpush2.bf16.msra.mxu0 0
      %7008 = vmatprep.subr.bf16.mxu0 0
      %7009 = vmatpush2.bf16.msra.mxu0 0
      %7010 = vmatprep.subr.bf16.mxu0 0
      %7011 = vmatpush2.bf16.msra.mxu0 0
      %7012 = vmatprep.subr.bf16.mxu0 0
      %7013 = vmatpush2.bf16.msra.mxu0 0
      %7014 = vmatprep.subr.bf16.mxu0 0
      %7015 = vmatpush2.bf16.msra.mxu0 0
      %7016 = vmatprep.mubr.bf16.mxu0 0
      %7017 = vmatmul.mubr.bf16.gmra.mxu0 %v6982
      %v7018 = vpop.f32.mrf.mxu0
      %v7019 = vadd.f32 0.0, %v7018
      %v7020 = vpop.f32.mrf.mxu0
      %v7021 = vpop.f32.mrf.mxu0
      %v7022 = vpop.f32.mrf.mxu0
      %7023 = vdwg.mxu0
      %v7024 = vpack.c.bf16 %v7019, %v7019
      %v7025 = vld [vmem:[%s8 + $0xe0] sm:$0xf]
      %v7026 = vld [vmem:[%s8 + $0xe4] sm:$0xf]
      %v7027 = vld [vmem:[%s8 + $0xe8] sm:$0xf]
      %v7028 = vld [vmem:[%s8 + $0xec] sm:$0xf]
      %v7029 = vld [vmem:[%s8 + $0xf0] sm:$0xf]
      %v7030 = vld [vmem:[%s8 + $0xf4] sm:$0xf]
      %v7031 = vld [vmem:[%s8 + $0xf8] sm:$0xf]
      %v7032 = vld [vmem:[%s8 + $0xfc] sm:$0xf]
      %v7041 = vunpack.c.l.b16 %v7025
      %v7042 = vunpack.c.l.b16 %v7026
      %v7043 = vunpack.c.l.b16 %v7027
      %v7044 = vunpack.c.l.b16 %v7028
      %v7045 = vunpack.c.l.b16 %v7029
      %v7046 = vunpack.c.l.b16 %v7030
      %v7047 = vunpack.c.l.b16 %v7031
      %v7048 = vunpack.c.l.b16 %v7032
      %v7049 = vpack.c.b16 %v7042, %v7041
      %v7050 = vpack.c.b16 %v7044, %v7043
      %v7051 = vpack.c.b16 %v7046, %v7045
      %v7052 = vpack.c.b16 %v7048, %v7047
      %v7058 = vsel %vm2570, %v7024, 0
      %7060 = vmatprep.subr.bf16.mxu0 0
      %7061 = vmatpush1.bf16.msra.mxu0 0
      %7062 = vmatprep.subr.bf16.mxu0 0
      %7063 = vmatpush1.bf16.msra.mxu0 0
      %7064 = vmatprep.subr.bf16.mxu0 0
      %7065 = vmatpush1.bf16.msra.mxu0 0
      %7066 = vmatprep.subr.bf16.mxu0 0
      %7067 = vmatpush1.bf16.msra.mxu0 0
      %7068 = vmatprep.subr.bf16.mxu0 0
      %7069 = vmatpush1.bf16.msra.mxu0 %v7052
      %7070 = vmatprep.subr.bf16.mxu0 0
      %7071 = vmatpush1.bf16.msra.mxu0 %v7051
      %7072 = vmatprep.subr.bf16.mxu0 0
      %7073 = vmatpush1.bf16.msra.mxu0 %v7050
      %7074 = vmatprep.subr.bf16.mxu0 0
      %7075 = vmatpush1.bf16.msra.mxu0 %v7049
      %7076 = vmatprep.subr.bf16.mxu0 0
      %7077 = vmatpush2.bf16.msra.mxu0 0
      %7078 = vmatprep.subr.bf16.mxu0 0
      %7079 = vmatpush2.bf16.msra.mxu0 0
      %7080 = vmatprep.subr.bf16.mxu0 0
      %7081 = vmatpush2.bf16.msra.mxu0 0
      %7082 = vmatprep.subr.bf16.mxu0 0
      %7083 = vmatpush2.bf16.msra.mxu0 0
      %7084 = vmatprep.subr.bf16.mxu0 0
      %7085 = vmatpush2.bf16.msra.mxu0 0
      %7086 = vmatprep.subr.bf16.mxu0 0
      %7087 = vmatpush2.bf16.msra.mxu0 0
      %7088 = vmatprep.subr.bf16.mxu0 0
      %7089 = vmatpush2.bf16.msra.mxu0 0
      %7090 = vmatprep.subr.bf16.mxu0 0
      %7091 = vmatpush2.bf16.msra.mxu0 0
      %7092 = vmatprep.mubr.bf16.mxu0 0
      %7093 = vmatmul.mubr.bf16.gmra.mxu0 %v7058
      %v7094 = vpop.f32.mrf.mxu0
      %v7095 = vadd.f32 0.0, %v7094
      %v7096 = vpop.f32.mrf.mxu0
      %v7097 = vpop.f32.mrf.mxu0
      %v7098 = vpop.f32.mrf.mxu0
      %7099 = vdwg.mxu0
      %v7100 = vadd.f32 %v6978, %v7095
      %s7101 = scalar_lea.vmem %s12, 16
      %v7102 = vld [vmem:[%s7101] sm:$0x3]
      %v7104 = vsel %vm6128, %v7102, 0
      %7106 = vmatprep.subr.bf16.mxu0 0
      %7107 = vmatpush1.bf16.msra.mxu0 0
      %7108 = vmatprep.subr.bf16.mxu0 0
      %7109 = vmatpush1.bf16.msra.mxu0 0
      %7110 = vmatprep.subr.bf16.mxu0 0
      %7111 = vmatpush1.bf16.msra.mxu0 0
      %7112 = vmatprep.subr.bf16.mxu0 0
      %7113 = vmatpush1.bf16.msra.mxu0 0
      %7114 = vmatprep.subr.bf16.mxu0 0
      %7115 = vmatpush1.bf16.msra.mxu0 0
      %7116 = vmatprep.subr.bf16.mxu0 0
      %7117 = vmatpush1.bf16.msra.mxu0 0
      %7118 = vmatprep.subr.bf16.mxu0 0
      %7119 = vmatpush1.bf16.msra.mxu0 0
      %7120 = vmatprep.subr.bf16.mxu0 0
      %7121 = vmatpush1.bf16.msra.mxu0 %v6126
      %7122 = vmatprep.subr.bf16.mxu0 0
      %7123 = vmatpush2.bf16.msra.mxu0 0
      %7124 = vmatprep.subr.bf16.mxu0 0
      %7125 = vmatpush2.bf16.msra.mxu0 0
      %7126 = vmatprep.subr.bf16.mxu0 0
      %7127 = vmatpush2.bf16.msra.mxu0 0
      %7128 = vmatprep.subr.bf16.mxu0 0
      %7129 = vmatpush2.bf16.msra.mxu0 0
      %7130 = vmatprep.subr.bf16.mxu0 0
      %7131 = vmatpush2.bf16.msra.mxu0 0
      %7132 = vmatprep.subr.bf16.mxu0 0
      %7133 = vmatpush2.bf16.msra.mxu0 0
      %7134 = vmatprep.subr.bf16.mxu0 0
      %7135 = vmatpush2.bf16.msra.mxu0 0
      %7136 = vmatprep.subr.bf16.mxu0 0
      %7137 = vmatpush2.bf16.msra.mxu0 0
      %7138 = vmatprep.mubr.bf16.mxu0 0
      %7139 = vmatmul.mubr.bf16.gmra.mxu0 %v7104
      %v7140 = vpop.f32.mrf.mxu0
      %v7141 = vadd.f32 0.0, %v7140
      %v7142 = vpop.f32.mrf.mxu0
      %v7143 = vpop.f32.mrf.mxu0
      %v7144 = vpop.f32.mrf.mxu0
      %7145 = vdwg.mxu0
      %v7146 = vpack.c.bf16 %v7141, %v7141
      %v7147 = vld [vmem:[%s8 + $0x100] sm:$0xf]
      %v7148 = vld [vmem:[%s8 + $0x104] sm:$0xf]
      %v7149 = vld [vmem:[%s8 + $0x108] sm:$0xf]
      %v7150 = vld [vmem:[%s8 + $0x10c] sm:$0xf]
      %v7151 = vld [vmem:[%s8 + $0x110] sm:$0xf]
      %v7152 = vld [vmem:[%s8 + $0x114] sm:$0xf]
      %v7153 = vld [vmem:[%s8 + $0x118] sm:$0xf]
      %v7154 = vld [vmem:[%s8 + $0x11c] sm:$0xf]
      %v7163 = vunpack.c.l.b16 %v7147
      %v7164 = vunpack.c.l.b16 %v7148
      %v7165 = vunpack.c.l.b16 %v7149
      %v7166 = vunpack.c.l.b16 %v7150
      %v7167 = vunpack.c.l.b16 %v7151
      %v7168 = vunpack.c.l.b16 %v7152
      %v7169 = vunpack.c.l.b16 %v7153
      %v7170 = vunpack.c.l.b16 %v7154
      %v7171 = vpack.c.b16 %v7164, %v7163
      %v7172 = vpack.c.b16 %v7166, %v7165
      %v7173 = vpack.c.b16 %v7168, %v7167
      %v7174 = vpack.c.b16 %v7170, %v7169
      %v7180 = vsel %vm2570, %v7146, 0
      %7182 = vmatprep.subr.bf16.mxu0 0
      %7183 = vmatpush1.bf16.msra.mxu0 0
      %7184 = vmatprep.subr.bf16.mxu0 0
      %7185 = vmatpush1.bf16.msra.mxu0 0
      %7186 = vmatprep.subr.bf16.mxu0 0
      %7187 = vmatpush1.bf16.msra.mxu0 0
      %7188 = vmatprep.subr.bf16.mxu0 0
      %7189 = vmatpush1.bf16.msra.mxu0 0
      %7190 = vmatprep.subr.bf16.mxu0 0
      %7191 = vmatpush1.bf16.msra.mxu0 %v7174
      %7192 = vmatprep.subr.bf16.mxu0 0
      %7193 = vmatpush1.bf16.msra.mxu0 %v7173
      %7194 = vmatprep.subr.bf16.mxu0 0
      %7195 = vmatpush1.bf16.msra.mxu0 %v7172
      %7196 = vmatprep.subr.bf16.mxu0 0
      %7197 = vmatpush1.bf16.msra.mxu0 %v7171
      %7198 = vmatprep.subr.bf16.mxu0 0
      %7199 = vmatpush2.bf16.msra.mxu0 0
      %7200 = vmatprep.subr.bf16.mxu0 0
      %7201 = vmatpush2.bf16.msra.mxu0 0
      %7202 = vmatprep.subr.bf16.mxu0 0
      %7203 = vmatpush2.bf16.msra.mxu0 0
      %7204 = vmatprep.subr.bf16.mxu0 0
      %7205 = vmatpush2.bf16.msra.mxu0 0
      %7206 = vmatprep.subr.bf16.mxu0 0
      %7207 = vmatpush2.bf16.msra.mxu0 0
      %7208 = vmatprep.subr.bf16.mxu0 0
      %7209 = vmatpush2.bf16.msra.mxu0 0
      %7210 = vmatprep.subr.bf16.mxu0 0
      %7211 = vmatpush2.bf16.msra.mxu0 0
      %7212 = vmatprep.subr.bf16.mxu0 0
      %7213 = vmatpush2.bf16.msra.mxu0 0
      %7214 = vmatprep.mubr.bf16.mxu0 0
      %7215 = vmatmul.mubr.bf16.gmra.mxu0 %v7180
      %v7216 = vpop.f32.mrf.mxu0
      %v7217 = vadd.f32 0.0, %v7216
      %v7218 = vpop.f32.mrf.mxu0
      %v7219 = vpop.f32.mrf.mxu0
      %v7220 = vpop.f32.mrf.mxu0
      %7221 = vdwg.mxu0
      %v7222 = vadd.f32 %v7100, %v7217
      %s7223 = scalar_lea.vmem %s12, 18
      %v7224 = vld [vmem:[%s7223] sm:$0x3]
      %v7226 = vsel %vm6128, %v7224, 0
      %7228 = vmatprep.subr.bf16.mxu0 0
      %7229 = vmatpush1.bf16.msra.mxu0 0
      %7230 = vmatprep.subr.bf16.mxu0 0
      %7231 = vmatpush1.bf16.msra.mxu0 0
      %7232 = vmatprep.subr.bf16.mxu0 0
      %7233 = vmatpush1.bf16.msra.mxu0 0
      %7234 = vmatprep.subr.bf16.mxu0 0
      %7235 = vmatpush1.bf16.msra.mxu0 0
      %7236 = vmatprep.subr.bf16.mxu0 0
      %7237 = vmatpush1.bf16.msra.mxu0 0
      %7238 = vmatprep.subr.bf16.mxu0 0
      %7239 = vmatpush1.bf16.msra.mxu0 0
      %7240 = vmatprep.subr.bf16.mxu0 0
      %7241 = vmatpush1.bf16.msra.mxu0 0
      %7242 = vmatprep.subr.bf16.mxu0 0
      %7243 = vmatpush1.bf16.msra.mxu0 %v6126
      %7244 = vmatprep.subr.bf16.mxu0 0
      %7245 = vmatpush2.bf16.msra.mxu0 0
      %7246 = vmatprep.subr.bf16.mxu0 0
      %7247 = vmatpush2.bf16.msra.mxu0 0
      %7248 = vmatprep.subr.bf16.mxu0 0
      %7249 = vmatpush2.bf16.msra.mxu0 0
      %7250 = vmatprep.subr.bf16.mxu0 0
      %7251 = vmatpush2.bf16.msra.mxu0 0
      %7252 = vmatprep.subr.bf16.mxu0 0
      %7253 = vmatpush2.bf16.msra.mxu0 0
      %7254 = vmatprep.subr.bf16.mxu0 0
      %7255 = vmatpush2.bf16.msra.mxu0 0
      %7256 = vmatprep.subr.bf16.mxu0 0
      %7257 = vmatpush2.bf16.msra.mxu0 0
      %7258 = vmatprep.subr.bf16.mxu0 0
      %7259 = vmatpush2.bf16.msra.mxu0 0
      %7260 = vmatprep.mubr.bf16.mxu0 0
      %7261 = vmatmul.mubr.bf16.gmra.mxu0 %v7226
      %v7262 = vpop.f32.mrf.mxu0
      %v7263 = vadd.f32 0.0, %v7262
      %v7264 = vpop.f32.mrf.mxu0
      %v7265 = vpop.f32.mrf.mxu0
      %v7266 = vpop.f32.mrf.mxu0
      %7267 = vdwg.mxu0
      %v7268 = vpack.c.bf16 %v7263, %v7263
      %v7269 = vld [vmem:[%s8 + $0x120] sm:$0xf]
      %v7270 = vld [vmem:[%s8 + $0x124] sm:$0xf]
      %v7271 = vld [vmem:[%s8 + $0x128] sm:$0xf]
      %v7272 = vld [vmem:[%s8 + $0x12c] sm:$0xf]
      %v7273 = vld [vmem:[%s8 + $0x130] sm:$0xf]
      %v7274 = vld [vmem:[%s8 + $0x134] sm:$0xf]
      %v7275 = vld [vmem:[%s8 + $0x138] sm:$0xf]
      %v7276 = vld [vmem:[%s8 + $0x13c] sm:$0xf]
      %v7285 = vunpack.c.l.b16 %v7269
      %v7286 = vunpack.c.l.b16 %v7270
      %v7287 = vunpack.c.l.b16 %v7271
      %v7288 = vunpack.c.l.b16 %v7272
      %v7289 = vunpack.c.l.b16 %v7273
      %v7290 = vunpack.c.l.b16 %v7274
      %v7291 = vunpack.c.l.b16 %v7275
      %v7292 = vunpack.c.l.b16 %v7276
      %v7293 = vpack.c.b16 %v7286, %v7285
      %v7294 = vpack.c.b16 %v7288, %v7287
      %v7295 = vpack.c.b16 %v7290, %v7289
      %v7296 = vpack.c.b16 %v7292, %v7291
      %v7302 = vsel %vm2570, %v7268, 0
      %7304 = vmatprep.subr.bf16.mxu0 0
      %7305 = vmatpush1.bf16.msra.mxu0 0
      %7306 = vmatprep.subr.bf16.mxu0 0
      %7307 = vmatpush1.bf16.msra.mxu0 0
      %7308 = vmatprep.subr.bf16.mxu0 0
      %7309 = vmatpush1.bf16.msra.mxu0 0
      %7310 = vmatprep.subr.bf16.mxu0 0
      %7311 = vmatpush1.bf16.msra.mxu0 0
      %7312 = vmatprep.subr.bf16.mxu0 0
      %7313 = vmatpush1.bf16.msra.mxu0 %v7296
      %7314 = vmatprep.subr.bf16.mxu0 0
      %7315 = vmatpush1.bf16.msra.mxu0 %v7295
      %7316 = vmatprep.subr.bf16.mxu0 0
      %7317 = vmatpush1.bf16.msra.mxu0 %v7294
      %7318 = vmatprep.subr.bf16.mxu0 0
      %7319 = vmatpush1.bf16.msra.mxu0 %v7293
      %7320 = vmatprep.subr.bf16.mxu0 0
      %7321 = vmatpush2.bf16.msra.mxu0 0
      %7322 = vmatprep.subr.bf16.mxu0 0
      %7323 = vmatpush2.bf16.msra.mxu0 0
      %7324 = vmatprep.subr.bf16.mxu0 0
      %7325 = vmatpush2.bf16.msra.mxu0 0
      %7326 = vmatprep.subr.bf16.mxu0 0
      %7327 = vmatpush2.bf16.msra.mxu0 0
      %7328 = vmatprep.subr.bf16.mxu0 0
      %7329 = vmatpush2.bf16.msra.mxu0 0
      %7330 = vmatprep.subr.bf16.mxu0 0
      %7331 = vmatpush2.bf16.msra.mxu0 0
      %7332 = vmatprep.subr.bf16.mxu0 0
      %7333 = vmatpush2.bf16.msra.mxu0 0
      %7334 = vmatprep.subr.bf16.mxu0 0
      %7335 = vmatpush2.bf16.msra.mxu0 0
      %7336 = vmatprep.mubr.bf16.mxu0 0
      %7337 = vmatmul.mubr.bf16.gmra.mxu0 %v7302
      %v7338 = vpop.f32.mrf.mxu0
      %v7339 = vadd.f32 0.0, %v7338
      %v7340 = vpop.f32.mrf.mxu0
      %v7341 = vpop.f32.mrf.mxu0
      %v7342 = vpop.f32.mrf.mxu0
      %7343 = vdwg.mxu0
      %v7344 = vadd.f32 %v7222, %v7339
      %s7345 = scalar_lea.vmem %s12, 20
      %v7346 = vld [vmem:[%s7345] sm:$0x3]
      %v7348 = vsel %vm6128, %v7346, 0
      %7350 = vmatprep.subr.bf16.mxu0 0
      %7351 = vmatpush1.bf16.msra.mxu0 0
      %7352 = vmatprep.subr.bf16.mxu0 0
      %7353 = vmatpush1.bf16.msra.mxu0 0
      %7354 = vmatprep.subr.bf16.mxu0 0
      %7355 = vmatpush1.bf16.msra.mxu0 0
      %7356 = vmatprep.subr.bf16.mxu0 0
      %7357 = vmatpush1.bf16.msra.mxu0 0
      %7358 = vmatprep.subr.bf16.mxu0 0
      %7359 = vmatpush1.bf16.msra.mxu0 0
      %7360 = vmatprep.subr.bf16.mxu0 0
      %7361 = vmatpush1.bf16.msra.mxu0 0
      %7362 = vmatprep.subr.bf16.mxu0 0
      %7363 = vmatpush1.bf16.msra.mxu0 0
      %7364 = vmatprep.subr.bf16.mxu0 0
      %7365 = vmatpush1.bf16.msra.mxu0 %v6126
      %7366 = vmatprep.subr.bf16.mxu0 0
      %7367 = vmatpush2.bf16.msra.mxu0 0
      %7368 = vmatprep.subr.bf16.mxu0 0
      %7369 = vmatpush2.bf16.msra.mxu0 0
      %7370 = vmatprep.subr.bf16.mxu0 0
      %7371 = vmatpush2.bf16.msra.mxu0 0
      %7372 = vmatprep.subr.bf16.mxu0 0
      %7373 = vmatpush2.bf16.msra.mxu0 0
      %7374 = vmatprep.subr.bf16.mxu0 0
      %7375 = vmatpush2.bf16.msra.mxu0 0
      %7376 = vmatprep.subr.bf16.mxu0 0
      %7377 = vmatpush2.bf16.msra.mxu0 0
      %7378 = vmatprep.subr.bf16.mxu0 0
      %7379 = vmatpush2.bf16.msra.mxu0 0
      %7380 = vmatprep.subr.bf16.mxu0 0
      %7381 = vmatpush2.bf16.msra.mxu0 0
      %7382 = vmatprep.mubr.bf16.mxu0 0
      %7383 = vmatmul.mubr.bf16.gmra.mxu0 %v7348
      %v7384 = vpop.f32.mrf.mxu0
      %v7385 = vadd.f32 0.0, %v7384
      %v7386 = vpop.f32.mrf.mxu0
      %v7387 = vpop.f32.mrf.mxu0
      %v7388 = vpop.f32.mrf.mxu0
      %7389 = vdwg.mxu0
      %v7390 = vpack.c.bf16 %v7385, %v7385
      %v7391 = vld [vmem:[%s8 + $0x140] sm:$0xf]
      %v7392 = vld [vmem:[%s8 + $0x144] sm:$0xf]
      %v7393 = vld [vmem:[%s8 + $0x148] sm:$0xf]
      %v7394 = vld [vmem:[%s8 + $0x14c] sm:$0xf]
      %v7395 = vld [vmem:[%s8 + $0x150] sm:$0xf]
      %v7396 = vld [vmem:[%s8 + $0x154] sm:$0xf]
      %v7397 = vld [vmem:[%s8 + $0x158] sm:$0xf]
      %v7398 = vld [vmem:[%s8 + $0x15c] sm:$0xf]
      %v7407 = vunpack.c.l.b16 %v7391
      %v7408 = vunpack.c.l.b16 %v7392
      %v7409 = vunpack.c.l.b16 %v7393
      %v7410 = vunpack.c.l.b16 %v7394
      %v7411 = vunpack.c.l.b16 %v7395
      %v7412 = vunpack.c.l.b16 %v7396
      %v7413 = vunpack.c.l.b16 %v7397
      %v7414 = vunpack.c.l.b16 %v7398
      %v7415 = vpack.c.b16 %v7408, %v7407
      %v7416 = vpack.c.b16 %v7410, %v7409
      %v7417 = vpack.c.b16 %v7412, %v7411
      %v7418 = vpack.c.b16 %v7414, %v7413
      %v7424 = vsel %vm2570, %v7390, 0
      %7426 = vmatprep.subr.bf16.mxu0 0
      %7427 = vmatpush1.bf16.msra.mxu0 0
      %7428 = vmatprep.subr.bf16.mxu0 0
      %7429 = vmatpush1.bf16.msra.mxu0 0
      %7430 = vmatprep.subr.bf16.mxu0 0
      %7431 = vmatpush1.bf16.msra.mxu0 0
      %7432 = vmatprep.subr.bf16.mxu0 0
      %7433 = vmatpush1.bf16.msra.mxu0 0
      %7434 = vmatprep.subr.bf16.mxu0 0
      %7435 = vmatpush1.bf16.msra.mxu0 %v7418
      %7436 = vmatprep.subr.bf16.mxu0 0
      %7437 = vmatpush1.bf16.msra.mxu0 %v7417
      %7438 = vmatprep.subr.bf16.mxu0 0
      %7439 = vmatpush1.bf16.msra.mxu0 %v7416
      %7440 = vmatprep.subr.bf16.mxu0 0
      %7441 = vmatpush1.bf16.msra.mxu0 %v7415
      %7442 = vmatprep.subr.bf16.mxu0 0
      %7443 = vmatpush2.bf16.msra.mxu0 0
      %7444 = vmatprep.subr.bf16.mxu0 0
      %7445 = vmatpush2.bf16.msra.mxu0 0
      %7446 = vmatprep.subr.bf16.mxu0 0
      %7447 = vmatpush2.bf16.msra.mxu0 0
      %7448 = vmatprep.subr.bf16.mxu0 0
      %7449 = vmatpush2.bf16.msra.mxu0 0
      %7450 = vmatprep.subr.bf16.mxu0 0
      %7451 = vmatpush2.bf16.msra.mxu0 0
      %7452 = vmatprep.subr.bf16.mxu0 0
      %7453 = vmatpush2.bf16.msra.mxu0 0
      %7454 = vmatprep.subr.bf16.mxu0 0
      %7455 = vmatpush2.bf16.msra.mxu0 0
      %7456 = vmatprep.subr.bf16.mxu0 0
      %7457 = vmatpush2.bf16.msra.mxu0 0
      %7458 = vmatprep.mubr.bf16.mxu0 0
      %7459 = vmatmul.mubr.bf16.gmra.mxu0 %v7424
      %v7460 = vpop.f32.mrf.mxu0
      %v7461 = vadd.f32 0.0, %v7460
      %v7462 = vpop.f32.mrf.mxu0
      %v7463 = vpop.f32.mrf.mxu0
      %v7464 = vpop.f32.mrf.mxu0
      %7465 = vdwg.mxu0
      %v7466 = vadd.f32 %v7344, %v7461
      %s7467 = scalar_lea.vmem %s12, 22
      %v7468 = vld [vmem:[%s7467] sm:$0x3]
      %v7470 = vsel %vm6128, %v7468, 0
      %7472 = vmatprep.subr.bf16.mxu0 0
      %7473 = vmatpush1.bf16.msra.mxu0 0
      %7474 = vmatprep.subr.bf16.mxu0 0
      %7475 = vmatpush1.bf16.msra.mxu0 0
      %7476 = vmatprep.subr.bf16.mxu0 0
      %7477 = vmatpush1.bf16.msra.mxu0 0
      %7478 = vmatprep.subr.bf16.mxu0 0
      %7479 = vmatpush1.bf16.msra.mxu0 0
      %7480 = vmatprep.subr.bf16.mxu0 0
      %7481 = vmatpush1.bf16.msra.mxu0 0
      %7482 = vmatprep.subr.bf16.mxu0 0
      %7483 = vmatpush1.bf16.msra.mxu0 0
      %7484 = vmatprep.subr.bf16.mxu0 0
      %7485 = vmatpush1.bf16.msra.mxu0 0
      %7486 = vmatprep.subr.bf16.mxu0 0
      %7487 = vmatpush1.bf16.msra.mxu0 %v6126
      %7488 = vmatprep.subr.bf16.mxu0 0
      %7489 = vmatpush2.bf16.msra.mxu0 0
      %7490 = vmatprep.subr.bf16.mxu0 0
      %7491 = vmatpush2.bf16.msra.mxu0 0
      %7492 = vmatprep.subr.bf16.mxu0 0
      %7493 = vmatpush2.bf16.msra.mxu0 0
      %7494 = vmatprep.subr.bf16.mxu0 0
      %7495 = vmatpush2.bf16.msra.mxu0 0
      %7496 = vmatprep.subr.bf16.mxu0 0
      %7497 = vmatpush2.bf16.msra.mxu0 0
      %7498 = vmatprep.subr.bf16.mxu0 0
      %7499 = vmatpush2.bf16.msra.mxu0 0
      %7500 = vmatprep.subr.bf16.mxu0 0
      %7501 = vmatpush2.bf16.msra.mxu0 0
      %7502 = vmatprep.subr.bf16.mxu0 0
      %7503 = vmatpush2.bf16.msra.mxu0 0
      %7504 = vmatprep.mubr.bf16.mxu0 0
      %7505 = vmatmul.mubr.bf16.gmra.mxu0 %v7470
      %v7506 = vpop.f32.mrf.mxu0
      %v7507 = vadd.f32 0.0, %v7506
      %v7508 = vpop.f32.mrf.mxu0
      %v7509 = vpop.f32.mrf.mxu0
      %v7510 = vpop.f32.mrf.mxu0
      %7511 = vdwg.mxu0
      %v7512 = vpack.c.bf16 %v7507, %v7507
      %v7513 = vld [vmem:[%s8 + $0x160] sm:$0xf]
      %v7514 = vld [vmem:[%s8 + $0x164] sm:$0xf]
      %v7515 = vld [vmem:[%s8 + $0x168] sm:$0xf]
      %v7516 = vld [vmem:[%s8 + $0x16c] sm:$0xf]
      %v7517 = vld [vmem:[%s8 + $0x170] sm:$0xf]
      %v7518 = vld [vmem:[%s8 + $0x174] sm:$0xf]
      %v7519 = vld [vmem:[%s8 + $0x178] sm:$0xf]
      %v7520 = vld [vmem:[%s8 + $0x17c] sm:$0xf]
      %v7529 = vunpack.c.l.b16 %v7513
      %v7530 = vunpack.c.l.b16 %v7514
      %v7531 = vunpack.c.l.b16 %v7515
      %v7532 = vunpack.c.l.b16 %v7516
      %v7533 = vunpack.c.l.b16 %v7517
      %v7534 = vunpack.c.l.b16 %v7518
      %v7535 = vunpack.c.l.b16 %v7519
      %v7536 = vunpack.c.l.b16 %v7520
      %v7537 = vpack.c.b16 %v7530, %v7529
      %v7538 = vpack.c.b16 %v7532, %v7531
      %v7539 = vpack.c.b16 %v7534, %v7533
      %v7540 = vpack.c.b16 %v7536, %v7535
      %v7546 = vsel %vm2570, %v7512, 0
      %7548 = vmatprep.subr.bf16.mxu0 0
      %7549 = vmatpush1.bf16.msra.mxu0 0
      %7550 = vmatprep.subr.bf16.mxu0 0
      %7551 = vmatpush1.bf16.msra.mxu0 0
      %7552 = vmatprep.subr.bf16.mxu0 0
      %7553 = vmatpush1.bf16.msra.mxu0 0
      %7554 = vmatprep.subr.bf16.mxu0 0
      %7555 = vmatpush1.bf16.msra.mxu0 0
      %7556 = vmatprep.subr.bf16.mxu0 0
      %7557 = vmatpush1.bf16.msra.mxu0 %v7540
      %7558 = vmatprep.subr.bf16.mxu0 0
      %7559 = vmatpush1.bf16.msra.mxu0 %v7539
      %7560 = vmatprep.subr.bf16.mxu0 0
      %7561 = vmatpush1.bf16.msra.mxu0 %v7538
      %7562 = vmatprep.subr.bf16.mxu0 0
      %7563 = vmatpush1.bf16.msra.mxu0 %v7537
      %7564 = vmatprep.subr.bf16.mxu0 0
      %7565 = vmatpush2.bf16.msra.mxu0 0
      %7566 = vmatprep.subr.bf16.mxu0 0
      %7567 = vmatpush2.bf16.msra.mxu0 0
      %7568 = vmatprep.subr.bf16.mxu0 0
      %7569 = vmatpush2.bf16.msra.mxu0 0
      %7570 = vmatprep.subr.bf16.mxu0 0
      %7571 = vmatpush2.bf16.msra.mxu0 0
      %7572 = vmatprep.subr.bf16.mxu0 0
      %7573 = vmatpush2.bf16.msra.mxu0 0
      %7574 = vmatprep.subr.bf16.mxu0 0
      %7575 = vmatpush2.bf16.msra.mxu0 0
      %7576 = vmatprep.subr.bf16.mxu0 0
      %7577 = vmatpush2.bf16.msra.mxu0 0
      %7578 = vmatprep.subr.bf16.mxu0 0
      %7579 = vmatpush2.bf16.msra.mxu0 0
      %7580 = vmatprep.mubr.bf16.mxu0 0
      %7581 = vmatmul.mubr.bf16.gmra.mxu0 %v7546
      %v7582 = vpop.f32.mrf.mxu0
      %v7583 = vadd.f32 0.0, %v7582
      %v7584 = vpop.f32.mrf.mxu0
      %v7585 = vpop.f32.mrf.mxu0
      %v7586 = vpop.f32.mrf.mxu0
      %7587 = vdwg.mxu0
      %v7588 = vadd.f32 %v7466, %v7583
      %s7589 = scalar_lea.vmem %s12, 24
      %v7590 = vld [vmem:[%s7589] sm:$0x3]
      %v7592 = vsel %vm6128, %v7590, 0
      %7594 = vmatprep.subr.bf16.mxu0 0
      %7595 = vmatpush1.bf16.msra.mxu0 0
      %7596 = vmatprep.subr.bf16.mxu0 0
      %7597 = vmatpush1.bf16.msra.mxu0 0
      %7598 = vmatprep.subr.bf16.mxu0 0
      %7599 = vmatpush1.bf16.msra.mxu0 0
      %7600 = vmatprep.subr.bf16.mxu0 0
      %7601 = vmatpush1.bf16.msra.mxu0 0
      %7602 = vmatprep.subr.bf16.mxu0 0
      %7603 = vmatpush1.bf16.msra.mxu0 0
      %7604 = vmatprep.subr.bf16.mxu0 0
      %7605 = vmatpush1.bf16.msra.mxu0 0
      %7606 = vmatprep.subr.bf16.mxu0 0
      %7607 = vmatpush1.bf16.msra.mxu0 0
      %7608 = vmatprep.subr.bf16.mxu0 0
      %7609 = vmatpush1.bf16.msra.mxu0 %v6126
      %7610 = vmatprep.subr.bf16.mxu0 0
      %7611 = vmatpush2.bf16.msra.mxu0 0
      %7612 = vmatprep.subr.bf16.mxu0 0
      %7613 = vmatpush2.bf16.msra.mxu0 0
      %7614 = vmatprep.subr.bf16.mxu0 0
      %7615 = vmatpush2.bf16.msra.mxu0 0
      %7616 = vmatprep.subr.bf16.mxu0 0
      %7617 = vmatpush2.bf16.msra.mxu0 0
      %7618 = vmatprep.subr.bf16.mxu0 0
      %7619 = vmatpush2.bf16.msra.mxu0 0
      %7620 = vmatprep.subr.bf16.mxu0 0
      %7621 = vmatpush2.bf16.msra.mxu0 0
      %7622 = vmatprep.subr.bf16.mxu0 0
      %7623 = vmatpush2.bf16.msra.mxu0 0
      %7624 = vmatprep.subr.bf16.mxu0 0
      %7625 = vmatpush2.bf16.msra.mxu0 0
      %7626 = vmatprep.mubr.bf16.mxu0 0
      %7627 = vmatmul.mubr.bf16.gmra.mxu0 %v7592
      %v7628 = vpop.f32.mrf.mxu0
      %v7629 = vadd.f32 0.0, %v7628
      %v7630 = vpop.f32.mrf.mxu0
      %v7631 = vpop.f32.mrf.mxu0
      %v7632 = vpop.f32.mrf.mxu0
      %7633 = vdwg.mxu0
      %v7634 = vpack.c.bf16 %v7629, %v7629
      %v7635 = vld [vmem:[%s8 + $0x180] sm:$0xf]
      %v7636 = vld [vmem:[%s8 + $0x184] sm:$0xf]
      %v7637 = vld [vmem:[%s8 + $0x188] sm:$0xf]
      %v7638 = vld [vmem:[%s8 + $0x18c] sm:$0xf]
      %v7639 = vld [vmem:[%s8 + $0x190] sm:$0xf]
      %v7640 = vld [vmem:[%s8 + $0x194] sm:$0xf]
      %v7641 = vld [vmem:[%s8 + $0x198] sm:$0xf]
      %v7642 = vld [vmem:[%s8 + $0x19c] sm:$0xf]
      %v7651 = vunpack.c.l.b16 %v7635
      %v7652 = vunpack.c.l.b16 %v7636
      %v7653 = vunpack.c.l.b16 %v7637
      %v7654 = vunpack.c.l.b16 %v7638
      %v7655 = vunpack.c.l.b16 %v7639
      %v7656 = vunpack.c.l.b16 %v7640
      %v7657 = vunpack.c.l.b16 %v7641
      %v7658 = vunpack.c.l.b16 %v7642
      %v7659 = vpack.c.b16 %v7652, %v7651
      %v7660 = vpack.c.b16 %v7654, %v7653
      %v7661 = vpack.c.b16 %v7656, %v7655
      %v7662 = vpack.c.b16 %v7658, %v7657
      %v7668 = vsel %vm2570, %v7634, 0
      %7670 = vmatprep.subr.bf16.mxu0 0
      %7671 = vmatpush1.bf16.msra.mxu0 0
      %7672 = vmatprep.subr.bf16.mxu0 0
      %7673 = vmatpush1.bf16.msra.mxu0 0
      %7674 = vmatprep.subr.bf16.mxu0 0
      %7675 = vmatpush1.bf16.msra.mxu0 0
      %7676 = vmatprep.subr.bf16.mxu0 0
      %7677 = vmatpush1.bf16.msra.mxu0 0
      %7678 = vmatprep.subr.bf16.mxu0 0
      %7679 = vmatpush1.bf16.msra.mxu0 %v7662
      %7680 = vmatprep.subr.bf16.mxu0 0
      %7681 = vmatpush1.bf16.msra.mxu0 %v7661
      %7682 = vmatprep.subr.bf16.mxu0 0
      %7683 = vmatpush1.bf16.msra.mxu0 %v7660
      %7684 = vmatprep.subr.bf16.mxu0 0
      %7685 = vmatpush1.bf16.msra.mxu0 %v7659
      %7686 = vmatprep.subr.bf16.mxu0 0
      %7687 = vmatpush2.bf16.msra.mxu0 0
      %7688 = vmatprep.subr.bf16.mxu0 0
      %7689 = vmatpush2.bf16.msra.mxu0 0
      %7690 = vmatprep.subr.bf16.mxu0 0
      %7691 = vmatpush2.bf16.msra.mxu0 0
      %7692 = vmatprep.subr.bf16.mxu0 0
      %7693 = vmatpush2.bf16.msra.mxu0 0
      %7694 = vmatprep.subr.bf16.mxu0 0
      %7695 = vmatpush2.bf16.msra.mxu0 0
      %7696 = vmatprep.subr.bf16.mxu0 0
      %7697 = vmatpush2.bf16.msra.mxu0 0
      %7698 = vmatprep.subr.bf16.mxu0 0
      %7699 = vmatpush2.bf16.msra.mxu0 0
      %7700 = vmatprep.subr.bf16.mxu0 0
      %7701 = vmatpush2.bf16.msra.mxu0 0
      %7702 = vmatprep.mubr.bf16.mxu0 0
      %7703 = vmatmul.mubr.bf16.gmra.mxu0 %v7668
      %v7704 = vpop.f32.mrf.mxu0
      %v7705 = vadd.f32 0.0, %v7704
      %v7706 = vpop.f32.mrf.mxu0
      %v7707 = vpop.f32.mrf.mxu0
      %v7708 = vpop.f32.mrf.mxu0
      %7709 = vdwg.mxu0
      %v7710 = vadd.f32 %v7588, %v7705
      %s7711 = scalar_lea.vmem %s12, 26
      %v7712 = vld [vmem:[%s7711] sm:$0x3]
      %v7714 = vsel %vm6128, %v7712, 0
      %7716 = vmatprep.subr.bf16.mxu0 0
      %7717 = vmatpush1.bf16.msra.mxu0 0
      %7718 = vmatprep.subr.bf16.mxu0 0
      %7719 = vmatpush1.bf16.msra.mxu0 0
      %7720 = vmatprep.subr.bf16.mxu0 0
      %7721 = vmatpush1.bf16.msra.mxu0 0
      %7722 = vmatprep.subr.bf16.mxu0 0
      %7723 = vmatpush1.bf16.msra.mxu0 0
      %7724 = vmatprep.subr.bf16.mxu0 0
      %7725 = vmatpush1.bf16.msra.mxu0 0
      %7726 = vmatprep.subr.bf16.mxu0 0
      %7727 = vmatpush1.bf16.msra.mxu0 0
      %7728 = vmatprep.subr.bf16.mxu0 0
      %7729 = vmatpush1.bf16.msra.mxu0 0
      %7730 = vmatprep.subr.bf16.mxu0 0
      %7731 = vmatpush1.bf16.msra.mxu0 %v6126
      %7732 = vmatprep.subr.bf16.mxu0 0
      %7733 = vmatpush2.bf16.msra.mxu0 0
      %7734 = vmatprep.subr.bf16.mxu0 0
      %7735 = vmatpush2.bf16.msra.mxu0 0
      %7736 = vmatprep.subr.bf16.mxu0 0
      %7737 = vmatpush2.bf16.msra.mxu0 0
      %7738 = vmatprep.subr.bf16.mxu0 0
      %7739 = vmatpush2.bf16.msra.mxu0 0
      %7740 = vmatprep.subr.bf16.mxu0 0
      %7741 = vmatpush2.bf16.msra.mxu0 0
      %7742 = vmatprep.subr.bf16.mxu0 0
      %7743 = vmatpush2.bf16.msra.mxu0 0
      %7744 = vmatprep.subr.bf16.mxu0 0
      %7745 = vmatpush2.bf16.msra.mxu0 0
      %7746 = vmatprep.subr.bf16.mxu0 0
      %7747 = vmatpush2.bf16.msra.mxu0 0
      %7748 = vmatprep.mubr.bf16.mxu0 0
      %7749 = vmatmul.mubr.bf16.gmra.mxu0 %v7714
      %v7750 = vpop.f32.mrf.mxu0
      %v7751 = vadd.f32 0.0, %v7750
      %v7752 = vpop.f32.mrf.mxu0
      %v7753 = vpop.f32.mrf.mxu0
      %v7754 = vpop.f32.mrf.mxu0
      %7755 = vdwg.mxu0
      %v7756 = vpack.c.bf16 %v7751, %v7751
      %v7757 = vld [vmem:[%s8 + $0x1a0] sm:$0xf]
      %v7758 = vld [vmem:[%s8 + $0x1a4] sm:$0xf]
      %v7759 = vld [vmem:[%s8 + $0x1a8] sm:$0xf]
      %v7760 = vld [vmem:[%s8 + $0x1ac] sm:$0xf]
      %v7761 = vld [vmem:[%s8 + $0x1b0] sm:$0xf]
      %v7762 = vld [vmem:[%s8 + $0x1b4] sm:$0xf]
      %v7763 = vld [vmem:[%s8 + $0x1b8] sm:$0xf]
      %v7764 = vld [vmem:[%s8 + $0x1bc] sm:$0xf]
      %v7773 = vunpack.c.l.b16 %v7757
      %v7774 = vunpack.c.l.b16 %v7758
      %v7775 = vunpack.c.l.b16 %v7759
      %v7776 = vunpack.c.l.b16 %v7760
      %v7777 = vunpack.c.l.b16 %v7761
      %v7778 = vunpack.c.l.b16 %v7762
      %v7779 = vunpack.c.l.b16 %v7763
      %v7780 = vunpack.c.l.b16 %v7764
      %v7781 = vpack.c.b16 %v7774, %v7773
      %v7782 = vpack.c.b16 %v7776, %v7775
      %v7783 = vpack.c.b16 %v7778, %v7777
      %v7784 = vpack.c.b16 %v7780, %v7779
      %v7790 = vsel %vm2570, %v7756, 0
      %7792 = vmatprep.subr.bf16.mxu0 0
      %7793 = vmatpush1.bf16.msra.mxu0 0
      %7794 = vmatprep.subr.bf16.mxu0 0
      %7795 = vmatpush1.bf16.msra.mxu0 0
      %7796 = vmatprep.subr.bf16.mxu0 0
      %7797 = vmatpush1.bf16.msra.mxu0 0
      %7798 = vmatprep.subr.bf16.mxu0 0
      %7799 = vmatpush1.bf16.msra.mxu0 0
      %7800 = vmatprep.subr.bf16.mxu0 0
      %7801 = vmatpush1.bf16.msra.mxu0 %v7784
      %7802 = vmatprep.subr.bf16.mxu0 0
      %7803 = vmatpush1.bf16.msra.mxu0 %v7783
      %7804 = vmatprep.subr.bf16.mxu0 0
      %7805 = vmatpush1.bf16.msra.mxu0 %v7782
      %7806 = vmatprep.subr.bf16.mxu0 0
      %7807 = vmatpush1.bf16.msra.mxu0 %v7781
      %7808 = vmatprep.subr.bf16.mxu0 0
      %7809 = vmatpush2.bf16.msra.mxu0 0
      %7810 = vmatprep.subr.bf16.mxu0 0
      %7811 = vmatpush2.bf16.msra.mxu0 0
      %7812 = vmatprep.subr.bf16.mxu0 0
      %7813 = vmatpush2.bf16.msra.mxu0 0
      %7814 = vmatprep.subr.bf16.mxu0 0
      %7815 = vmatpush2.bf16.msra.mxu0 0
      %7816 = vmatprep.subr.bf16.mxu0 0
      %7817 = vmatpush2.bf16.msra.mxu0 0
      %7818 = vmatprep.subr.bf16.mxu0 0
      %7819 = vmatpush2.bf16.msra.mxu0 0
      %7820 = vmatprep.subr.bf16.mxu0 0
      %7821 = vmatpush2.bf16.msra.mxu0 0
      %7822 = vmatprep.subr.bf16.mxu0 0
      %7823 = vmatpush2.bf16.msra.mxu0 0
      %7824 = vmatprep.mubr.bf16.mxu0 0
      %7825 = vmatmul.mubr.bf16.gmra.mxu0 %v7790
      %v7826 = vpop.f32.mrf.mxu0
      %v7827 = vadd.f32 0.0, %v7826
      %v7828 = vpop.f32.mrf.mxu0
      %v7829 = vpop.f32.mrf.mxu0
      %v7830 = vpop.f32.mrf.mxu0
      %7831 = vdwg.mxu0
      %v7832 = vadd.f32 %v7710, %v7827
      %s7833 = scalar_lea.vmem %s12, 28
      %v7834 = vld [vmem:[%s7833] sm:$0x3]
      %v7836 = vsel %vm6128, %v7834, 0
      %7838 = vmatprep.subr.bf16.mxu0 0
      %7839 = vmatpush1.bf16.msra.mxu0 0
      %7840 = vmatprep.subr.bf16.mxu0 0
      %7841 = vmatpush1.bf16.msra.mxu0 0
      %7842 = vmatprep.subr.bf16.mxu0 0
      %7843 = vmatpush1.bf16.msra.mxu0 0
      %7844 = vmatprep.subr.bf16.mxu0 0
      %7845 = vmatpush1.bf16.msra.mxu0 0
      %7846 = vmatprep.subr.bf16.mxu0 0
      %7847 = vmatpush1.bf16.msra.mxu0 0
      %7848 = vmatprep.subr.bf16.mxu0 0
      %7849 = vmatpush1.bf16.msra.mxu0 0
      %7850 = vmatprep.subr.bf16.mxu0 0
      %7851 = vmatpush1.bf16.msra.mxu0 0
      %7852 = vmatprep.subr.bf16.mxu0 0
      %7853 = vmatpush1.bf16.msra.mxu0 %v6126
      %7854 = vmatprep.subr.bf16.mxu0 0
      %7855 = vmatpush2.bf16.msra.mxu0 0
      %7856 = vmatprep.subr.bf16.mxu0 0
      %7857 = vmatpush2.bf16.msra.mxu0 0
      %7858 = vmatprep.subr.bf16.mxu0 0
      %7859 = vmatpush2.bf16.msra.mxu0 0
      %7860 = vmatprep.subr.bf16.mxu0 0
      %7861 = vmatpush2.bf16.msra.mxu0 0
      %7862 = vmatprep.subr.bf16.mxu0 0
      %7863 = vmatpush2.bf16.msra.mxu0 0
      %7864 = vmatprep.subr.bf16.mxu0 0
      %7865 = vmatpush2.bf16.msra.mxu0 0
      %7866 = vmatprep.subr.bf16.mxu0 0
      %7867 = vmatpush2.bf16.msra.mxu0 0
      %7868 = vmatprep.subr.bf16.mxu0 0
      %7869 = vmatpush2.bf16.msra.mxu0 0
      %7870 = vmatprep.mubr.bf16.mxu0 0
      %7871 = vmatmul.mubr.bf16.gmra.mxu0 %v7836
      %v7872 = vpop.f32.mrf.mxu0
      %v7873 = vadd.f32 0.0, %v7872
      %v7874 = vpop.f32.mrf.mxu0
      %v7875 = vpop.f32.mrf.mxu0
      %v7876 = vpop.f32.mrf.mxu0
      %7877 = vdwg.mxu0
      %v7878 = vpack.c.bf16 %v7873, %v7873
      %v7879 = vld [vmem:[%s8 + $0x1c0] sm:$0xf]
      %v7880 = vld [vmem:[%s8 + $0x1c4] sm:$0xf]
      %v7881 = vld [vmem:[%s8 + $0x1c8] sm:$0xf]
      %v7882 = vld [vmem:[%s8 + $0x1cc] sm:$0xf]
      %v7883 = vld [vmem:[%s8 + $0x1d0] sm:$0xf]
      %v7884 = vld [vmem:[%s8 + $0x1d4] sm:$0xf]
      %v7885 = vld [vmem:[%s8 + $0x1d8] sm:$0xf]
      %v7886 = vld [vmem:[%s8 + $0x1dc] sm:$0xf]
      %v7895 = vunpack.c.l.b16 %v7879
      %v7896 = vunpack.c.l.b16 %v7880
      %v7897 = vunpack.c.l.b16 %v7881
      %v7898 = vunpack.c.l.b16 %v7882
      %v7899 = vunpack.c.l.b16 %v7883
      %v7900 = vunpack.c.l.b16 %v7884
      %v7901 = vunpack.c.l.b16 %v7885
      %v7902 = vunpack.c.l.b16 %v7886
      %v7903 = vpack.c.b16 %v7896, %v7895
      %v7904 = vpack.c.b16 %v7898, %v7897
      %v7905 = vpack.c.b16 %v7900, %v7899
      %v7906 = vpack.c.b16 %v7902, %v7901
      %v7912 = vsel %vm2570, %v7878, 0
      %7914 = vmatprep.subr.bf16.mxu0 0
      %7915 = vmatpush1.bf16.msra.mxu0 0
      %7916 = vmatprep.subr.bf16.mxu0 0
      %7917 = vmatpush1.bf16.msra.mxu0 0
      %7918 = vmatprep.subr.bf16.mxu0 0
      %7919 = vmatpush1.bf16.msra.mxu0 0
      %7920 = vmatprep.subr.bf16.mxu0 0
      %7921 = vmatpush1.bf16.msra.mxu0 0
      %7922 = vmatprep.subr.bf16.mxu0 0
      %7923 = vmatpush1.bf16.msra.mxu0 %v7906
      %7924 = vmatprep.subr.bf16.mxu0 0
      %7925 = vmatpush1.bf16.msra.mxu0 %v7905
      %7926 = vmatprep.subr.bf16.mxu0 0
      %7927 = vmatpush1.bf16.msra.mxu0 %v7904
      %7928 = vmatprep.subr.bf16.mxu0 0
      %7929 = vmatpush1.bf16.msra.mxu0 %v7903
      %7930 = vmatprep.subr.bf16.mxu0 0
      %7931 = vmatpush2.bf16.msra.mxu0 0
      %7932 = vmatprep.subr.bf16.mxu0 0
      %7933 = vmatpush2.bf16.msra.mxu0 0
      %7934 = vmatprep.subr.bf16.mxu0 0
      %7935 = vmatpush2.bf16.msra.mxu0 0
      %7936 = vmatprep.subr.bf16.mxu0 0
      %7937 = vmatpush2.bf16.msra.mxu0 0
      %7938 = vmatprep.subr.bf16.mxu0 0
      %7939 = vmatpush2.bf16.msra.mxu0 0
      %7940 = vmatprep.subr.bf16.mxu0 0
      %7941 = vmatpush2.bf16.msra.mxu0 0
      %7942 = vmatprep.subr.bf16.mxu0 0
      %7943 = vmatpush2.bf16.msra.mxu0 0
      %7944 = vmatprep.subr.bf16.mxu0 0
      %7945 = vmatpush2.bf16.msra.mxu0 0
      %7946 = vmatprep.mubr.bf16.mxu0 0
      %7947 = vmatmul.mubr.bf16.gmra.mxu0 %v7912
      %v7948 = vpop.f32.mrf.mxu0
      %v7949 = vadd.f32 0.0, %v7948
      %v7950 = vpop.f32.mrf.mxu0
      %v7951 = vpop.f32.mrf.mxu0
      %v7952 = vpop.f32.mrf.mxu0
      %7953 = vdwg.mxu0
      %v7954 = vadd.f32 %v7832, %v7949
      %s7955 = scalar_lea.vmem %s12, 30
      %v7956 = vld [vmem:[%s7955] sm:$0x3]
      %v7958 = vsel %vm6128, %v7956, 0
      %7960 = vmatprep.subr.bf16.mxu0 0
      %7961 = vmatpush1.bf16.msra.mxu0 0
      %7962 = vmatprep.subr.bf16.mxu0 0
      %7963 = vmatpush1.bf16.msra.mxu0 0
      %7964 = vmatprep.subr.bf16.mxu0 0
      %7965 = vmatpush1.bf16.msra.mxu0 0
      %7966 = vmatprep.subr.bf16.mxu0 0
      %7967 = vmatpush1.bf16.msra.mxu0 0
      %7968 = vmatprep.subr.bf16.mxu0 0
      %7969 = vmatpush1.bf16.msra.mxu0 0
      %7970 = vmatprep.subr.bf16.mxu0 0
      %7971 = vmatpush1.bf16.msra.mxu0 0
      %7972 = vmatprep.subr.bf16.mxu0 0
      %7973 = vmatpush1.bf16.msra.mxu0 0
      %7974 = vmatprep.subr.bf16.mxu0 0
      %7975 = vmatpush1.bf16.msra.mxu0 %v6126
      %7976 = vmatprep.subr.bf16.mxu0 0
      %7977 = vmatpush2.bf16.msra.mxu0 0
      %7978 = vmatprep.subr.bf16.mxu0 0
      %7979 = vmatpush2.bf16.msra.mxu0 0
      %7980 = vmatprep.subr.bf16.mxu0 0
      %7981 = vmatpush2.bf16.msra.mxu0 0
      %7982 = vmatprep.subr.bf16.mxu0 0
      %7983 = vmatpush2.bf16.msra.mxu0 0
      %7984 = vmatprep.subr.bf16.mxu0 0
      %7985 = vmatpush2.bf16.msra.mxu0 0
      %7986 = vmatprep.subr.bf16.mxu0 0
      %7987 = vmatpush2.bf16.msra.mxu0 0
      %7988 = vmatprep.subr.bf16.mxu0 0
      %7989 = vmatpush2.bf16.msra.mxu0 0
      %7990 = vmatprep.subr.bf16.mxu0 0
      %7991 = vmatpush2.bf16.msra.mxu0 0
      %7992 = vmatprep.mubr.bf16.mxu0 0
      %7993 = vmatmul.mubr.bf16.gmra.mxu0 %v7958
      %v7994 = vpop.f32.mrf.mxu0
      %v7995 = vadd.f32 0.0, %v7994
      %v7996 = vpop.f32.mrf.mxu0
      %v7997 = vpop.f32.mrf.mxu0
      %v7998 = vpop.f32.mrf.mxu0
      %7999 = vdwg.mxu0
      %v8000 = vpack.c.bf16 %v7995, %v7995
      %v8001 = vld [vmem:[%s8 + $0x1e0] sm:$0xf]
      %v8002 = vld [vmem:[%s8 + $0x1e4] sm:$0xf]
      %v8003 = vld [vmem:[%s8 + $0x1e8] sm:$0xf]
      %v8004 = vld [vmem:[%s8 + $0x1ec] sm:$0xf]
      %v8005 = vld [vmem:[%s8 + $0x1f0] sm:$0xf]
      %v8006 = vld [vmem:[%s8 + $0x1f4] sm:$0xf]
      %v8007 = vld [vmem:[%s8 + $0x1f8] sm:$0xf]
      %v8008 = vld [vmem:[%s8 + $0x1fc] sm:$0xf]
      %v8017 = vunpack.c.l.b16 %v8001
      %v8018 = vunpack.c.l.b16 %v8002
      %v8019 = vunpack.c.l.b16 %v8003
      %v8020 = vunpack.c.l.b16 %v8004
      %v8021 = vunpack.c.l.b16 %v8005
      %v8022 = vunpack.c.l.b16 %v8006
      %v8023 = vunpack.c.l.b16 %v8007
      %v8024 = vunpack.c.l.b16 %v8008
      %v8025 = vpack.c.b16 %v8018, %v8017
      %v8026 = vpack.c.b16 %v8020, %v8019
      %v8027 = vpack.c.b16 %v8022, %v8021
      %v8028 = vpack.c.b16 %v8024, %v8023
      %v8034 = vsel %vm2570, %v8000, 0
      %8036 = vmatprep.subr.bf16.mxu0 0
      %8037 = vmatpush1.bf16.msra.mxu0 0
      %8038 = vmatprep.subr.bf16.mxu0 0
      %8039 = vmatpush1.bf16.msra.mxu0 0
      %8040 = vmatprep.subr.bf16.mxu0 0
      %8041 = vmatpush1.bf16.msra.mxu0 0
      %8042 = vmatprep.subr.bf16.mxu0 0
      %8043 = vmatpush1.bf16.msra.mxu0 0
      %8044 = vmatprep.subr.bf16.mxu0 0
      %8045 = vmatpush1.bf16.msra.mxu0 %v8028
      %8046 = vmatprep.subr.bf16.mxu0 0
      %8047 = vmatpush1.bf16.msra.mxu0 %v8027
      %8048 = vmatprep.subr.bf16.mxu0 0
      %8049 = vmatpush1.bf16.msra.mxu0 %v8026
      %8050 = vmatprep.subr.bf16.mxu0 0
      %8051 = vmatpush1.bf16.msra.mxu0 %v8025
      %8052 = vmatprep.subr.bf16.mxu0 0
      %8053 = vmatpush2.bf16.msra.mxu0 0
      %8054 = vmatprep.subr.bf16.mxu0 0
      %8055 = vmatpush2.bf16.msra.mxu0 0
      %8056 = vmatprep.subr.bf16.mxu0 0
      %8057 = vmatpush2.bf16.msra.mxu0 0
      %8058 = vmatprep.subr.bf16.mxu0 0
      %8059 = vmatpush2.bf16.msra.mxu0 0
      %8060 = vmatprep.subr.bf16.mxu0 0
      %8061 = vmatpush2.bf16.msra.mxu0 0
      %8062 = vmatprep.subr.bf16.mxu0 0
      %8063 = vmatpush2.bf16.msra.mxu0 0
      %8064 = vmatprep.subr.bf16.mxu0 0
      %8065 = vmatpush2.bf16.msra.mxu0 0
      %8066 = vmatprep.subr.bf16.mxu0 0
      %8067 = vmatpush2.bf16.msra.mxu0 0
      %8068 = vmatprep.mubr.bf16.mxu0 0
      %8069 = vmatmul.mubr.bf16.gmra.mxu0 %v8034
      %v8070 = vpop.f32.mrf.mxu0
      %v8071 = vadd.f32 0.0, %v8070
      %v8072 = vpop.f32.mrf.mxu0
      %v8073 = vpop.f32.mrf.mxu0
      %v8074 = vpop.f32.mrf.mxu0
      %8075 = vdwg.mxu0
      %v8076 = vadd.f32 %v7954, %v8071
      %v8077 = vld [vmem:[%s9] sm:$0x1]
      %v8079 = vlaneseq
      %v8080 = vshrl.u32 %v8079, 7
      %v8081 = vsub.s32 0, %v8080
      %v8082 = vrot.slane %v8077, %v8081
      %v8084 = vadd.f32 %v8076, %v8082
      %vm8085 = vcmask 519168
      %v8086 = vsel %vm8085, %v8084, 0.0
      %v8087 = vrot.slane %v8086, 4
      %v8088 = vadd.f32 %v8086, %v8087
      %v8089 = vrot.slane %v8088, 2
      %v8090 = vadd.f32 %v8088, %v8089
      %v8091 = vrot.slane %v8090, 1
      %v8092 = vadd.f32 %v8090, %v8091
      %v8093 = vrcp.pop 4.0
      %v8094 = vmul.f32 %v8092, %v8093
      %v8095 = vsub.f32 %v8084, %v8094
      %v8096 = vmul.f32 %v8095, %v8095
      %v8097 = vsel %vm8085, %v8096, 0.0
      %v8098 = vrot.slane %v8097, 4
      %v8099 = vadd.f32 %v8097, %v8098
      %v8100 = vrot.slane %v8099, 2
      %v8101 = vadd.f32 %v8099, %v8100
      %v8102 = vrot.slane %v8101, 1
      %v8103 = vadd.f32 %v8101, %v8102
      %v8104 = vmul.f32 %v8103, %v8093
      %v8105 = vadd.f32 %v8104, 1e-05
      %v8106 = vrsqrt.pop %v8105
      %v8107 = vmul.f32 %v8095, %v8106
      %vm8108 = vcmp.gt.f32.partialorder %v8107, 0.0
      %v8109 = vmul.f32 %v8107, 0.1
      %v8110 = vsel %vm8108, %v8107, %v8109
      %v8111 = vld [vmem:[%s672] sm:$0x1]
      %v8112 = vld [vmem:[%s13] sm:$0xff]
      %v8113 = vld [vmem:[%s13 + $0x8] sm:$0xff]
      %v8114 = vld [vmem:[%s13 + $0x10] sm:$0xff]
      %v8115 = vld [vmem:[%s13 + $0x18] sm:$0xff]
      %v8116 = vld [vmem:[%s13 + $0x20] sm:$0xff]
      %v8117 = vld [vmem:[%s13 + $0x28] sm:$0xff]
      %v8118 = vld [vmem:[%s13 + $0x30] sm:$0xff]
      %v8119 = vld [vmem:[%s13 + $0x38] sm:$0xff]
      %v8120 = vld [vmem:[%s13 + $0x40] sm:$0xff]
      %v8121 = vld [vmem:[%s13 + $0x48] sm:$0xff]
      %v8122 = vld [vmem:[%s13 + $0x50] sm:$0xff]
      %v8123 = vld [vmem:[%s13 + $0x58] sm:$0xff]
      %v8124 = vld [vmem:[%s13 + $0x60] sm:$0xff]
      %v8125 = vld [vmem:[%s13 + $0x68] sm:$0xff]
      %v8126 = vld [vmem:[%s13 + $0x70] sm:$0xff]
      %v8127 = vld [vmem:[%s13 + $0x78] sm:$0xff]
      %v8128 = vld [vmem:[%s13 + $0x80] sm:$0xff]
      %v8129 = vld [vmem:[%s13 + $0x88] sm:$0xff]
      %v8130 = vld [vmem:[%s13 + $0x90] sm:$0xff]
      %v8131 = vld [vmem:[%s13 + $0x98] sm:$0xff]
      %v8132 = vld [vmem:[%s13 + $0xa0] sm:$0xff]
      %v8133 = vld [vmem:[%s13 + $0xa8] sm:$0xff]
      %v8134 = vld [vmem:[%s13 + $0xb0] sm:$0xff]
      %v8135 = vld [vmem:[%s13 + $0xb8] sm:$0xff]
      %v8136 = vld [vmem:[%s13 + $0xc0] sm:$0xff]
      %v8137 = vld [vmem:[%s13 + $0xc8] sm:$0xff]
      %v8138 = vld [vmem:[%s13 + $0xd0] sm:$0xff]
      %v8139 = vld [vmem:[%s13 + $0xd8] sm:$0xff]
      %v8140 = vld [vmem:[%s13 + $0xe0] sm:$0xff]
      %v8141 = vld [vmem:[%s13 + $0xe8] sm:$0xff]
      %v8142 = vld [vmem:[%s13 + $0xf0] sm:$0xff]
      %v8143 = vld [vmem:[%s13 + $0xf8] sm:$0xff]
      %v8144 = vld [vmem:[%s14] sm:$0xf]
      %v8177 = vunpack.c.l.b16 %v8112
      %v8178 = vunpack.c.h.b16 %v8112
      %v8179 = vunpack.c.l.b16 %v8113
      %v8180 = vunpack.c.h.b16 %v8113
      %v8181 = vunpack.c.l.b16 %v8114
      %v8182 = vunpack.c.h.b16 %v8114
      %v8183 = vunpack.c.l.b16 %v8115
      %v8184 = vunpack.c.h.b16 %v8115
      %v8185 = vunpack.c.l.b16 %v8116
      %v8186 = vunpack.c.h.b16 %v8116
      %v8187 = vunpack.c.l.b16 %v8117
      %v8188 = vunpack.c.h.b16 %v8117
      %v8189 = vunpack.c.l.b16 %v8118
      %v8190 = vunpack.c.h.b16 %v8118
      %v8191 = vunpack.c.l.b16 %v8119
      %v8192 = vunpack.c.h.b16 %v8119
      %v8193 = vunpack.c.l.b16 %v8120
      %v8194 = vunpack.c.h.b16 %v8120
      %v8195 = vunpack.c.l.b16 %v8121
      %v8196 = vunpack.c.h.b16 %v8121
      %v8197 = vunpack.c.l.b16 %v8122
      %v8198 = vunpack.c.h.b16 %v8122
      %v8199 = vunpack.c.l.b16 %v8123
      %v8200 = vunpack.c.h.b16 %v8123
      %v8201 = vunpack.c.l.b16 %v8124
      %v8202 = vunpack.c.h.b16 %v8124
      %v8203 = vunpack.c.l.b16 %v8125
      %v8204 = vunpack.c.h.b16 %v8125
      %v8205 = vunpack.c.l.b16 %v8126
      %v8206 = vunpack.c.h.b16 %v8126
      %v8207 = vunpack.c.l.b16 %v8127
      %v8208 = vunpack.c.h.b16 %v8127
      %v8209 = vunpack.c.l.b16 %v8128
      %v8210 = vunpack.c.h.b16 %v8128
      %v8211 = vunpack.c.l.b16 %v8129
      %v8212 = vunpack.c.h.b16 %v8129
      %v8213 = vunpack.c.l.b16 %v8130
      %v8214 = vunpack.c.h.b16 %v8130
      %v8215 = vunpack.c.l.b16 %v8131
      %v8216 = vunpack.c.h.b16 %v8131
      %v8217 = vunpack.c.l.b16 %v8132
      %v8218 = vunpack.c.h.b16 %v8132
      %v8219 = vunpack.c.l.b16 %v8133
      %v8220 = vunpack.c.h.b16 %v8133
      %v8221 = vunpack.c.l.b16 %v8134
      %v8222 = vunpack.c.h.b16 %v8134
      %v8223 = vunpack.c.l.b16 %v8135
      %v8224 = vunpack.c.h.b16 %v8135
      %v8225 = vunpack.c.l.b16 %v8136
      %v8226 = vunpack.c.h.b16 %v8136
      %v8227 = vunpack.c.l.b16 %v8137
      %v8228 = vunpack.c.h.b16 %v8137
      %v8229 = vunpack.c.l.b16 %v8138
      %v8230 = vunpack.c.h.b16 %v8138
      %v8231 = vunpack.c.l.b16 %v8139
      %v8232 = vunpack.c.h.b16 %v8139
      %v8233 = vunpack.c.l.b16 %v8140
      %v8234 = vunpack.c.h.b16 %v8140
      %v8235 = vunpack.c.l.b16 %v8141
      %v8236 = vunpack.c.h.b16 %v8141
      %v8237 = vunpack.c.l.b16 %v8142
      %v8238 = vunpack.c.h.b16 %v8142
      %v8239 = vunpack.c.l.b16 %v8143
      %v8240 = vunpack.c.h.b16 %v8143
      %v8241 = vpack.c.b16 %v8181, %v8177
      %v8242 = vpack.c.b16 %v8182, %v8178
      %v8243 = vpack.c.b16 %v8183, %v8179
      %v8244 = vpack.c.b16 %v8184, %v8180
      %v8245 = vpack.c.b16 %v8189, %v8185
      %v8246 = vpack.c.b16 %v8190, %v8186
      %v8247 = vpack.c.b16 %v8191, %v8187
      %v8248 = vpack.c.b16 %v8192, %v8188
      %v8249 = vpack.c.b16 %v8197, %v8193
      %v8250 = vpack.c.b16 %v8198, %v8194
      %v8251 = vpack.c.b16 %v8199, %v8195
      %v8252 = vpack.c.b16 %v8200, %v8196
      %v8253 = vpack.c.b16 %v8205, %v8201
      %v8254 = vpack.c.b16 %v8206, %v8202
      %v8255 = vpack.c.b16 %v8207, %v8203
      %v8256 = vpack.c.b16 %v8208, %v8204
      %v8257 = vpack.c.b16 %v8213, %v8209
      %v8258 = vpack.c.b16 %v8214, %v8210
      %v8259 = vpack.c.b16 %v8215, %v8211
      %v8260 = vpack.c.b16 %v8216, %v8212
      %v8261 = vpack.c.b16 %v8221, %v8217
      %v8262 = vpack.c.b16 %v8222, %v8218
      %v8263 = vpack.c.b16 %v8223, %v8219
      %v8264 = vpack.c.b16 %v8224, %v8220
      %v8265 = vpack.c.b16 %v8229, %v8225
      %v8266 = vpack.c.b16 %v8230, %v8226
      %v8267 = vpack.c.b16 %v8231, %v8227
      %v8268 = vpack.c.b16 %v8232, %v8228
      %v8269 = vpack.c.b16 %v8237, %v8233
      %v8270 = vpack.c.b16 %v8238, %v8234
      %v8271 = vpack.c.b16 %v8239, %v8235
      %v8272 = vpack.c.b16 %v8240, %v8236
      %v8306 = vlaneseq
      %v8307 = vshrl.u32 %v8306, 7
      %v8308 = vsub.s32 0, %v8307
      %v8309 = vrot.slane %v8144, %v8308
      %v8310 = vlaneseq
      %v8311 = vshrl.u32 %v8310, 7
      %v8312 = vsub.s32 1, %v8311
      %v8313 = vrot.slane %v8144, %v8312
      %v8314 = vlaneseq
      %v8315 = vshrl.u32 %v8314, 7
      %v8316 = vsub.s32 2, %v8315
      %v8317 = vrot.slane %v8144, %v8316
      %v8318 = vlaneseq
      %v8319 = vshrl.u32 %v8318, 7
      %v8320 = vsub.s32 3, %v8319
      %v8321 = vrot.slane %v8144, %v8320
      %8326 = vmatprep.subr.bf16.mxu0 %v8270
      %8327 = vmatpush1.bf16.msra.mxu0 %v8269
      %8328 = vmatprep.subr.bf16.mxu0 %v8266
      %8329 = vmatpush1.bf16.msra.mxu0 %v8265
      %8330 = vmatprep.subr.bf16.mxu0 %v8262
      %8331 = vmatpush1.bf16.msra.mxu0 %v8261
      %8332 = vmatprep.subr.bf16.mxu0 %v8258
      %8333 = vmatpush1.bf16.msra.mxu0 %v8257
      %8334 = vmatprep.subr.bf16.mxu0 %v8254
      %8335 = vmatpush1.bf16.msra.mxu0 %v8253
      %8336 = vmatprep.subr.bf16.mxu0 %v8250
      %8337 = vmatpush1.bf16.msra.mxu0 %v8249
      %8338 = vmatprep.subr.bf16.mxu0 %v8246
      %8339 = vmatpush1.bf16.msra.mxu0 %v8245
      %8340 = vmatprep.subr.bf16.mxu0 %v8242
      %8341 = vmatpush1.bf16.msra.mxu0 %v8241
      %8342 = vmatprep.subr.bf16.mxu0 0
      %8343 = vmatpush2.bf16.msra.mxu0 0
      %8344 = vmatprep.subr.bf16.mxu0 0
      %8345 = vmatpush2.bf16.msra.mxu0 0
      %8346 = vmatprep.subr.bf16.mxu0 0
      %8347 = vmatpush2.bf16.msra.mxu0 0
      %8348 = vmatprep.subr.bf16.mxu0 0
      %8349 = vmatpush2.bf16.msra.mxu0 0
      %8350 = vmatprep.subr.bf16.mxu0 0
      %8351 = vmatpush2.bf16.msra.mxu0 0
      %8352 = vmatprep.subr.bf16.mxu0 0
      %8353 = vmatpush2.bf16.msra.mxu0 0
      %8354 = vmatprep.subr.bf16.mxu0 0
      %8355 = vmatpush2.bf16.msra.mxu0 0
      %8356 = vmatprep.subr.bf16.mxu0 0
      %8357 = vmatpush2.bf16.msra.mxu0 0
      %8358 = vmatprep.mubr.bf16.mxu0 0
      %8359 = vmatmul.mubr.bf16.gmra.mxu0 %v8111
      %v8360 = vpop.f32.mrf.mxu0
      %v8361 = vadd.f32 %v8309, %v8360
      %v8362 = vpop.f32.mrf.mxu0
      %v8363 = vadd.f32 %v8313, %v8362
      %v8364 = vpop.f32.mrf.mxu0
      %v8365 = vpop.f32.mrf.mxu0
      %8366 = vdwg.mxu0
      %8367 = vmatprep.subr.bf16.mxu0 %v8272
      %8368 = vmatpush1.bf16.msra.mxu0 %v8271
      %8369 = vmatprep.subr.bf16.mxu0 %v8268
      %8370 = vmatpush1.bf16.msra.mxu0 %v8267
      %8371 = vmatprep.subr.bf16.mxu0 %v8264
      %8372 = vmatpush1.bf16.msra.mxu0 %v8263
      %8373 = vmatprep.subr.bf16.mxu0 %v8260
      %8374 = vmatpush1.bf16.msra.mxu0 %v8259
      %8375 = vmatprep.subr.bf16.mxu0 %v8256
      %8376 = vmatpush1.bf16.msra.mxu0 %v8255
      %8377 = vmatprep.subr.bf16.mxu0 %v8252
      %8378 = vmatpush1.bf16.msra.mxu0 %v8251
      %8379 = vmatprep.subr.bf16.mxu0 %v8248
      %8380 = vmatpush1.bf16.msra.mxu0 %v8247
      %8381 = vmatprep.subr.bf16.mxu0 %v8244
      %8382 = vmatpush1.bf16.msra.mxu0 %v8243
      %8383 = vmatprep.subr.bf16.mxu0 0
      %8384 = vmatpush2.bf16.msra.mxu0 0
      %8385 = vmatprep.subr.bf16.mxu0 0
      %8386 = vmatpush2.bf16.msra.mxu0 0
      %8387 = vmatprep.subr.bf16.mxu0 0
      %8388 = vmatpush2.bf16.msra.mxu0 0
      %8389 = vmatprep.subr.bf16.mxu0 0
      %8390 = vmatpush2.bf16.msra.mxu0 0
      %8391 = vmatprep.subr.bf16.mxu0 0
      %8392 = vmatpush2.bf16.msra.mxu0 0
      %8393 = vmatprep.subr.bf16.mxu0 0
      %8394 = vmatpush2.bf16.msra.mxu0 0
      %8395 = vmatprep.subr.bf16.mxu0 0
      %8396 = vmatpush2.bf16.msra.mxu0 0
      %8397 = vmatprep.subr.bf16.mxu0 0
      %8398 = vmatpush2.bf16.msra.mxu0 0
      %8399 = vmatprep.mubr.bf16.mxu0 0
      %8400 = vmatmul.mubr.bf16.gmra.mxu0 %v8111
      %v8401 = vpop.f32.mrf.mxu0
      %v8402 = vadd.f32 %v8317, %v8401
      %v8403 = vpop.f32.mrf.mxu0
      %v8404 = vadd.f32 %v8321, %v8403
      %v8405 = vpop.f32.mrf.mxu0
      %v8406 = vpop.f32.mrf.mxu0
      %8407 = vdwg.mxu0
      %v8408 = vpack.c.bf16 %v8361, %v8361
      %v8409 = vpack.c.bf16 %v8363, %v8363
      %v8410 = vpack.c.bf16 %v8402, %v8402
      %v8411 = vpack.c.bf16 %v8404, %v8404
      %v8412 = vld [vmem:[%s16] sm:$0xff]
      %v8413 = vld [vmem:[%s16 + $0x8] sm:$0xff]
      %v8414 = vld [vmem:[%s16 + $0x10] sm:$0xff]
      %v8415 = vld [vmem:[%s16 + $0x18] sm:$0xff]
      %v8416 = vld [vmem:[%s16 + $0x20] sm:$0xff]
      %v8417 = vld [vmem:[%s16 + $0x28] sm:$0xff]
      %v8418 = vld [vmem:[%s16 + $0x30] sm:$0xff]
      %v8419 = vld [vmem:[%s16 + $0x38] sm:$0xff]
      %v8420 = vld [vmem:[%s16 + $0x40] sm:$0xff]
      %v8421 = vld [vmem:[%s16 + $0x48] sm:$0xff]
      %v8422 = vld [vmem:[%s16 + $0x50] sm:$0xff]
      %v8423 = vld [vmem:[%s16 + $0x58] sm:$0xff]
      %v8424 = vld [vmem:[%s16 + $0x60] sm:$0xff]
      %v8425 = vld [vmem:[%s16 + $0x68] sm:$0xff]
      %v8426 = vld [vmem:[%s16 + $0x70] sm:$0xff]
      %v8427 = vld [vmem:[%s16 + $0x78] sm:$0xff]
      %v8428 = vld [vmem:[%s16 + $0x80] sm:$0xff]
      %v8429 = vld [vmem:[%s16 + $0x88] sm:$0xff]
      %v8430 = vld [vmem:[%s16 + $0x90] sm:$0xff]
      %v8431 = vld [vmem:[%s16 + $0x98] sm:$0xff]
      %v8432 = vld [vmem:[%s16 + $0xa0] sm:$0xff]
      %v8433 = vld [vmem:[%s16 + $0xa8] sm:$0xff]
      %v8434 = vld [vmem:[%s16 + $0xb0] sm:$0xff]
      %v8435 = vld [vmem:[%s16 + $0xb8] sm:$0xff]
      %v8436 = vld [vmem:[%s16 + $0xc0] sm:$0xff]
      %v8437 = vld [vmem:[%s16 + $0xc8] sm:$0xff]
      %v8438 = vld [vmem:[%s16 + $0xd0] sm:$0xff]
      %v8439 = vld [vmem:[%s16 + $0xd8] sm:$0xff]
      %v8440 = vld [vmem:[%s16 + $0xe0] sm:$0xff]
      %v8441 = vld [vmem:[%s16 + $0xe8] sm:$0xff]
      %v8442 = vld [vmem:[%s16 + $0xf0] sm:$0xff]
      %v8443 = vld [vmem:[%s16 + $0xf8] sm:$0xff]
      %v8444 = vld [vmem:[%s16 + $0x100] sm:$0xff]
      %v8445 = vld [vmem:[%s16 + $0x108] sm:$0xff]
      %v8446 = vld [vmem:[%s16 + $0x110] sm:$0xff]
      %v8447 = vld [vmem:[%s16 + $0x118] sm:$0xff]
      %v8448 = vld [vmem:[%s16 + $0x120] sm:$0xff]
      %v8449 = vld [vmem:[%s16 + $0x128] sm:$0xff]
      %v8450 = vld [vmem:[%s16 + $0x130] sm:$0xff]
      %v8451 = vld [vmem:[%s16 + $0x138] sm:$0xff]
      %v8452 = vld [vmem:[%s16 + $0x140] sm:$0xff]
      %v8453 = vld [vmem:[%s16 + $0x148] sm:$0xff]
      %v8454 = vld [vmem:[%s16 + $0x150] sm:$0xff]
      %v8455 = vld [vmem:[%s16 + $0x158] sm:$0xff]
      %v8456 = vld [vmem:[%s16 + $0x160] sm:$0xff]
      %v8457 = vld [vmem:[%s16 + $0x168] sm:$0xff]
      %v8458 = vld [vmem:[%s16 + $0x170] sm:$0xff]
      %v8459 = vld [vmem:[%s16 + $0x178] sm:$0xff]
      %v8460 = vld [vmem:[%s16 + $0x180] sm:$0xff]
      %v8461 = vld [vmem:[%s16 + $0x188] sm:$0xff]
      %v8462 = vld [vmem:[%s16 + $0x190] sm:$0xff]
      %v8463 = vld [vmem:[%s16 + $0x198] sm:$0xff]
      %v8464 = vld [vmem:[%s16 + $0x1a0] sm:$0xff]
      %v8465 = vld [vmem:[%s16 + $0x1a8] sm:$0xff]
      %v8466 = vld [vmem:[%s16 + $0x1b0] sm:$0xff]
      %v8467 = vld [vmem:[%s16 + $0x1b8] sm:$0xff]
      %v8468 = vld [vmem:[%s16 + $0x1c0] sm:$0xff]
      %v8469 = vld [vmem:[%s16 + $0x1c8] sm:$0xff]
      %v8470 = vld [vmem:[%s16 + $0x1d0] sm:$0xff]
      %v8471 = vld [vmem:[%s16 + $0x1d8] sm:$0xff]
      %v8472 = vld [vmem:[%s16 + $0x1e0] sm:$0xff]
      %v8473 = vld [vmem:[%s16 + $0x1e8] sm:$0xff]
      %v8474 = vld [vmem:[%s16 + $0x1f0] sm:$0xff]
      %v8475 = vld [vmem:[%s16 + $0x1f8] sm:$0xff]
      %v8476 = vld [vmem:[%s16 + $0x200] sm:$0xff]
      %v8477 = vld [vmem:[%s16 + $0x208] sm:$0xff]
      %v8478 = vld [vmem:[%s16 + $0x210] sm:$0xff]
      %v8479 = vld [vmem:[%s16 + $0x218] sm:$0xff]
      %v8480 = vld [vmem:[%s16 + $0x220] sm:$0xff]
      %v8481 = vld [vmem:[%s16 + $0x228] sm:$0xff]
      %v8482 = vld [vmem:[%s16 + $0x230] sm:$0xff]
      %v8483 = vld [vmem:[%s16 + $0x238] sm:$0xff]
      %v8484 = vld [vmem:[%s16 + $0x240] sm:$0xff]
      %v8485 = vld [vmem:[%s16 + $0x248] sm:$0xff]
      %v8486 = vld [vmem:[%s16 + $0x250] sm:$0xff]
      %v8487 = vld [vmem:[%s16 + $0x258] sm:$0xff]
      %v8488 = vld [vmem:[%s16 + $0x260] sm:$0xff]
      %v8489 = vld [vmem:[%s16 + $0x268] sm:$0xff]
      %v8490 = vld [vmem:[%s16 + $0x270] sm:$0xff]
      %v8491 = vld [vmem:[%s16 + $0x278] sm:$0xff]
      %v8492 = vld [vmem:[%s16 + $0x280] sm:$0xff]
      %v8493 = vld [vmem:[%s16 + $0x288] sm:$0xff]
      %v8494 = vld [vmem:[%s16 + $0x290] sm:$0xff]
      %v8495 = vld [vmem:[%s16 + $0x298] sm:$0xff]
      %v8496 = vld [vmem:[%s16 + $0x2a0] sm:$0xff]
      %v8497 = vld [vmem:[%s16 + $0x2a8] sm:$0xff]
      %v8498 = vld [vmem:[%s16 + $0x2b0] sm:$0xff]
      %v8499 = vld [vmem:[%s16 + $0x2b8] sm:$0xff]
      %v8500 = vld [vmem:[%s16 + $0x2c0] sm:$0xff]
      %v8501 = vld [vmem:[%s16 + $0x2c8] sm:$0xff]
      %v8502 = vld [vmem:[%s16 + $0x2d0] sm:$0xff]
      %v8503 = vld [vmem:[%s16 + $0x2d8] sm:$0xff]
      %v8504 = vld [vmem:[%s16 + $0x2e0] sm:$0xff]
      %v8505 = vld [vmem:[%s16 + $0x2e8] sm:$0xff]
      %v8506 = vld [vmem:[%s16 + $0x2f0] sm:$0xff]
      %v8507 = vld [vmem:[%s16 + $0x2f8] sm:$0xff]
      %v8508 = vld [vmem:[%s16 + $0x300] sm:$0xff]
      %v8509 = vld [vmem:[%s16 + $0x308] sm:$0xff]
      %v8510 = vld [vmem:[%s16 + $0x310] sm:$0xff]
      %v8511 = vld [vmem:[%s16 + $0x318] sm:$0xff]
      %v8512 = vld [vmem:[%s16 + $0x320] sm:$0xff]
      %v8513 = vld [vmem:[%s16 + $0x328] sm:$0xff]
      %v8514 = vld [vmem:[%s16 + $0x330] sm:$0xff]
      %v8515 = vld [vmem:[%s16 + $0x338] sm:$0xff]
      %v8516 = vld [vmem:[%s16 + $0x340] sm:$0xff]
      %v8517 = vld [vmem:[%s16 + $0x348] sm:$0xff]
      %v8518 = vld [vmem:[%s16 + $0x350] sm:$0xff]
      %v8519 = vld [vmem:[%s16 + $0x358] sm:$0xff]
      %v8520 = vld [vmem:[%s16 + $0x360] sm:$0xff]
      %v8521 = vld [vmem:[%s16 + $0x368] sm:$0xff]
      %v8522 = vld [vmem:[%s16 + $0x370] sm:$0xff]
      %v8523 = vld [vmem:[%s16 + $0x378] sm:$0xff]
      %v8524 = vld [vmem:[%s16 + $0x380] sm:$0xff]
      %v8525 = vld [vmem:[%s16 + $0x388] sm:$0xff]
      %v8526 = vld [vmem:[%s16 + $0x390] sm:$0xff]
      %v8527 = vld [vmem:[%s16 + $0x398] sm:$0xff]
      %v8528 = vld [vmem:[%s16 + $0x3a0] sm:$0xff]
      %v8529 = vld [vmem:[%s16 + $0x3a8] sm:$0xff]
      %v8530 = vld [vmem:[%s16 + $0x3b0] sm:$0xff]
      %v8531 = vld [vmem:[%s16 + $0x3b8] sm:$0xff]
      %v8532 = vld [vmem:[%s16 + $0x3c0] sm:$0xff]
      %v8533 = vld [vmem:[%s16 + $0x3c8] sm:$0xff]
      %v8534 = vld [vmem:[%s16 + $0x3d0] sm:$0xff]
      %v8535 = vld [vmem:[%s16 + $0x3d8] sm:$0xff]
      %v8536 = vld [vmem:[%s16 + $0x3e0] sm:$0xff]
      %v8537 = vld [vmem:[%s16 + $0x3e8] sm:$0xff]
      %v8538 = vld [vmem:[%s16 + $0x3f0] sm:$0xff]
      %v8539 = vld [vmem:[%s16 + $0x3f8] sm:$0xff]
      %v8540 = vld [vmem:[%s16 + $0x400] sm:$0xff]
      %v8541 = vld [vmem:[%s16 + $0x408] sm:$0xff]
      %v8542 = vld [vmem:[%s16 + $0x410] sm:$0xff]
      %v8543 = vld [vmem:[%s16 + $0x418] sm:$0xff]
      %v8544 = vld [vmem:[%s16 + $0x420] sm:$0xff]
      %v8545 = vld [vmem:[%s16 + $0x428] sm:$0xff]
      %v8546 = vld [vmem:[%s16 + $0x430] sm:$0xff]
      %v8547 = vld [vmem:[%s16 + $0x438] sm:$0xff]
      %v8548 = vld [vmem:[%s16 + $0x440] sm:$0xff]
      %v8549 = vld [vmem:[%s16 + $0x448] sm:$0xff]
      %v8550 = vld [vmem:[%s16 + $0x450] sm:$0xff]
      %v8551 = vld [vmem:[%s16 + $0x458] sm:$0xff]
      %v8552 = vld [vmem:[%s16 + $0x460] sm:$0xff]
      %v8553 = vld [vmem:[%s16 + $0x468] sm:$0xff]
      %v8554 = vld [vmem:[%s16 + $0x470] sm:$0xff]
      %v8555 = vld [vmem:[%s16 + $0x478] sm:$0xff]
      %v8556 = vld [vmem:[%s16 + $0x480] sm:$0xff]
      %v8557 = vld [vmem:[%s16 + $0x488] sm:$0xff]
      %v8558 = vld [vmem:[%s16 + $0x490] sm:$0xff]
      %v8559 = vld [vmem:[%s16 + $0x498] sm:$0xff]
      %v8560 = vld [vmem:[%s16 + $0x4a0] sm:$0xff]
      %v8561 = vld [vmem:[%s16 + $0x4a8] sm:$0xff]
      %v8562 = vld [vmem:[%s16 + $0x4b0] sm:$0xff]
      %v8563 = vld [vmem:[%s16 + $0x4b8] sm:$0xff]
      %v8564 = vld [vmem:[%s16 + $0x4c0] sm:$0xff]
      %v8565 = vld [vmem:[%s16 + $0x4c8] sm:$0xff]
      %v8566 = vld [vmem:[%s16 + $0x4d0] sm:$0xff]
      %v8567 = vld [vmem:[%s16 + $0x4d8] sm:$0xff]
      %v8568 = vld [vmem:[%s16 + $0x4e0] sm:$0xff]
      %v8569 = vld [vmem:[%s16 + $0x4e8] sm:$0xff]
      %v8570 = vld [vmem:[%s16 + $0x4f0] sm:$0xff]
      %v8571 = vld [vmem:[%s16 + $0x4f8] sm:$0xff]
      %v8572 = vld [vmem:[%s16 + $0x500] sm:$0xff]
      %v8573 = vld [vmem:[%s16 + $0x508] sm:$0xff]
      %v8574 = vld [vmem:[%s16 + $0x510] sm:$0xff]
      %v8575 = vld [vmem:[%s16 + $0x518] sm:$0xff]
      %v8576 = vld [vmem:[%s16 + $0x520] sm:$0xff]
      %v8577 = vld [vmem:[%s16 + $0x528] sm:$0xff]
      %v8578 = vld [vmem:[%s16 + $0x530] sm:$0xff]
      %v8579 = vld [vmem:[%s16 + $0x538] sm:$0xff]
      %v8580 = vld [vmem:[%s16 + $0x540] sm:$0xff]
      %v8581 = vld [vmem:[%s16 + $0x548] sm:$0xff]
      %v8582 = vld [vmem:[%s16 + $0x550] sm:$0xff]
      %v8583 = vld [vmem:[%s16 + $0x558] sm:$0xff]
      %v8584 = vld [vmem:[%s16 + $0x560] sm:$0xff]
      %v8585 = vld [vmem:[%s16 + $0x568] sm:$0xff]
      %v8586 = vld [vmem:[%s16 + $0x570] sm:$0xff]
      %v8587 = vld [vmem:[%s16 + $0x578] sm:$0xff]
      %v8588 = vld [vmem:[%s16 + $0x580] sm:$0xff]
      %v8589 = vld [vmem:[%s16 + $0x588] sm:$0xff]
      %v8590 = vld [vmem:[%s16 + $0x590] sm:$0xff]
      %v8591 = vld [vmem:[%s16 + $0x598] sm:$0xff]
      %v8592 = vld [vmem:[%s16 + $0x5a0] sm:$0xff]
      %v8593 = vld [vmem:[%s16 + $0x5a8] sm:$0xff]
      %v8594 = vld [vmem:[%s16 + $0x5b0] sm:$0xff]
      %v8595 = vld [vmem:[%s16 + $0x5b8] sm:$0xff]
      %v8596 = vld [vmem:[%s16 + $0x5c0] sm:$0xff]
      %v8597 = vld [vmem:[%s16 + $0x5c8] sm:$0xff]
      %v8598 = vld [vmem:[%s16 + $0x5d0] sm:$0xff]
      %v8599 = vld [vmem:[%s16 + $0x5d8] sm:$0xff]
      %v8600 = vld [vmem:[%s16 + $0x5e0] sm:$0xff]
      %v8601 = vld [vmem:[%s16 + $0x5e8] sm:$0xff]
      %v8602 = vld [vmem:[%s16 + $0x5f0] sm:$0xff]
      %v8603 = vld [vmem:[%s16 + $0x5f8] sm:$0xff]
      %v8604 = vld [vmem:[%s16 + $0x600] sm:$0xff]
      %v8605 = vld [vmem:[%s16 + $0x608] sm:$0xff]
      %v8606 = vld [vmem:[%s16 + $0x610] sm:$0xff]
      %v8607 = vld [vmem:[%s16 + $0x618] sm:$0xff]
      %v8608 = vld [vmem:[%s16 + $0x620] sm:$0xff]
      %v8609 = vld [vmem:[%s16 + $0x628] sm:$0xff]
      %v8610 = vld [vmem:[%s16 + $0x630] sm:$0xff]
      %v8611 = vld [vmem:[%s16 + $0x638] sm:$0xff]
      %v8612 = vld [vmem:[%s16 + $0x640] sm:$0xff]
      %v8613 = vld [vmem:[%s16 + $0x648] sm:$0xff]
      %v8614 = vld [vmem:[%s16 + $0x650] sm:$0xff]
      %v8615 = vld [vmem:[%s16 + $0x658] sm:$0xff]
      %v8616 = vld [vmem:[%s16 + $0x660] sm:$0xff]
      %v8617 = vld [vmem:[%s16 + $0x668] sm:$0xff]
      %v8618 = vld [vmem:[%s16 + $0x670] sm:$0xff]
      %v8619 = vld [vmem:[%s16 + $0x678] sm:$0xff]
      %v8620 = vld [vmem:[%s16 + $0x680] sm:$0xff]
      %v8621 = vld [vmem:[%s16 + $0x688] sm:$0xff]
      %v8622 = vld [vmem:[%s16 + $0x690] sm:$0xff]
      %v8623 = vld [vmem:[%s16 + $0x698] sm:$0xff]
      %v8624 = vld [vmem:[%s16 + $0x6a0] sm:$0xff]
      %v8625 = vld [vmem:[%s16 + $0x6a8] sm:$0xff]
      %v8626 = vld [vmem:[%s16 + $0x6b0] sm:$0xff]
      %v8627 = vld [vmem:[%s16 + $0x6b8] sm:$0xff]
      %v8628 = vld [vmem:[%s16 + $0x6c0] sm:$0xff]
      %v8629 = vld [vmem:[%s16 + $0x6c8] sm:$0xff]
      %v8630 = vld [vmem:[%s16 + $0x6d0] sm:$0xff]
      %v8631 = vld [vmem:[%s16 + $0x6d8] sm:$0xff]
      %v8632 = vld [vmem:[%s16 + $0x6e0] sm:$0xff]
      %v8633 = vld [vmem:[%s16 + $0x6e8] sm:$0xff]
      %v8634 = vld [vmem:[%s16 + $0x6f0] sm:$0xff]
      %v8635 = vld [vmem:[%s16 + $0x6f8] sm:$0xff]
      %v8636 = vld [vmem:[%s16 + $0x700] sm:$0xff]
      %v8637 = vld [vmem:[%s16 + $0x708] sm:$0xff]
      %v8638 = vld [vmem:[%s16 + $0x710] sm:$0xff]
      %v8639 = vld [vmem:[%s16 + $0x718] sm:$0xff]
      %v8640 = vld [vmem:[%s16 + $0x720] sm:$0xff]
      %v8641 = vld [vmem:[%s16 + $0x728] sm:$0xff]
      %v8642 = vld [vmem:[%s16 + $0x730] sm:$0xff]
      %v8643 = vld [vmem:[%s16 + $0x738] sm:$0xff]
      %v8644 = vld [vmem:[%s16 + $0x740] sm:$0xff]
      %v8645 = vld [vmem:[%s16 + $0x748] sm:$0xff]
      %v8646 = vld [vmem:[%s16 + $0x750] sm:$0xff]
      %v8647 = vld [vmem:[%s16 + $0x758] sm:$0xff]
      %v8648 = vld [vmem:[%s16 + $0x760] sm:$0xff]
      %v8649 = vld [vmem:[%s16 + $0x768] sm:$0xff]
      %v8650 = vld [vmem:[%s16 + $0x770] sm:$0xff]
      %v8651 = vld [vmem:[%s16 + $0x778] sm:$0xff]
      %v8652 = vld [vmem:[%s16 + $0x780] sm:$0xff]
      %v8653 = vld [vmem:[%s16 + $0x788] sm:$0xff]
      %v8654 = vld [vmem:[%s16 + $0x790] sm:$0xff]
      %v8655 = vld [vmem:[%s16 + $0x798] sm:$0xff]
      %v8656 = vld [vmem:[%s16 + $0x7a0] sm:$0xff]
      %v8657 = vld [vmem:[%s16 + $0x7a8] sm:$0xff]
      %v8658 = vld [vmem:[%s16 + $0x7b0] sm:$0xff]
      %v8659 = vld [vmem:[%s16 + $0x7b8] sm:$0xff]
      %v8660 = vld [vmem:[%s16 + $0x7c0] sm:$0xff]
      %v8661 = vld [vmem:[%s16 + $0x7c8] sm:$0xff]
      %v8662 = vld [vmem:[%s16 + $0x7d0] sm:$0xff]
      %v8663 = vld [vmem:[%s16 + $0x7d8] sm:$0xff]
      %v8664 = vld [vmem:[%s16 + $0x7e0] sm:$0xff]
      %v8665 = vld [vmem:[%s16 + $0x7e8] sm:$0xff]
      %v8666 = vld [vmem:[%s16 + $0x7f0] sm:$0xff]
      %v8667 = vld [vmem:[%s16 + $0x7f8] sm:$0xff]
      %v8668 = vld [vmem:[%s17] sm:$0xff]
      %v8925 = vunpack.c.l.b16 %v8412
      %v8926 = vunpack.c.h.b16 %v8412
      %v8927 = vunpack.c.l.b16 %v8413
      %v8928 = vunpack.c.h.b16 %v8413
      %v8929 = vunpack.c.l.b16 %v8414
      %v8930 = vunpack.c.h.b16 %v8414
      %v8931 = vunpack.c.l.b16 %v8415
      %v8932 = vunpack.c.h.b16 %v8415
      %v8933 = vunpack.c.l.b16 %v8416
      %v8934 = vunpack.c.h.b16 %v8416
      %v8935 = vunpack.c.l.b16 %v8417
      %v8936 = vunpack.c.h.b16 %v8417
      %v8937 = vunpack.c.l.b16 %v8418
      %v8938 = vunpack.c.h.b16 %v8418
      %v8939 = vunpack.c.l.b16 %v8419
      %v8940 = vunpack.c.h.b16 %v8419
      %v8941 = vunpack.c.l.b16 %v8420
      %v8942 = vunpack.c.h.b16 %v8420
      %v8943 = vunpack.c.l.b16 %v8421
      %v8944 = vunpack.c.h.b16 %v8421
      %v8945 = vunpack.c.l.b16 %v8422
      %v8946 = vunpack.c.h.b16 %v8422
      %v8947 = vunpack.c.l.b16 %v8423
      %v8948 = vunpack.c.h.b16 %v8423
      %v8949 = vunpack.c.l.b16 %v8424
      %v8950 = vunpack.c.h.b16 %v8424
      %v8951 = vunpack.c.l.b16 %v8425
      %v8952 = vunpack.c.h.b16 %v8425
      %v8953 = vunpack.c.l.b16 %v8426
      %v8954 = vunpack.c.h.b16 %v8426
      %v8955 = vunpack.c.l.b16 %v8427
      %v8956 = vunpack.c.h.b16 %v8427
      %v8957 = vunpack.c.l.b16 %v8428
      %v8958 = vunpack.c.h.b16 %v8428
      %v8959 = vunpack.c.l.b16 %v8429
      %v8960 = vunpack.c.h.b16 %v8429
      %v8961 = vunpack.c.l.b16 %v8430
      %v8962 = vunpack.c.h.b16 %v8430
      %v8963 = vunpack.c.l.b16 %v8431
      %v8964 = vunpack.c.h.b16 %v8431
      %v8965 = vunpack.c.l.b16 %v8432
      %v8966 = vunpack.c.h.b16 %v8432
      %v8967 = vunpack.c.l.b16 %v8433
      %v8968 = vunpack.c.h.b16 %v8433
      %v8969 = vunpack.c.l.b16 %v8434
      %v8970 = vunpack.c.h.b16 %v8434
      %v8971 = vunpack.c.l.b16 %v8435
      %v8972 = vunpack.c.h.b16 %v8435
      %v8973 = vunpack.c.l.b16 %v8436
      %v8974 = vunpack.c.h.b16 %v8436
      %v8975 = vunpack.c.l.b16 %v8437
      %v8976 = vunpack.c.h.b16 %v8437
      %v8977 = vunpack.c.l.b16 %v8438
      %v8978 = vunpack.c.h.b16 %v8438
      %v8979 = vunpack.c.l.b16 %v8439
      %v8980 = vunpack.c.h.b16 %v8439
      %v8981 = vunpack.c.l.b16 %v8440
      %v8982 = vunpack.c.h.b16 %v8440
      %v8983 = vunpack.c.l.b16 %v8441
      %v8984 = vunpack.c.h.b16 %v8441
      %v8985 = vunpack.c.l.b16 %v8442
      %v8986 = vunpack.c.h.b16 %v8442
      %v8987 = vunpack.c.l.b16 %v8443
      %v8988 = vunpack.c.h.b16 %v8443
      %v8989 = vunpack.c.l.b16 %v8444
      %v8990 = vunpack.c.h.b16 %v8444
      %v8991 = vunpack.c.l.b16 %v8445
      %v8992 = vunpack.c.h.b16 %v8445
      %v8993 = vunpack.c.l.b16 %v8446
      %v8994 = vunpack.c.h.b16 %v8446
      %v8995 = vunpack.c.l.b16 %v8447
      %v8996 = vunpack.c.h.b16 %v8447
      %v8997 = vunpack.c.l.b16 %v8448
      %v8998 = vunpack.c.h.b16 %v8448
      %v8999 = vunpack.c.l.b16 %v8449
      %v9000 = vunpack.c.h.b16 %v8449
      %v9001 = vunpack.c.l.b16 %v8450
      %v9002 = vunpack.c.h.b16 %v8450
      %v9003 = vunpack.c.l.b16 %v8451
      %v9004 = vunpack.c.h.b16 %v8451
      %v9005 = vunpack.c.l.b16 %v8452
      %v9006 = vunpack.c.h.b16 %v8452
      %v9007 = vunpack.c.l.b16 %v8453
      %v9008 = vunpack.c.h.b16 %v8453
      %v9009 = vunpack.c.l.b16 %v8454
      %v9010 = vunpack.c.h.b16 %v8454
      %v9011 = vunpack.c.l.b16 %v8455
      %v9012 = vunpack.c.h.b16 %v8455
      %v9013 = vunpack.c.l.b16 %v8456
      %v9014 = vunpack.c.h.b16 %v8456
      %v9015 = vunpack.c.l.b16 %v8457
      %v9016 = vunpack.c.h.b16 %v8457
      %v9017 = vunpack.c.l.b16 %v8458
      %v9018 = vunpack.c.h.b16 %v8458
      %v9019 = vunpack.c.l.b16 %v8459
      %v9020 = vunpack.c.h.b16 %v8459
      %v9021 = vunpack.c.l.b16 %v8460
      %v9022 = vunpack.c.h.b16 %v8460
      %v9023 = vunpack.c.l.b16 %v8461
      %v9024 = vunpack.c.h.b16 %v8461
      %v9025 = vunpack.c.l.b16 %v8462
      %v9026 = vunpack.c.h.b16 %v8462
      %v9027 = vunpack.c.l.b16 %v8463
      %v9028 = vunpack.c.h.b16 %v8463
      %v9029 = vunpack.c.l.b16 %v8464
      %v9030 = vunpack.c.h.b16 %v8464
      %v9031 = vunpack.c.l.b16 %v8465
      %v9032 = vunpack.c.h.b16 %v8465
      %v9033 = vunpack.c.l.b16 %v8466
      %v9034 = vunpack.c.h.b16 %v8466
      %v9035 = vunpack.c.l.b16 %v8467
      %v9036 = vunpack.c.h.b16 %v8467
      %v9037 = vunpack.c.l.b16 %v8468
      %v9038 = vunpack.c.h.b16 %v8468
      %v9039 = vunpack.c.l.b16 %v8469
      %v9040 = vunpack.c.h.b16 %v8469
      %v9041 = vunpack.c.l.b16 %v8470
      %v9042 = vunpack.c.h.b16 %v8470
      %v9043 = vunpack.c.l.b16 %v8471
      %v9044 = vunpack.c.h.b16 %v8471
      %v9045 = vunpack.c.l.b16 %v8472
      %v9046 = vunpack.c.h.b16 %v8472
      %v9047 = vunpack.c.l.b16 %v8473
      %v9048 = vunpack.c.h.b16 %v8473
      %v9049 = vunpack.c.l.b16 %v8474
      %v9050 = vunpack.c.h.b16 %v8474
      %v9051 = vunpack.c.l.b16 %v8475
      %v9052 = vunpack.c.h.b16 %v8475
      %v9053 = vunpack.c.l.b16 %v8476
      %v9054 = vunpack.c.h.b16 %v8476
      %v9055 = vunpack.c.l.b16 %v8477
      %v9056 = vunpack.c.h.b16 %v8477
      %v9057 = vunpack.c.l.b16 %v8478
      %v9058 = vunpack.c.h.b16 %v8478
      %v9059 = vunpack.c.l.b16 %v8479
      %v9060 = vunpack.c.h.b16 %v8479
      %v9061 = vunpack.c.l.b16 %v8480
      %v9062 = vunpack.c.h.b16 %v8480
      %v9063 = vunpack.c.l.b16 %v8481
      %v9064 = vunpack.c.h.b16 %v8481
      %v9065 = vunpack.c.l.b16 %v8482
      %v9066 = vunpack.c.h.b16 %v8482
      %v9067 = vunpack.c.l.b16 %v8483
      %v9068 = vunpack.c.h.b16 %v8483
      %v9069 = vunpack.c.l.b16 %v8484
      %v9070 = vunpack.c.h.b16 %v8484
      %v9071 = vunpack.c.l.b16 %v8485
      %v9072 = vunpack.c.h.b16 %v8485
      %v9073 = vunpack.c.l.b16 %v8486
      %v9074 = vunpack.c.h.b16 %v8486
      %v9075 = vunpack.c.l.b16 %v8487
      %v9076 = vunpack.c.h.b16 %v8487
      %v9077 = vunpack.c.l.b16 %v8488
      %v9078 = vunpack.c.h.b16 %v8488
      %v9079 = vunpack.c.l.b16 %v8489
      %v9080 = vunpack.c.h.b16 %v8489
      %v9081 = vunpack.c.l.b16 %v8490
      %v9082 = vunpack.c.h.b16 %v8490
      %v9083 = vunpack.c.l.b16 %v8491
      %v9084 = vunpack.c.h.b16 %v8491
      %v9085 = vunpack.c.l.b16 %v8492
      %v9086 = vunpack.c.h.b16 %v8492
      %v9087 = vunpack.c.l.b16 %v8493
      %v9088 = vunpack.c.h.b16 %v8493
      %v9089 = vunpack.c.l.b16 %v8494
      %v9090 = vunpack.c.h.b16 %v8494
      %v9091 = vunpack.c.l.b16 %v8495
      %v9092 = vunpack.c.h.b16 %v8495
      %v9093 = vunpack.c.l.b16 %v8496
      %v9094 = vunpack.c.h.b16 %v8496
      %v9095 = vunpack.c.l.b16 %v8497
      %v9096 = vunpack.c.h.b16 %v8497
      %v9097 = vunpack.c.l.b16 %v8498
      %v9098 = vunpack.c.h.b16 %v8498
      %v9099 = vunpack.c.l.b16 %v8499
      %v9100 = vunpack.c.h.b16 %v8499
      %v9101 = vunpack.c.l.b16 %v8500
      %v9102 = vunpack.c.h.b16 %v8500
      %v9103 = vunpack.c.l.b16 %v8501
      %v9104 = vunpack.c.h.b16 %v8501
      %v9105 = vunpack.c.l.b16 %v8502
      %v9106 = vunpack.c.h.b16 %v8502
      %v9107 = vunpack.c.l.b16 %v8503
      %v9108 = vunpack.c.h.b16 %v8503
      %v9109 = vunpack.c.l.b16 %v8504
      %v9110 = vunpack.c.h.b16 %v8504
      %v9111 = vunpack.c.l.b16 %v8505
      %v9112 = vunpack.c.h.b16 %v8505
      %v9113 = vunpack.c.l.b16 %v8506
      %v9114 = vunpack.c.h.b16 %v8506
      %v9115 = vunpack.c.l.b16 %v8507
      %v9116 = vunpack.c.h.b16 %v8507
      %v9117 = vunpack.c.l.b16 %v8508
      %v9118 = vunpack.c.h.b16 %v8508
      %v9119 = vunpack.c.l.b16 %v8509
      %v9120 = vunpack.c.h.b16 %v8509
      %v9121 = vunpack.c.l.b16 %v8510
      %v9122 = vunpack.c.h.b16 %v8510
      %v9123 = vunpack.c.l.b16 %v8511
      %v9124 = vunpack.c.h.b16 %v8511
      %v9125 = vunpack.c.l.b16 %v8512
      %v9126 = vunpack.c.h.b16 %v8512
      %v9127 = vunpack.c.l.b16 %v8513
      %v9128 = vunpack.c.h.b16 %v8513
      %v9129 = vunpack.c.l.b16 %v8514
      %v9130 = vunpack.c.h.b16 %v8514
      %v9131 = vunpack.c.l.b16 %v8515
      %v9132 = vunpack.c.h.b16 %v8515
      %v9133 = vunpack.c.l.b16 %v8516
      %v9134 = vunpack.c.h.b16 %v8516
      %v9135 = vunpack.c.l.b16 %v8517
      %v9136 = vunpack.c.h.b16 %v8517
      %v9137 = vunpack.c.l.b16 %v8518
      %v9138 = vunpack.c.h.b16 %v8518
      %v9139 = vunpack.c.l.b16 %v8519
      %v9140 = vunpack.c.h.b16 %v8519
      %v9141 = vunpack.c.l.b16 %v8520
      %v9142 = vunpack.c.h.b16 %v8520
      %v9143 = vunpack.c.l.b16 %v8521
      %v9144 = vunpack.c.h.b16 %v8521
      %v9145 = vunpack.c.l.b16 %v8522
      %v9146 = vunpack.c.h.b16 %v8522
      %v9147 = vunpack.c.l.b16 %v8523
      %v9148 = vunpack.c.h.b16 %v8523
      %v9149 = vunpack.c.l.b16 %v8524
      %v9150 = vunpack.c.h.b16 %v8524
      %v9151 = vunpack.c.l.b16 %v8525
      %v9152 = vunpack.c.h.b16 %v8525
      %v9153 = vunpack.c.l.b16 %v8526
      %v9154 = vunpack.c.h.b16 %v8526
      %v9155 = vunpack.c.l.b16 %v8527
      %v9156 = vunpack.c.h.b16 %v8527
      %v9157 = vunpack.c.l.b16 %v8528
      %v9158 = vunpack.c.h.b16 %v8528
      %v9159 = vunpack.c.l.b16 %v8529
      %v9160 = vunpack.c.h.b16 %v8529
      %v9161 = vunpack.c.l.b16 %v8530
      %v9162 = vunpack.c.h.b16 %v8530
      %v9163 = vunpack.c.l.b16 %v8531
      %v9164 = vunpack.c.h.b16 %v8531
      %v9165 = vunpack.c.l.b16 %v8532
      %v9166 = vunpack.c.h.b16 %v8532
      %v9167 = vunpack.c.l.b16 %v8533
      %v9168 = vunpack.c.h.b16 %v8533
      %v9169 = vunpack.c.l.b16 %v8534
      %v9170 = vunpack.c.h.b16 %v8534
      %v9171 = vunpack.c.l.b16 %v8535
      %v9172 = vunpack.c.h.b16 %v8535
      %v9173 = vunpack.c.l.b16 %v8536
      %v9174 = vunpack.c.h.b16 %v8536
      %v9175 = vunpack.c.l.b16 %v8537
      %v9176 = vunpack.c.h.b16 %v8537
      %v9177 = vunpack.c.l.b16 %v8538
      %v9178 = vunpack.c.h.b16 %v8538
      %v9179 = vunpack.c.l.b16 %v8539
      %v9180 = vunpack.c.h.b16 %v8539
      %v9181 = vunpack.c.l.b16 %v8540
      %v9182 = vunpack.c.h.b16 %v8540
      %v9183 = vunpack.c.l.b16 %v8541
      %v9184 = vunpack.c.h.b16 %v8541
      %v9185 = vunpack.c.l.b16 %v8542
      %v9186 = vunpack.c.h.b16 %v8542
      %v9187 = vunpack.c.l.b16 %v8543
      %v9188 = vunpack.c.h.b16 %v8543
      %v9189 = vunpack.c.l.b16 %v8544
      %v9190 = vunpack.c.h.b16 %v8544
      %v9191 = vunpack.c.l.b16 %v8545
      %v9192 = vunpack.c.h.b16 %v8545
      %v9193 = vunpack.c.l.b16 %v8546
      %v9194 = vunpack.c.h.b16 %v8546
      %v9195 = vunpack.c.l.b16 %v8547
      %v9196 = vunpack.c.h.b16 %v8547
      %v9197 = vunpack.c.l.b16 %v8548
      %v9198 = vunpack.c.h.b16 %v8548
      %v9199 = vunpack.c.l.b16 %v8549
      %v9200 = vunpack.c.h.b16 %v8549
      %v9201 = vunpack.c.l.b16 %v8550
      %v9202 = vunpack.c.h.b16 %v8550
      %v9203 = vunpack.c.l.b16 %v8551
      %v9204 = vunpack.c.h.b16 %v8551
      %v9205 = vunpack.c.l.b16 %v8552
      %v9206 = vunpack.c.h.b16 %v8552
      %v9207 = vunpack.c.l.b16 %v8553
      %v9208 = vunpack.c.h.b16 %v8553
      %v9209 = vunpack.c.l.b16 %v8554
      %v9210 = vunpack.c.h.b16 %v8554
      %v9211 = vunpack.c.l.b16 %v8555
      %v9212 = vunpack.c.h.b16 %v8555
      %v9213 = vunpack.c.l.b16 %v8556
      %v9214 = vunpack.c.h.b16 %v8556
      %v9215 = vunpack.c.l.b16 %v8557
      %v9216 = vunpack.c.h.b16 %v8557
      %v9217 = vunpack.c.l.b16 %v8558
      %v9218 = vunpack.c.h.b16 %v8558
      %v9219 = vunpack.c.l.b16 %v8559
      %v9220 = vunpack.c.h.b16 %v8559
      %v9221 = vunpack.c.l.b16 %v8560
      %v9222 = vunpack.c.h.b16 %v8560
      %v9223 = vunpack.c.l.b16 %v8561
      %v9224 = vunpack.c.h.b16 %v8561
      %v9225 = vunpack.c.l.b16 %v8562
      %v9226 = vunpack.c.h.b16 %v8562
      %v9227 = vunpack.c.l.b16 %v8563
      %v9228 = vunpack.c.h.b16 %v8563
      %v9229 = vunpack.c.l.b16 %v8564
      %v9230 = vunpack.c.h.b16 %v8564
      %v9231 = vunpack.c.l.b16 %v8565
      %v9232 = vunpack.c.h.b16 %v8565
      %v9233 = vunpack.c.l.b16 %v8566
      %v9234 = vunpack.c.h.b16 %v8566
      %v9235 = vunpack.c.l.b16 %v8567
      %v9236 = vunpack.c.h.b16 %v8567
      %v9237 = vunpack.c.l.b16 %v8568
      %v9238 = vunpack.c.h.b16 %v8568
      %v9239 = vunpack.c.l.b16 %v8569
      %v9240 = vunpack.c.h.b16 %v8569
      %v9241 = vunpack.c.l.b16 %v8570
      %v9242 = vunpack.c.h.b16 %v8570
      %v9243 = vunpack.c.l.b16 %v8571
      %v9244 = vunpack.c.h.b16 %v8571
      %v9245 = vunpack.c.l.b16 %v8572
      %v9246 = vunpack.c.h.b16 %v8572
      %v9247 = vunpack.c.l.b16 %v8573
      %v9248 = vunpack.c.h.b16 %v8573
      %v9249 = vunpack.c.l.b16 %v8574
      %v9250 = vunpack.c.h.b16 %v8574
      %v9251 = vunpack.c.l.b16 %v8575
      %v9252 = vunpack.c.h.b16 %v8575
      %v9253 = vunpack.c.l.b16 %v8576
      %v9254 = vunpack.c.h.b16 %v8576
      %v9255 = vunpack.c.l.b16 %v8577
      %v9256 = vunpack.c.h.b16 %v8577
      %v9257 = vunpack.c.l.b16 %v8578
      %v9258 = vunpack.c.h.b16 %v8578
      %v9259 = vunpack.c.l.b16 %v8579
      %v9260 = vunpack.c.h.b16 %v8579
      %v9261 = vunpack.c.l.b16 %v8580
      %v9262 = vunpack.c.h.b16 %v8580
      %v9263 = vunpack.c.l.b16 %v8581
      %v9264 = vunpack.c.h.b16 %v8581
      %v9265 = vunpack.c.l.b16 %v8582
      %v9266 = vunpack.c.h.b16 %v8582
      %v9267 = vunpack.c.l.b16 %v8583
      %v9268 = vunpack.c.h.b16 %v8583
      %v9269 = vunpack.c.l.b16 %v8584
      %v9270 = vunpack.c.h.b16 %v8584
      %v9271 = vunpack.c.l.b16 %v8585
      %v9272 = vunpack.c.h.b16 %v8585
      %v9273 = vunpack.c.l.b16 %v8586
      %v9274 = vunpack.c.h.b16 %v8586
      %v9275 = vunpack.c.l.b16 %v8587
      %v9276 = vunpack.c.h.b16 %v8587
      %v9277 = vunpack.c.l.b16 %v8588
      %v9278 = vunpack.c.h.b16 %v8588
      %v9279 = vunpack.c.l.b16 %v8589
      %v9280 = vunpack.c.h.b16 %v8589
      %v9281 = vunpack.c.l.b16 %v8590
      %v9282 = vunpack.c.h.b16 %v8590
      %v9283 = vunpack.c.l.b16 %v8591
      %v9284 = vunpack.c.h.b16 %v8591
      %v9285 = vunpack.c.l.b16 %v8592
      %v9286 = vunpack.c.h.b16 %v8592
      %v9287 = vunpack.c.l.b16 %v8593
      %v9288 = vunpack.c.h.b16 %v8593
      %v9289 = vunpack.c.l.b16 %v8594
      %v9290 = vunpack.c.h.b16 %v8594
      %v9291 = vunpack.c.l.b16 %v8595
      %v9292 = vunpack.c.h.b16 %v8595
      %v9293 = vunpack.c.l.b16 %v8596
      %v9294 = vunpack.c.h.b16 %v8596
      %v9295 = vunpack.c.l.b16 %v8597
      %v9296 = vunpack.c.h.b16 %v8597
      %v9297 = vunpack.c.l.b16 %v8598
      %v9298 = vunpack.c.h.b16 %v8598
      %v9299 = vunpack.c.l.b16 %v8599
      %v9300 = vunpack.c.h.b16 %v8599
      %v9301 = vunpack.c.l.b16 %v8600
      %v9302 = vunpack.c.h.b16 %v8600
      %v9303 = vunpack.c.l.b16 %v8601
      %v9304 = vunpack.c.h.b16 %v8601
      %v9305 = vunpack.c.l.b16 %v8602
      %v9306 = vunpack.c.h.b16 %v8602
      %v9307 = vunpack.c.l.b16 %v8603
      %v9308 = vunpack.c.h.b16 %v8603
      %v9309 = vunpack.c.l.b16 %v8604
      %v9310 = vunpack.c.h.b16 %v8604
      %v9311 = vunpack.c.l.b16 %v8605
      %v9312 = vunpack.c.h.b16 %v8605
      %v9313 = vunpack.c.l.b16 %v8606
      %v9314 = vunpack.c.h.b16 %v8606
      %v9315 = vunpack.c.l.b16 %v8607
      %v9316 = vunpack.c.h.b16 %v8607
      %v9317 = vunpack.c.l.b16 %v8608
      %v9318 = vunpack.c.h.b16 %v8608
      %v9319 = vunpack.c.l.b16 %v8609
      %v9320 = vunpack.c.h.b16 %v8609
      %v9321 = vunpack.c.l.b16 %v8610
      %v9322 = vunpack.c.h.b16 %v8610
      %v9323 = vunpack.c.l.b16 %v8611
      %v9324 = vunpack.c.h.b16 %v8611
      %v9325 = vunpack.c.l.b16 %v8612
      %v9326 = vunpack.c.h.b16 %v8612
      %v9327 = vunpack.c.l.b16 %v8613
      %v9328 = vunpack.c.h.b16 %v8613
      %v9329 = vunpack.c.l.b16 %v8614
      %v9330 = vunpack.c.h.b16 %v8614
      %v9331 = vunpack.c.l.b16 %v8615
      %v9332 = vunpack.c.h.b16 %v8615
      %v9333 = vunpack.c.l.b16 %v8616
      %v9334 = vunpack.c.h.b16 %v8616
      %v9335 = vunpack.c.l.b16 %v8617
      %v9336 = vunpack.c.h.b16 %v8617
      %v9337 = vunpack.c.l.b16 %v8618
      %v9338 = vunpack.c.h.b16 %v8618
      %v9339 = vunpack.c.l.b16 %v8619
      %v9340 = vunpack.c.h.b16 %v8619
      %v9341 = vunpack.c.l.b16 %v8620
      %v9342 = vunpack.c.h.b16 %v8620
      %v9343 = vunpack.c.l.b16 %v8621
      %v9344 = vunpack.c.h.b16 %v8621
      %v9345 = vunpack.c.l.b16 %v8622
      %v9346 = vunpack.c.h.b16 %v8622
      %v9347 = vunpack.c.l.b16 %v8623
      %v9348 = vunpack.c.h.b16 %v8623
      %v9349 = vunpack.c.l.b16 %v8624
      %v9350 = vunpack.c.h.b16 %v8624
      %v9351 = vunpack.c.l.b16 %v8625
      %v9352 = vunpack.c.h.b16 %v8625
      %v9353 = vunpack.c.l.b16 %v8626
      %v9354 = vunpack.c.h.b16 %v8626
      %v9355 = vunpack.c.l.b16 %v8627
      %v9356 = vunpack.c.h.b16 %v8627
      %v9357 = vunpack.c.l.b16 %v8628
      %v9358 = vunpack.c.h.b16 %v8628
      %v9359 = vunpack.c.l.b16 %v8629
      %v9360 = vunpack.c.h.b16 %v8629
      %v9361 = vunpack.c.l.b16 %v8630
      %v9362 = vunpack.c.h.b16 %v8630
      %v9363 = vunpack.c.l.b16 %v8631
      %v9364 = vunpack.c.h.b16 %v8631
      %v9365 = vunpack.c.l.b16 %v8632
      %v9366 = vunpack.c.h.b16 %v8632
      %v9367 = vunpack.c.l.b16 %v8633
      %v9368 = vunpack.c.h.b16 %v8633
      %v9369 = vunpack.c.l.b16 %v8634
      %v9370 = vunpack.c.h.b16 %v8634
      %v9371 = vunpack.c.l.b16 %v8635
      %v9372 = vunpack.c.h.b16 %v8635
      %v9373 = vunpack.c.l.b16 %v8636
      %v9374 = vunpack.c.h.b16 %v8636
      %v9375 = vunpack.c.l.b16 %v8637
      %v9376 = vunpack.c.h.b16 %v8637
      %v9377 = vunpack.c.l.b16 %v8638
      %v9378 = vunpack.c.h.b16 %v8638
      %v9379 = vunpack.c.l.b16 %v8639
      %v9380 = vunpack.c.h.b16 %v8639
      %v9381 = vunpack.c.l.b16 %v8640
      %v9382 = vunpack.c.h.b16 %v8640
      %v9383 = vunpack.c.l.b16 %v8641
      %v9384 = vunpack.c.h.b16 %v8641
      %v9385 = vunpack.c.l.b16 %v8642
      %v9386 = vunpack.c.h.b16 %v8642
      %v9387 = vunpack.c.l.b16 %v8643
      %v9388 = vunpack.c.h.b16 %v8643
      %v9389 = vunpack.c.l.b16 %v8644
      %v9390 = vunpack.c.h.b16 %v8644
      %v9391 = vunpack.c.l.b16 %v8645
      %v9392 = vunpack.c.h.b16 %v8645
      %v9393 = vunpack.c.l.b16 %v8646
      %v9394 = vunpack.c.h.b16 %v8646
      %v9395 = vunpack.c.l.b16 %v8647
      %v9396 = vunpack.c.h.b16 %v8647
      %v9397 = vunpack.c.l.b16 %v8648
      %v9398 = vunpack.c.h.b16 %v8648
      %v9399 = vunpack.c.l.b16 %v8649
      %v9400 = vunpack.c.h.b16 %v8649
      %v9401 = vunpack.c.l.b16 %v8650
      %v9402 = vunpack.c.h.b16 %v8650
      %v9403 = vunpack.c.l.b16 %v8651
      %v9404 = vunpack.c.h.b16 %v8651
      %v9405 = vunpack.c.l.b16 %v8652
      %v9406 = vunpack.c.h.b16 %v8652
      %v9407 = vunpack.c.l.b16 %v8653
      %v9408 = vunpack.c.h.b16 %v8653
      %v9409 = vunpack.c.l.b16 %v8654
      %v9410 = vunpack.c.h.b16 %v8654
      %v9411 = vunpack.c.l.b16 %v8655
      %v9412 = vunpack.c.h.b16 %v8655
      %v9413 = vunpack.c.l.b16 %v8656
      %v9414 = vunpack.c.h.b16 %v8656
      %v9415 = vunpack.c.l.b16 %v8657
      %v9416 = vunpack.c.h.b16 %v8657
      %v9417 = vunpack.c.l.b16 %v8658
      %v9418 = vunpack.c.h.b16 %v8658
      %v9419 = vunpack.c.l.b16 %v8659
      %v9420 = vunpack.c.h.b16 %v8659
      %v9421 = vunpack.c.l.b16 %v8660
      %v9422 = vunpack.c.h.b16 %v8660
      %v9423 = vunpack.c.l.b16 %v8661
      %v9424 = vunpack.c.h.b16 %v8661
      %v9425 = vunpack.c.l.b16 %v8662
      %v9426 = vunpack.c.h.b16 %v8662
      %v9427 = vunpack.c.l.b16 %v8663
      %v9428 = vunpack.c.h.b16 %v8663
      %v9429 = vunpack.c.l.b16 %v8664
      %v9430 = vunpack.c.h.b16 %v8664
      %v9431 = vunpack.c.l.b16 %v8665
      %v9432 = vunpack.c.h.b16 %v8665
      %v9433 = vunpack.c.l.b16 %v8666
      %v9434 = vunpack.c.h.b16 %v8666
      %v9435 = vunpack.c.l.b16 %v8667
      %v9436 = vunpack.c.h.b16 %v8667
      %v9437 = vpack.c.b16 %v8933, %v8925
      %v9438 = vpack.c.b16 %v8934, %v8926
      %v9439 = vpack.c.b16 %v8935, %v8927
      %v9440 = vpack.c.b16 %v8936, %v8928
      %v9441 = vpack.c.b16 %v8937, %v8929
      %v9442 = vpack.c.b16 %v8938, %v8930
      %v9443 = vpack.c.b16 %v8939, %v8931
      %v9444 = vpack.c.b16 %v8940, %v8932
      %v9445 = vpack.c.b16 %v8949, %v8941
      %v9446 = vpack.c.b16 %v8950, %v8942
      %v9447 = vpack.c.b16 %v8951, %v8943
      %v9448 = vpack.c.b16 %v8952, %v8944
      %v9449 = vpack.c.b16 %v8953, %v8945
      %v9450 = vpack.c.b16 %v8954, %v8946
      %v9451 = vpack.c.b16 %v8955, %v8947
      %v9452 = vpack.c.b16 %v8956, %v8948
      %v9453 = vpack.c.b16 %v8965, %v8957
      %v9454 = vpack.c.b16 %v8966, %v8958
      %v9455 = vpack.c.b16 %v8967, %v8959
      %v9456 = vpack.c.b16 %v8968, %v8960
      %v9457 = vpack.c.b16 %v8969, %v8961
      %v9458 = vpack.c.b16 %v8970, %v8962
      %v9459 = vpack.c.b16 %v8971, %v8963
      %v9460 = vpack.c.b16 %v8972, %v8964
      %v9461 = vpack.c.b16 %v8981, %v8973
      %v9462 = vpack.c.b16 %v8982, %v8974
      %v9463 = vpack.c.b16 %v8983, %v8975
      %v9464 = vpack.c.b16 %v8984, %v8976
      %v9465 = vpack.c.b16 %v8985, %v8977
      %v9466 = vpack.c.b16 %v8986, %v8978
      %v9467 = vpack.c.b16 %v8987, %v8979
      %v9468 = vpack.c.b16 %v8988, %v8980
      %v9469 = vpack.c.b16 %v8997, %v8989
      %v9470 = vpack.c.b16 %v8998, %v8990
      %v9471 = vpack.c.b16 %v8999, %v8991
      %v9472 = vpack.c.b16 %v9000, %v8992
      %v9473 = vpack.c.b16 %v9001, %v8993
      %v9474 = vpack.c.b16 %v9002, %v8994
      %v9475 = vpack.c.b16 %v9003, %v8995
      %v9476 = vpack.c.b16 %v9004, %v8996
      %v9477 = vpack.c.b16 %v9013, %v9005
      %v9478 = vpack.c.b16 %v9014, %v9006
      %v9479 = vpack.c.b16 %v9015, %v9007
      %v9480 = vpack.c.b16 %v9016, %v9008
      %v9481 = vpack.c.b16 %v9017, %v9009
      %v9482 = vpack.c.b16 %v9018, %v9010
      %v9483 = vpack.c.b16 %v9019, %v9011
      %v9484 = vpack.c.b16 %v9020, %v9012
      %v9485 = vpack.c.b16 %v9029, %v9021
      %v9486 = vpack.c.b16 %v9030, %v9022
      %v9487 = vpack.c.b16 %v9031, %v9023
      %v9488 = vpack.c.b16 %v9032, %v9024
      %v9489 = vpack.c.b16 %v9033, %v9025
      %v9490 = vpack.c.b16 %v9034, %v9026
      %v9491 = vpack.c.b16 %v9035, %v9027
      %v9492 = vpack.c.b16 %v9036, %v9028
      %v9493 = vpack.c.b16 %v9045, %v9037
      %v9494 = vpack.c.b16 %v9046, %v9038
      %v9495 = vpack.c.b16 %v9047, %v9039
      %v9496 = vpack.c.b16 %v9048, %v9040
      %v9497 = vpack.c.b16 %v9049, %v9041
      %v9498 = vpack.c.b16 %v9050, %v9042
      %v9499 = vpack.c.b16 %v9051, %v9043
      %v9500 = vpack.c.b16 %v9052, %v9044
      %v9501 = vpack.c.b16 %v9061, %v9053
      %v9502 = vpack.c.b16 %v9062, %v9054
      %v9503 = vpack.c.b16 %v9063, %v9055
      %v9504 = vpack.c.b16 %v9064, %v9056
      %v9505 = vpack.c.b16 %v9065, %v9057
      %v9506 = vpack.c.b16 %v9066, %v9058
      %v9507 = vpack.c.b16 %v9067, %v9059
      %v9508 = vpack.c.b16 %v9068, %v9060
      %v9509 = vpack.c.b16 %v9077, %v9069
      %v9510 = vpack.c.b16 %v9078, %v9070
      %v9511 = vpack.c.b16 %v9079, %v9071
      %v9512 = vpack.c.b16 %v9080, %v9072
      %v9513 = vpack.c.b16 %v9081, %v9073
      %v9514 = vpack.c.b16 %v9082, %v9074
      %v9515 = vpack.c.b16 %v9083, %v9075
      %v9516 = vpack.c.b16 %v9084, %v9076
      %v9517 = vpack.c.b16 %v9093, %v9085
      %v9518 = vpack.c.b16 %v9094, %v9086
      %v9519 = vpack.c.b16 %v9095, %v9087
      %v9520 = vpack.c.b16 %v9096, %v9088
      %v9521 = vpack.c.b16 %v9097, %v9089
      %v9522 = vpack.c.b16 %v9098, %v9090
      %v9523 = vpack.c.b16 %v9099, %v9091
      %v9524 = vpack.c.b16 %v9100, %v9092
      %v9525 = vpack.c.b16 %v9109, %v9101
      %v9526 = vpack.c.b16 %v9110, %v9102
      %v9527 = vpack.c.b16 %v9111, %v9103
      %v9528 = vpack.c.b16 %v9112, %v9104
      %v9529 = vpack.c.b16 %v9113, %v9105
      %v9530 = vpack.c.b16 %v9114, %v9106
      %v9531 = vpack.c.b16 %v9115, %v9107
      %v9532 = vpack.c.b16 %v9116, %v9108
      %v9533 = vpack.c.b16 %v9125, %v9117
      %v9534 = vpack.c.b16 %v9126, %v9118
      %v9535 = vpack.c.b16 %v9127, %v9119
      %v9536 = vpack.c.b16 %v9128, %v9120
      %v9537 = vpack.c.b16 %v9129, %v9121
      %v9538 = vpack.c.b16 %v9130, %v9122
      %v9539 = vpack.c.b16 %v9131, %v9123
      %v9540 = vpack.c.b16 %v9132, %v9124
      %v9541 = vpack.c.b16 %v9141, %v9133
      %v9542 = vpack.c.b16 %v9142, %v9134
      %v9543 = vpack.c.b16 %v9143, %v9135
      %v9544 = vpack.c.b16 %v9144, %v9136
      %v9545 = vpack.c.b16 %v9145, %v9137
      %v9546 = vpack.c.b16 %v9146, %v9138
      %v9547 = vpack.c.b16 %v9147, %v9139
      %v9548 = vpack.c.b16 %v9148, %v9140
      %v9549 = vpack.c.b16 %v9157, %v9149
      %v9550 = vpack.c.b16 %v9158, %v9150
      %v9551 = vpack.c.b16 %v9159, %v9151
      %v9552 = vpack.c.b16 %v9160, %v9152
      %v9553 = vpack.c.b16 %v9161, %v9153
      %v9554 = vpack.c.b16 %v9162, %v9154
      %v9555 = vpack.c.b16 %v9163, %v9155
      %v9556 = vpack.c.b16 %v9164, %v9156
      %v9557 = vpack.c.b16 %v9173, %v9165
      %v9558 = vpack.c.b16 %v9174, %v9166
      %v9559 = vpack.c.b16 %v9175, %v9167
      %v9560 = vpack.c.b16 %v9176, %v9168
      %v9561 = vpack.c.b16 %v9177, %v9169
      %v9562 = vpack.c.b16 %v9178, %v9170
      %v9563 = vpack.c.b16 %v9179, %v9171
      %v9564 = vpack.c.b16 %v9180, %v9172
      %v9565 = vpack.c.b16 %v9189, %v9181
      %v9566 = vpack.c.b16 %v9190, %v9182
      %v9567 = vpack.c.b16 %v9191, %v9183
      %v9568 = vpack.c.b16 %v9192, %v9184
      %v9569 = vpack.c.b16 %v9193, %v9185
      %v9570 = vpack.c.b16 %v9194, %v9186
      %v9571 = vpack.c.b16 %v9195, %v9187
      %v9572 = vpack.c.b16 %v9196, %v9188
      %v9573 = vpack.c.b16 %v9205, %v9197
      %v9574 = vpack.c.b16 %v9206, %v9198
      %v9575 = vpack.c.b16 %v9207, %v9199
      %v9576 = vpack.c.b16 %v9208, %v9200
      %v9577 = vpack.c.b16 %v9209, %v9201
      %v9578 = vpack.c.b16 %v9210, %v9202
      %v9579 = vpack.c.b16 %v9211, %v9203
      %v9580 = vpack.c.b16 %v9212, %v9204
      %v9581 = vpack.c.b16 %v9221, %v9213
      %v9582 = vpack.c.b16 %v9222, %v9214
      %v9583 = vpack.c.b16 %v9223, %v9215
      %v9584 = vpack.c.b16 %v9224, %v9216
      %v9585 = vpack.c.b16 %v9225, %v9217
      %v9586 = vpack.c.b16 %v9226, %v9218
      %v9587 = vpack.c.b16 %v9227, %v9219
      %v9588 = vpack.c.b16 %v9228, %v9220
      %v9589 = vpack.c.b16 %v9237, %v9229
      %v9590 = vpack.c.b16 %v9238, %v9230
      %v9591 = vpack.c.b16 %v9239, %v9231
      %v9592 = vpack.c.b16 %v9240, %v9232
      %v9593 = vpack.c.b16 %v9241, %v9233
      %v9594 = vpack.c.b16 %v9242, %v9234
      %v9595 = vpack.c.b16 %v9243, %v9235
      %v9596 = vpack.c.b16 %v9244, %v9236
      %v9597 = vpack.c.b16 %v9253, %v9245
      %v9598 = vpack.c.b16 %v9254, %v9246
      %v9599 = vpack.c.b16 %v9255, %v9247
      %v9600 = vpack.c.b16 %v9256, %v9248
      %v9601 = vpack.c.b16 %v9257, %v9249
      %v9602 = vpack.c.b16 %v9258, %v9250
      %v9603 = vpack.c.b16 %v9259, %v9251
      %v9604 = vpack.c.b16 %v9260, %v9252
      %v9605 = vpack.c.b16 %v9269, %v9261
      %v9606 = vpack.c.b16 %v9270, %v9262
      %v9607 = vpack.c.b16 %v9271, %v9263
      %v9608 = vpack.c.b16 %v9272, %v9264
      %v9609 = vpack.c.b16 %v9273, %v9265
      %v9610 = vpack.c.b16 %v9274, %v9266
      %v9611 = vpack.c.b16 %v9275, %v9267
      %v9612 = vpack.c.b16 %v9276, %v9268
      %v9613 = vpack.c.b16 %v9285, %v9277
      %v9614 = vpack.c.b16 %v9286, %v9278
      %v9615 = vpack.c.b16 %v9287, %v9279
      %v9616 = vpack.c.b16 %v9288, %v9280
      %v9617 = vpack.c.b16 %v9289, %v9281
      %v9618 = vpack.c.b16 %v9290, %v9282
      %v9619 = vpack.c.b16 %v9291, %v9283
      %v9620 = vpack.c.b16 %v9292, %v9284
      %v9621 = vpack.c.b16 %v9301, %v9293
      %v9622 = vpack.c.b16 %v9302, %v9294
      %v9623 = vpack.c.b16 %v9303, %v9295
      %v9624 = vpack.c.b16 %v9304, %v9296
      %v9625 = vpack.c.b16 %v9305, %v9297
      %v9626 = vpack.c.b16 %v9306, %v9298
      %v9627 = vpack.c.b16 %v9307, %v9299
      %v9628 = vpack.c.b16 %v9308, %v9300
      %v9629 = vpack.c.b16 %v9317, %v9309
      %v9630 = vpack.c.b16 %v9318, %v9310
      %v9631 = vpack.c.b16 %v9319, %v9311
      %v9632 = vpack.c.b16 %v9320, %v9312
      %v9633 = vpack.c.b16 %v9321, %v9313
      %v9634 = vpack.c.b16 %v9322, %v9314
      %v9635 = vpack.c.b16 %v9323, %v9315
      %v9636 = vpack.c.b16 %v9324, %v9316
      %v9637 = vpack.c.b16 %v9333, %v9325
      %v9638 = vpack.c.b16 %v9334, %v9326
      %v9639 = vpack.c.b16 %v9335, %v9327
      %v9640 = vpack.c.b16 %v9336, %v9328
      %v9641 = vpack.c.b16 %v9337, %v9329
      %v9642 = vpack.c.b16 %v9338, %v9330
      %v9643 = vpack.c.b16 %v9339, %v9331
      %v9644 = vpack.c.b16 %v9340, %v9332
      %v9645 = vpack.c.b16 %v9349, %v9341
      %v9646 = vpack.c.b16 %v9350, %v9342
      %v9647 = vpack.c.b16 %v9351, %v9343
      %v9648 = vpack.c.b16 %v9352, %v9344
      %v9649 = vpack.c.b16 %v9353, %v9345
      %v9650 = vpack.c.b16 %v9354, %v9346
      %v9651 = vpack.c.b16 %v9355, %v9347
      %v9652 = vpack.c.b16 %v9356, %v9348
      %v9653 = vpack.c.b16 %v9365, %v9357
      %v9654 = vpack.c.b16 %v9366, %v9358
      %v9655 = vpack.c.b16 %v9367, %v9359
      %v9656 = vpack.c.b16 %v9368, %v9360
      %v9657 = vpack.c.b16 %v9369, %v9361
      %v9658 = vpack.c.b16 %v9370, %v9362
      %v9659 = vpack.c.b16 %v9371, %v9363
      %v9660 = vpack.c.b16 %v9372, %v9364
      %v9661 = vpack.c.b16 %v9381, %v9373
      %v9662 = vpack.c.b16 %v9382, %v9374
      %v9663 = vpack.c.b16 %v9383, %v9375
      %v9664 = vpack.c.b16 %v9384, %v9376
      %v9665 = vpack.c.b16 %v9385, %v9377
      %v9666 = vpack.c.b16 %v9386, %v9378
      %v9667 = vpack.c.b16 %v9387, %v9379
      %v9668 = vpack.c.b16 %v9388, %v9380
      %v9669 = vpack.c.b16 %v9397, %v9389
      %v9670 = vpack.c.b16 %v9398, %v9390
      %v9671 = vpack.c.b16 %v9399, %v9391
      %v9672 = vpack.c.b16 %v9400, %v9392
      %v9673 = vpack.c.b16 %v9401, %v9393
      %v9674 = vpack.c.b16 %v9402, %v9394
      %v9675 = vpack.c.b16 %v9403, %v9395
      %v9676 = vpack.c.b16 %v9404, %v9396
      %v9677 = vpack.c.b16 %v9413, %v9405
      %v9678 = vpack.c.b16 %v9414, %v9406
      %v9679 = vpack.c.b16 %v9415, %v9407
      %v9680 = vpack.c.b16 %v9416, %v9408
      %v9681 = vpack.c.b16 %v9417, %v9409
      %v9682 = vpack.c.b16 %v9418, %v9410
      %v9683 = vpack.c.b16 %v9419, %v9411
      %v9684 = vpack.c.b16 %v9420, %v9412
      %v9685 = vpack.c.b16 %v9429, %v9421
      %v9686 = vpack.c.b16 %v9430, %v9422
      %v9687 = vpack.c.b16 %v9431, %v9423
      %v9688 = vpack.c.b16 %v9432, %v9424
      %v9689 = vpack.c.b16 %v9433, %v9425
      %v9690 = vpack.c.b16 %v9434, %v9426
      %v9691 = vpack.c.b16 %v9435, %v9427
      %v9692 = vpack.c.b16 %v9436, %v9428
      %v9950 = vlaneseq
      %v9951 = vshrl.u32 %v9950, 7
      %v9952 = vsub.s32 0, %v9951
      %v9953 = vrot.slane %v8668, %v9952
      %v9954 = vlaneseq
      %v9955 = vshrl.u32 %v9954, 7
      %v9956 = vsub.s32 1, %v9955
      %v9957 = vrot.slane %v8668, %v9956
      %v9958 = vlaneseq
      %v9959 = vshrl.u32 %v9958, 7
      %v9960 = vsub.s32 2, %v9959
      %v9961 = vrot.slane %v8668, %v9960
      %v9962 = vlaneseq
      %v9963 = vshrl.u32 %v9962, 7
      %v9964 = vsub.s32 3, %v9963
      %v9965 = vrot.slane %v8668, %v9964
      %v9966 = vlaneseq
      %v9967 = vshrl.u32 %v9966, 7
      %v9968 = vsub.s32 4, %v9967
      %v9969 = vrot.slane %v8668, %v9968
      %v9970 = vlaneseq
      %v9971 = vshrl.u32 %v9970, 7
      %v9972 = vsub.s32 5, %v9971
      %v9973 = vrot.slane %v8668, %v9972
      %v9974 = vlaneseq
      %v9975 = vshrl.u32 %v9974, 7
      %v9976 = vsub.s32 6, %v9975
      %v9977 = vrot.slane %v8668, %v9976
      %v9978 = vlaneseq
      %v9979 = vshrl.u32 %v9978, 7
      %v9980 = vsub.s32 7, %v9979
      %v9981 = vrot.slane %v8668, %v9980
      %9990 = vmatprep.subr.bf16.mxu0 %v9494
      %9991 = vmatpush1.bf16.msra.mxu0 %v9493
      %9992 = vmatprep.subr.bf16.mxu0 %v9486
      %9993 = vmatpush1.bf16.msra.mxu0 %v9485
      %9994 = vmatprep.subr.bf16.mxu0 %v9478
      %9995 = vmatpush1.bf16.msra.mxu0 %v9477
      %9996 = vmatprep.subr.bf16.mxu0 %v9470
      %9997 = vmatpush1.bf16.msra.mxu0 %v9469
      %9998 = vmatprep.subr.bf16.mxu0 %v9462
      %9999 = vmatpush1.bf16.msra.mxu0 %v9461
      %10000 = vmatprep.subr.bf16.mxu0 %v9454
      %10001 = vmatpush1.bf16.msra.mxu0 %v9453
      %10002 = vmatprep.subr.bf16.mxu0 %v9446
      %10003 = vmatpush1.bf16.msra.mxu0 %v9445
      %10004 = vmatprep.subr.bf16.mxu0 %v9438
      %10005 = vmatpush1.bf16.msra.mxu0 %v9437
      %10006 = vmatprep.subr.bf16.mxu0 %v9558
      %10007 = vmatpush2.bf16.msra.mxu0 %v9557
      %10008 = vmatprep.subr.bf16.mxu0 %v9550
      %10009 = vmatpush2.bf16.msra.mxu0 %v9549
      %10010 = vmatprep.subr.bf16.mxu0 %v9542
      %10011 = vmatpush2.bf16.msra.mxu0 %v9541
      %10012 = vmatprep.subr.bf16.mxu0 %v9534
      %10013 = vmatpush2.bf16.msra.mxu0 %v9533
      %10014 = vmatprep.subr.bf16.mxu0 %v9526
      %10015 = vmatpush2.bf16.msra.mxu0 %v9525
      %10016 = vmatprep.subr.bf16.mxu0 %v9518
      %10017 = vmatpush2.bf16.msra.mxu0 %v9517
      %10018 = vmatprep.subr.bf16.mxu0 %v9510
      %10019 = vmatpush2.bf16.msra.mxu0 %v9509
      %10020 = vmatprep.subr.bf16.mxu0 %v9502
      %10021 = vmatpush2.bf16.msra.mxu0 %v9501
      %10022 = vmatprep.mubr.bf16.mxu0 %v8409
      %10023 = vmatmul.mubr.bf16.gmra.mxu0 %v8408
      %v10024 = vpop.f32.mrf.mxu0
      %v10025 = vadd.f32 %v9953, %v10024
      %v10026 = vpop.f32.mrf.mxu0
      %v10027 = vadd.f32 %v9957, %v10026
      %v10028 = vpop.f32.mrf.mxu0
      %v10029 = vpop.f32.mrf.mxu0
      %10030 = vdwg.mxu0
      %10031 = vmatprep.subr.bf16.mxu0 %v9622
      %10032 = vmatpush1.bf16.msra.mxu0 %v9621
      %10033 = vmatprep.subr.bf16.mxu0 %v9614
      %10034 = vmatpush1.bf16.msra.mxu0 %v9613
      %10035 = vmatprep.subr.bf16.mxu0 %v9606
      %10036 = vmatpush1.bf16.msra.mxu0 %v9605
      %10037 = vmatprep.subr.bf16.mxu0 %v9598
      %10038 = vmatpush1.bf16.msra.mxu0 %v9597
      %10039 = vmatprep.subr.bf16.mxu0 %v9590
      %10040 = vmatpush1.bf16.msra.mxu0 %v9589
      %10041 = vmatprep.subr.bf16.mxu0 %v9582
      %10042 = vmatpush1.bf16.msra.mxu0 %v9581
      %10043 = vmatprep.subr.bf16.mxu0 %v9574
      %10044 = vmatpush1.bf16.msra.mxu0 %v9573
      %10045 = vmatprep.subr.bf16.mxu0 %v9566
      %10046 = vmatpush1.bf16.msra.mxu0 %v9565
      %10047 = vmatprep.subr.bf16.mxu0 %v9686
      %10048 = vmatpush2.bf16.msra.mxu0 %v9685
      %10049 = vmatprep.subr.bf16.mxu0 %v9678
      %10050 = vmatpush2.bf16.msra.mxu0 %v9677
      %10051 = vmatprep.subr.bf16.mxu0 %v9670
      %10052 = vmatpush2.bf16.msra.mxu0 %v9669
      %10053 = vmatprep.subr.bf16.mxu0 %v9662
      %10054 = vmatpush2.bf16.msra.mxu0 %v9661
      %10055 = vmatprep.subr.bf16.mxu0 %v9654
      %10056 = vmatpush2.bf16.msra.mxu0 %v9653
      %10057 = vmatprep.subr.bf16.mxu0 %v9646
      %10058 = vmatpush2.bf16.msra.mxu0 %v9645
      %10059 = vmatprep.subr.bf16.mxu0 %v9638
      %10060 = vmatpush2.bf16.msra.mxu0 %v9637
      %10061 = vmatprep.subr.bf16.mxu0 %v9630
      %10062 = vmatpush2.bf16.msra.mxu0 %v9629
      %10063 = vmatprep.mubr.bf16.mxu0 %v8411
      %10064 = vmatmul.mubr.bf16.gmra.mxu0 %v8410
      %v10065 = vpop.f32.mrf.mxu0
      %v10066 = vadd.f32 %v10025, %v10065
      %v10067 = vpop.f32.mrf.mxu0
      %v10068 = vadd.f32 %v10027, %v10067
      %v10069 = vpop.f32.mrf.mxu0
      %v10070 = vpop.f32.mrf.mxu0
      %10071 = vdwg.mxu0
      %10072 = vmatprep.subr.bf16.mxu0 %v9496
      %10073 = vmatpush1.bf16.msra.mxu0 %v9495
      %10074 = vmatprep.subr.bf16.mxu0 %v9488
      %10075 = vmatpush1.bf16.msra.mxu0 %v9487
      %10076 = vmatprep.subr.bf16.mxu0 %v9480
      %10077 = vmatpush1.bf16.msra.mxu0 %v9479
      %10078 = vmatprep.subr.bf16.mxu0 %v9472
      %10079 = vmatpush1.bf16.msra.mxu0 %v9471
      %10080 = vmatprep.subr.bf16.mxu0 %v9464
      %10081 = vmatpush1.bf16.msra.mxu0 %v9463
      %10082 = vmatprep.subr.bf16.mxu0 %v9456
      %10083 = vmatpush1.bf16.msra.mxu0 %v9455
      %10084 = vmatprep.subr.bf16.mxu0 %v9448
      %10085 = vmatpush1.bf16.msra.mxu0 %v9447
      %10086 = vmatprep.subr.bf16.mxu0 %v9440
      %10087 = vmatpush1.bf16.msra.mxu0 %v9439
      %10088 = vmatprep.subr.bf16.mxu0 %v9560
      %10089 = vmatpush2.bf16.msra.mxu0 %v9559
      %10090 = vmatprep.subr.bf16.mxu0 %v9552
      %10091 = vmatpush2.bf16.msra.mxu0 %v9551
      %10092 = vmatprep.subr.bf16.mxu0 %v9544
      %10093 = vmatpush2.bf16.msra.mxu0 %v9543
      %10094 = vmatprep.subr.bf16.mxu0 %v9536
      %10095 = vmatpush2.bf16.msra.mxu0 %v9535
      %10096 = vmatprep.subr.bf16.mxu0 %v9528
      %10097 = vmatpush2.bf16.msra.mxu0 %v9527
      %10098 = vmatprep.subr.bf16.mxu0 %v9520
      %10099 = vmatpush2.bf16.msra.mxu0 %v9519
      %10100 = vmatprep.subr.bf16.mxu0 %v9512
      %10101 = vmatpush2.bf16.msra.mxu0 %v9511
      %10102 = vmatprep.subr.bf16.mxu0 %v9504
      %10103 = vmatpush2.bf16.msra.mxu0 %v9503
      %10104 = vmatprep.mubr.bf16.mxu0 %v8409
      %10105 = vmatmul.mubr.bf16.gmra.mxu0 %v8408
      %v10106 = vpop.f32.mrf.mxu0
      %v10107 = vadd.f32 %v9961, %v10106
      %v10108 = vpop.f32.mrf.mxu0
      %v10109 = vadd.f32 %v9965, %v10108
      %v10110 = vpop.f32.mrf.mxu0
      %v10111 = vpop.f32.mrf.mxu0
      %10112 = vdwg.mxu0
      %10113 = vmatprep.subr.bf16.mxu0 %v9624
      %10114 = vmatpush1.bf16.msra.mxu0 %v9623
      %10115 = vmatprep.subr.bf16.mxu0 %v9616
      %10116 = vmatpush1.bf16.msra.mxu0 %v9615
      %10117 = vmatprep.subr.bf16.mxu0 %v9608
      %10118 = vmatpush1.bf16.msra.mxu0 %v9607
      %10119 = vmatprep.subr.bf16.mxu0 %v9600
      %10120 = vmatpush1.bf16.msra.mxu0 %v9599
      %10121 = vmatprep.subr.bf16.mxu0 %v9592
      %10122 = vmatpush1.bf16.msra.mxu0 %v9591
      %10123 = vmatprep.subr.bf16.mxu0 %v9584
      %10124 = vmatpush1.bf16.msra.mxu0 %v9583
      %10125 = vmatprep.subr.bf16.mxu0 %v9576
      %10126 = vmatpush1.bf16.msra.mxu0 %v9575
      %10127 = vmatprep.subr.bf16.mxu0 %v9568
      %10128 = vmatpush1.bf16.msra.mxu0 %v9567
      %10129 = vmatprep.subr.bf16.mxu0 %v9688
      %10130 = vmatpush2.bf16.msra.mxu0 %v9687
      %10131 = vmatprep.subr.bf16.mxu0 %v9680
      %10132 = vmatpush2.bf16.msra.mxu0 %v9679
      %10133 = vmatprep.subr.bf16.mxu0 %v9672
      %10134 = vmatpush2.bf16.msra.mxu0 %v9671
      %10135 = vmatprep.subr.bf16.mxu0 %v9664
      %10136 = vmatpush2.bf16.msra.mxu0 %v9663
      %10137 = vmatprep.subr.bf16.mxu0 %v9656
      %10138 = vmatpush2.bf16.msra.mxu0 %v9655
      %10139 = vmatprep.subr.bf16.mxu0 %v9648
      %10140 = vmatpush2.bf16.msra.mxu0 %v9647
      %10141 = vmatprep.subr.bf16.mxu0 %v9640
      %10142 = vmatpush2.bf16.msra.mxu0 %v9639
      %10143 = vmatprep.subr.bf16.mxu0 %v9632
      %10144 = vmatpush2.bf16.msra.mxu0 %v9631
      %10145 = vmatprep.mubr.bf16.mxu0 %v8411
      %10146 = vmatmul.mubr.bf16.gmra.mxu0 %v8410
      %v10147 = vpop.f32.mrf.mxu0
      %v10148 = vadd.f32 %v10107, %v10147
      %v10149 = vpop.f32.mrf.mxu0
      %v10150 = vadd.f32 %v10109, %v10149
      %v10151 = vpop.f32.mrf.mxu0
      %v10152 = vpop.f32.mrf.mxu0
      %10153 = vdwg.mxu0
      %10154 = vmatprep.subr.bf16.mxu0 %v9498
      %10155 = vmatpush1.bf16.msra.mxu0 %v9497
      %10156 = vmatprep.subr.bf16.mxu0 %v9490
      %10157 = vmatpush1.bf16.msra.mxu0 %v9489
      %10158 = vmatprep.subr.bf16.mxu0 %v9482
      %10159 = vmatpush1.bf16.msra.mxu0 %v9481
      %10160 = vmatprep.subr.bf16.mxu0 %v9474
      %10161 = vmatpush1.bf16.msra.mxu0 %v9473
      %10162 = vmatprep.subr.bf16.mxu0 %v9466
      %10163 = vmatpush1.bf16.msra.mxu0 %v9465
      %10164 = vmatprep.subr.bf16.mxu0 %v9458
      %10165 = vmatpush1.bf16.msra.mxu0 %v9457
      %10166 = vmatprep.subr.bf16.mxu0 %v9450
      %10167 = vmatpush1.bf16.msra.mxu0 %v9449
      %10168 = vmatprep.subr.bf16.mxu0 %v9442
      %10169 = vmatpush1.bf16.msra.mxu0 %v9441
      %10170 = vmatprep.subr.bf16.mxu0 %v9562
      %10171 = vmatpush2.bf16.msra.mxu0 %v9561
      %10172 = vmatprep.subr.bf16.mxu0 %v9554
      %10173 = vmatpush2.bf16.msra.mxu0 %v9553
      %10174 = vmatprep.subr.bf16.mxu0 %v9546
      %10175 = vmatpush2.bf16.msra.mxu0 %v9545
      %10176 = vmatprep.subr.bf16.mxu0 %v9538
      %10177 = vmatpush2.bf16.msra.mxu0 %v9537
      %10178 = vmatprep.subr.bf16.mxu0 %v9530
      %10179 = vmatpush2.bf16.msra.mxu0 %v9529
      %10180 = vmatprep.subr.bf16.mxu0 %v9522
      %10181 = vmatpush2.bf16.msra.mxu0 %v9521
      %10182 = vmatprep.subr.bf16.mxu0 %v9514
      %10183 = vmatpush2.bf16.msra.mxu0 %v9513
      %10184 = vmatprep.subr.bf16.mxu0 %v9506
      %10185 = vmatpush2.bf16.msra.mxu0 %v9505
      %10186 = vmatprep.mubr.bf16.mxu0 %v8409
      %10187 = vmatmul.mubr.bf16.gmra.mxu0 %v8408
      %v10188 = vpop.f32.mrf.mxu0
      %v10189 = vadd.f32 %v9969, %v10188
      %v10190 = vpop.f32.mrf.mxu0
      %v10191 = vadd.f32 %v9973, %v10190
      %v10192 = vpop.f32.mrf.mxu0
      %v10193 = vpop.f32.mrf.mxu0
      %10194 = vdwg.mxu0
      %10195 = vmatprep.subr.bf16.mxu0 %v9626
      %10196 = vmatpush1.bf16.msra.mxu0 %v9625
      %10197 = vmatprep.subr.bf16.mxu0 %v9618
      %10198 = vmatpush1.bf16.msra.mxu0 %v9617
      %10199 = vmatprep.subr.bf16.mxu0 %v9610
      %10200 = vmatpush1.bf16.msra.mxu0 %v9609
      %10201 = vmatprep.subr.bf16.mxu0 %v9602
      %10202 = vmatpush1.bf16.msra.mxu0 %v9601
      %10203 = vmatprep.subr.bf16.mxu0 %v9594
      %10204 = vmatpush1.bf16.msra.mxu0 %v9593
      %10205 = vmatprep.subr.bf16.mxu0 %v9586
      %10206 = vmatpush1.bf16.msra.mxu0 %v9585
      %10207 = vmatprep.subr.bf16.mxu0 %v9578
      %10208 = vmatpush1.bf16.msra.mxu0 %v9577
      %10209 = vmatprep.subr.bf16.mxu0 %v9570
      %10210 = vmatpush1.bf16.msra.mxu0 %v9569
      %10211 = vmatprep.subr.bf16.mxu0 %v9690
      %10212 = vmatpush2.bf16.msra.mxu0 %v9689
      %10213 = vmatprep.subr.bf16.mxu0 %v9682
      %10214 = vmatpush2.bf16.msra.mxu0 %v9681
      %10215 = vmatprep.subr.bf16.mxu0 %v9674
      %10216 = vmatpush2.bf16.msra.mxu0 %v9673
      %10217 = vmatprep.subr.bf16.mxu0 %v9666
      %10218 = vmatpush2.bf16.msra.mxu0 %v9665
      %10219 = vmatprep.subr.bf16.mxu0 %v9658
      %10220 = vmatpush2.bf16.msra.mxu0 %v9657
      %10221 = vmatprep.subr.bf16.mxu0 %v9650
      %10222 = vmatpush2.bf16.msra.mxu0 %v9649
      %10223 = vmatprep.subr.bf16.mxu0 %v9642
      %10224 = vmatpush2.bf16.msra.mxu0 %v9641
      %10225 = vmatprep.subr.bf16.mxu0 %v9634
      %10226 = vmatpush2.bf16.msra.mxu0 %v9633
      %10227 = vmatprep.mubr.bf16.mxu0 %v8411
      %10228 = vmatmul.mubr.bf16.gmra.mxu0 %v8410
      %v10229 = vpop.f32.mrf.mxu0
      %v10230 = vadd.f32 %v10189, %v10229
      %v10231 = vpop.f32.mrf.mxu0
      %v10232 = vadd.f32 %v10191, %v10231
      %v10233 = vpop.f32.mrf.mxu0
      %v10234 = vpop.f32.mrf.mxu0
      %10235 = vdwg.mxu0
      %10236 = vmatprep.subr.bf16.mxu0 %v9500
      %10237 = vmatpush1.bf16.msra.mxu0 %v9499
      %10238 = vmatprep.subr.bf16.mxu0 %v9492
      %10239 = vmatpush1.bf16.msra.mxu0 %v9491
      %10240 = vmatprep.subr.bf16.mxu0 %v9484
      %10241 = vmatpush1.bf16.msra.mxu0 %v9483
      %10242 = vmatprep.subr.bf16.mxu0 %v9476
      %10243 = vmatpush1.bf16.msra.mxu0 %v9475
      %10244 = vmatprep.subr.bf16.mxu0 %v9468
      %10245 = vmatpush1.bf16.msra.mxu0 %v9467
      %10246 = vmatprep.subr.bf16.mxu0 %v9460
      %10247 = vmatpush1.bf16.msra.mxu0 %v9459
      %10248 = vmatprep.subr.bf16.mxu0 %v9452
      %10249 = vmatpush1.bf16.msra.mxu0 %v9451
      %10250 = vmatprep.subr.bf16.mxu0 %v9444
      %10251 = vmatpush1.bf16.msra.mxu0 %v9443
      %10252 = vmatprep.subr.bf16.mxu0 %v9564
      %10253 = vmatpush2.bf16.msra.mxu0 %v9563
      %10254 = vmatprep.subr.bf16.mxu0 %v9556
      %10255 = vmatpush2.bf16.msra.mxu0 %v9555
      %10256 = vmatprep.subr.bf16.mxu0 %v9548
      %10257 = vmatpush2.bf16.msra.mxu0 %v9547
      %10258 = vmatprep.subr.bf16.mxu0 %v9540
      %10259 = vmatpush2.bf16.msra.mxu0 %v9539
      %10260 = vmatprep.subr.bf16.mxu0 %v9532
      %10261 = vmatpush2.bf16.msra.mxu0 %v9531
      %10262 = vmatprep.subr.bf16.mxu0 %v9524
      %10263 = vmatpush2.bf16.msra.mxu0 %v9523
      %10264 = vmatprep.subr.bf16.mxu0 %v9516
      %10265 = vmatpush2.bf16.msra.mxu0 %v9515
      %10266 = vmatprep.subr.bf16.mxu0 %v9508
      %10267 = vmatpush2.bf16.msra.mxu0 %v9507
      %10268 = vmatprep.mubr.bf16.mxu0 %v8409
      %10269 = vmatmul.mubr.bf16.gmra.mxu0 %v8408
      %v10270 = vpop.f32.mrf.mxu0
      %v10271 = vadd.f32 %v9977, %v10270
      %v10272 = vpop.f32.mrf.mxu0
      %v10273 = vadd.f32 %v9981, %v10272
      %v10274 = vpop.f32.mrf.mxu0
      %v10275 = vpop.f32.mrf.mxu0
      %10276 = vdwg.mxu0
      %10277 = vmatprep.subr.bf16.mxu0 %v9628
      %10278 = vmatpush1.bf16.msra.mxu0 %v9627
      %10279 = vmatprep.subr.bf16.mxu0 %v9620
      %10280 = vmatpush1.bf16.msra.mxu0 %v9619
      %10281 = vmatprep.subr.bf16.mxu0 %v9612
      %10282 = vmatpush1.bf16.msra.mxu0 %v9611
      %10283 = vmatprep.subr.bf16.mxu0 %v9604
      %10284 = vmatpush1.bf16.msra.mxu0 %v9603
      %10285 = vmatprep.subr.bf16.mxu0 %v9596
      %10286 = vmatpush1.bf16.msra.mxu0 %v9595
      %10287 = vmatprep.subr.bf16.mxu0 %v9588
      %10288 = vmatpush1.bf16.msra.mxu0 %v9587
      %10289 = vmatprep.subr.bf16.mxu0 %v9580
      %10290 = vmatpush1.bf16.msra.mxu0 %v9579
      %10291 = vmatprep.subr.bf16.mxu0 %v9572
      %10292 = vmatpush1.bf16.msra.mxu0 %v9571
      %10293 = vmatprep.subr.bf16.mxu0 %v9692
      %10294 = vmatpush2.bf16.msra.mxu0 %v9691
      %10295 = vmatprep.subr.bf16.mxu0 %v9684
      %10296 = vmatpush2.bf16.msra.mxu0 %v9683
      %10297 = vmatprep.subr.bf16.mxu0 %v9676
      %10298 = vmatpush2.bf16.msra.mxu0 %v9675
      %10299 = vmatprep.subr.bf16.mxu0 %v9668
      %10300 = vmatpush2.bf16.msra.mxu0 %v9667
      %10301 = vmatprep.subr.bf16.mxu0 %v9660
      %10302 = vmatpush2.bf16.msra.mxu0 %v9659
      %10303 = vmatprep.subr.bf16.mxu0 %v9652
      %10304 = vmatpush2.bf16.msra.mxu0 %v9651
      %10305 = vmatprep.subr.bf16.mxu0 %v9644
      %10306 = vmatpush2.bf16.msra.mxu0 %v9643
      %10307 = vmatprep.subr.bf16.mxu0 %v9636
      %10308 = vmatpush2.bf16.msra.mxu0 %v9635
      %10309 = vmatprep.mubr.bf16.mxu0 %v8411
      %10310 = vmatmul.mubr.bf16.gmra.mxu0 %v8410
      %v10311 = vpop.f32.mrf.mxu0
      %v10312 = vadd.f32 %v10271, %v10311
      %v10313 = vpop.f32.mrf.mxu0
      %v10314 = vadd.f32 %v10273, %v10313
      %v10315 = vpop.f32.mrf.mxu0
      %v10316 = vpop.f32.mrf.mxu0
      %10317 = vdwg.mxu0
      %v10318 = vpack.c.bf16 %v8110, %v8110
      %v10319 = vld [vmem:[%s15] sm:$0xff]
      %v10320 = vld [vmem:[%s15 + $0x8] sm:$0xff]
      %v10321 = vld [vmem:[%s15 + $0x10] sm:$0xff]
      %v10322 = vld [vmem:[%s15 + $0x18] sm:$0xff]
      %v10323 = vld [vmem:[%s15 + $0x20] sm:$0xff]
      %v10324 = vld [vmem:[%s15 + $0x28] sm:$0xff]
      %v10325 = vld [vmem:[%s15 + $0x30] sm:$0xff]
      %v10326 = vld [vmem:[%s15 + $0x38] sm:$0xff]
      %v10327 = vld [vmem:[%s15 + $0x40] sm:$0xff]
      %v10328 = vld [vmem:[%s15 + $0x48] sm:$0xff]
      %v10329 = vld [vmem:[%s15 + $0x50] sm:$0xff]
      %v10330 = vld [vmem:[%s15 + $0x58] sm:$0xff]
      %v10331 = vld [vmem:[%s15 + $0x60] sm:$0xff]
      %v10332 = vld [vmem:[%s15 + $0x68] sm:$0xff]
      %v10333 = vld [vmem:[%s15 + $0x70] sm:$0xff]
      %v10334 = vld [vmem:[%s15 + $0x78] sm:$0xff]
      %v10335 = vld [vmem:[%s15 + $0x80] sm:$0xff]
      %v10336 = vld [vmem:[%s15 + $0x88] sm:$0xff]
      %v10337 = vld [vmem:[%s15 + $0x90] sm:$0xff]
      %v10338 = vld [vmem:[%s15 + $0x98] sm:$0xff]
      %v10339 = vld [vmem:[%s15 + $0xa0] sm:$0xff]
      %v10340 = vld [vmem:[%s15 + $0xa8] sm:$0xff]
      %v10341 = vld [vmem:[%s15 + $0xb0] sm:$0xff]
      %v10342 = vld [vmem:[%s15 + $0xb8] sm:$0xff]
      %v10343 = vld [vmem:[%s15 + $0xc0] sm:$0xff]
      %v10344 = vld [vmem:[%s15 + $0xc8] sm:$0xff]
      %v10345 = vld [vmem:[%s15 + $0xd0] sm:$0xff]
      %v10346 = vld [vmem:[%s15 + $0xd8] sm:$0xff]
      %v10347 = vld [vmem:[%s15 + $0xe0] sm:$0xff]
      %v10348 = vld [vmem:[%s15 + $0xe8] sm:$0xff]
      %v10349 = vld [vmem:[%s15 + $0xf0] sm:$0xff]
      %v10350 = vld [vmem:[%s15 + $0xf8] sm:$0xff]
      %v10383 = vunpack.c.l.b16 %v10319
      %v10384 = vunpack.c.h.b16 %v10319
      %v10385 = vunpack.c.l.b16 %v10320
      %v10386 = vunpack.c.h.b16 %v10320
      %v10387 = vunpack.c.l.b16 %v10321
      %v10388 = vunpack.c.h.b16 %v10321
      %v10389 = vunpack.c.l.b16 %v10322
      %v10390 = vunpack.c.h.b16 %v10322
      %v10391 = vunpack.c.l.b16 %v10323
      %v10392 = vunpack.c.h.b16 %v10323
      %v10393 = vunpack.c.l.b16 %v10324
      %v10394 = vunpack.c.h.b16 %v10324
      %v10395 = vunpack.c.l.b16 %v10325
      %v10396 = vunpack.c.h.b16 %v10325
      %v10397 = vunpack.c.l.b16 %v10326
      %v10398 = vunpack.c.h.b16 %v10326
      %v10399 = vunpack.c.l.b16 %v10327
      %v10400 = vunpack.c.h.b16 %v10327
      %v10401 = vunpack.c.l.b16 %v10328
      %v10402 = vunpack.c.h.b16 %v10328
      %v10403 = vunpack.c.l.b16 %v10329
      %v10404 = vunpack.c.h.b16 %v10329
      %v10405 = vunpack.c.l.b16 %v10330
      %v10406 = vunpack.c.h.b16 %v10330
      %v10407 = vunpack.c.l.b16 %v10331
      %v10408 = vunpack.c.h.b16 %v10331
      %v10409 = vunpack.c.l.b16 %v10332
      %v10410 = vunpack.c.h.b16 %v10332
      %v10411 = vunpack.c.l.b16 %v10333
      %v10412 = vunpack.c.h.b16 %v10333
      %v10413 = vunpack.c.l.b16 %v10334
      %v10414 = vunpack.c.h.b16 %v10334
      %v10415 = vunpack.c.l.b16 %v10335
      %v10416 = vunpack.c.h.b16 %v10335
      %v10417 = vunpack.c.l.b16 %v10336
      %v10418 = vunpack.c.h.b16 %v10336
      %v10419 = vunpack.c.l.b16 %v10337
      %v10420 = vunpack.c.h.b16 %v10337
      %v10421 = vunpack.c.l.b16 %v10338
      %v10422 = vunpack.c.h.b16 %v10338
      %v10423 = vunpack.c.l.b16 %v10339
      %v10424 = vunpack.c.h.b16 %v10339
      %v10425 = vunpack.c.l.b16 %v10340
      %v10426 = vunpack.c.h.b16 %v10340
      %v10427 = vunpack.c.l.b16 %v10341
      %v10428 = vunpack.c.h.b16 %v10341
      %v10429 = vunpack.c.l.b16 %v10342
      %v10430 = vunpack.c.h.b16 %v10342
      %v10431 = vunpack.c.l.b16 %v10343
      %v10432 = vunpack.c.h.b16 %v10343
      %v10433 = vunpack.c.l.b16 %v10344
      %v10434 = vunpack.c.h.b16 %v10344
      %v10435 = vunpack.c.l.b16 %v10345
      %v10436 = vunpack.c.h.b16 %v10345
      %v10437 = vunpack.c.l.b16 %v10346
      %v10438 = vunpack.c.h.b16 %v10346
      %v10439 = vunpack.c.l.b16 %v10347
      %v10440 = vunpack.c.h.b16 %v10347
      %v10441 = vunpack.c.l.b16 %v10348
      %v10442 = vunpack.c.h.b16 %v10348
      %v10443 = vunpack.c.l.b16 %v10349
      %v10444 = vunpack.c.h.b16 %v10349
      %v10445 = vunpack.c.l.b16 %v10350
      %v10446 = vunpack.c.h.b16 %v10350
      %v10447 = vpack.c.b16 %v10391, %v10383
      %v10448 = vpack.c.b16 %v10392, %v10384
      %v10449 = vpack.c.b16 %v10393, %v10385
      %v10450 = vpack.c.b16 %v10394, %v10386
      %v10451 = vpack.c.b16 %v10395, %v10387
      %v10452 = vpack.c.b16 %v10396, %v10388
      %v10453 = vpack.c.b16 %v10397, %v10389
      %v10454 = vpack.c.b16 %v10398, %v10390
      %v10455 = vpack.c.b16 %v10407, %v10399
      %v10456 = vpack.c.b16 %v10408, %v10400
      %v10457 = vpack.c.b16 %v10409, %v10401
      %v10458 = vpack.c.b16 %v10410, %v10402
      %v10459 = vpack.c.b16 %v10411, %v10403
      %v10460 = vpack.c.b16 %v10412, %v10404
      %v10461 = vpack.c.b16 %v10413, %v10405
      %v10462 = vpack.c.b16 %v10414, %v10406
      %v10463 = vpack.c.b16 %v10423, %v10415
      %v10464 = vpack.c.b16 %v10424, %v10416
      %v10465 = vpack.c.b16 %v10425, %v10417
      %v10466 = vpack.c.b16 %v10426, %v10418
      %v10467 = vpack.c.b16 %v10427, %v10419
      %v10468 = vpack.c.b16 %v10428, %v10420
      %v10469 = vpack.c.b16 %v10429, %v10421
      %v10470 = vpack.c.b16 %v10430, %v10422
      %v10471 = vpack.c.b16 %v10439, %v10431
      %v10472 = vpack.c.b16 %v10440, %v10432
      %v10473 = vpack.c.b16 %v10441, %v10433
      %v10474 = vpack.c.b16 %v10442, %v10434
      %v10475 = vpack.c.b16 %v10443, %v10435
      %v10476 = vpack.c.b16 %v10444, %v10436
      %v10477 = vpack.c.b16 %v10445, %v10437
      %v10478 = vpack.c.b16 %v10446, %v10438
      %v10512 = vsel %vm2570, %v10318, 0
      %10514 = vmatprep.subr.bf16.mxu0 0
      %10515 = vmatpush1.bf16.msra.mxu0 0
      %10516 = vmatprep.subr.bf16.mxu0 0
      %10517 = vmatpush1.bf16.msra.mxu0 0
      %10518 = vmatprep.subr.bf16.mxu0 0
      %10519 = vmatpush1.bf16.msra.mxu0 0
      %10520 = vmatprep.subr.bf16.mxu0 0
      %10521 = vmatpush1.bf16.msra.mxu0 0
      %10522 = vmatprep.subr.bf16.mxu0 %v10472
      %10523 = vmatpush1.bf16.msra.mxu0 %v10471
      %10524 = vmatprep.subr.bf16.mxu0 %v10464
      %10525 = vmatpush1.bf16.msra.mxu0 %v10463
      %10526 = vmatprep.subr.bf16.mxu0 %v10456
      %10527 = vmatpush1.bf16.msra.mxu0 %v10455
      %10528 = vmatprep.subr.bf16.mxu0 %v10448
      %10529 = vmatpush1.bf16.msra.mxu0 %v10447
      %10530 = vmatprep.subr.bf16.mxu0 0
      %10531 = vmatpush2.bf16.msra.mxu0 0
      %10532 = vmatprep.subr.bf16.mxu0 0
      %10533 = vmatpush2.bf16.msra.mxu0 0
      %10534 = vmatprep.subr.bf16.mxu0 0
      %10535 = vmatpush2.bf16.msra.mxu0 0
      %10536 = vmatprep.subr.bf16.mxu0 0
      %10537 = vmatpush2.bf16.msra.mxu0 0
      %10538 = vmatprep.subr.bf16.mxu0 0
      %10539 = vmatpush2.bf16.msra.mxu0 0
      %10540 = vmatprep.subr.bf16.mxu0 0
      %10541 = vmatpush2.bf16.msra.mxu0 0
      %10542 = vmatprep.subr.bf16.mxu0 0
      %10543 = vmatpush2.bf16.msra.mxu0 0
      %10544 = vmatprep.subr.bf16.mxu0 0
      %10545 = vmatpush2.bf16.msra.mxu0 0
      %10546 = vmatprep.mubr.bf16.mxu0 0
      %10547 = vmatmul.mubr.bf16.gmra.mxu0 %v10512
      %v10548 = vpop.f32.mrf.mxu0
      %v10549 = vadd.f32 0.0, %v10548
      %v10550 = vpop.f32.mrf.mxu0
      %v10551 = vadd.f32 0.0, %v10550
      %v10552 = vpop.f32.mrf.mxu0
      %v10553 = vpop.f32.mrf.mxu0
      %10554 = vdwg.mxu0
      %10555 = vmatprep.subr.bf16.mxu0 0
      %10556 = vmatpush1.bf16.msra.mxu0 0
      %10557 = vmatprep.subr.bf16.mxu0 0
      %10558 = vmatpush1.bf16.msra.mxu0 0
      %10559 = vmatprep.subr.bf16.mxu0 0
      %10560 = vmatpush1.bf16.msra.mxu0 0
      %10561 = vmatprep.subr.bf16.mxu0 0
      %10562 = vmatpush1.bf16.msra.mxu0 0
      %10563 = vmatprep.subr.bf16.mxu0 %v10474
      %10564 = vmatpush1.bf16.msra.mxu0 %v10473
      %10565 = vmatprep.subr.bf16.mxu0 %v10466
      %10566 = vmatpush1.bf16.msra.mxu0 %v10465
      %10567 = vmatprep.subr.bf16.mxu0 %v10458
      %10568 = vmatpush1.bf16.msra.mxu0 %v10457
      %10569 = vmatprep.subr.bf16.mxu0 %v10450
      %10570 = vmatpush1.bf16.msra.mxu0 %v10449
      %10571 = vmatprep.subr.bf16.mxu0 0
      %10572 = vmatpush2.bf16.msra.mxu0 0
      %10573 = vmatprep.subr.bf16.mxu0 0
      %10574 = vmatpush2.bf16.msra.mxu0 0
      %10575 = vmatprep.subr.bf16.mxu0 0
      %10576 = vmatpush2.bf16.msra.mxu0 0
      %10577 = vmatprep.subr.bf16.mxu0 0
      %10578 = vmatpush2.bf16.msra.mxu0 0
      %10579 = vmatprep.subr.bf16.mxu0 0
      %10580 = vmatpush2.bf16.msra.mxu0 0
      %10581 = vmatprep.subr.bf16.mxu0 0
      %10582 = vmatpush2.bf16.msra.mxu0 0
      %10583 = vmatprep.subr.bf16.mxu0 0
      %10584 = vmatpush2.bf16.msra.mxu0 0
      %10585 = vmatprep.subr.bf16.mxu0 0
      %10586 = vmatpush2.bf16.msra.mxu0 0
      %10587 = vmatprep.mubr.bf16.mxu0 0
      %10588 = vmatmul.mubr.bf16.gmra.mxu0 %v10512
      %v10589 = vpop.f32.mrf.mxu0
      %v10590 = vadd.f32 0.0, %v10589
      %v10591 = vpop.f32.mrf.mxu0
      %v10592 = vadd.f32 0.0, %v10591
      %v10593 = vpop.f32.mrf.mxu0
      %v10594 = vpop.f32.mrf.mxu0
      %10595 = vdwg.mxu0
      %10596 = vmatprep.subr.bf16.mxu0 0
      %10597 = vmatpush1.bf16.msra.mxu0 0
      %10598 = vmatprep.subr.bf16.mxu0 0
      %10599 = vmatpush1.bf16.msra.mxu0 0
      %10600 = vmatprep.subr.bf16.mxu0 0
      %10601 = vmatpush1.bf16.msra.mxu0 0
      %10602 = vmatprep.subr.bf16.mxu0 0
      %10603 = vmatpush1.bf16.msra.mxu0 0
      %10604 = vmatprep.subr.bf16.mxu0 %v10476
      %10605 = vmatpush1.bf16.msra.mxu0 %v10475
      %10606 = vmatprep.subr.bf16.mxu0 %v10468
      %10607 = vmatpush1.bf16.msra.mxu0 %v10467
      %10608 = vmatprep.subr.bf16.mxu0 %v10460
      %10609 = vmatpush1.bf16.msra.mxu0 %v10459
      %10610 = vmatprep.subr.bf16.mxu0 %v10452
      %10611 = vmatpush1.bf16.msra.mxu0 %v10451
      %10612 = vmatprep.subr.bf16.mxu0 0
      %10613 = vmatpush2.bf16.msra.mxu0 0
      %10614 = vmatprep.subr.bf16.mxu0 0
      %10615 = vmatpush2.bf16.msra.mxu0 0
      %10616 = vmatprep.subr.bf16.mxu0 0
      %10617 = vmatpush2.bf16.msra.mxu0 0
      %10618 = vmatprep.subr.bf16.mxu0 0
      %10619 = vmatpush2.bf16.msra.mxu0 0
      %10620 = vmatprep.subr.bf16.mxu0 0
      %10621 = vmatpush2.bf16.msra.mxu0 0
      %10622 = vmatprep.subr.bf16.mxu0 0
      %10623 = vmatpush2.bf16.msra.mxu0 0
      %10624 = vmatprep.subr.bf16.mxu0 0
      %10625 = vmatpush2.bf16.msra.mxu0 0
      %10626 = vmatprep.subr.bf16.mxu0 0
      %10627 = vmatpush2.bf16.msra.mxu0 0
      %10628 = vmatprep.mubr.bf16.mxu0 0
      %10629 = vmatmul.mubr.bf16.gmra.mxu0 %v10512
      %v10630 = vpop.f32.mrf.mxu0
      %v10631 = vadd.f32 0.0, %v10630
      %v10632 = vpop.f32.mrf.mxu0
      %v10633 = vadd.f32 0.0, %v10632
      %v10634 = vpop.f32.mrf.mxu0
      %v10635 = vpop.f32.mrf.mxu0
      %10636 = vdwg.mxu0
      %10637 = vmatprep.subr.bf16.mxu0 0
      %10638 = vmatpush1.bf16.msra.mxu0 0
      %10639 = vmatprep.subr.bf16.mxu0 0
      %10640 = vmatpush1.bf16.msra.mxu0 0
      %10641 = vmatprep.subr.bf16.mxu0 0
      %10642 = vmatpush1.bf16.msra.mxu0 0
      %10643 = vmatprep.subr.bf16.mxu0 0
      %10644 = vmatpush1.bf16.msra.mxu0 0
      %10645 = vmatprep.subr.bf16.mxu0 %v10478
      %10646 = vmatpush1.bf16.msra.mxu0 %v10477
      %10647 = vmatprep.subr.bf16.mxu0 %v10470
      %10648 = vmatpush1.bf16.msra.mxu0 %v10469
      %10649 = vmatprep.subr.bf16.mxu0 %v10462
      %10650 = vmatpush1.bf16.msra.mxu0 %v10461
      %10651 = vmatprep.subr.bf16.mxu0 %v10454
      %10652 = vmatpush1.bf16.msra.mxu0 %v10453
      %10653 = vmatprep.subr.bf16.mxu0 0
      %10654 = vmatpush2.bf16.msra.mxu0 0
      %10655 = vmatprep.subr.bf16.mxu0 0
      %10656 = vmatpush2.bf16.msra.mxu0 0
      %10657 = vmatprep.subr.bf16.mxu0 0
      %10658 = vmatpush2.bf16.msra.mxu0 0
      %10659 = vmatprep.subr.bf16.mxu0 0
      %10660 = vmatpush2.bf16.msra.mxu0 0
      %10661 = vmatprep.subr.bf16.mxu0 0
      %10662 = vmatpush2.bf16.msra.mxu0 0
      %10663 = vmatprep.subr.bf16.mxu0 0
      %10664 = vmatpush2.bf16.msra.mxu0 0
      %10665 = vmatprep.subr.bf16.mxu0 0
      %10666 = vmatpush2.bf16.msra.mxu0 0
      %10667 = vmatprep.subr.bf16.mxu0 0
      %10668 = vmatpush2.bf16.msra.mxu0 0
      %10669 = vmatprep.mubr.bf16.mxu0 0
      %10670 = vmatmul.mubr.bf16.gmra.mxu0 %v10512
      %v10671 = vpop.f32.mrf.mxu0
      %v10672 = vadd.f32 0.0, %v10671
      %v10673 = vpop.f32.mrf.mxu0
      %v10674 = vadd.f32 0.0, %v10673
      %v10675 = vpop.f32.mrf.mxu0
      %v10676 = vpop.f32.mrf.mxu0
      %10677 = vdwg.mxu0
      %v10678 = vadd.f32 %v10066, %v10549
      %v10679 = vadd.f32 %v10068, %v10551
      %v10680 = vadd.f32 %v10148, %v10590
      %v10681 = vadd.f32 %v10150, %v10592
      %v10682 = vadd.f32 %v10230, %v10631
      %v10683 = vadd.f32 %v10232, %v10633
      %v10684 = vadd.f32 %v10312, %v10672
      %v10685 = vadd.f32 %v10314, %v10674
      %s10686 = scalar_lea.vmem %s15, 256
      %v10687 = vld [vmem:[%s10686] sm:$0xff]
      %v10688 = vld [vmem:[%s10686 + $0x8] sm:$0xff]
      %v10689 = vld [vmem:[%s10686 + $0x10] sm:$0xff]
      %v10690 = vld [vmem:[%s10686 + $0x18] sm:$0xff]
      %v10691 = vld [vmem:[%s10686 + $0x20] sm:$0xff]
      %v10692 = vld [vmem:[%s10686 + $0x28] sm:$0xff]
      %v10693 = vld [vmem:[%s10686 + $0x30] sm:$0xff]
      %v10694 = vld [vmem:[%s10686 + $0x38] sm:$0xff]
      %v10695 = vld [vmem:[%s10686 + $0x40] sm:$0xff]
      %v10696 = vld [vmem:[%s10686 + $0x48] sm:$0xff]
      %v10697 = vld [vmem:[%s10686 + $0x50] sm:$0xff]
      %v10698 = vld [vmem:[%s10686 + $0x58] sm:$0xff]
      %v10699 = vld [vmem:[%s10686 + $0x60] sm:$0xff]
      %v10700 = vld [vmem:[%s10686 + $0x68] sm:$0xff]
      %v10701 = vld [vmem:[%s10686 + $0x70] sm:$0xff]
      %v10702 = vld [vmem:[%s10686 + $0x78] sm:$0xff]
      %v10703 = vld [vmem:[%s10686 + $0x80] sm:$0xff]
      %v10704 = vld [vmem:[%s10686 + $0x88] sm:$0xff]
      %v10705 = vld [vmem:[%s10686 + $0x90] sm:$0xff]
      %v10706 = vld [vmem:[%s10686 + $0x98] sm:$0xff]
      %v10707 = vld [vmem:[%s10686 + $0xa0] sm:$0xff]
      %v10708 = vld [vmem:[%s10686 + $0xa8] sm:$0xff]
      %v10709 = vld [vmem:[%s10686 + $0xb0] sm:$0xff]
      %v10710 = vld [vmem:[%s10686 + $0xb8] sm:$0xff]
      %v10711 = vld [vmem:[%s10686 + $0xc0] sm:$0xff]
      %v10712 = vld [vmem:[%s10686 + $0xc8] sm:$0xff]
      %v10713 = vld [vmem:[%s10686 + $0xd0] sm:$0xff]
      %v10714 = vld [vmem:[%s10686 + $0xd8] sm:$0xff]
      %v10715 = vld [vmem:[%s10686 + $0xe0] sm:$0xff]
      %v10716 = vld [vmem:[%s10686 + $0xe8] sm:$0xff]
      %v10717 = vld [vmem:[%s10686 + $0xf0] sm:$0xff]
      %v10718 = vld [vmem:[%s10686 + $0xf8] sm:$0xff]
      %v10719 = vshrl.u32 %v10318, 16
      %v10753 = vunpack.c.l.b16 %v10687
      %v10754 = vunpack.c.h.b16 %v10687
      %v10755 = vunpack.c.l.b16 %v10688
      %v10756 = vunpack.c.h.b16 %v10688
      %v10757 = vunpack.c.l.b16 %v10689
      %v10758 = vunpack.c.h.b16 %v10689
      %v10759 = vunpack.c.l.b16 %v10690
      %v10760 = vunpack.c.h.b16 %v10690
      %v10761 = vunpack.c.l.b16 %v10691
      %v10762 = vunpack.c.h.b16 %v10691
      %v10763 = vunpack.c.l.b16 %v10692
      %v10764 = vunpack.c.h.b16 %v10692
      %v10765 = vunpack.c.l.b16 %v10693
      %v10766 = vunpack.c.h.b16 %v10693
      %v10767 = vunpack.c.l.b16 %v10694
      %v10768 = vunpack.c.h.b16 %v10694
      %v10769 = vunpack.c.l.b16 %v10695
      %v10770 = vunpack.c.h.b16 %v10695
      %v10771 = vunpack.c.l.b16 %v10696
      %v10772 = vunpack.c.h.b16 %v10696
      %v10773 = vunpack.c.l.b16 %v10697
      %v10774 = vunpack.c.h.b16 %v10697
      %v10775 = vunpack.c.l.b16 %v10698
      %v10776 = vunpack.c.h.b16 %v10698
      %v10777 = vunpack.c.l.b16 %v10699
      %v10778 = vunpack.c.h.b16 %v10699
      %v10779 = vunpack.c.l.b16 %v10700
      %v10780 = vunpack.c.h.b16 %v10700
      %v10781 = vunpack.c.l.b16 %v10701
      %v10782 = vunpack.c.h.b16 %v10701
      %v10783 = vunpack.c.l.b16 %v10702
      %v10784 = vunpack.c.h.b16 %v10702
      %v10785 = vunpack.c.l.b16 %v10703
      %v10786 = vunpack.c.h.b16 %v10703
      %v10787 = vunpack.c.l.b16 %v10704
      %v10788 = vunpack.c.h.b16 %v10704
      %v10789 = vunpack.c.l.b16 %v10705
      %v10790 = vunpack.c.h.b16 %v10705
      %v10791 = vunpack.c.l.b16 %v10706
      %v10792 = vunpack.c.h.b16 %v10706
      %v10793 = vunpack.c.l.b16 %v10707
      %v10794 = vunpack.c.h.b16 %v10707
      %v10795 = vunpack.c.l.b16 %v10708
      %v10796 = vunpack.c.h.b16 %v10708
      %v10797 = vunpack.c.l.b16 %v10709
      %v10798 = vunpack.c.h.b16 %v10709
      %v10799 = vunpack.c.l.b16 %v10710
      %v10800 = vunpack.c.h.b16 %v10710
      %v10801 = vunpack.c.l.b16 %v10711
      %v10802 = vunpack.c.h.b16 %v10711
      %v10803 = vunpack.c.l.b16 %v10712
      %v10804 = vunpack.c.h.b16 %v10712
      %v10805 = vunpack.c.l.b16 %v10713
      %v10806 = vunpack.c.h.b16 %v10713
      %v10807 = vunpack.c.l.b16 %v10714
      %v10808 = vunpack.c.h.b16 %v10714
      %v10809 = vunpack.c.l.b16 %v10715
      %v10810 = vunpack.c.h.b16 %v10715
      %v10811 = vunpack.c.l.b16 %v10716
      %v10812 = vunpack.c.h.b16 %v10716
      %v10813 = vunpack.c.l.b16 %v10717
      %v10814 = vunpack.c.h.b16 %v10717
      %v10815 = vunpack.c.l.b16 %v10718
      %v10816 = vunpack.c.h.b16 %v10718
      %v10817 = vpack.c.b16 %v10761, %v10753
      %v10818 = vpack.c.b16 %v10762, %v10754
      %v10819 = vpack.c.b16 %v10763, %v10755
      %v10820 = vpack.c.b16 %v10764, %v10756
      %v10821 = vpack.c.b16 %v10765, %v10757
      %v10822 = vpack.c.b16 %v10766, %v10758
      %v10823 = vpack.c.b16 %v10767, %v10759
      %v10824 = vpack.c.b16 %v10768, %v10760
      %v10825 = vpack.c.b16 %v10777, %v10769
      %v10826 = vpack.c.b16 %v10778, %v10770
      %v10827 = vpack.c.b16 %v10779, %v10771
      %v10828 = vpack.c.b16 %v10780, %v10772
      %v10829 = vpack.c.b16 %v10781, %v10773
      %v10830 = vpack.c.b16 %v10782, %v10774
      %v10831 = vpack.c.b16 %v10783, %v10775
      %v10832 = vpack.c.b16 %v10784, %v10776
      %v10833 = vpack.c.b16 %v10793, %v10785
      %v10834 = vpack.c.b16 %v10794, %v10786
      %v10835 = vpack.c.b16 %v10795, %v10787
      %v10836 = vpack.c.b16 %v10796, %v10788
      %v10837 = vpack.c.b16 %v10797, %v10789
      %v10838 = vpack.c.b16 %v10798, %v10790
      %v10839 = vpack.c.b16 %v10799, %v10791
      %v10840 = vpack.c.b16 %v10800, %v10792
      %v10841 = vpack.c.b16 %v10809, %v10801
      %v10842 = vpack.c.b16 %v10810, %v10802
      %v10843 = vpack.c.b16 %v10811, %v10803
      %v10844 = vpack.c.b16 %v10812, %v10804
      %v10845 = vpack.c.b16 %v10813, %v10805
      %v10846 = vpack.c.b16 %v10814, %v10806
      %v10847 = vpack.c.b16 %v10815, %v10807
      %v10848 = vpack.c.b16 %v10816, %v10808
      %v10882 = vsel %vm2570, %v10719, 0
      %10884 = vmatprep.subr.bf16.mxu0 0
      %10885 = vmatpush1.bf16.msra.mxu0 0
      %10886 = vmatprep.subr.bf16.mxu0 0
      %10887 = vmatpush1.bf16.msra.mxu0 0
      %10888 = vmatprep.subr.bf16.mxu0 0
      %10889 = vmatpush1.bf16.msra.mxu0 0
      %10890 = vmatprep.subr.bf16.mxu0 0
      %10891 = vmatpush1.bf16.msra.mxu0 0
      %10892 = vmatprep.subr.bf16.mxu0 %v10842
      %10893 = vmatpush1.bf16.msra.mxu0 %v10841
      %10894 = vmatprep.subr.bf16.mxu0 %v10834
      %10895 = vmatpush1.bf16.msra.mxu0 %v10833
      %10896 = vmatprep.subr.bf16.mxu0 %v10826
      %10897 = vmatpush1.bf16.msra.mxu0 %v10825
      %10898 = vmatprep.subr.bf16.mxu0 %v10818
      %10899 = vmatpush1.bf16.msra.mxu0 %v10817
      %10900 = vmatprep.subr.bf16.mxu0 0
      %10901 = vmatpush2.bf16.msra.mxu0 0
      %10902 = vmatprep.subr.bf16.mxu0 0
      %10903 = vmatpush2.bf16.msra.mxu0 0
      %10904 = vmatprep.subr.bf16.mxu0 0
      %10905 = vmatpush2.bf16.msra.mxu0 0
      %10906 = vmatprep.subr.bf16.mxu0 0
      %10907 = vmatpush2.bf16.msra.mxu0 0
      %10908 = vmatprep.subr.bf16.mxu0 0
      %10909 = vmatpush2.bf16.msra.mxu0 0
      %10910 = vmatprep.subr.bf16.mxu0 0
      %10911 = vmatpush2.bf16.msra.mxu0 0
      %10912 = vmatprep.subr.bf16.mxu0 0
      %10913 = vmatpush2.bf16.msra.mxu0 0
      %10914 = vmatprep.subr.bf16.mxu0 0
      %10915 = vmatpush2.bf16.msra.mxu0 0
      %10916 = vmatprep.mubr.bf16.mxu0 0
      %10917 = vmatmul.mubr.bf16.gmra.mxu0 %v10882
      %v10918 = vpop.f32.mrf.mxu0
      %v10919 = vadd.f32 0.0, %v10918
      %v10920 = vpop.f32.mrf.mxu0
      %v10921 = vadd.f32 0.0, %v10920
      %v10922 = vpop.f32.mrf.mxu0
      %v10923 = vpop.f32.mrf.mxu0
      %10924 = vdwg.mxu0
      %10925 = vmatprep.subr.bf16.mxu0 0
      %10926 = vmatpush1.bf16.msra.mxu0 0
      %10927 = vmatprep.subr.bf16.mxu0 0
      %10928 = vmatpush1.bf16.msra.mxu0 0
      %10929 = vmatprep.subr.bf16.mxu0 0
      %10930 = vmatpush1.bf16.msra.mxu0 0
      %10931 = vmatprep.subr.bf16.mxu0 0
      %10932 = vmatpush1.bf16.msra.mxu0 0
      %10933 = vmatprep.subr.bf16.mxu0 %v10844
      %10934 = vmatpush1.bf16.msra.mxu0 %v10843
      %10935 = vmatprep.subr.bf16.mxu0 %v10836
      %10936 = vmatpush1.bf16.msra.mxu0 %v10835
      %10937 = vmatprep.subr.bf16.mxu0 %v10828
      %10938 = vmatpush1.bf16.msra.mxu0 %v10827
      %10939 = vmatprep.subr.bf16.mxu0 %v10820
      %10940 = vmatpush1.bf16.msra.mxu0 %v10819
      %10941 = vmatprep.subr.bf16.mxu0 0
      %10942 = vmatpush2.bf16.msra.mxu0 0
      %10943 = vmatprep.subr.bf16.mxu0 0
      %10944 = vmatpush2.bf16.msra.mxu0 0
      %10945 = vmatprep.subr.bf16.mxu0 0
      %10946 = vmatpush2.bf16.msra.mxu0 0
      %10947 = vmatprep.subr.bf16.mxu0 0
      %10948 = vmatpush2.bf16.msra.mxu0 0
      %10949 = vmatprep.subr.bf16.mxu0 0
      %10950 = vmatpush2.bf16.msra.mxu0 0
      %10951 = vmatprep.subr.bf16.mxu0 0
      %10952 = vmatpush2.bf16.msra.mxu0 0
      %10953 = vmatprep.subr.bf16.mxu0 0
      %10954 = vmatpush2.bf16.msra.mxu0 0
      %10955 = vmatprep.subr.bf16.mxu0 0
      %10956 = vmatpush2.bf16.msra.mxu0 0
      %10957 = vmatprep.mubr.bf16.mxu0 0
      %10958 = vmatmul.mubr.bf16.gmra.mxu0 %v10882
      %v10959 = vpop.f32.mrf.mxu0
      %v10960 = vadd.f32 0.0, %v10959
      %v10961 = vpop.f32.mrf.mxu0
      %v10962 = vadd.f32 0.0, %v10961
      %v10963 = vpop.f32.mrf.mxu0
      %v10964 = vpop.f32.mrf.mxu0
      %10965 = vdwg.mxu0
      %10966 = vmatprep.subr.bf16.mxu0 0
      %10967 = vmatpush1.bf16.msra.mxu0 0
      %10968 = vmatprep.subr.bf16.mxu0 0
      %10969 = vmatpush1.bf16.msra.mxu0 0
      %10970 = vmatprep.subr.bf16.mxu0 0
      %10971 = vmatpush1.bf16.msra.mxu0 0
      %10972 = vmatprep.subr.bf16.mxu0 0
      %10973 = vmatpush1.bf16.msra.mxu0 0
      %10974 = vmatprep.subr.bf16.mxu0 %v10846
      %10975 = vmatpush1.bf16.msra.mxu0 %v10845
      %10976 = vmatprep.subr.bf16.mxu0 %v10838
      %10977 = vmatpush1.bf16.msra.mxu0 %v10837
      %10978 = vmatprep.subr.bf16.mxu0 %v10830
      %10979 = vmatpush1.bf16.msra.mxu0 %v10829
      %10980 = vmatprep.subr.bf16.mxu0 %v10822
      %10981 = vmatpush1.bf16.msra.mxu0 %v10821
      %10982 = vmatprep.subr.bf16.mxu0 0
      %10983 = vmatpush2.bf16.msra.mxu0 0
      %10984 = vmatprep.subr.bf16.mxu0 0
      %10985 = vmatpush2.bf16.msra.mxu0 0
      %10986 = vmatprep.subr.bf16.mxu0 0
      %10987 = vmatpush2.bf16.msra.mxu0 0
      %10988 = vmatprep.subr.bf16.mxu0 0
      %10989 = vmatpush2.bf16.msra.mxu0 0
      %10990 = vmatprep.subr.bf16.mxu0 0
      %10991 = vmatpush2.bf16.msra.mxu0 0
      %10992 = vmatprep.subr.bf16.mxu0 0
      %10993 = vmatpush2.bf16.msra.mxu0 0
      %10994 = vmatprep.subr.bf16.mxu0 0
      %10995 = vmatpush2.bf16.msra.mxu0 0
      %10996 = vmatprep.subr.bf16.mxu0 0
      %10997 = vmatpush2.bf16.msra.mxu0 0
      %10998 = vmatprep.mubr.bf16.mxu0 0
      %10999 = vmatmul.mubr.bf16.gmra.mxu0 %v10882
      %v11000 = vpop.f32.mrf.mxu0
      %v11001 = vadd.f32 0.0, %v11000
      %v11002 = vpop.f32.mrf.mxu0
      %v11003 = vadd.f32 0.0, %v11002
      %v11004 = vpop.f32.mrf.mxu0
      %v11005 = vpop.f32.mrf.mxu0
      %11006 = vdwg.mxu0
      %11007 = vmatprep.subr.bf16.mxu0 0
      %11008 = vmatpush1.bf16.msra.mxu0 0
      %11009 = vmatprep.subr.bf16.mxu0 0
      %11010 = vmatpush1.bf16.msra.mxu0 0
      %11011 = vmatprep.subr.bf16.mxu0 0
      %11012 = vmatpush1.bf16.msra.mxu0 0
      %11013 = vmatprep.subr.bf16.mxu0 0
      %11014 = vmatpush1.bf16.msra.mxu0 0
      %11015 = vmatprep.subr.bf16.mxu0 %v10848
      %11016 = vmatpush1.bf16.msra.mxu0 %v10847
      %11017 = vmatprep.subr.bf16.mxu0 %v10840
      %11018 = vmatpush1.bf16.msra.mxu0 %v10839
      %11019 = vmatprep.subr.bf16.mxu0 %v10832
      %11020 = vmatpush1.bf16.msra.mxu0 %v10831
      %11021 = vmatprep.subr.bf16.mxu0 %v10824
      %11022 = vmatpush1.bf16.msra.mxu0 %v10823
      %11023 = vmatprep.subr.bf16.mxu0 0
      %11024 = vmatpush2.bf16.msra.mxu0 0
      %11025 = vmatprep.subr.bf16.mxu0 0
      %11026 = vmatpush2.bf16.msra.mxu0 0
      %11027 = vmatprep.subr.bf16.mxu0 0
      %11028 = vmatpush2.bf16.msra.mxu0 0
      %11029 = vmatprep.subr.bf16.mxu0 0
      %11030 = vmatpush2.bf16.msra.mxu0 0
      %11031 = vmatprep.subr.bf16.mxu0 0
      %11032 = vmatpush2.bf16.msra.mxu0 0
      %11033 = vmatprep.subr.bf16.mxu0 0
      %11034 = vmatpush2.bf16.msra.mxu0 0
      %11035 = vmatprep.subr.bf16.mxu0 0
      %11036 = vmatpush2.bf16.msra.mxu0 0
      %11037 = vmatprep.subr.bf16.mxu0 0
      %11038 = vmatpush2.bf16.msra.mxu0 0
      %11039 = vmatprep.mubr.bf16.mxu0 0
      %11040 = vmatmul.mubr.bf16.gmra.mxu0 %v10882
      %v11041 = vpop.f32.mrf.mxu0
      %v11042 = vadd.f32 0.0, %v11041
      %v11043 = vpop.f32.mrf.mxu0
      %v11044 = vadd.f32 0.0, %v11043
      %v11045 = vpop.f32.mrf.mxu0
      %v11046 = vpop.f32.mrf.mxu0
      %11047 = vdwg.mxu0
      %v11048 = vadd.f32 %v10678, %v10919
      %v11049 = vadd.f32 %v10679, %v10921
      %v11050 = vadd.f32 %v10680, %v10960
      %v11051 = vadd.f32 %v10681, %v10962
      %v11052 = vadd.f32 %v10682, %v11001
      %v11053 = vadd.f32 %v10683, %v11003
      %v11054 = vadd.f32 %v10684, %v11042
      %v11055 = vadd.f32 %v10685, %v11044
      %s11056 = scalar_lea.vmem %s15, 512
      %v11057 = vld [vmem:[%s11056] sm:$0xff]
      %v11058 = vld [vmem:[%s11056 + $0x8] sm:$0xff]
      %v11059 = vld [vmem:[%s11056 + $0x10] sm:$0xff]
      %v11060 = vld [vmem:[%s11056 + $0x18] sm:$0xff]
      %v11061 = vld [vmem:[%s11056 + $0x20] sm:$0xff]
      %v11062 = vld [vmem:[%s11056 + $0x28] sm:$0xff]
      %v11063 = vld [vmem:[%s11056 + $0x30] sm:$0xff]
      %v11064 = vld [vmem:[%s11056 + $0x38] sm:$0xff]
      %v11065 = vld [vmem:[%s11056 + $0x40] sm:$0xff]
      %v11066 = vld [vmem:[%s11056 + $0x48] sm:$0xff]
      %v11067 = vld [vmem:[%s11056 + $0x50] sm:$0xff]
      %v11068 = vld [vmem:[%s11056 + $0x58] sm:$0xff]
      %v11069 = vld [vmem:[%s11056 + $0x60] sm:$0xff]
      %v11070 = vld [vmem:[%s11056 + $0x68] sm:$0xff]
      %v11071 = vld [vmem:[%s11056 + $0x70] sm:$0xff]
      %v11072 = vld [vmem:[%s11056 + $0x78] sm:$0xff]
      %v11073 = vld [vmem:[%s11056 + $0x80] sm:$0xff]
      %v11074 = vld [vmem:[%s11056 + $0x88] sm:$0xff]
      %v11075 = vld [vmem:[%s11056 + $0x90] sm:$0xff]
      %v11076 = vld [vmem:[%s11056 + $0x98] sm:$0xff]
      %v11077 = vld [vmem:[%s11056 + $0xa0] sm:$0xff]
      %v11078 = vld [vmem:[%s11056 + $0xa8] sm:$0xff]
      %v11079 = vld [vmem:[%s11056 + $0xb0] sm:$0xff]
      %v11080 = vld [vmem:[%s11056 + $0xb8] sm:$0xff]
      %v11081 = vld [vmem:[%s11056 + $0xc0] sm:$0xff]
      %v11082 = vld [vmem:[%s11056 + $0xc8] sm:$0xff]
      %v11083 = vld [vmem:[%s11056 + $0xd0] sm:$0xff]
      %v11084 = vld [vmem:[%s11056 + $0xd8] sm:$0xff]
      %v11085 = vld [vmem:[%s11056 + $0xe0] sm:$0xff]
      %v11086 = vld [vmem:[%s11056 + $0xe8] sm:$0xff]
      %v11087 = vld [vmem:[%s11056 + $0xf0] sm:$0xff]
      %v11088 = vld [vmem:[%s11056 + $0xf8] sm:$0xff]
      %v11090 = vrot.slane %v10318, 1
      %v11123 = vunpack.c.l.b16 %v11057
      %v11124 = vunpack.c.h.b16 %v11057
      %v11125 = vunpack.c.l.b16 %v11058
      %v11126 = vunpack.c.h.b16 %v11058
      %v11127 = vunpack.c.l.b16 %v11059
      %v11128 = vunpack.c.h.b16 %v11059
      %v11129 = vunpack.c.l.b16 %v11060
      %v11130 = vunpack.c.h.b16 %v11060
      %v11131 = vunpack.c.l.b16 %v11061
      %v11132 = vunpack.c.h.b16 %v11061
      %v11133 = vunpack.c.l.b16 %v11062
      %v11134 = vunpack.c.h.b16 %v11062
      %v11135 = vunpack.c.l.b16 %v11063
      %v11136 = vunpack.c.h.b16 %v11063
      %v11137 = vunpack.c.l.b16 %v11064
      %v11138 = vunpack.c.h.b16 %v11064
      %v11139 = vunpack.c.l.b16 %v11065
      %v11140 = vunpack.c.h.b16 %v11065
      %v11141 = vunpack.c.l.b16 %v11066
      %v11142 = vunpack.c.h.b16 %v11066
      %v11143 = vunpack.c.l.b16 %v11067
      %v11144 = vunpack.c.h.b16 %v11067
      %v11145 = vunpack.c.l.b16 %v11068
      %v11146 = vunpack.c.h.b16 %v11068
      %v11147 = vunpack.c.l.b16 %v11069
      %v11148 = vunpack.c.h.b16 %v11069
      %v11149 = vunpack.c.l.b16 %v11070
      %v11150 = vunpack.c.h.b16 %v11070
      %v11151 = vunpack.c.l.b16 %v11071
      %v11152 = vunpack.c.h.b16 %v11071
      %v11153 = vunpack.c.l.b16 %v11072
      %v11154 = vunpack.c.h.b16 %v11072
      %v11155 = vunpack.c.l.b16 %v11073
      %v11156 = vunpack.c.h.b16 %v11073
      %v11157 = vunpack.c.l.b16 %v11074
      %v11158 = vunpack.c.h.b16 %v11074
      %v11159 = vunpack.c.l.b16 %v11075
      %v11160 = vunpack.c.h.b16 %v11075
      %v11161 = vunpack.c.l.b16 %v11076
      %v11162 = vunpack.c.h.b16 %v11076
      %v11163 = vunpack.c.l.b16 %v11077
      %v11164 = vunpack.c.h.b16 %v11077
      %v11165 = vunpack.c.l.b16 %v11078
      %v11166 = vunpack.c.h.b16 %v11078
      %v11167 = vunpack.c.l.b16 %v11079
      %v11168 = vunpack.c.h.b16 %v11079
      %v11169 = vunpack.c.l.b16 %v11080
      %v11170 = vunpack.c.h.b16 %v11080
      %v11171 = vunpack.c.l.b16 %v11081
      %v11172 = vunpack.c.h.b16 %v11081
      %v11173 = vunpack.c.l.b16 %v11082
      %v11174 = vunpack.c.h.b16 %v11082
      %v11175 = vunpack.c.l.b16 %v11083
      %v11176 = vunpack.c.h.b16 %v11083
      %v11177 = vunpack.c.l.b16 %v11084
      %v11178 = vunpack.c.h.b16 %v11084
      %v11179 = vunpack.c.l.b16 %v11085
      %v11180 = vunpack.c.h.b16 %v11085
      %v11181 = vunpack.c.l.b16 %v11086
      %v11182 = vunpack.c.h.b16 %v11086
      %v11183 = vunpack.c.l.b16 %v11087
      %v11184 = vunpack.c.h.b16 %v11087
      %v11185 = vunpack.c.l.b16 %v11088
      %v11186 = vunpack.c.h.b16 %v11088
      %v11187 = vpack.c.b16 %v11131, %v11123
      %v11188 = vpack.c.b16 %v11132, %v11124
      %v11189 = vpack.c.b16 %v11133, %v11125
      %v11190 = vpack.c.b16 %v11134, %v11126
      %v11191 = vpack.c.b16 %v11135, %v11127
      %v11192 = vpack.c.b16 %v11136, %v11128
      %v11193 = vpack.c.b16 %v11137, %v11129
      %v11194 = vpack.c.b16 %v11138, %v11130
      %v11195 = vpack.c.b16 %v11147, %v11139
      %v11196 = vpack.c.b16 %v11148, %v11140
      %v11197 = vpack.c.b16 %v11149, %v11141
      %v11198 = vpack.c.b16 %v11150, %v11142
      %v11199 = vpack.c.b16 %v11151, %v11143
      %v11200 = vpack.c.b16 %v11152, %v11144
      %v11201 = vpack.c.b16 %v11153, %v11145
      %v11202 = vpack.c.b16 %v11154, %v11146
      %v11203 = vpack.c.b16 %v11163, %v11155
      %v11204 = vpack.c.b16 %v11164, %v11156
      %v11205 = vpack.c.b16 %v11165, %v11157
      %v11206 = vpack.c.b16 %v11166, %v11158
      %v11207 = vpack.c.b16 %v11167, %v11159
      %v11208 = vpack.c.b16 %v11168, %v11160
      %v11209 = vpack.c.b16 %v11169, %v11161
      %v11210 = vpack.c.b16 %v11170, %v11162
      %v11211 = vpack.c.b16 %v11179, %v11171
      %v11212 = vpack.c.b16 %v11180, %v11172
      %v11213 = vpack.c.b16 %v11181, %v11173
      %v11214 = vpack.c.b16 %v11182, %v11174
      %v11215 = vpack.c.b16 %v11183, %v11175
      %v11216 = vpack.c.b16 %v11184, %v11176
      %v11217 = vpack.c.b16 %v11185, %v11177
      %v11218 = vpack.c.b16 %v11186, %v11178
      %v11252 = vsel %vm2570, %v11090, 0
      %11254 = vmatprep.subr.bf16.mxu0 0
      %11255 = vmatpush1.bf16.msra.mxu0 0
      %11256 = vmatprep.subr.bf16.mxu0 0
      %11257 = vmatpush1.bf16.msra.mxu0 0
      %11258 = vmatprep.subr.bf16.mxu0 0
      %11259 = vmatpush1.bf16.msra.mxu0 0
      %11260 = vmatprep.subr.bf16.mxu0 0
      %11261 = vmatpush1.bf16.msra.mxu0 0
      %11262 = vmatprep.subr.bf16.mxu0 %v11212
      %11263 = vmatpush1.bf16.msra.mxu0 %v11211
      %11264 = vmatprep.subr.bf16.mxu0 %v11204
      %11265 = vmatpush1.bf16.msra.mxu0 %v11203
      %11266 = vmatprep.subr.bf16.mxu0 %v11196
      %11267 = vmatpush1.bf16.msra.mxu0 %v11195
      %11268 = vmatprep.subr.bf16.mxu0 %v11188
      %11269 = vmatpush1.bf16.msra.mxu0 %v11187
      %11270 = vmatprep.subr.bf16.mxu0 0
      %11271 = vmatpush2.bf16.msra.mxu0 0
      %11272 = vmatprep.subr.bf16.mxu0 0
      %11273 = vmatpush2.bf16.msra.mxu0 0
      %11274 = vmatprep.subr.bf16.mxu0 0
      %11275 = vmatpush2.bf16.msra.mxu0 0
      %11276 = vmatprep.subr.bf16.mxu0 0
      %11277 = vmatpush2.bf16.msra.mxu0 0
      %11278 = vmatprep.subr.bf16.mxu0 0
      %11279 = vmatpush2.bf16.msra.mxu0 0
      %11280 = vmatprep.subr.bf16.mxu0 0
      %11281 = vmatpush2.bf16.msra.mxu0 0
      %11282 = vmatprep.subr.bf16.mxu0 0
      %11283 = vmatpush2.bf16.msra.mxu0 0
      %11284 = vmatprep.subr.bf16.mxu0 0
      %11285 = vmatpush2.bf16.msra.mxu0 0
      %11286 = vmatprep.mubr.bf16.mxu0 0
      %11287 = vmatmul.mubr.bf16.gmra.mxu0 %v11252
      %v11288 = vpop.f32.mrf.mxu0
      %v11289 = vadd.f32 0.0, %v11288
      %v11290 = vpop.f32.mrf.mxu0
      %v11291 = vadd.f32 0.0, %v11290
      %v11292 = vpop.f32.mrf.mxu0
      %v11293 = vpop.f32.mrf.mxu0
      %11294 = vdwg.mxu0
      %11295 = vmatprep.subr.bf16.mxu0 0
      %11296 = vmatpush1.bf16.msra.mxu0 0
      %11297 = vmatprep.subr.bf16.mxu0 0
      %11298 = vmatpush1.bf16.msra.mxu0 0
      %11299 = vmatprep.subr.bf16.mxu0 0
      %11300 = vmatpush1.bf16.msra.mxu0 0
      %11301 = vmatprep.subr.bf16.mxu0 0
      %11302 = vmatpush1.bf16.msra.mxu0 0
      %11303 = vmatprep.subr.bf16.mxu0 %v11214
      %11304 = vmatpush1.bf16.msra.mxu0 %v11213
      %11305 = vmatprep.subr.bf16.mxu0 %v11206
      %11306 = vmatpush1.bf16.msra.mxu0 %v11205
      %11307 = vmatprep.subr.bf16.mxu0 %v11198
      %11308 = vmatpush1.bf16.msra.mxu0 %v11197
      %11309 = vmatprep.subr.bf16.mxu0 %v11190
      %11310 = vmatpush1.bf16.msra.mxu0 %v11189
      %11311 = vmatprep.subr.bf16.mxu0 0
      %11312 = vmatpush2.bf16.msra.mxu0 0
      %11313 = vmatprep.subr.bf16.mxu0 0
      %11314 = vmatpush2.bf16.msra.mxu0 0
      %11315 = vmatprep.subr.bf16.mxu0 0
      %11316 = vmatpush2.bf16.msra.mxu0 0
      %11317 = vmatprep.subr.bf16.mxu0 0
      %11318 = vmatpush2.bf16.msra.mxu0 0
      %11319 = vmatprep.subr.bf16.mxu0 0
      %11320 = vmatpush2.bf16.msra.mxu0 0
      %11321 = vmatprep.subr.bf16.mxu0 0
      %11322 = vmatpush2.bf16.msra.mxu0 0
      %11323 = vmatprep.subr.bf16.mxu0 0
      %11324 = vmatpush2.bf16.msra.mxu0 0
      %11325 = vmatprep.subr.bf16.mxu0 0
      %11326 = vmatpush2.bf16.msra.mxu0 0
      %11327 = vmatprep.mubr.bf16.mxu0 0
      %11328 = vmatmul.mubr.bf16.gmra.mxu0 %v11252
      %v11329 = vpop.f32.mrf.mxu0
      %v11330 = vadd.f32 0.0, %v11329
      %v11331 = vpop.f32.mrf.mxu0
      %v11332 = vadd.f32 0.0, %v11331
      %v11333 = vpop.f32.mrf.mxu0
      %v11334 = vpop.f32.mrf.mxu0
      %11335 = vdwg.mxu0
      %11336 = vmatprep.subr.bf16.mxu0 0
      %11337 = vmatpush1.bf16.msra.mxu0 0
      %11338 = vmatprep.subr.bf16.mxu0 0
      %11339 = vmatpush1.bf16.msra.mxu0 0
      %11340 = vmatprep.subr.bf16.mxu0 0
      %11341 = vmatpush1.bf16.msra.mxu0 0
      %11342 = vmatprep.subr.bf16.mxu0 0
      %11343 = vmatpush1.bf16.msra.mxu0 0
      %11344 = vmatprep.subr.bf16.mxu0 %v11216
      %11345 = vmatpush1.bf16.msra.mxu0 %v11215
      %11346 = vmatprep.subr.bf16.mxu0 %v11208
      %11347 = vmatpush1.bf16.msra.mxu0 %v11207
      %11348 = vmatprep.subr.bf16.mxu0 %v11200
      %11349 = vmatpush1.bf16.msra.mxu0 %v11199
      %11350 = vmatprep.subr.bf16.mxu0 %v11192
      %11351 = vmatpush1.bf16.msra.mxu0 %v11191
      %11352 = vmatprep.subr.bf16.mxu0 0
      %11353 = vmatpush2.bf16.msra.mxu0 0
      %11354 = vmatprep.subr.bf16.mxu0 0
      %11355 = vmatpush2.bf16.msra.mxu0 0
      %11356 = vmatprep.subr.bf16.mxu0 0
      %11357 = vmatpush2.bf16.msra.mxu0 0
      %11358 = vmatprep.subr.bf16.mxu0 0
      %11359 = vmatpush2.bf16.msra.mxu0 0
      %11360 = vmatprep.subr.bf16.mxu0 0
      %11361 = vmatpush2.bf16.msra.mxu0 0
      %11362 = vmatprep.subr.bf16.mxu0 0
      %11363 = vmatpush2.bf16.msra.mxu0 0
      %11364 = vmatprep.subr.bf16.mxu0 0
      %11365 = vmatpush2.bf16.msra.mxu0 0
      %11366 = vmatprep.subr.bf16.mxu0 0
      %11367 = vmatpush2.bf16.msra.mxu0 0
      %11368 = vmatprep.mubr.bf16.mxu0 0
      %11369 = vmatmul.mubr.bf16.gmra.mxu0 %v11252
      %v11370 = vpop.f32.mrf.mxu0
      %v11371 = vadd.f32 0.0, %v11370
      %v11372 = vpop.f32.mrf.mxu0
      %v11373 = vadd.f32 0.0, %v11372
      %v11374 = vpop.f32.mrf.mxu0
      %v11375 = vpop.f32.mrf.mxu0
      %11376 = vdwg.mxu0
      %11377 = vmatprep.subr.bf16.mxu0 0
      %11378 = vmatpush1.bf16.msra.mxu0 0
      %11379 = vmatprep.subr.bf16.mxu0 0
      %11380 = vmatpush1.bf16.msra.mxu0 0
      %11381 = vmatprep.subr.bf16.mxu0 0
      %11382 = vmatpush1.bf16.msra.mxu0 0
      %11383 = vmatprep.subr.bf16.mxu0 0
      %11384 = vmatpush1.bf16.msra.mxu0 0
      %11385 = vmatprep.subr.bf16.mxu0 %v11218
      %11386 = vmatpush1.bf16.msra.mxu0 %v11217
      %11387 = vmatprep.subr.bf16.mxu0 %v11210
      %11388 = vmatpush1.bf16.msra.mxu0 %v11209
      %11389 = vmatprep.subr.bf16.mxu0 %v11202
      %11390 = vmatpush1.bf16.msra.mxu0 %v11201
      %11391 = vmatprep.subr.bf16.mxu0 %v11194
      %11392 = vmatpush1.bf16.msra.mxu0 %v11193
      %11393 = vmatprep.subr.bf16.mxu0 0
      %11394 = vmatpush2.bf16.msra.mxu0 0
      %11395 = vmatprep.subr.bf16.mxu0 0
      %11396 = vmatpush2.bf16.msra.mxu0 0
      %11397 = vmatprep.subr.bf16.mxu0 0
      %11398 = vmatpush2.bf16.msra.mxu0 0
      %11399 = vmatprep.subr.bf16.mxu0 0
      %11400 = vmatpush2.bf16.msra.mxu0 0
      %11401 = vmatprep.subr.bf16.mxu0 0
      %11402 = vmatpush2.bf16.msra.mxu0 0
      %11403 = vmatprep.subr.bf16.mxu0 0
      %11404 = vmatpush2.bf16.msra.mxu0 0
      %11405 = vmatprep.subr.bf16.mxu0 0
      %11406 = vmatpush2.bf16.msra.mxu0 0
      %11407 = vmatprep.subr.bf16.mxu0 0
      %11408 = vmatpush2.bf16.msra.mxu0 0
      %11409 = vmatprep.mubr.bf16.mxu0 0
      %11410 = vmatmul.mubr.bf16.gmra.mxu0 %v11252
      %v11411 = vpop.f32.mrf.mxu0
      %v11412 = vadd.f32 0.0, %v11411
      %v11413 = vpop.f32.mrf.mxu0
      %v11414 = vadd.f32 0.0, %v11413
      %v11415 = vpop.f32.mrf.mxu0
      %v11416 = vpop.f32.mrf.mxu0
      %11417 = vdwg.mxu0
      %v11418 = vadd.f32 %v11048, %v11289
      %v11419 = vadd.f32 %v11049, %v11291
      %v11420 = vadd.f32 %v11050, %v11330
      %v11421 = vadd.f32 %v11051, %v11332
      %v11422 = vadd.f32 %v11052, %v11371
      %v11423 = vadd.f32 %v11053, %v11373
      %v11424 = vadd.f32 %v11054, %v11412
      %v11425 = vadd.f32 %v11055, %v11414
      %s11426 = scalar_lea.vmem %s15, 768
      %v11427 = vld [vmem:[%s11426] sm:$0xff]
      %v11428 = vld [vmem:[%s11426 + $0x8] sm:$0xff]
      %v11429 = vld [vmem:[%s11426 + $0x10] sm:$0xff]
      %v11430 = vld [vmem:[%s11426 + $0x18] sm:$0xff]
      %v11431 = vld [vmem:[%s11426 + $0x20] sm:$0xff]
      %v11432 = vld [vmem:[%s11426 + $0x28] sm:$0xff]
      %v11433 = vld [vmem:[%s11426 + $0x30] sm:$0xff]
      %v11434 = vld [vmem:[%s11426 + $0x38] sm:$0xff]
      %v11435 = vld [vmem:[%s11426 + $0x40] sm:$0xff]
      %v11436 = vld [vmem:[%s11426 + $0x48] sm:$0xff]
      %v11437 = vld [vmem:[%s11426 + $0x50] sm:$0xff]
      %v11438 = vld [vmem:[%s11426 + $0x58] sm:$0xff]
      %v11439 = vld [vmem:[%s11426 + $0x60] sm:$0xff]
      %v11440 = vld [vmem:[%s11426 + $0x68] sm:$0xff]
      %v11441 = vld [vmem:[%s11426 + $0x70] sm:$0xff]
      %v11442 = vld [vmem:[%s11426 + $0x78] sm:$0xff]
      %v11443 = vld [vmem:[%s11426 + $0x80] sm:$0xff]
      %v11444 = vld [vmem:[%s11426 + $0x88] sm:$0xff]
      %v11445 = vld [vmem:[%s11426 + $0x90] sm:$0xff]
      %v11446 = vld [vmem:[%s11426 + $0x98] sm:$0xff]
      %v11447 = vld [vmem:[%s11426 + $0xa0] sm:$0xff]
      %v11448 = vld [vmem:[%s11426 + $0xa8] sm:$0xff]
      %v11449 = vld [vmem:[%s11426 + $0xb0] sm:$0xff]
      %v11450 = vld [vmem:[%s11426 + $0xb8] sm:$0xff]
      %v11451 = vld [vmem:[%s11426 + $0xc0] sm:$0xff]
      %v11452 = vld [vmem:[%s11426 + $0xc8] sm:$0xff]
      %v11453 = vld [vmem:[%s11426 + $0xd0] sm:$0xff]
      %v11454 = vld [vmem:[%s11426 + $0xd8] sm:$0xff]
      %v11455 = vld [vmem:[%s11426 + $0xe0] sm:$0xff]
      %v11456 = vld [vmem:[%s11426 + $0xe8] sm:$0xff]
      %v11457 = vld [vmem:[%s11426 + $0xf0] sm:$0xff]
      %v11458 = vld [vmem:[%s11426 + $0xf8] sm:$0xff]
      %v11459 = vrot.slane %v10719, 1
      %v11492 = vunpack.c.l.b16 %v11427
      %v11493 = vunpack.c.h.b16 %v11427
      %v11494 = vunpack.c.l.b16 %v11428
      %v11495 = vunpack.c.h.b16 %v11428
      %v11496 = vunpack.c.l.b16 %v11429
      %v11497 = vunpack.c.h.b16 %v11429
      %v11498 = vunpack.c.l.b16 %v11430
      %v11499 = vunpack.c.h.b16 %v11430
      %v11500 = vunpack.c.l.b16 %v11431
      %v11501 = vunpack.c.h.b16 %v11431
      %v11502 = vunpack.c.l.b16 %v11432
      %v11503 = vunpack.c.h.b16 %v11432
      %v11504 = vunpack.c.l.b16 %v11433
      %v11505 = vunpack.c.h.b16 %v11433
      %v11506 = vunpack.c.l.b16 %v11434
      %v11507 = vunpack.c.h.b16 %v11434
      %v11508 = vunpack.c.l.b16 %v11435
      %v11509 = vunpack.c.h.b16 %v11435
      %v11510 = vunpack.c.l.b16 %v11436
      %v11511 = vunpack.c.h.b16 %v11436
      %v11512 = vunpack.c.l.b16 %v11437
      %v11513 = vunpack.c.h.b16 %v11437
      %v11514 = vunpack.c.l.b16 %v11438
      %v11515 = vunpack.c.h.b16 %v11438
      %v11516 = vunpack.c.l.b16 %v11439
      %v11517 = vunpack.c.h.b16 %v11439
      %v11518 = vunpack.c.l.b16 %v11440
      %v11519 = vunpack.c.h.b16 %v11440
      %v11520 = vunpack.c.l.b16 %v11441
      %v11521 = vunpack.c.h.b16 %v11441
      %v11522 = vunpack.c.l.b16 %v11442
      %v11523 = vunpack.c.h.b16 %v11442
      %v11524 = vunpack.c.l.b16 %v11443
      %v11525 = vunpack.c.h.b16 %v11443
      %v11526 = vunpack.c.l.b16 %v11444
      %v11527 = vunpack.c.h.b16 %v11444
      %v11528 = vunpack.c.l.b16 %v11445
      %v11529 = vunpack.c.h.b16 %v11445
      %v11530 = vunpack.c.l.b16 %v11446
      %v11531 = vunpack.c.h.b16 %v11446
      %v11532 = vunpack.c.l.b16 %v11447
      %v11533 = vunpack.c.h.b16 %v11447
      %v11534 = vunpack.c.l.b16 %v11448
      %v11535 = vunpack.c.h.b16 %v11448
      %v11536 = vunpack.c.l.b16 %v11449
      %v11537 = vunpack.c.h.b16 %v11449
      %v11538 = vunpack.c.l.b16 %v11450
      %v11539 = vunpack.c.h.b16 %v11450
      %v11540 = vunpack.c.l.b16 %v11451
      %v11541 = vunpack.c.h.b16 %v11451
      %v11542 = vunpack.c.l.b16 %v11452
      %v11543 = vunpack.c.h.b16 %v11452
      %v11544 = vunpack.c.l.b16 %v11453
      %v11545 = vunpack.c.h.b16 %v11453
      %v11546 = vunpack.c.l.b16 %v11454
      %v11547 = vunpack.c.h.b16 %v11454
      %v11548 = vunpack.c.l.b16 %v11455
      %v11549 = vunpack.c.h.b16 %v11455
      %v11550 = vunpack.c.l.b16 %v11456
      %v11551 = vunpack.c.h.b16 %v11456
      %v11552 = vunpack.c.l.b16 %v11457
      %v11553 = vunpack.c.h.b16 %v11457
      %v11554 = vunpack.c.l.b16 %v11458
      %v11555 = vunpack.c.h.b16 %v11458
      %v11556 = vpack.c.b16 %v11500, %v11492
      %v11557 = vpack.c.b16 %v11501, %v11493
      %v11558 = vpack.c.b16 %v11502, %v11494
      %v11559 = vpack.c.b16 %v11503, %v11495
      %v11560 = vpack.c.b16 %v11504, %v11496
      %v11561 = vpack.c.b16 %v11505, %v11497
      %v11562 = vpack.c.b16 %v11506, %v11498
      %v11563 = vpack.c.b16 %v11507, %v11499
      %v11564 = vpack.c.b16 %v11516, %v11508
      %v11565 = vpack.c.b16 %v11517, %v11509
      %v11566 = vpack.c.b16 %v11518, %v11510
      %v11567 = vpack.c.b16 %v11519, %v11511
      %v11568 = vpack.c.b16 %v11520, %v11512
      %v11569 = vpack.c.b16 %v11521, %v11513
      %v11570 = vpack.c.b16 %v11522, %v11514
      %v11571 = vpack.c.b16 %v11523, %v11515
      %v11572 = vpack.c.b16 %v11532, %v11524
      %v11573 = vpack.c.b16 %v11533, %v11525
      %v11574 = vpack.c.b16 %v11534, %v11526
      %v11575 = vpack.c.b16 %v11535, %v11527
      %v11576 = vpack.c.b16 %v11536, %v11528
      %v11577 = vpack.c.b16 %v11537, %v11529
      %v11578 = vpack.c.b16 %v11538, %v11530
      %v11579 = vpack.c.b16 %v11539, %v11531
      %v11580 = vpack.c.b16 %v11548, %v11540
      %v11581 = vpack.c.b16 %v11549, %v11541
      %v11582 = vpack.c.b16 %v11550, %v11542
      %v11583 = vpack.c.b16 %v11551, %v11543
      %v11584 = vpack.c.b16 %v11552, %v11544
      %v11585 = vpack.c.b16 %v11553, %v11545
      %v11586 = vpack.c.b16 %v11554, %v11546
      %v11587 = vpack.c.b16 %v11555, %v11547
      %v11621 = vsel %vm2570, %v11459, 0
      %11623 = vmatprep.subr.bf16.mxu0 0
      %11624 = vmatpush1.bf16.msra.mxu0 0
      %11625 = vmatprep.subr.bf16.mxu0 0
      %11626 = vmatpush1.bf16.msra.mxu0 0
      %11627 = vmatprep.subr.bf16.mxu0 0
      %11628 = vmatpush1.bf16.msra.mxu0 0
      %11629 = vmatprep.subr.bf16.mxu0 0
      %11630 = vmatpush1.bf16.msra.mxu0 0
      %11631 = vmatprep.subr.bf16.mxu0 %v11581
      %11632 = vmatpush1.bf16.msra.mxu0 %v11580
      %11633 = vmatprep.subr.bf16.mxu0 %v11573
      %11634 = vmatpush1.bf16.msra.mxu0 %v11572
      %11635 = vmatprep.subr.bf16.mxu0 %v11565
      %11636 = vmatpush1.bf16.msra.mxu0 %v11564
      %11637 = vmatprep.subr.bf16.mxu0 %v11557
      %11638 = vmatpush1.bf16.msra.mxu0 %v11556
      %11639 = vmatprep.subr.bf16.mxu0 0
      %11640 = vmatpush2.bf16.msra.mxu0 0
      %11641 = vmatprep.subr.bf16.mxu0 0
      %11642 = vmatpush2.bf16.msra.mxu0 0
      %11643 = vmatprep.subr.bf16.mxu0 0
      %11644 = vmatpush2.bf16.msra.mxu0 0
      %11645 = vmatprep.subr.bf16.mxu0 0
      %11646 = vmatpush2.bf16.msra.mxu0 0
      %11647 = vmatprep.subr.bf16.mxu0 0
      %11648 = vmatpush2.bf16.msra.mxu0 0
      %11649 = vmatprep.subr.bf16.mxu0 0
      %11650 = vmatpush2.bf16.msra.mxu0 0
      %11651 = vmatprep.subr.bf16.mxu0 0
      %11652 = vmatpush2.bf16.msra.mxu0 0
      %11653 = vmatprep.subr.bf16.mxu0 0
      %11654 = vmatpush2.bf16.msra.mxu0 0
      %11655 = vmatprep.mubr.bf16.mxu0 0
      %11656 = vmatmul.mubr.bf16.gmra.mxu0 %v11621
      %v11657 = vpop.f32.mrf.mxu0
      %v11658 = vadd.f32 0.0, %v11657
      %v11659 = vpop.f32.mrf.mxu0
      %v11660 = vadd.f32 0.0, %v11659
      %v11661 = vpop.f32.mrf.mxu0
      %v11662 = vpop.f32.mrf.mxu0
      %11663 = vdwg.mxu0
      %11664 = vmatprep.subr.bf16.mxu0 0
      %11665 = vmatpush1.bf16.msra.mxu0 0
      %11666 = vmatprep.subr.bf16.mxu0 0
      %11667 = vmatpush1.bf16.msra.mxu0 0
      %11668 = vmatprep.subr.bf16.mxu0 0
      %11669 = vmatpush1.bf16.msra.mxu0 0
      %11670 = vmatprep.subr.bf16.mxu0 0
      %11671 = vmatpush1.bf16.msra.mxu0 0
      %11672 = vmatprep.subr.bf16.mxu0 %v11583
      %11673 = vmatpush1.bf16.msra.mxu0 %v11582
      %11674 = vmatprep.subr.bf16.mxu0 %v11575
      %11675 = vmatpush1.bf16.msra.mxu0 %v11574
      %11676 = vmatprep.subr.bf16.mxu0 %v11567
      %11677 = vmatpush1.bf16.msra.mxu0 %v11566
      %11678 = vmatprep.subr.bf16.mxu0 %v11559
      %11679 = vmatpush1.bf16.msra.mxu0 %v11558
      %11680 = vmatprep.subr.bf16.mxu0 0
      %11681 = vmatpush2.bf16.msra.mxu0 0
      %11682 = vmatprep.subr.bf16.mxu0 0
      %11683 = vmatpush2.bf16.msra.mxu0 0
      %11684 = vmatprep.subr.bf16.mxu0 0
      %11685 = vmatpush2.bf16.msra.mxu0 0
      %11686 = vmatprep.subr.bf16.mxu0 0
      %11687 = vmatpush2.bf16.msra.mxu0 0
      %11688 = vmatprep.subr.bf16.mxu0 0
      %11689 = vmatpush2.bf16.msra.mxu0 0
      %11690 = vmatprep.subr.bf16.mxu0 0
      %11691 = vmatpush2.bf16.msra.mxu0 0
      %11692 = vmatprep.subr.bf16.mxu0 0
      %11693 = vmatpush2.bf16.msra.mxu0 0
      %11694 = vmatprep.subr.bf16.mxu0 0
      %11695 = vmatpush2.bf16.msra.mxu0 0
      %11696 = vmatprep.mubr.bf16.mxu0 0
      %11697 = vmatmul.mubr.bf16.gmra.mxu0 %v11621
      %v11698 = vpop.f32.mrf.mxu0
      %v11699 = vadd.f32 0.0, %v11698
      %v11700 = vpop.f32.mrf.mxu0
      %v11701 = vadd.f32 0.0, %v11700
      %v11702 = vpop.f32.mrf.mxu0
      %v11703 = vpop.f32.mrf.mxu0
      %11704 = vdwg.mxu0
      %11705 = vmatprep.subr.bf16.mxu0 0
      %11706 = vmatpush1.bf16.msra.mxu0 0
      %11707 = vmatprep.subr.bf16.mxu0 0
      %11708 = vmatpush1.bf16.msra.mxu0 0
      %11709 = vmatprep.subr.bf16.mxu0 0
      %11710 = vmatpush1.bf16.msra.mxu0 0
      %11711 = vmatprep.subr.bf16.mxu0 0
      %11712 = vmatpush1.bf16.msra.mxu0 0
      %11713 = vmatprep.subr.bf16.mxu0 %v11585
      %11714 = vmatpush1.bf16.msra.mxu0 %v11584
      %11715 = vmatprep.subr.bf16.mxu0 %v11577
      %11716 = vmatpush1.bf16.msra.mxu0 %v11576
      %11717 = vmatprep.subr.bf16.mxu0 %v11569
      %11718 = vmatpush1.bf16.msra.mxu0 %v11568
      %11719 = vmatprep.subr.bf16.mxu0 %v11561
      %11720 = vmatpush1.bf16.msra.mxu0 %v11560
      %11721 = vmatprep.subr.bf16.mxu0 0
      %11722 = vmatpush2.bf16.msra.mxu0 0
      %11723 = vmatprep.subr.bf16.mxu0 0
      %11724 = vmatpush2.bf16.msra.mxu0 0
      %11725 = vmatprep.subr.bf16.mxu0 0
      %11726 = vmatpush2.bf16.msra.mxu0 0
      %11727 = vmatprep.subr.bf16.mxu0 0
      %11728 = vmatpush2.bf16.msra.mxu0 0
      %11729 = vmatprep.subr.bf16.mxu0 0
      %11730 = vmatpush2.bf16.msra.mxu0 0
      %11731 = vmatprep.subr.bf16.mxu0 0
      %11732 = vmatpush2.bf16.msra.mxu0 0
      %11733 = vmatprep.subr.bf16.mxu0 0
      %11734 = vmatpush2.bf16.msra.mxu0 0
      %11735 = vmatprep.subr.bf16.mxu0 0
      %11736 = vmatpush2.bf16.msra.mxu0 0
      %11737 = vmatprep.mubr.bf16.mxu0 0
      %11738 = vmatmul.mubr.bf16.gmra.mxu0 %v11621
      %v11739 = vpop.f32.mrf.mxu0
      %v11740 = vadd.f32 0.0, %v11739
      %v11741 = vpop.f32.mrf.mxu0
      %v11742 = vadd.f32 0.0, %v11741
      %v11743 = vpop.f32.mrf.mxu0
      %v11744 = vpop.f32.mrf.mxu0
      %11745 = vdwg.mxu0
      %11746 = vmatprep.subr.bf16.mxu0 0
      %11747 = vmatpush1.bf16.msra.mxu0 0
      %11748 = vmatprep.subr.bf16.mxu0 0
      %11749 = vmatpush1.bf16.msra.mxu0 0
      %11750 = vmatprep.subr.bf16.mxu0 0
      %11751 = vmatpush1.bf16.msra.mxu0 0
      %11752 = vmatprep.subr.bf16.mxu0 0
      %11753 = vmatpush1.bf16.msra.mxu0 0
      %11754 = vmatprep.subr.bf16.mxu0 %v11587
      %11755 = vmatpush1.bf16.msra.mxu0 %v11586
      %11756 = vmatprep.subr.bf16.mxu0 %v11579
      %11757 = vmatpush1.bf16.msra.mxu0 %v11578
      %11758 = vmatprep.subr.bf16.mxu0 %v11571
      %11759 = vmatpush1.bf16.msra.mxu0 %v11570
      %11760 = vmatprep.subr.bf16.mxu0 %v11563
      %11761 = vmatpush1.bf16.msra.mxu0 %v11562
      %11762 = vmatprep.subr.bf16.mxu0 0
      %11763 = vmatpush2.bf16.msra.mxu0 0
      %11764 = vmatprep.subr.bf16.mxu0 0
      %11765 = vmatpush2.bf16.msra.mxu0 0
      %11766 = vmatprep.subr.bf16.mxu0 0
      %11767 = vmatpush2.bf16.msra.mxu0 0
      %11768 = vmatprep.subr.bf16.mxu0 0
      %11769 = vmatpush2.bf16.msra.mxu0 0
      %11770 = vmatprep.subr.bf16.mxu0 0
      %11771 = vmatpush2.bf16.msra.mxu0 0
      %11772 = vmatprep.subr.bf16.mxu0 0
      %11773 = vmatpush2.bf16.msra.mxu0 0
      %11774 = vmatprep.subr.bf16.mxu0 0
      %11775 = vmatpush2.bf16.msra.mxu0 0
      %11776 = vmatprep.subr.bf16.mxu0 0
      %11777 = vmatpush2.bf16.msra.mxu0 0
      %11778 = vmatprep.mubr.bf16.mxu0 0
      %11779 = vmatmul.mubr.bf16.gmra.mxu0 %v11621
      %v11780 = vpop.f32.mrf.mxu0
      %v11781 = vadd.f32 0.0, %v11780
      %v11782 = vpop.f32.mrf.mxu0
      %v11783 = vadd.f32 0.0, %v11782
      %v11784 = vpop.f32.mrf.mxu0
      %v11785 = vpop.f32.mrf.mxu0
      %11786 = vdwg.mxu0
      %v11787 = vadd.f32 %v11418, %v11658
      %v11788 = vadd.f32 %v11419, %v11660
      %v11789 = vadd.f32 %v11420, %v11699
      %v11790 = vadd.f32 %v11421, %v11701
      %v11791 = vadd.f32 %v11422, %v11740
      %v11792 = vadd.f32 %v11423, %v11742
      %v11793 = vadd.f32 %v11424, %v11781
      %v11794 = vadd.f32 %v11425, %v11783
      %vm11795 = vcmp.gt.f32.partialorder %v11787, 0.0
      %vm11796 = vcmp.gt.f32.partialorder %v11788, 0.0
      %vm11797 = vcmp.gt.f32.partialorder %v11789, 0.0
      %vm11798 = vcmp.gt.f32.partialorder %v11790, 0.0
      %vm11799 = vcmp.gt.f32.partialorder %v11791, 0.0
      %vm11800 = vcmp.gt.f32.partialorder %v11792, 0.0
      %vm11801 = vcmp.gt.f32.partialorder %v11793, 0.0
      %vm11802 = vcmp.gt.f32.partialorder %v11794, 0.0
      %v11803 = vmul.f32 %v11787, 0.1
      %v11804 = vmul.f32 %v11788, 0.1
      %v11805 = vmul.f32 %v11789, 0.1
      %v11806 = vmul.f32 %v11790, 0.1
      %v11807 = vmul.f32 %v11791, 0.1
      %v11808 = vmul.f32 %v11792, 0.1
      %v11809 = vmul.f32 %v11793, 0.1
      %v11810 = vmul.f32 %v11794, 0.1
      %v11811 = vsel %vm11795, %v11787, %v11803
      %v11812 = vsel %vm11796, %v11788, %v11804
      %v11813 = vsel %vm11797, %v11789, %v11805
      %v11814 = vsel %vm11798, %v11790, %v11806
      %v11815 = vsel %vm11799, %v11791, %v11807
      %v11816 = vsel %vm11800, %v11792, %v11808
      %v11817 = vsel %vm11801, %v11793, %v11809
      %v11818 = vsel %vm11802, %v11794, %v11810
      %v11827 = vcombine.low %v11811, %v11812
      %v11828 = vcombine.low %v11813, %v11814
      %v11829 = vcombine.low %v11815, %v11816
      %v11830 = vcombine.low %v11817, %v11818
      %v11832 = vunpack.c.l.s4 1966171168
      %v11833 = vunpack.c.0.s8 %v11832
      %v11834 = vlaneseq
      %v11835 = vshrl.u32 %v11834, 7
      %v11836 = vsub.s32 %v11833, %v11835
      %v11837 = vrot.slane %v11827, %v11836
      %v11839 = vunpack.c.l.s4 1966171168
      %v11840 = vunpack.c.0.s8 %v11839
      %v11841 = vlaneseq
      %v11842 = vshrl.u32 %v11841, 7
      %v11843 = vsub.s32 %v11840, %v11842
      %v11844 = vrot.slane %v11828, %v11843
      %v11846 = vunpack.c.l.s4 1966171168
      %v11847 = vunpack.c.0.s8 %v11846
      %v11848 = vlaneseq
      %v11849 = vshrl.u32 %v11848, 7
      %v11850 = vsub.s32 %v11847, %v11849
      %v11851 = vrot.slane %v11829, %v11850
      %v11853 = vunpack.c.l.s4 1966171168
      %v11854 = vunpack.c.0.s8 %v11853
      %v11855 = vlaneseq
      %v11856 = vshrl.u32 %v11855, 7
      %v11857 = vsub.s32 %v11854, %v11856
      %v11858 = vrot.slane %v11830, %v11857
      %v11859 = vcombine.low %v11837, %v11844
      %v11860 = vcombine.low %v11851, %v11858
      %v11862 = vunpack.c.l.s4 1966171168
      %v11863 = vunpack.c.0.s8 %v11862
      %v11864 = vlaneseq
      %v11865 = vshrl.u32 %v11864, 7
      %v11866 = vsub.s32 %v11863, %v11865
      %v11867 = vrot.slane %v11859, %v11866
      %v11869 = vunpack.c.l.s4 1966171168
      %v11870 = vunpack.c.0.s8 %v11869
      %v11871 = vlaneseq
      %v11872 = vshrl.u32 %v11871, 7
      %v11873 = vsub.s32 %v11870, %v11872
      %v11874 = vrot.slane %v11860, %v11873
      %v11875 = vcombine.low %v11867, %v11874
      %11877 = vst [vmem:[%s676] sm:$0xff] %v11875
      %v11878 = vld [vmem:[%s18] sm:$0xff]
      %v11880 = vlaneseq
      %v11881 = vshrl.u32 %v11880, 7
      %v11882 = vsub.s32 0, %v11881
      %v11883 = vrot.slane %v11878, %v11882
      %v11884 = vlaneseq
      %v11885 = vshrl.u32 %v11884, 7
      %v11886 = vsub.s32 1, %v11885
      %v11887 = vrot.slane %v11878, %v11886
      %v11888 = vlaneseq
      %v11889 = vshrl.u32 %v11888, 7
      %v11890 = vsub.s32 2, %v11889
      %v11891 = vrot.slane %v11878, %v11890
      %v11892 = vlaneseq
      %v11893 = vshrl.u32 %v11892, 7
      %v11894 = vsub.s32 3, %v11893
      %v11895 = vrot.slane %v11878, %v11894
      %v11896 = vlaneseq
      %v11897 = vshrl.u32 %v11896, 7
      %v11898 = vsub.s32 4, %v11897
      %v11899 = vrot.slane %v11878, %v11898
      %v11900 = vlaneseq
      %v11901 = vshrl.u32 %v11900, 7
      %v11902 = vsub.s32 5, %v11901
      %v11903 = vrot.slane %v11878, %v11902
      %v11904 = vlaneseq
      %v11905 = vshrl.u32 %v11904, 7
      %v11906 = vsub.s32 6, %v11905
      %v11907 = vrot.slane %v11878, %v11906
      %v11908 = vlaneseq
      %v11909 = vshrl.u32 %v11908, 7
      %v11910 = vsub.s32 7, %v11909
      %v11911 = vrot.slane %v11878, %v11910
      %v11920 = vmul.f32 %v11811, %v11883
      %v11921 = vmul.f32 %v11812, %v11887
      %v11922 = vmul.f32 %v11813, %v11891
      %v11923 = vmul.f32 %v11814, %v11895
      %v11924 = vmul.f32 %v11815, %v11899
      %v11925 = vmul.f32 %v11816, %v11903
      %v11926 = vmul.f32 %v11817, %v11907
      %v11927 = vmul.f32 %v11818, %v11911
      %vm11928 = vcmask 1040384
      %v11929 = vsel %vm11928, %v11920, 0.0
      %v11930 = vsel %vm11928, %v11921, 0.0
      %v11931 = vadd.f32 %v11929, %v11930
      %v11932 = vsel %vm11928, %v11922, 0.0
      %v11933 = vadd.f32 %v11931, %v11932
      %v11934 = vsel %vm11928, %v11923, 0.0
      %v11935 = vadd.f32 %v11933, %v11934
      %v11936 = vsel %vm11928, %v11924, 0.0
      %v11937 = vadd.f32 %v11935, %v11936
      %v11938 = vsel %vm11928, %v11925, 0.0
      %v11939 = vadd.f32 %v11937, %v11938
      %v11940 = vsel %vm11928, %v11926, 0.0
      %v11941 = vadd.f32 %v11939, %v11940
      %v11942 = vsel %vm11928, %v11927, 0.0
      %v11943 = vadd.f32 %v11941, %v11942
      %11944 = vadd.xlane.f32.xlu0 %v11943
      %v11945 = vpop.xlane.xlu0 %11944
      %v11946 = vld [vmem:[#allocation2] sm:$0x1]
      %v11947 = vadd.f32 %v11945, %v11946
      %vm11948 = vcmask 0
      %11949 = vst.msk [vmem:[%s679] sm:$0x1] %vm11948, %v11947
      %p11950 = scmp.lt.s32.totalorder %s35, 1
      %s11951 = scalar_select %p11950, %s35, 1
      %s11952 = smul.addr %s11951, 8
      %s11953 = scalar_lea.vmem %s20, %s11952
      %p11954 = scmp.lt.s32.totalorder %s35, 1
      %s11955 = scalar_select %p11954, %s35, 1
      %s11956 = scalar_lea.vmem %s21, %s11955
      // Predicated region
      $region101: #{discriminatorxz_forward.1} parent=99 // pred_check
        %p11957 = pneg %p483
      $region102: #{discriminatorxz_forward.1} parent=99 // pred_check_branch
        %11959 = sbr.rel (%p11957) target = $region104
      $region103: #{discriminatorxz_forward.1} parent=99 // pred_region
        _
      $region104: #{discriminatorxz_forward.1} parent=99 // pred_fallthru
        _
      // Predicated region
      $region105: #{discriminatorxz_forward.1} parent=99 // pred_check
        %p11960 = pneg %p509
      $region106: #{discriminatorxz_forward.1} parent=99 // pred_check_branch
        %11962 = sbr.rel (%p11960) target = $region108
      $region107: #{discriminatorxz_forward.1} parent=99 // pred_region
        _
      $region108: #{discriminatorxz_forward.1} parent=99 // pred_fallthru
        _
    $region100: #{discriminatorxz_forward.1} parent=5 // pred_fallthru
      _
    %p11963 = scmp.le.s32.totalorder 2, %s30
    // Predicated region
    $region109: #{discriminatorxz_forward.1} parent=5 // pred_check
      %p11964 = pneg %p11963
    $region110: #{discriminatorxz_forward.1} parent=5 // pred_check_branch
      %11966 = sbr.rel (%p11964) target = $region112
    $region111: #{discriminatorxz_forward.1} parent=5 // pred_region
      %s11967 = ssub.s32 %s30, 2
      // Predicated region
      $region113: #{discriminatorxz_forward.1} parent=111 // pred_check
        %p11968 = pneg %p489
      $region114: #{discriminatorxz_forward.1} parent=111 // pred_check_branch
        %11970 = sbr.rel (%p11968) target = $region116
      $region115: #{discriminatorxz_forward.1} parent=111 // pred_region
        %p11971 = scmp.lt.s32.totalorder %s36, 1
        %s11972 = scalar_select %p11971, %s36, 1
        %s11973 = smul.addr %s11972, 8
        %s11974 = scalar_lea.vmem %s20, %s11973
      $region116: #{discriminatorxz_forward.1} parent=111 // pred_fallthru
        _
      // Predicated region
      $region117: #{discriminatorxz_forward.1} parent=111 // pred_check
        %p11975 = pneg %p515
      $region118: #{discriminatorxz_forward.1} parent=111 // pred_check_branch
        %11977 = sbr.rel (%p11975) target = $region120
      $region119: #{discriminatorxz_forward.1} parent=111 // pred_region
        %p11978 = scmp.lt.s32.totalorder %s36, 1
        %s11979 = scalar_select %p11978, %s36, 1
        %s11980 = scalar_lea.vmem %s21, %s11979
      $region120: #{discriminatorxz_forward.1} parent=111 // pred_fallthru
        _
    $region112: #{discriminatorxz_forward.1} parent=5 // pred_fallthru
      _
  $region6: #{discriminatorxz_forward.1} parent=0 // loop_footer
    %s34 = sadd.s32 1, %s30
  $region7: #{discriminatorxz_forward.1} parent=0 // loop_footer_branch
    %29 = sbr.rel target = $region3
  $region8: #{discriminatorxz_forward.1} parent=0 // loop_exit
    _

</llo_original>
